<compile_context>
chip_gen: v7x
topology: tpu7x:2x2x1
jax: 0.10.0
libtpu: 0.0.40
codegen_flags: <defaults>
</compile_context>

<pallas_src>
import jax
import jax.numpy as jnp
from jax import lax
from jax.experimental import pallas as pl
from jax.experimental.pallas import tpu as pltpu


def _round_up(x, m):
    return (x + m - 1) // m * m


# ------------------------------ fused kernel -------------------------------

def _bottleneck_kernel(x_ref, xh_ref, w1_ref, b1_ref, w2_ref, b2_ref,
                       w3_ref, b3_ref, o_ref, halo_ref, sem_ref, y1p_ref):
    """Fused Bottleneck on one (batch, row-tile) block.

    x_ref   : (1, TH, W, Cin)  bf16  auto-pipelined input rows
    xh_ref  : (N, H, W, Cin)   bf16  same array, raw HBM (halo rows)
    w*_ref  : folded conv+BN weights (bf16) / biases (f32), VMEM-resident
    o_ref   : (1, TH, W, Cout) bf16  output rows
    halo_ref: (2, W, Cin)      bf16  scratch for the two halo rows
    y1p_ref : (TH+2, W+2, Cw)  bf16  persistent zero-padded conv2 input
    """
    n = pl.program_id(0)
    h = pl.program_id(1)
    TH = x_ref.shape[1]
    W = x_ref.shape[2]
    Cin = x_ref.shape[3]
    Cw = w1_ref.shape[1]
    Cout = w3_ref.shape[1]
    Htot = xh_ref.shape[1]
    M = TH * W

    # --- kick off the two halo-row DMAs (overlapped with interior conv1).
    # Row indices are clamped at the image boundary; boundary rows are zeroed
    # below instead of being used, so the clamped fetch is just discarded.
    top_src = jnp.maximum(h * TH - 1, 0)
    bot_src = jnp.minimum(h * TH + TH, Htot - 1)
    top_cp = pltpu.make_async_copy(xh_ref.at[n, top_src], halo_ref.at[0],
                                   sem_ref.at[0])
    bot_cp = pltpu.make_async_copy(xh_ref.at[n, bot_src], halo_ref.at[1],
                                   sem_ref.at[1])
    top_cp.start()
    bot_cp.start()

    # --- re-zero only the thin left/right padding columns of the scratch.
    zcol = jnp.zeros((TH + 2, 1, Cw), jnp.bfloat16)
    y1p_ref[:, 0:1, :] = zcol
    y1p_ref[:, W + 1:W + 2, :] = zcol

    # --- conv1 (1x1) + folded BN + ReLU on the interior rows (bf16 MXU, f32 acc).
    x2d = x_ref[0].reshape(M, Cin)
    y1 = jnp.dot(x2d, w1_ref[...], preferred_element_type=jnp.float32)
    y1 = jnp.maximum(y1 + b1_ref[...], 0.0).astype(jnp.bfloat16)
    y1p_ref[1:TH + 1, 1:W + 1, :] = y1.reshape(TH, W, Cw)

    # --- conv1 on the two halo rows; zero at the image top/bottom boundary
    #     (conv2 pads its *input* y1 with zeros, not with conv1(0)).
    top_cp.wait()
    bot_cp.wait()
    xh2d = halo_ref[...].reshape(2 * W, Cin)
    yh = jnp.dot(xh2d, w1_ref[...], preferred_element_type=jnp.float32)
    yh = jnp.maximum(yh + b1_ref[...], 0.0).astype(jnp.bfloat16).reshape(2, W, Cw)
    zero_row = jnp.zeros((1, W, Cw), jnp.bfloat16)
    y1p_ref[0:1, 1:W + 1, :] = jnp.where(h > 0, yh[0:1], zero_row)
    y1p_ref[TH + 1:TH + 2, 1:W + 1, :] = jnp.where(
        h < pl.num_programs(1) - 1, yh[1:2], zero_row)

    # --- conv2 (3x3, stride 1, pad 1) as 9 accumulated K=Cw tap dots.
    tap0 = y1p_ref[0:TH, 0:W, :].reshape(M, Cw)
    acc = jnp.dot(tap0, w2_ref[0], preferred_element_type=jnp.float32)
    for k in range(1, 9):
        kh, kw = divmod(k, 3)
        tap = y1p_ref[kh:kh + TH, kw:kw + W, :].reshape(M, Cw)
        acc = acc + jnp.dot(tap, w2_ref[k], preferred_element_type=jnp.float32)
    y2 = jnp.maximum(acc + b2_ref[...], 0.0).astype(jnp.bfloat16)

    # --- conv3 (1x1) + folded BN + residual add + ReLU; bf16 writeback.
    y3 = jnp.dot(y2, w3_ref[...], preferred_element_type=jnp.float32)
    y3 = y3 + b3_ref[...] + x2d.astype(jnp.float32)
    o_ref[0] = jnp.maximum(y3, 0.0).reshape(TH, W, Cout).astype(o_ref.dtype)


# ------------------------------ host wrapper -------------------------------

def _pack_params(params, cin_p, cw_p, cout_p):
    """Zero-pad folded conv/BN params to the lane-aligned channel counts,
    cast matmul weights to bf16 (biases stay f32)."""
    w1, b1 = params["w1"], params["b1"]
    w2, b2 = params["w2"], params["b2"]
    w3, b3 = params["w3"], params["b3"]
    cin, cw = w1.shape
    cout = w3.shape[1]

    w1p = jnp.zeros((cin_p, cw_p), jnp.float32).at[:cin, :cw].set(w1)
    w2p = jnp.zeros((3, 3, cw_p, cw_p), jnp.float32).at[:, :, :cw, :cw].set(w2)
    w3p = jnp.zeros((cw_p, cout_p), jnp.float32).at[:cw, :cout].set(w3)
    b1p = jnp.zeros((1, cw_p), jnp.float32).at[0, :cw].set(b1)
    b2p = jnp.zeros((1, cw_p), jnp.float32).at[0, :cw].set(b2)
    b3p = jnp.zeros((1, cout_p), jnp.float32).at[0, :cout].set(b3)

    return (w1p.astype(jnp.bfloat16), b1p,
            w2p.reshape(9, cw_p, cw_p).astype(jnp.bfloat16), b2p,
            w3p.astype(jnp.bfloat16), b3p)


def bottleneck_forward_nhwc(x_nhwc, params, *, block_h=32):
    """Channels-last Bottleneck forward: (N, H, W, Cin) bf16/f32 -> (N, H, W, Cout) bf16."""
    N, H, W, Cin = x_nhwc.shape
    cw = params["w1"].shape[1]
    Cout = params["w3"].shape[1]
    assert Cin == Cout, "downsample=None requires inplanes == planes*expansion"

    # 256-aligned channel padding for large channel counts (v6e/v7x 2x256x256
    # MXU), 128 otherwise; for real ResNet stages this is a no-op.
    def _align(c):
        return _round_up(c, 256 if c >= 256 else 128)

    cin_p, cw_p, cout_p = _align(Cin), _align(cw), _align(Cout)
    assert cin_p == cout_p

    # Row tile: largest divisor of H not exceeding block_h.
    th = max(d for d in range(1, min(block_h, H) + 1) if H % d == 0)
    n_h = H // th

    x = x_nhwc.astype(jnp.bfloat16)
    if cin_p != Cin:
        x = jnp.pad(x, ((0, 0), (0, 0), (0, 0), (0, cin_p - Cin)))

    w1, b1, w2, b2, w3, b3 = _pack_params(params, cin_p, cw_p, cout_p)

    # Advisory cost estimate for XLA's scheduler.
    flops = 2 * N * H * W * (cin_p * cw_p + 9 * cw_p * cw_p + cw_p * cout_p)
    bytes_accessed = ((x.size + N * H * W * cout_p + w1.size + w2.size + w3.size) * 2
                      + (b1.size + b2.size + b3.size) * 4)
    cost = pl.CostEstimate(flops=int(flops), transcendentals=0,
                           bytes_accessed=int(bytes_accessed))

    # VMEM budget from the actual live set (double-buffered x/out blocks,
    # resident weights, scratch, f32 temporaries), with ~2x headroom.
    blk_x = th * W * cin_p * 2
    blk_o = th * W * cout_p * 2
    w_bytes = (w1.size + w2.size + w3.size) * 2 + (b1.size + b2.size + b3.size) * 4
    scratch_bytes = (th + 2) * (W + 2) * cw_p * 2 + 2 * W * cin_p * 2
    f32_live = th * W * (2 * cw_p + cout_p) * 4
    vmem_est = 2 * blk_x + 2 * blk_o + 2 * w_bytes + scratch_bytes + f32_live
    vmem_budget = int(min(max(2 * vmem_est, 32 * 2**20), 64 * 2**20))

    def _build(weight_mode):
        def wspec(arr):
            shape = arr.shape
            if weight_mode is None:
                return pl.BlockSpec(shape, lambda n, hh: (0,) * len(shape))
            return pl.BlockSpec(shape, lambda n, hh: (0,) * len(shape),
                                pipeline_mode=weight_mode)

        return pl.pallas_call(
            _bottleneck_kernel,
            out_shape=jax.ShapeDtypeStruct((N, H, W, cout_p), jnp.bfloat16),
            grid=(N, n_h),
            in_specs=[
                pl.BlockSpec((1, th, W, cin_p), lambda n, hh: (n, hh, 0, 0)),
                pl.BlockSpec(memory_space=pl.ANY),   # same x, raw HBM for halo rows
                wspec(w1), wspec(b1), wspec(w2), wspec(b2), wspec(w3), wspec(b3),
            ],
            out_specs=pl.BlockSpec((1, th, W, cout_p), lambda n, hh: (n, hh, 0, 0)),
            scratch_shapes=[
                pltpu.VMEM((2, W, cin_p), jnp.bfloat16),       # halo rows
                pltpu.SemaphoreType.DMA((2,)),                 # halo DMA sems
                pltpu.VMEM((th + 2, W + 2, cw_p), jnp.bfloat16),  # padded y1
            ],
            compiler_params=pltpu.CompilerParams(
                dimension_semantics=("parallel", "parallel"),
                vmem_limit_bytes=vmem_budget,
            ),
            cost_estimate=cost,
        )

    try:
        # Single-buffered constant weights (they never change across the grid).
        out = _build(pl.Buffered(1))(x, x, w1, b1, w2, b2, w3, b3)
    except Exception:
        # Fallback if single-buffering via pipeline_mode is unsupported here.
        out = _build(None)(x, x, w1, b1, w2, b2, w3, b3)

    if cout_p != Cout:
        out = out[..., :Cout]
    return out


def bottleneck_forward(x_nchw, params, *, block_h=32):
    """Module-compatible NCHW wrapper: (N, inplanes, H, W) -> (N, planes*4, H, W).

    TODO(synk): keep the surrounding graph channels-last and call
                bottleneck_forward_nhwc directly to drop these two
                full-tensor HBM transposes.
    """
    x = jnp.transpose(x_nchw, (0, 2, 3, 1))
    out = bottleneck_forward_nhwc(x, params, block_h=block_h)
    return jnp.transpose(out, (0, 3, 1, 2))


# ----------------------- deterministic parameter init ----------------------

def init_params(key, inplanes, planes, base_width=64, groups=1):
    expansion = 4
    width = int(planes * (base_width / 64.0)) * groups
    outp = planes * expansion
    eps = 1e-5
    keys = jax.random.split(key, 15)

    def bn_fold(kg, kb, km, kv, c):
        gamma = jax.random.uniform(kg, (c,), minval=0.5, maxval=1.5)
        beta = 0.1 * jax.random.normal(kb, (c,))
        mean = 0.1 * jax.random.normal(km, (c,))
        var = jax.random.uniform(kv, (c,), minval=0.5, maxval=1.5)
        scale = gamma / jnp.sqrt(var + eps)
        bias = beta - mean * scale
        return scale.astype(jnp.float32), bias.astype(jnp.float32)

    w1c = 0.1 * jax.random.normal(keys[0], (inplanes, width), dtype=jnp.float32)
    w2c = 0.1 * jax.random.normal(keys[1], (3, 3, width, width), dtype=jnp.float32)
    w3c = 0.1 * jax.random.normal(keys[2], (width, outp), dtype=jnp.float32)

    s1, b1 = bn_fold(keys[3], keys[4], keys[5], keys[6], width)
    s2, b2 = bn_fold(keys[7], keys[8], keys[9], keys[10], width)
    s3, b3 = bn_fold(keys[11], keys[12], keys[13], keys[14], outp)

    return {
        "w1": w1c * s1[None, :],                     "b1": b1,
        "w2": w2c * s2[None, None, None, :],         "b2": b2,
        "w3": w3c * s3[None, :],                     "b3": b3,
    }


# ------------------------- pure-JAX reference check ------------------------

def reference_forward(x_nchw, params):
    """XLA reference with the same numerical recipe as the kernel
    (bf16 matmul inputs, f32 accumulation, f32 bias/ReLU/residual)."""
    x = jnp.transpose(x_nchw, (0, 2, 3, 1)).astype(jnp.bfloat16)
    xf = x.astype(jnp.float32)
    w1 = params["w1"].astype(jnp.bfloat16)
    w2 = params["w2"].astype(jnp.bfloat16)
    w3 = params["w3"].astype(jnp.bfloat16)

    y1 = jax.nn.relu(
        jnp.einsum("nhwc,co->nhwo", x, w1,
                   preferred_element_type=jnp.float32) + params["b1"])
    y1 = y1.astype(jnp.bfloat16)
    y2 = jax.nn.relu(
        lax.conv_general_dilated(
            y1, w2, window_strides=(1, 1), padding="SAME",
            dimension_numbers=("NHWC", "HWIO", "NHWC"),
            preferred_element_type=jnp.float32) + params["b2"])
    y2 = y2.astype(jnp.bfloat16)
    y3 = jax.nn.relu(
        jnp.einsum("nhwc,co->nhwo", y2, w3,
                   preferred_element_type=jnp.float32) + params["b3"] + xf)
    return jnp.transpose(y3, (0, 3, 1, 2))


if __name__ == "__main__":
    key = jax.random.PRNGKey(0)
    kx, kp = jax.random.split(key)

    # Small shapes consistent with the module: planes=4 -> width=4,
    # out channels = planes*4 = 16 = inplanes (so downsample=None is valid).
    N, planes, H, W = 2, 4, 16, 16
    inplanes = planes * 4

    x = jax.random.normal(kx, (N, inplanes, H, W), dtype=jnp.float32)
    params = init_params(kp, inplanes, planes)

    # block_h=4 -> 4 row tiles per image, exercising interior and boundary halos.
    out = jax.block_until_ready(bottleneck_forward(x, params, block_h=4))
    ref = jax.block_until_ready(reference_forward(x, params))

    assert out.shape == (N, planes * 4, H, W)
    out_f32 = out.astype(jnp.float32)
    assert jnp.allclose(out_f32, ref, atol=3e-2, rtol=3e-2), (
        "mismatch vs reference, max abs err = "
        f"{float(jnp.max(jnp.abs(out_f32 - ref)))}")

    print("KERNEL_OK")
</pallas_src>

<mosaic_0001>
module attributes {stable_mosaic.version = 11 : i64} {
  func.func @_bottleneck_kernel(%arg0: i32, %arg1: i32, %arg2: memref<1x4x16x128xbf16, #tpu.memory_space<vmem>>, %arg3: memref<2x16x16x128xbf16, #tpu.memory_space<any>>, %arg4: memref<128x128xbf16, #tpu.memory_space<vmem>>, %arg5: memref<1x128xf32, #tpu.memory_space<vmem>>, %arg6: memref<9x128x128xbf16, #tpu.memory_space<vmem>>, %arg7: memref<1x128xf32, #tpu.memory_space<vmem>>, %arg8: memref<128x128xbf16, #tpu.memory_space<vmem>>, %arg9: memref<1x128xf32, #tpu.memory_space<vmem>>, %arg10: memref<1x4x16x128xbf16, #tpu.memory_space<vmem>>, %arg11: memref<2x16x128xbf16, #tpu.memory_space<vmem>>, %arg12: memref<2x!tpu.dma_semaphore, #tpu.memory_space<semaphore_mem>>, %arg13: memref<6x18x128xbf16, #tpu.memory_space<vmem>>) attributes {dimension_semantics = [#tpu.dimension_semantics<parallel>, #tpu.dimension_semantics<parallel>], iteration_bounds = array<i64: 2, 4>, scalar_prefetch = 0 : i64, scratch_operands = 3 : i64, tpu.core_type = #tpu.core_type<tc>, window_params = [{transform_indices = @transform_0, window_bounds = array<i64: 1, 4, 16, 128>}, {}, {pipeline_mode = #tpu.pipeline_mode<synchronous>, transform_indices = @transform_2, window_bounds = array<i64: 128, 128>}, {pipeline_mode = #tpu.pipeline_mode<synchronous>, transform_indices = @transform_3, window_bounds = array<i64: 1, 128>}, {pipeline_mode = #tpu.pipeline_mode<synchronous>, transform_indices = @transform_4, window_bounds = array<i64: 9, 128, 128>}, {pipeline_mode = #tpu.pipeline_mode<synchronous>, transform_indices = @transform_5, window_bounds = array<i64: 1, 128>}, {pipeline_mode = #tpu.pipeline_mode<synchronous>, transform_indices = @transform_6, window_bounds = array<i64: 128, 128>}, {pipeline_mode = #tpu.pipeline_mode<synchronous>, transform_indices = @transform_7, window_bounds = array<i64: 1, 128>}, {transform_indices = @transform_8, window_bounds = array<i64: 1, 4, 16, 128>}]} {
    %c4_i32 = arith.constant 4 : i32
    %0 = arith.muli %arg1, %c4_i32 : i32
    %c1_i32 = arith.constant 1 : i32
    %1 = arith.subi %0, %c1_i32 : i32
    %c0_i32 = arith.constant 0 : i32
    %2 = arith.maxsi %1, %c0_i32 : i32
    %c4_i32_0 = arith.constant 4 : i32
    %3 = arith.muli %arg1, %c4_i32_0 : i32
    %c4_i32_1 = arith.constant 4 : i32
    %4 = arith.addi %3, %c4_i32_1 : i32
    %c15_i32 = arith.constant 15 : i32
    %5 = arith.minsi %4, %c15_i32 : i32
    %c0_i32_2 = arith.constant 0 : i32
    %c0_i32_3 = arith.constant 0 : i32
    %c0_i32_4 = arith.constant 0 : i32
    %c0_i32_5 = arith.constant 0 : i32
    %6 = tpu.memref_slice %arg3[%arg0, %2, %c0_i32_4, %c0_i32_5] : memref<2x16x16x128xbf16, #tpu.memory_space<any>> -> memref<1x1x16x128xbf16, #tpu.memory_space<any>>
    %7 = tpu.memref_squeeze %6 : memref<1x1x16x128xbf16, #tpu.memory_space<any>> -> memref<16x128xbf16, #tpu.memory_space<any>>
    %c0_i32_6 = arith.constant 0 : i32
    %c0_i32_7 = arith.constant 0 : i32
    %8 = tpu.memref_slice %arg11[%c0_i32_2, %c0_i32_6, %c0_i32_7] : memref<2x16x128xbf16, #tpu.memory_space<vmem>> -> memref<1x16x128xbf16, #tpu.memory_space<vmem>>
    %9 = tpu.memref_squeeze %8 : memref<1x16x128xbf16, #tpu.memory_space<vmem>> -> memref<16x128xbf16, #tpu.memory_space<vmem>>
    %10 = tpu.memref_slice %arg12[%c0_i32_3] : memref<2x!tpu.dma_semaphore, #tpu.memory_space<semaphore_mem>> -> memref<1x!tpu.dma_semaphore, #tpu.memory_space<semaphore_mem>>
    %11 = tpu.memref_squeeze %10 : memref<1x!tpu.dma_semaphore, #tpu.memory_space<semaphore_mem>> -> memref<!tpu.dma_semaphore, #tpu.memory_space<semaphore_mem>>
    tpu.enqueue_dma source(%7 : memref<16x128xbf16, #tpu.memory_space<any>>) target(%9 : memref<16x128xbf16, #tpu.memory_space<vmem>>) target_semaphore(%11 : memref<!tpu.dma_semaphore, #tpu.memory_space<semaphore_mem>>)
    %c1_i32_8 = arith.constant 1 : i32
    %c1_i32_9 = arith.constant 1 : i32
    %c0_i32_10 = arith.constant 0 : i32
    %c0_i32_11 = arith.constant 0 : i32
    %12 = tpu.memref_slice %arg3[%arg0, %5, %c0_i32_10, %c0_i32_11] : memref<2x16x16x128xbf16, #tpu.memory_space<any>> -> memref<1x1x16x128xbf16, #tpu.memory_space<any>>
    %13 = tpu.memref_squeeze %12 : memref<1x1x16x128xbf16, #tpu.memory_space<any>> -> memref<16x128xbf16, #tpu.memory_space<any>>
    %c0_i32_12 = arith.constant 0 : i32
    %c0_i32_13 = arith.constant 0 : i32
    %14 = tpu.memref_slice %arg11[%c1_i32_8, %c0_i32_12, %c0_i32_13] : memref<2x16x128xbf16, #tpu.memory_space<vmem>> -> memref<1x16x128xbf16, #tpu.memory_space<vmem>>
    %15 = tpu.memref_squeeze %14 : memref<1x16x128xbf16, #tpu.memory_space<vmem>> -> memref<16x128xbf16, #tpu.memory_space<vmem>>
    %16 = tpu.memref_slice %arg12[%c1_i32_9] : memref<2x!tpu.dma_semaphore, #tpu.memory_space<semaphore_mem>> -> memref<1x!tpu.dma_semaphore, #tpu.memory_space<semaphore_mem>>
    %17 = tpu.memref_squeeze %16 : memref<1x!tpu.dma_semaphore, #tpu.memory_space<semaphore_mem>> -> memref<!tpu.dma_semaphore, #tpu.memory_space<semaphore_mem>>
    tpu.enqueue_dma source(%13 : memref<16x128xbf16, #tpu.memory_space<any>>) target(%15 : memref<16x128xbf16, #tpu.memory_space<vmem>>) target_semaphore(%17 : memref<!tpu.dma_semaphore, #tpu.memory_space<semaphore_mem>>)
    %cst = arith.constant 0.000000e+00 : bf16
    %18 = vector.broadcast %cst : bf16 to vector<6x1x128xbf16>
    %c0 = arith.constant 0 : index
    %c0_14 = arith.constant 0 : index
    %c0_15 = arith.constant 0 : index
    %19 = vector.load %arg13[%c0, %c0_14, %c0_15] : memref<6x18x128xbf16, #tpu.memory_space<vmem>>, vector<6x1x128xbf16>
    tpu.vector_store %arg13[%c0, %c0_14, %c0_15], %18 {strides = array<i32>} : memref<6x18x128xbf16, #tpu.memory_space<vmem>>, vector<6x1x128xbf16>,
    %c0_16 = arith.constant 0 : index
    %c17 = arith.constant 17 : index
    %c0_17 = arith.constant 0 : index
    %20 = vector.load %arg13[%c0_16, %c17, %c0_17] : memref<6x18x128xbf16, #tpu.memory_space<vmem>>, vector<6x1x128xbf16>
    tpu.vector_store %arg13[%c0_16, %c17, %c0_17], %18 {strides = array<i32>} : memref<6x18x128xbf16, #tpu.memory_space<vmem>>, vector<6x1x128xbf16>,
    %c0_18 = arith.constant 0 : index
    %c0_19 = arith.constant 0 : index
    %c0_20 = arith.constant 0 : index
    %c0_21 = arith.constant 0 : index
    %21 = vector.load %arg2[%c0_18, %c0_19, %c0_20, %c0_21] : memref<1x4x16x128xbf16, #tpu.memory_space<vmem>>, vector<1x4x16x128xbf16>
    %22 = vector.shape_cast %21 : vector<1x4x16x128xbf16> to vector<4x16x128xbf16>
    %23 = vector.shape_cast %22 : vector<4x16x128xbf16> to vector<64x128xbf16>
    %c0_22 = arith.constant 0 : index
    %c0_23 = arith.constant 0 : index
    %24 = vector.load %arg4[%c0_22, %c0_23] : memref<128x128xbf16, #tpu.memory_space<vmem>>, vector<128x128xbf16>
    %cst_24 = arith.constant dense<0.000000e+00> : vector<64x128xf32>
    %25 = tpu.matmul %23, %24, %cst_24 {dimension_numbers = #tpu.dot_dimension_numbers<[1], [0], [0], [1], [0, 0, 1, 1], [], []>} : vector<64x128xbf16>, vector<128x128xbf16>, vector<64x128xf32> -> vector<64x128xf32>
    %c0_25 = arith.constant 0 : index
    %c0_26 = arith.constant 0 : index
    %26 = vector.load %arg5[%c0_25, %c0_26] : memref<1x128xf32, #tpu.memory_space<vmem>>, vector<1x128xf32>
    %27 = vector.broadcast %26 : vector<1x128xf32> to vector<64x128xf32>
    %28 = arith.addf %25, %27 : vector<64x128xf32>
    %cst_27 = arith.constant 0.000000e+00 : f32
    %29 = vector.broadcast %cst_27 : f32 to vector<64x128xf32>
    %30 = arith.maximumf %28, %29 : vector<64x128xf32>
    %31 = arith.truncf %30 : vector<64x128xf32> to vector<64x128xbf16>
    %32 = vector.shape_cast %31 : vector<64x128xbf16> to vector<4x16x128xbf16>
    %c1 = arith.constant 1 : index
    %c1_28 = arith.constant 1 : index
    %c0_29 = arith.constant 0 : index
    %33 = vector.load %arg13[%c1, %c1_28, %c0_29] : memref<6x18x128xbf16, #tpu.memory_space<vmem>>, vector<4x16x128xbf16>
    tpu.vector_store %arg13[%c1, %c1_28, %c0_29], %32 {strides = array<i32>} : memref<6x18x128xbf16, #tpu.memory_space<vmem>>, vector<4x16x128xbf16>,
    %c0_i32_30 = arith.constant 0 : i32
    %c0_i32_31 = arith.constant 0 : i32
    %c0_i32_32 = arith.constant 0 : i32
    %c0_i32_33 = arith.constant 0 : i32
    %34 = tpu.memref_slice %arg3[%arg0, %2, %c0_i32_32, %c0_i32_33] : memref<2x16x16x128xbf16, #tpu.memory_space<any>> -> memref<1x1x16x128xbf16, #tpu.memory_space<any>>
    %35 = tpu.memref_squeeze %34 : memref<1x1x16x128xbf16, #tpu.memory_space<any>> -> memref<16x128xbf16, #tpu.memory_space<any>>
    %c0_i32_34 = arith.constant 0 : i32
    %c0_i32_35 = arith.constant 0 : i32
    %36 = tpu.memref_slice %arg11[%c0_i32_30, %c0_i32_34, %c0_i32_35] : memref<2x16x128xbf16, #tpu.memory_space<vmem>> -> memref<1x16x128xbf16, #tpu.memory_space<vmem>>
    %37 = tpu.memref_squeeze %36 : memref<1x16x128xbf16, #tpu.memory_space<vmem>> -> memref<16x128xbf16, #tpu.memory_space<vmem>>
    %38 = tpu.memref_slice %arg12[%c0_i32_31] : memref<2x!tpu.dma_semaphore, #tpu.memory_space<semaphore_mem>> -> memref<1x!tpu.dma_semaphore, #tpu.memory_space<semaphore_mem>>
    %39 = tpu.memref_squeeze %38 : memref<1x!tpu.dma_semaphore, #tpu.memory_space<semaphore_mem>> -> memref<!tpu.dma_semaphore, #tpu.memory_space<semaphore_mem>>
    tpu.wait_dma2 semaphore(%39 : memref<!tpu.dma_semaphore, #tpu.memory_space<semaphore_mem>>) src(%35 : memref<16x128xbf16, #tpu.memory_space<any>>) dst(%37 : memref<16x128xbf16, #tpu.memory_space<vmem>>)
    %c1_i32_36 = arith.constant 1 : i32
    %c1_i32_37 = arith.constant 1 : i32
    %c0_i32_38 = arith.constant 0 : i32
    %c0_i32_39 = arith.constant 0 : i32
    %40 = tpu.memref_slice %arg3[%arg0, %5, %c0_i32_38, %c0_i32_39] : memref<2x16x16x128xbf16, #tpu.memory_space<any>> -> memref<1x1x16x128xbf16, #tpu.memory_space<any>>
    %41 = tpu.memref_squeeze %40 : memref<1x1x16x128xbf16, #tpu.memory_space<any>> -> memref<16x128xbf16, #tpu.memory_space<any>>
    %c0_i32_40 = arith.constant 0 : i32
    %c0_i32_41 = arith.constant 0 : i32
    %42 = tpu.memref_slice %arg11[%c1_i32_36, %c0_i32_40, %c0_i32_41] : memref<2x16x128xbf16, #tpu.memory_space<vmem>> -> memref<1x16x128xbf16, #tpu.memory_space<vmem>>
    %43 = tpu.memref_squeeze %42 : memref<1x16x128xbf16, #tpu.memory_space<vmem>> -> memref<16x128xbf16, #tpu.memory_space<vmem>>
    %44 = tpu.memref_slice %arg12[%c1_i32_37] : memref<2x!tpu.dma_semaphore, #tpu.memory_space<semaphore_mem>> -> memref<1x!tpu.dma_semaphore, #tpu.memory_space<semaphore_mem>>
    %45 = tpu.memref_squeeze %44 : memref<1x!tpu.dma_semaphore, #tpu.memory_space<semaphore_mem>> -> memref<!tpu.dma_semaphore, #tpu.memory_space<semaphore_mem>>
    tpu.wait_dma2 semaphore(%45 : memref<!tpu.dma_semaphore, #tpu.memory_space<semaphore_mem>>) src(%41 : memref<16x128xbf16, #tpu.memory_space<any>>) dst(%43 : memref<16x128xbf16, #tpu.memory_space<vmem>>)
    %c0_42 = arith.constant 0 : index
    %c0_43 = arith.constant 0 : index
    %c0_44 = arith.constant 0 : index
    %46 = vector.load %arg11[%c0_42, %c0_43, %c0_44] : memref<2x16x128xbf16, #tpu.memory_space<vmem>>, vector<2x16x128xbf16>
    %47 = vector.shape_cast %46 : vector<2x16x128xbf16> to vector<32x128xbf16>
    %c0_45 = arith.constant 0 : index
    %c0_46 = arith.constant 0 : index
    %48 = vector.load %arg4[%c0_45, %c0_46] : memref<128x128xbf16, #tpu.memory_space<vmem>>, vector<128x128xbf16>
    %cst_47 = arith.constant dense<0.000000e+00> : vector<32x128xf32>
    %49 = tpu.matmul %47, %48, %cst_47 {dimension_numbers = #tpu.dot_dimension_numbers<[1], [0], [0], [1], [0, 0, 1, 1], [], []>} : vector<32x128xbf16>, vector<128x128xbf16>, vector<32x128xf32> -> vector<32x128xf32>
    %c0_48 = arith.constant 0 : index
    %c0_49 = arith.constant 0 : index
    %50 = vector.load %arg5[%c0_48, %c0_49] : memref<1x128xf32, #tpu.memory_space<vmem>>, vector<1x128xf32>
    %51 = vector.broadcast %50 : vector<1x128xf32> to vector<32x128xf32>
    %52 = arith.addf %49, %51 : vector<32x128xf32>
    %cst_50 = arith.constant 0.000000e+00 : f32
    %53 = vector.broadcast %cst_50 : f32 to vector<32x128xf32>
    %54 = arith.maximumf %52, %53 : vector<32x128xf32>
    %55 = arith.truncf %54 : vector<32x128xf32> to vector<32x128xbf16>
    %56 = vector.shape_cast %55 : vector<32x128xbf16> to vector<2x16x128xbf16>
    %cst_51 = arith.constant 0.000000e+00 : bf16
    %57 = vector.broadcast %cst_51 : bf16 to vector<1x16x128xbf16>
    %c0_i32_52 = arith.constant 0 : i32
    %58 = arith.cmpi sgt, %arg1, %c0_i32_52 : i32
    %59 = vector.extract_strided_slice %56 {offsets = [0, 0, 0], sizes = [1, 16, 128], strides = [1, 1, 1]} : vector<2x16x128xbf16> to vector<1x16x128xbf16>
    %60 = arith.select %58, %59, %57 : vector<1x16x128xbf16>
    %c0_53 = arith.constant 0 : index
    %c1_54 = arith.constant 1 : index
    %c0_55 = arith.constant 0 : index
    %61 = vector.load %arg13[%c0_53, %c1_54, %c0_55] : memref<6x18x128xbf16, #tpu.memory_space<vmem>>, vector<1x16x128xbf16>
    tpu.vector_store %arg13[%c0_53, %c1_54, %c0_55], %60 {strides = array<i32>} : memref<6x18x128xbf16, #tpu.memory_space<vmem>>, vector<1x16x128xbf16>,
    %c3_i32 = arith.constant 3 : i32
    %62 = arith.cmpi slt, %arg1, %c3_i32 : i32
    %63 = vector.extract_strided_slice %56 {offsets = [1, 0, 0], sizes = [1, 16, 128], strides = [1, 1, 1]} : vector<2x16x128xbf16> to vector<1x16x128xbf16>
    %64 = arith.select %62, %63, %57 : vector<1x16x128xbf16>
    %c5 = arith.constant 5 : index
    %c1_56 = arith.constant 1 : index
    %c0_57 = arith.constant 0 : index
    %65 = vector.load %arg13[%c5, %c1_56, %c0_57] : memref<6x18x128xbf16, #tpu.memory_space<vmem>>, vector<1x16x128xbf16>
    tpu.vector_store %arg13[%c5, %c1_56, %c0_57], %64 {strides = array<i32>} : memref<6x18x128xbf16, #tpu.memory_space<vmem>>, vector<1x16x128xbf16>,
    %c0_58 = arith.constant 0 : index
    %c0_59 = arith.constant 0 : index
    %c0_60 = arith.constant 0 : index
    %66 = vector.load %arg13[%c0_58, %c0_59, %c0_60] : memref<6x18x128xbf16, #tpu.memory_space<vmem>>, vector<4x16x128xbf16>
    %67 = vector.shape_cast %66 : vector<4x16x128xbf16> to vector<64x128xbf16>
    %c0_61 = arith.constant 0 : index
    %c0_62 = arith.constant 0 : index
    %c0_63 = arith.constant 0 : index
    %68 = vector.load %arg6[%c0_61, %c0_62, %c0_63] : memref<9x128x128xbf16, #tpu.memory_space<vmem>>, vector<1x128x128xbf16>
    %69 = vector.shape_cast %68 : vector<1x128x128xbf16> to vector<128x128xbf16>
    %cst_64 = arith.constant dense<0.000000e+00> : vector<64x128xf32>
    %70 = tpu.matmul %67, %69, %cst_64 {dimension_numbers = #tpu.dot_dimension_numbers<[1], [0], [0], [1], [0, 0, 1, 1], [], []>} : vector<64x128xbf16>, vector<128x128xbf16>, vector<64x128xf32> -> vector<64x128xf32>
    %c0_65 = arith.constant 0 : index
    %c1_66 = arith.constant 1 : index
    %c0_67 = arith.constant 0 : index
    %71 = vector.load %arg13[%c0_65, %c1_66, %c0_67] : memref<6x18x128xbf16, #tpu.memory_space<vmem>>, vector<4x16x128xbf16>
    %72 = vector.shape_cast %71 : vector<4x16x128xbf16> to vector<64x128xbf16>
    %c1_68 = arith.constant 1 : index
    %c0_69 = arith.constant 0 : index
    %c0_70 = arith.constant 0 : index
    %73 = vector.load %arg6[%c1_68, %c0_69, %c0_70] : memref<9x128x128xbf16, #tpu.memory_space<vmem>>, vector<1x128x128xbf16>
    %74 = vector.shape_cast %73 : vector<1x128x128xbf16> to vector<128x128xbf16>
    %cst_71 = arith.constant dense<0.000000e+00> : vector<64x128xf32>
    %75 = tpu.matmul %72, %74, %cst_71 {dimension_numbers = #tpu.dot_dimension_numbers<[1], [0], [0], [1], [0, 0, 1, 1], [], []>} : vector<64x128xbf16>, vector<128x128xbf16>, vector<64x128xf32> -> vector<64x128xf32>
    %76 = arith.addf %70, %75 : vector<64x128xf32>
    %c0_72 = arith.constant 0 : index
    %c2 = arith.constant 2 : index
    %c0_73 = arith.constant 0 : index
    %77 = vector.load %arg13[%c0_72, %c2, %c0_73] : memref<6x18x128xbf16, #tpu.memory_space<vmem>>, vector<4x16x128xbf16>
    %78 = vector.shape_cast %77 : vector<4x16x128xbf16> to vector<64x128xbf16>
    %c2_74 = arith.constant 2 : index
    %c0_75 = arith.constant 0 : index
    %c0_76 = arith.constant 0 : index
    %79 = vector.load %arg6[%c2_74, %c0_75, %c0_76] : memref<9x128x128xbf16, #tpu.memory_space<vmem>>, vector<1x128x128xbf16>
    %80 = vector.shape_cast %79 : vector<1x128x128xbf16> to vector<128x128xbf16>
    %cst_77 = arith.constant dense<0.000000e+00> : vector<64x128xf32>
    %81 = tpu.matmul %78, %80, %cst_77 {dimension_numbers = #tpu.dot_dimension_numbers<[1], [0], [0], [1], [0, 0, 1, 1], [], []>} : vector<64x128xbf16>, vector<128x128xbf16>, vector<64x128xf32> -> vector<64x128xf32>
    %82 = arith.addf %76, %81 : vector<64x128xf32>
    %c1_78 = arith.constant 1 : index
    %c0_79 = arith.constant 0 : index
    %c0_80 = arith.constant 0 : index
    %83 = vector.load %arg13[%c1_78, %c0_79, %c0_80] : memref<6x18x128xbf16, #tpu.memory_space<vmem>>, vector<4x16x128xbf16>
    %84 = vector.shape_cast %83 : vector<4x16x128xbf16> to vector<64x128xbf16>
    %c3 = arith.constant 3 : index
    %c0_81 = arith.constant 0 : index
    %c0_82 = arith.constant 0 : index
    %85 = vector.load %arg6[%c3, %c0_81, %c0_82] : memref<9x128x128xbf16, #tpu.memory_space<vmem>>, vector<1x128x128xbf16>
    %86 = vector.shape_cast %85 : vector<1x128x128xbf16> to vector<128x128xbf16>
    %cst_83 = arith.constant dense<0.000000e+00> : vector<64x128xf32>
    %87 = tpu.matmul %84, %86, %cst_83 {dimension_numbers = #tpu.dot_dimension_numbers<[1], [0], [0], [1], [0, 0, 1, 1], [], []>} : vector<64x128xbf16>, vector<128x128xbf16>, vector<64x128xf32> -> vector<64x128xf32>
    %88 = arith.addf %82, %87 : vector<64x128xf32>
    %c1_84 = arith.constant 1 : index
    %c1_85 = arith.constant 1 : index
    %c0_86 = arith.constant 0 : index
    %89 = vector.load %arg13[%c1_84, %c1_85, %c0_86] : memref<6x18x128xbf16, #tpu.memory_space<vmem>>, vector<4x16x128xbf16>
    %90 = vector.shape_cast %89 : vector<4x16x128xbf16> to vector<64x128xbf16>
    %c4 = arith.constant 4 : index
    %c0_87 = arith.constant 0 : index
    %c0_88 = arith.constant 0 : index
    %91 = vector.load %arg6[%c4, %c0_87, %c0_88] : memref<9x128x128xbf16, #tpu.memory_space<vmem>>, vector<1x128x128xbf16>
    %92 = vector.shape_cast %91 : vector<1x128x128xbf16> to vector<128x128xbf16>
    %cst_89 = arith.constant dense<0.000000e+00> : vector<64x128xf32>
    %93 = tpu.matmul %90, %92, %cst_89 {dimension_numbers = #tpu.dot_dimension_numbers<[1], [0], [0], [1], [0, 0, 1, 1], [], []>} : vector<64x128xbf16>, vector<128x128xbf16>, vector<64x128xf32> -> vector<64x128xf32>
    %94 = arith.addf %88, %93 : vector<64x128xf32>
    %c1_90 = arith.constant 1 : index
    %c2_91 = arith.constant 2 : index
    %c0_92 = arith.constant 0 : index
    %95 = vector.load %arg13[%c1_90, %c2_91, %c0_92] : memref<6x18x128xbf16, #tpu.memory_space<vmem>>, vector<4x16x128xbf16>
    %96 = vector.shape_cast %95 : vector<4x16x128xbf16> to vector<64x128xbf16>
    %c5_93 = arith.constant 5 : index
    %c0_94 = arith.constant 0 : index
    %c0_95 = arith.constant 0 : index
    %97 = vector.load %arg6[%c5_93, %c0_94, %c0_95] : memref<9x128x128xbf16, #tpu.memory_space<vmem>>, vector<1x128x128xbf16>
    %98 = vector.shape_cast %97 : vector<1x128x128xbf16> to vector<128x128xbf16>
    %cst_96 = arith.constant dense<0.000000e+00> : vector<64x128xf32>
    %99 = tpu.matmul %96, %98, %cst_96 {dimension_numbers = #tpu.dot_dimension_numbers<[1], [0], [0], [1], [0, 0, 1, 1], [], []>} : vector<64x128xbf16>, vector<128x128xbf16>, vector<64x128xf32> -> vector<64x128xf32>
    %100 = arith.addf %94, %99 : vector<64x128xf32>
    %c2_97 = arith.constant 2 : index
    %c0_98 = arith.constant 0 : index
    %c0_99 = arith.constant 0 : index
    %101 = vector.load %arg13[%c2_97, %c0_98, %c0_99] : memref<6x18x128xbf16, #tpu.memory_space<vmem>>, vector<4x16x128xbf16>
    %102 = vector.shape_cast %101 : vector<4x16x128xbf16> to vector<64x128xbf16>
    %c6 = arith.constant 6 : index
    %c0_100 = arith.constant 0 : index
    %c0_101 = arith.constant 0 : index
    %103 = vector.load %arg6[%c6, %c0_100, %c0_101] : memref<9x128x128xbf16, #tpu.memory_space<vmem>>, vector<1x128x128xbf16>
    %104 = vector.shape_cast %103 : vector<1x128x128xbf16> to vector<128x128xbf16>
    %cst_102 = arith.constant dense<0.000000e+00> : vector<64x128xf32>
    %105 = tpu.matmul %102, %104, %cst_102 {dimension_numbers = #tpu.dot_dimension_numbers<[1], [0], [0], [1], [0, 0, 1, 1], [], []>} : vector<64x128xbf16>, vector<128x128xbf16>, vector<64x128xf32> -> vector<64x128xf32>
    %106 = arith.addf %100, %105 : vector<64x128xf32>
    %c2_103 = arith.constant 2 : index
    %c1_104 = arith.constant 1 : index
    %c0_105 = arith.constant 0 : index
    %107 = vector.load %arg13[%c2_103, %c1_104, %c0_105] : memref<6x18x128xbf16, #tpu.memory_space<vmem>>, vector<4x16x128xbf16>
    %108 = vector.shape_cast %107 : vector<4x16x128xbf16> to vector<64x128xbf16>
    %c7 = arith.constant 7 : index
    %c0_106 = arith.constant 0 : index
    %c0_107 = arith.constant 0 : index
    %109 = vector.load %arg6[%c7, %c0_106, %c0_107] : memref<9x128x128xbf16, #tpu.memory_space<vmem>>, vector<1x128x128xbf16>
    %110 = vector.shape_cast %109 : vector<1x128x128xbf16> to vector<128x128xbf16>
    %cst_108 = arith.constant dense<0.000000e+00> : vector<64x128xf32>
    %111 = tpu.matmul %108, %110, %cst_108 {dimension_numbers = #tpu.dot_dimension_numbers<[1], [0], [0], [1], [0, 0, 1, 1], [], []>} : vector<64x128xbf16>, vector<128x128xbf16>, vector<64x128xf32> -> vector<64x128xf32>
    %112 = arith.addf %106, %111 : vector<64x128xf32>
    %c2_109 = arith.constant 2 : index
    %c2_110 = arith.constant 2 : index
    %c0_111 = arith.constant 0 : index
    %113 = vector.load %arg13[%c2_109, %c2_110, %c0_111] : memref<6x18x128xbf16, #tpu.memory_space<vmem>>, vector<4x16x128xbf16>
    %114 = vector.shape_cast %113 : vector<4x16x128xbf16> to vector<64x128xbf16>
    %c8 = arith.constant 8 : index
    %c0_112 = arith.constant 0 : index
    %c0_113 = arith.constant 0 : index
    %115 = vector.load %arg6[%c8, %c0_112, %c0_113] : memref<9x128x128xbf16, #tpu.memory_space<vmem>>, vector<1x128x128xbf16>
    %116 = vector.shape_cast %115 : vector<1x128x128xbf16> to vector<128x128xbf16>
    %cst_114 = arith.constant dense<0.000000e+00> : vector<64x128xf32>
    %117 = tpu.matmul %114, %116, %cst_114 {dimension_numbers = #tpu.dot_dimension_numbers<[1], [0], [0], [1], [0, 0, 1, 1], [], []>} : vector<64x128xbf16>, vector<128x128xbf16>, vector<64x128xf32> -> vector<64x128xf32>
    %118 = arith.addf %112, %117 : vector<64x128xf32>
    %c0_115 = arith.constant 0 : index
    %c0_116 = arith.constant 0 : index
    %119 = vector.load %arg7[%c0_115, %c0_116] : memref<1x128xf32, #tpu.memory_space<vmem>>, vector<1x128xf32>
    %120 = vector.broadcast %119 : vector<1x128xf32> to vector<64x128xf32>
    %121 = arith.addf %118, %120 : vector<64x128xf32>
    %cst_117 = arith.constant 0.000000e+00 : f32
    %122 = vector.broadcast %cst_117 : f32 to vector<64x128xf32>
    %123 = arith.maximumf %121, %122 : vector<64x128xf32>
    %124 = arith.truncf %123 : vector<64x128xf32> to vector<64x128xbf16>
    %c0_118 = arith.constant 0 : index
    %c0_119 = arith.constant 0 : index
    %125 = vector.load %arg8[%c0_118, %c0_119] : memref<128x128xbf16, #tpu.memory_space<vmem>>, vector<128x128xbf16>
    %cst_120 = arith.constant dense<0.000000e+00> : vector<64x128xf32>
    %126 = tpu.matmul %124, %125, %cst_120 {dimension_numbers = #tpu.dot_dimension_numbers<[1], [0], [0], [1], [0, 0, 1, 1], [], []>} : vector<64x128xbf16>, vector<128x128xbf16>, vector<64x128xf32> -> vector<64x128xf32>
    %c0_121 = arith.constant 0 : index
    %c0_122 = arith.constant 0 : index
    %127 = vector.load %arg9[%c0_121, %c0_122] : memref<1x128xf32, #tpu.memory_space<vmem>>, vector<1x128xf32>
    %128 = vector.broadcast %127 : vector<1x128xf32> to vector<64x128xf32>
    %129 = arith.addf %126, %128 : vector<64x128xf32>
    %130 = arith.extf %23 : vector<64x128xbf16> to vector<64x128xf32>
    %131 = arith.addf %129, %130 : vector<64x128xf32>
    %cst_123 = arith.constant 0.000000e+00 : f32
    %132 = vector.broadcast %cst_123 : f32 to vector<64x128xf32>
    %133 = arith.maximumf %131, %132 : vector<64x128xf32>
    %134 = vector.shape_cast %133 : vector<64x128xf32> to vector<4x16x128xf32>
    %135 = arith.truncf %134 : vector<4x16x128xf32> to vector<4x16x128xbf16>
    %c0_124 = arith.constant 0 : index
    %c0_125 = arith.constant 0 : index
    %c0_126 = arith.constant 0 : index
    %c0_127 = arith.constant 0 : index
    %136 = vector.load %arg10[%c0_124, %c0_125, %c0_126, %c0_127] : memref<1x4x16x128xbf16, #tpu.memory_space<vmem>>, vector<1x4x16x128xbf16>
    %137 = vector.shape_cast %136 : vector<1x4x16x128xbf16> to vector<4x16x128xbf16>
    %138 = vector.shape_cast %135 : vector<4x16x128xbf16> to vector<1x4x16x128xbf16>
    tpu.vector_store %arg10[%c0_124, %c0_125, %c0_126, %c0_127], %138 {strides = array<i32>} : memref<1x4x16x128xbf16, #tpu.memory_space<vmem>>, vector<1x4x16x128xbf16>,
    return
  }
  func.func @transform_0(%arg0: i32, %arg1: i32) -> (i32, i32, i32, i32) {
    %c0_i32 = arith.constant 0 : i32
    %c0_i32_0 = arith.constant 0 : i32
    %c0_i32_1 = arith.constant 0 : i32
    return %arg0, %arg1, %c0_i32, %c0_i32_0 : i32, i32, i32, i32
  }
  func.func @transform_2(%arg0: i32, %arg1: i32) -> (i32, i32) {
    %c0_i32 = arith.constant 0 : i32
    %c0_i32_0 = arith.constant 0 : i32
    %c0_i32_1 = arith.constant 0 : i32
    return %c0_i32, %c0_i32_0 : i32, i32
  }
  func.func @transform_3(%arg0: i32, %arg1: i32) -> (i32, i32) {
    %c0_i32 = arith.constant 0 : i32
    %c0_i32_0 = arith.constant 0 : i32
    %c0_i32_1 = arith.constant 0 : i32
    return %c0_i32, %c0_i32_0 : i32, i32
  }
  func.func @transform_4(%arg0: i32, %arg1: i32) -> (i32, i32, i32) {
    %c0_i32 = arith.constant 0 : i32
    %c0_i32_0 = arith.constant 0 : i32
    %c0_i32_1 = arith.constant 0 : i32
    %c0_i32_2 = arith.constant 0 : i32
    return %c0_i32, %c0_i32_0, %c0_i32_1 : i32, i32, i32
  }
  func.func @transform_5(%arg0: i32, %arg1: i32) -> (i32, i32) {
    %c0_i32 = arith.constant 0 : i32
    %c0_i32_0 = arith.constant 0 : i32
    %c0_i32_1 = arith.constant 0 : i32
    return %c0_i32, %c0_i32_0 : i32, i32
  }
  func.func @transform_6(%arg0: i32, %arg1: i32) -> (i32, i32) {
    %c0_i32 = arith.constant 0 : i32
    %c0_i32_0 = arith.constant 0 : i32
    %c0_i32_1 = arith.constant 0 : i32
    return %c0_i32, %c0_i32_0 : i32, i32
  }
  func.func @transform_7(%arg0: i32, %arg1: i32) -> (i32, i32) {
    %c0_i32 = arith.constant 0 : i32
    %c0_i32_0 = arith.constant 0 : i32
    %c0_i32_1 = arith.constant 0 : i32
    return %c0_i32, %c0_i32_0 : i32, i32
  }
  func.func @transform_8(%arg0: i32, %arg1: i32) -> (i32, i32, i32, i32) {
    %c0_i32 = arith.constant 0 : i32
    %c0_i32_0 = arith.constant 0 : i32
    %c0_i32_1 = arith.constant 0 : i32
    return %arg0, %arg1, %c0_i32, %c0_i32_0 : i32, i32, i32, i32
  }
}

module attributes {stable_mosaic.version = 11 : i64} {
  func.func @_bottleneck_kernel(%arg0: i32, %arg1: i32, %arg2: memref<1x4x16x128xbf16, #tpu.memory_space<vmem>>, %arg3: memref<2x16x16x128xbf16, #tpu.memory_space<any>>, %arg4: memref<128x128xbf16, #tpu.memory_space<vmem>>, %arg5: memref<1x128xf32, #tpu.memory_space<vmem>>, %arg6: memref<9x128x128xbf16, #tpu.memory_space<vmem>>, %arg7: memref<1x128xf32, #tpu.memory_space<vmem>>, %arg8: memref<128x128xbf16, #tpu.memory_space<vmem>>, %arg9: memref<1x128xf32, #tpu.memory_space<vmem>>, %arg10: memref<1x4x16x128xbf16, #tpu.memory_space<vmem>>, %arg11: memref<2x16x128xbf16, #tpu.memory_space<vmem>>, %arg12: memref<2x!tpu.dma_semaphore, #tpu.memory_space<semaphore_mem>>, %arg13: memref<6x18x128xbf16, #tpu.memory_space<vmem>>) attributes {dimension_semantics = [#tpu.dimension_semantics<parallel>, #tpu.dimension_semantics<parallel>], iteration_bounds = array<i64: 2, 4>, scalar_prefetch = 0 : i64, scratch_operands = 3 : i64, tpu.core_type = #tpu.core_type<tc>, window_params = [{transform_indices = @transform_0, window_bounds = array<i64: 1, 4, 16, 128>}, {}, {pipeline_mode = #tpu.pipeline_mode<synchronous>, transform_indices = @transform_2, window_bounds = array<i64: 128, 128>}, {pipeline_mode = #tpu.pipeline_mode<synchronous>, transform_indices = @transform_3, window_bounds = array<i64: 1, 128>}, {pipeline_mode = #tpu.pipeline_mode<synchronous>, transform_indices = @transform_4, window_bounds = array<i64: 9, 128, 128>}, {pipeline_mode = #tpu.pipeline_mode<synchronous>, transform_indices = @transform_5, window_bounds = array<i64: 1, 128>}, {pipeline_mode = #tpu.pipeline_mode<synchronous>, transform_indices = @transform_6, window_bounds = array<i64: 128, 128>}, {pipeline_mode = #tpu.pipeline_mode<synchronous>, transform_indices = @transform_7, window_bounds = array<i64: 1, 128>}, {transform_indices = @transform_8, window_bounds = array<i64: 1, 4, 16, 128>}]} {
    %c4_i32 = arith.constant 4 : i32
    %0 = arith.muli %arg1, %c4_i32 : i32
    %c1_i32 = arith.constant 1 : i32
    %1 = arith.subi %0, %c1_i32 : i32
    %c0_i32 = arith.constant 0 : i32
    %2 = arith.maxsi %1, %c0_i32 : i32
    %c4_i32_0 = arith.constant 4 : i32
    %3 = arith.muli %arg1, %c4_i32_0 : i32
    %c4_i32_1 = arith.constant 4 : i32
    %4 = arith.addi %3, %c4_i32_1 : i32
    %c15_i32 = arith.constant 15 : i32
    %5 = arith.minsi %4, %c15_i32 : i32
    %c0_i32_2 = arith.constant 0 : i32
    %c0_i32_3 = arith.constant 0 : i32
    %c0_i32_4 = arith.constant 0 : i32
    %c0_i32_5 = arith.constant 0 : i32
    %6 = tpu.memref_slice %arg3[%arg0, %2, %c0_i32_4, %c0_i32_5] : memref<2x16x16x128xbf16, #tpu.memory_space<any>> -> memref<1x1x16x128xbf16, #tpu.memory_space<any>>
    %7 = tpu.memref_squeeze %6 : memref<1x1x16x128xbf16, #tpu.memory_space<any>> -> memref<16x128xbf16, #tpu.memory_space<any>>
    %c0_i32_6 = arith.constant 0 : i32
    %c0_i32_7 = arith.constant 0 : i32
    %8 = tpu.memref_slice %arg11[%c0_i32_2, %c0_i32_6, %c0_i32_7] : memref<2x16x128xbf16, #tpu.memory_space<vmem>> -> memref<1x16x128xbf16, #tpu.memory_space<vmem>>
    %9 = tpu.memref_squeeze %8 : memref<1x16x128xbf16, #tpu.memory_space<vmem>> -> memref<16x128xbf16, #tpu.memory_space<vmem>>
    %10 = tpu.memref_slice %arg12[%c0_i32_3] : memref<2x!tpu.dma_semaphore, #tpu.memory_space<semaphore_mem>> -> memref<1x!tpu.dma_semaphore, #tpu.memory_space<semaphore_mem>>
    %11 = tpu.memref_squeeze %10 : memref<1x!tpu.dma_semaphore, #tpu.memory_space<semaphore_mem>> -> memref<!tpu.dma_semaphore, #tpu.memory_space<semaphore_mem>>
    tpu.enqueue_dma source(%7 : memref<16x128xbf16, #tpu.memory_space<any>>) target(%9 : memref<16x128xbf16, #tpu.memory_space<vmem>>) target_semaphore(%11 : memref<!tpu.dma_semaphore, #tpu.memory_space<semaphore_mem>>)
    %c1_i32_8 = arith.constant 1 : i32
    %c1_i32_9 = arith.constant 1 : i32
    %c0_i32_10 = arith.constant 0 : i32
    %c0_i32_11 = arith.constant 0 : i32
    %12 = tpu.memref_slice %arg3[%arg0, %5, %c0_i32_10, %c0_i32_11] : memref<2x16x16x128xbf16, #tpu.memory_space<any>> -> memref<1x1x16x128xbf16, #tpu.memory_space<any>>
    %13 = tpu.memref_squeeze %12 : memref<1x1x16x128xbf16, #tpu.memory_space<any>> -> memref<16x128xbf16, #tpu.memory_space<any>>
    %c0_i32_12 = arith.constant 0 : i32
    %c0_i32_13 = arith.constant 0 : i32
    %14 = tpu.memref_slice %arg11[%c1_i32_8, %c0_i32_12, %c0_i32_13] : memref<2x16x128xbf16, #tpu.memory_space<vmem>> -> memref<1x16x128xbf16, #tpu.memory_space<vmem>>
    %15 = tpu.memref_squeeze %14 : memref<1x16x128xbf16, #tpu.memory_space<vmem>> -> memref<16x128xbf16, #tpu.memory_space<vmem>>
    %16 = tpu.memref_slice %arg12[%c1_i32_9] : memref<2x!tpu.dma_semaphore, #tpu.memory_space<semaphore_mem>> -> memref<1x!tpu.dma_semaphore, #tpu.memory_space<semaphore_mem>>
    %17 = tpu.memref_squeeze %16 : memref<1x!tpu.dma_semaphore, #tpu.memory_space<semaphore_mem>> -> memref<!tpu.dma_semaphore, #tpu.memory_space<semaphore_mem>>
    tpu.enqueue_dma source(%13 : memref<16x128xbf16, #tpu.memory_space<any>>) target(%15 : memref<16x128xbf16, #tpu.memory_space<vmem>>) target_semaphore(%17 : memref<!tpu.dma_semaphore, #tpu.memory_space<semaphore_mem>>)
    %cst = arith.constant 0.000000e+00 : bf16
    %18 = vector.broadcast %cst : bf16 to vector<6x1x128xbf16>
    %c0 = arith.constant 0 : index
    %c0_14 = arith.constant 0 : index
    %c0_15 = arith.constant 0 : index
    %19 = vector.load %arg13[%c0, %c0_14, %c0_15] : memref<6x18x128xbf16, #tpu.memory_space<vmem>>, vector<6x1x128xbf16>
    tpu.vector_store %arg13[%c0, %c0_14, %c0_15], %18 {strides = array<i32>} : memref<6x18x128xbf16, #tpu.memory_space<vmem>>, vector<6x1x128xbf16>,
    %c0_16 = arith.constant 0 : index
    %c17 = arith.constant 17 : index
    %c0_17 = arith.constant 0 : index
    %20 = vector.load %arg13[%c0_16, %c17, %c0_17] : memref<6x18x128xbf16, #tpu.memory_space<vmem>>, vector<6x1x128xbf16>
    tpu.vector_store %arg13[%c0_16, %c17, %c0_17], %18 {strides = array<i32>} : memref<6x18x128xbf16, #tpu.memory_space<vmem>>, vector<6x1x128xbf16>,
    %c0_18 = arith.constant 0 : index
    %c0_19 = arith.constant 0 : index
    %c0_20 = arith.constant 0 : index
    %c0_21 = arith.constant 0 : index
    %21 = vector.load %arg2[%c0_18, %c0_19, %c0_20, %c0_21] : memref<1x4x16x128xbf16, #tpu.memory_space<vmem>>, vector<1x4x16x128xbf16>
    %22 = vector.shape_cast %21 : vector<1x4x16x128xbf16> to vector<4x16x128xbf16>
    %23 = vector.shape_cast %22 : vector<4x16x128xbf16> to vector<64x128xbf16>
    %c0_22 = arith.constant 0 : index
    %c0_23 = arith.constant 0 : index
    %24 = vector.load %arg4[%c0_22, %c0_23] : memref<128x128xbf16, #tpu.memory_space<vmem>>, vector<128x128xbf16>
    %cst_24 = arith.constant dense<0.000000e+00> : vector<64x128xf32>
    %25 = tpu.matmul %23, %24, %cst_24 {dimension_numbers = #tpu.dot_dimension_numbers<[1], [0], [0], [1], [0, 0, 1, 1], [], []>} : vector<64x128xbf16>, vector<128x128xbf16>, vector<64x128xf32> -> vector<64x128xf32>
    %c0_25 = arith.constant 0 : index
    %c0_26 = arith.constant 0 : index
    %26 = vector.load %arg5[%c0_25, %c0_26] : memref<1x128xf32, #tpu.memory_space<vmem>>, vector<1x128xf32>
    %27 = vector.broadcast %26 : vector<1x128xf32> to vector<64x128xf32>
    %28 = arith.addf %25, %27 : vector<64x128xf32>
    %cst_27 = arith.constant 0.000000e+00 : f32
    %29 = vector.broadcast %cst_27 : f32 to vector<64x128xf32>
    %30 = arith.maximumf %28, %29 : vector<64x128xf32>
    %31 = arith.truncf %30 : vector<64x128xf32> to vector<64x128xbf16>
    %32 = vector.shape_cast %31 : vector<64x128xbf16> to vector<4x16x128xbf16>
    %c1 = arith.constant 1 : index
    %c1_28 = arith.constant 1 : index
    %c0_29 = arith.constant 0 : index
    %33 = vector.load %arg13[%c1, %c1_28, %c0_29] : memref<6x18x128xbf16, #tpu.memory_space<vmem>>, vector<4x16x128xbf16>
    tpu.vector_store %arg13[%c1, %c1_28, %c0_29], %32 {strides = array<i32>} : memref<6x18x128xbf16, #tpu.memory_space<vmem>>, vector<4x16x128xbf16>,
    %c0_i32_30 = arith.constant 0 : i32
    %c0_i32_31 = arith.constant 0 : i32
    %c0_i32_32 = arith.constant 0 : i32
    %c0_i32_33 = arith.constant 0 : i32
    %34 = tpu.memref_slice %arg3[%arg0, %2, %c0_i32_32, %c0_i32_33] : memref<2x16x16x128xbf16, #tpu.memory_space<any>> -> memref<1x1x16x128xbf16, #tpu.memory_space<any>>
    %35 = tpu.memref_squeeze %34 : memref<1x1x16x128xbf16, #tpu.memory_space<any>> -> memref<16x128xbf16, #tpu.memory_space<any>>
    %c0_i32_34 = arith.constant 0 : i32
    %c0_i32_35 = arith.constant 0 : i32
    %36 = tpu.memref_slice %arg11[%c0_i32_30, %c0_i32_34, %c0_i32_35] : memref<2x16x128xbf16, #tpu.memory_space<vmem>> -> memref<1x16x128xbf16, #tpu.memory_space<vmem>>
    %37 = tpu.memref_squeeze %36 : memref<1x16x128xbf16, #tpu.memory_space<vmem>> -> memref<16x128xbf16, #tpu.memory_space<vmem>>
    %38 = tpu.memref_slice %arg12[%c0_i32_31] : memref<2x!tpu.dma_semaphore, #tpu.memory_space<semaphore_mem>> -> memref<1x!tpu.dma_semaphore, #tpu.memory_space<semaphore_mem>>
    %39 = tpu.memref_squeeze %38 : memref<1x!tpu.dma_semaphore, #tpu.memory_space<semaphore_mem>> -> memref<!tpu.dma_semaphore, #tpu.memory_space<semaphore_mem>>
    tpu.wait_dma2 semaphore(%39 : memref<!tpu.dma_semaphore, #tpu.memory_space<semaphore_mem>>) src(%35 : memref<16x128xbf16, #tpu.memory_space<any>>) dst(%37 : memref<16x128xbf16, #tpu.memory_space<vmem>>)
    %c1_i32_36 = arith.constant 1 : i32
    %c1_i32_37 = arith.constant 1 : i32
    %c0_i32_38 = arith.constant 0 : i32
    %c0_i32_39 = arith.constant 0 : i32
    %40 = tpu.memref_slice %arg3[%arg0, %5, %c0_i32_38, %c0_i32_39] : memref<2x16x16x128xbf16, #tpu.memory_space<any>> -> memref<1x1x16x128xbf16, #tpu.memory_space<any>>
    %41 = tpu.memref_squeeze %40 : memref<1x1x16x128xbf16, #tpu.memory_space<any>> -> memref<16x128xbf16, #tpu.memory_space<any>>
    %c0_i32_40 = arith.constant 0 : i32
    %c0_i32_41 = arith.constant 0 : i32
    %42 = tpu.memref_slice %arg11[%c1_i32_36, %c0_i32_40, %c0_i32_41] : memref<2x16x128xbf16, #tpu.memory_space<vmem>> -> memref<1x16x128xbf16, #tpu.memory_space<vmem>>
    %43 = tpu.memref_squeeze %42 : memref<1x16x128xbf16, #tpu.memory_space<vmem>> -> memref<16x128xbf16, #tpu.memory_space<vmem>>
    %44 = tpu.memref_slice %arg12[%c1_i32_37] : memref<2x!tpu.dma_semaphore, #tpu.memory_space<semaphore_mem>> -> memref<1x!tpu.dma_semaphore, #tpu.memory_space<semaphore_mem>>
    %45 = tpu.memref_squeeze %44 : memref<1x!tpu.dma_semaphore, #tpu.memory_space<semaphore_mem>> -> memref<!tpu.dma_semaphore, #tpu.memory_space<semaphore_mem>>
    tpu.wait_dma2 semaphore(%45 : memref<!tpu.dma_semaphore, #tpu.memory_space<semaphore_mem>>) src(%41 : memref<16x128xbf16, #tpu.memory_space<any>>) dst(%43 : memref<16x128xbf16, #tpu.memory_space<vmem>>)
    %c0_42 = arith.constant 0 : index
    %c0_43 = arith.constant 0 : index
    %c0_44 = arith.constant 0 : index
    %46 = vector.load %arg11[%c0_42, %c0_43, %c0_44] : memref<2x16x128xbf16, #tpu.memory_space<vmem>>, vector<2x16x128xbf16>
    %47 = vector.shape_cast %46 : vector<2x16x128xbf16> to vector<32x128xbf16>
    %c0_45 = arith.constant 0 : index
    %c0_46 = arith.constant 0 : index
    %48 = vector.load %arg4[%c0_45, %c0_46] : memref<128x128xbf16, #tpu.memory_space<vmem>>, vector<128x128xbf16>
    %cst_47 = arith.constant dense<0.000000e+00> : vector<32x128xf32>
    %49 = tpu.matmul %47, %48, %cst_47 {dimension_numbers = #tpu.dot_dimension_numbers<[1], [0], [0], [1], [0, 0, 1, 1], [], []>} : vector<32x128xbf16>, vector<128x128xbf16>, vector<32x128xf32> -> vector<32x128xf32>
    %c0_48 = arith.constant 0 : index
    %c0_49 = arith.constant 0 : index
    %50 = vector.load %arg5[%c0_48, %c0_49] : memref<1x128xf32, #tpu.memory_space<vmem>>, vector<1x128xf32>
    %51 = vector.broadcast %50 : vector<1x128xf32> to vector<32x128xf32>
    %52 = arith.addf %49, %51 : vector<32x128xf32>
    %cst_50 = arith.constant 0.000000e+00 : f32
    %53 = vector.broadcast %cst_50 : f32 to vector<32x128xf32>
    %54 = arith.maximumf %52, %53 : vector<32x128xf32>
    %55 = arith.truncf %54 : vector<32x128xf32> to vector<32x128xbf16>
    %56 = vector.shape_cast %55 : vector<32x128xbf16> to vector<2x16x128xbf16>
    %cst_51 = arith.constant 0.000000e+00 : bf16
    %57 = vector.broadcast %cst_51 : bf16 to vector<1x16x128xbf16>
    %c0_i32_52 = arith.constant 0 : i32
    %58 = arith.cmpi sgt, %arg1, %c0_i32_52 : i32
    %59 = vector.extract_strided_slice %56 {offsets = [0, 0, 0], sizes = [1, 16, 128], strides = [1, 1, 1]} : vector<2x16x128xbf16> to vector<1x16x128xbf16>
    %60 = arith.select %58, %59, %57 : vector<1x16x128xbf16>
    %c0_53 = arith.constant 0 : index
    %c1_54 = arith.constant 1 : index
    %c0_55 = arith.constant 0 : index
    %61 = vector.load %arg13[%c0_53, %c1_54, %c0_55] : memref<6x18x128xbf16, #tpu.memory_space<vmem>>, vector<1x16x128xbf16>
    tpu.vector_store %arg13[%c0_53, %c1_54, %c0_55], %60 {strides = array<i32>} : memref<6x18x128xbf16, #tpu.memory_space<vmem>>, vector<1x16x128xbf16>,
    %c3_i32 = arith.constant 3 : i32
    %62 = arith.cmpi slt, %arg1, %c3_i32 : i32
    %63 = vector.extract_strided_slice %56 {offsets = [1, 0, 0], sizes = [1, 16, 128], strides = [1, 1, 1]} : vector<2x16x128xbf16> to vector<1x16x128xbf16>
    %64 = arith.select %62, %63, %57 : vector<1x16x128xbf16>
    %c5 = arith.constant 5 : index
    %c1_56 = arith.constant 1 : index
    %c0_57 = arith.constant 0 : index
    %65 = vector.load %arg13[%c5, %c1_56, %c0_57] : memref<6x18x128xbf16, #tpu.memory_space<vmem>>, vector<1x16x128xbf16>
    tpu.vector_store %arg13[%c5, %c1_56, %c0_57], %64 {strides = array<i32>} : memref<6x18x128xbf16, #tpu.memory_space<vmem>>, vector<1x16x128xbf16>,
    %c0_58 = arith.constant 0 : index
    %c0_59 = arith.constant 0 : index
    %c0_60 = arith.constant 0 : index
    %66 = vector.load %arg13[%c0_58, %c0_59, %c0_60] : memref<6x18x128xbf16, #tpu.memory_space<vmem>>, vector<4x16x128xbf16>
    %67 = vector.shape_cast %66 : vector<4x16x128xbf16> to vector<64x128xbf16>
    %c0_61 = arith.constant 0 : index
    %c0_62 = arith.constant 0 : index
    %c0_63 = arith.constant 0 : index
    %68 = vector.load %arg6[%c0_61, %c0_62, %c0_63] : memref<9x128x128xbf16, #tpu.memory_space<vmem>>, vector<1x128x128xbf16>
    %69 = vector.shape_cast %68 : vector<1x128x128xbf16> to vector<128x128xbf16>
    %cst_64 = arith.constant dense<0.000000e+00> : vector<64x128xf32>
    %70 = tpu.matmul %67, %69, %cst_64 {dimension_numbers = #tpu.dot_dimension_numbers<[1], [0], [0], [1], [0, 0, 1, 1], [], []>} : vector<64x128xbf16>, vector<128x128xbf16>, vector<64x128xf32> -> vector<64x128xf32>
    %c0_65 = arith.constant 0 : index
    %c1_66 = arith.constant 1 : index
    %c0_67 = arith.constant 0 : index
    %71 = vector.load %arg13[%c0_65, %c1_66, %c0_67] : memref<6x18x128xbf16, #tpu.memory_space<vmem>>, vector<4x16x128xbf16>
    %72 = vector.shape_cast %71 : vector<4x16x128xbf16> to vector<64x128xbf16>
    %c1_68 = arith.constant 1 : index
    %c0_69 = arith.constant 0 : index
    %c0_70 = arith.constant 0 : index
    %73 = vector.load %arg6[%c1_68, %c0_69, %c0_70] : memref<9x128x128xbf16, #tpu.memory_space<vmem>>, vector<1x128x128xbf16>
    %74 = vector.shape_cast %73 : vector<1x128x128xbf16> to vector<128x128xbf16>
    %cst_71 = arith.constant dense<0.000000e+00> : vector<64x128xf32>
    %75 = tpu.matmul %72, %74, %cst_71 {dimension_numbers = #tpu.dot_dimension_numbers<[1], [0], [0], [1], [0, 0, 1, 1], [], []>} : vector<64x128xbf16>, vector<128x128xbf16>, vector<64x128xf32> -> vector<64x128xf32>
    %76 = arith.addf %70, %75 : vector<64x128xf32>
    %c0_72 = arith.constant 0 : index
    %c2 = arith.constant 2 : index
    %c0_73 = arith.constant 0 : index
    %77 = vector.load %arg13[%c0_72, %c2, %c0_73] : memref<6x18x128xbf16, #tpu.memory_space<vmem>>, vector<4x16x128xbf16>
    %78 = vector.shape_cast %77 : vector<4x16x128xbf16> to vector<64x128xbf16>
    %c2_74 = arith.constant 2 : index
    %c0_75 = arith.constant 0 : index
    %c0_76 = arith.constant 0 : index
    %79 = vector.load %arg6[%c2_74, %c0_75, %c0_76] : memref<9x128x128xbf16, #tpu.memory_space<vmem>>, vector<1x128x128xbf16>
    %80 = vector.shape_cast %79 : vector<1x128x128xbf16> to vector<128x128xbf16>
    %cst_77 = arith.constant dense<0.000000e+00> : vector<64x128xf32>
    %81 = tpu.matmul %78, %80, %cst_77 {dimension_numbers = #tpu.dot_dimension_numbers<[1], [0], [0], [1], [0, 0, 1, 1], [], []>} : vector<64x128xbf16>, vector<128x128xbf16>, vector<64x128xf32> -> vector<64x128xf32>
    %82 = arith.addf %76, %81 : vector<64x128xf32>
    %c1_78 = arith.constant 1 : index
    %c0_79 = arith.constant 0 : index
    %c0_80 = arith.constant 0 : index
    %83 = vector.load %arg13[%c1_78, %c0_79, %c0_80] : memref<6x18x128xbf16, #tpu.memory_space<vmem>>, vector<4x16x128xbf16>
    %84 = vector.shape_cast %83 : vector<4x16x128xbf16> to vector<64x128xbf16>
    %c3 = arith.constant 3 : index
    %c0_81 = arith.constant 0 : index
    %c0_82 = arith.constant 0 : index
    %85 = vector.load %arg6[%c3, %c0_81, %c0_82] : memref<9x128x128xbf16, #tpu.memory_space<vmem>>, vector<1x128x128xbf16>
    %86 = vector.shape_cast %85 : vector<1x128x128xbf16> to vector<128x128xbf16>
    %cst_83 = arith.constant dense<0.000000e+00> : vector<64x128xf32>
    %87 = tpu.matmul %84, %86, %cst_83 {dimension_numbers = #tpu.dot_dimension_numbers<[1], [0], [0], [1], [0, 0, 1, 1], [], []>} : vector<64x128xbf16>, vector<128x128xbf16>, vector<64x128xf32> -> vector<64x128xf32>
    %88 = arith.addf %82, %87 : vector<64x128xf32>
    %c1_84 = arith.constant 1 : index
    %c1_85 = arith.constant 1 : index
    %c0_86 = arith.constant 0 : index
    %89 = vector.load %arg13[%c1_84, %c1_85, %c0_86] : memref<6x18x128xbf16, #tpu.memory_space<vmem>>, vector<4x16x128xbf16>
    %90 = vector.shape_cast %89 : vector<4x16x128xbf16> to vector<64x128xbf16>
    %c4 = arith.constant 4 : index
    %c0_87 = arith.constant 0 : index
    %c0_88 = arith.constant 0 : index
    %91 = vector.load %arg6[%c4, %c0_87, %c0_88] : memref<9x128x128xbf16, #tpu.memory_space<vmem>>, vector<1x128x128xbf16>
    %92 = vector.shape_cast %91 : vector<1x128x128xbf16> to vector<128x128xbf16>
    %cst_89 = arith.constant dense<0.000000e+00> : vector<64x128xf32>
    %93 = tpu.matmul %90, %92, %cst_89 {dimension_numbers = #tpu.dot_dimension_numbers<[1], [0], [0], [1], [0, 0, 1, 1], [], []>} : vector<64x128xbf16>, vector<128x128xbf16>, vector<64x128xf32> -> vector<64x128xf32>
    %94 = arith.addf %88, %93 : vector<64x128xf32>
    %c1_90 = arith.constant 1 : index
    %c2_91 = arith.constant 2 : index
    %c0_92 = arith.constant 0 : index
    %95 = vector.load %arg13[%c1_90, %c2_91, %c0_92] : memref<6x18x128xbf16, #tpu.memory_space<vmem>>, vector<4x16x128xbf16>
    %96 = vector.shape_cast %95 : vector<4x16x128xbf16> to vector<64x128xbf16>
    %c5_93 = arith.constant 5 : index
    %c0_94 = arith.constant 0 : index
    %c0_95 = arith.constant 0 : index
    %97 = vector.load %arg6[%c5_93, %c0_94, %c0_95] : memref<9x128x128xbf16, #tpu.memory_space<vmem>>, vector<1x128x128xbf16>
    %98 = vector.shape_cast %97 : vector<1x128x128xbf16> to vector<128x128xbf16>
    %cst_96 = arith.constant dense<0.000000e+00> : vector<64x128xf32>
    %99 = tpu.matmul %96, %98, %cst_96 {dimension_numbers = #tpu.dot_dimension_numbers<[1], [0], [0], [1], [0, 0, 1, 1], [], []>} : vector<64x128xbf16>, vector<128x128xbf16>, vector<64x128xf32> -> vector<64x128xf32>
    %100 = arith.addf %94, %99 : vector<64x128xf32>
    %c2_97 = arith.constant 2 : index
    %c0_98 = arith.constant 0 : index
    %c0_99 = arith.constant 0 : index
    %101 = vector.load %arg13[%c2_97, %c0_98, %c0_99] : memref<6x18x128xbf16, #tpu.memory_space<vmem>>, vector<4x16x128xbf16>
    %102 = vector.shape_cast %101 : vector<4x16x128xbf16> to vector<64x128xbf16>
    %c6 = arith.constant 6 : index
    %c0_100 = arith.constant 0 : index
    %c0_101 = arith.constant 0 : index
    %103 = vector.load %arg6[%c6, %c0_100, %c0_101] : memref<9x128x128xbf16, #tpu.memory_space<vmem>>, vector<1x128x128xbf16>
    %104 = vector.shape_cast %103 : vector<1x128x128xbf16> to vector<128x128xbf16>
    %cst_102 = arith.constant dense<0.000000e+00> : vector<64x128xf32>
    %105 = tpu.matmul %102, %104, %cst_102 {dimension_numbers = #tpu.dot_dimension_numbers<[1], [0], [0], [1], [0, 0, 1, 1], [], []>} : vector<64x128xbf16>, vector<128x128xbf16>, vector<64x128xf32> -> vector<64x128xf32>
    %106 = arith.addf %100, %105 : vector<64x128xf32>
    %c2_103 = arith.constant 2 : index
    %c1_104 = arith.constant 1 : index
    %c0_105 = arith.constant 0 : index
    %107 = vector.load %arg13[%c2_103, %c1_104, %c0_105] : memref<6x18x128xbf16, #tpu.memory_space<vmem>>, vector<4x16x128xbf16>
    %108 = vector.shape_cast %107 : vector<4x16x128xbf16> to vector<64x128xbf16>
    %c7 = arith.constant 7 : index
    %c0_106 = arith.constant 0 : index
    %c0_107 = arith.constant 0 : index
    %109 = vector.load %arg6[%c7, %c0_106, %c0_107] : memref<9x128x128xbf16, #tpu.memory_space<vmem>>, vector<1x128x128xbf16>
    %110 = vector.shape_cast %109 : vector<1x128x128xbf16> to vector<128x128xbf16>
    %cst_108 = arith.constant dense<0.000000e+00> : vector<64x128xf32>
    %111 = tpu.matmul %108, %110, %cst_108 {dimension_numbers = #tpu.dot_dimension_numbers<[1], [0], [0], [1], [0, 0, 1, 1], [], []>} : vector<64x128xbf16>, vector<128x128xbf16>, vector<64x128xf32> -> vector<64x128xf32>
    %112 = arith.addf %106, %111 : vector<64x128xf32>
    %c2_109 = arith.constant 2 : index
    %c2_110 = arith.constant 2 : index
    %c0_111 = arith.constant 0 : index
    %113 = vector.load %arg13[%c2_109, %c2_110, %c0_111] : memref<6x18x128xbf16, #tpu.memory_space<vmem>>, vector<4x16x128xbf16>
    %114 = vector.shape_cast %113 : vector<4x16x128xbf16> to vector<64x128xbf16>
    %c8 = arith.constant 8 : index
    %c0_112 = arith.constant 0 : index
    %c0_113 = arith.constant 0 : index
    %115 = vector.load %arg6[%c8, %c0_112, %c0_113] : memref<9x128x128xbf16, #tpu.memory_space<vmem>>, vector<1x128x128xbf16>
    %116 = vector.shape_cast %115 : vector<1x128x128xbf16> to vector<128x128xbf16>
    %cst_114 = arith.constant dense<0.000000e+00> : vector<64x128xf32>
    %117 = tpu.matmul %114, %116, %cst_114 {dimension_numbers = #tpu.dot_dimension_numbers<[1], [0], [0], [1], [0, 0, 1, 1], [], []>} : vector<64x128xbf16>, vector<128x128xbf16>, vector<64x128xf32> -> vector<64x128xf32>
    %118 = arith.addf %112, %117 : vector<64x128xf32>
    %c0_115 = arith.constant 0 : index
    %c0_116 = arith.constant 0 : index
    %119 = vector.load %arg7[%c0_115, %c0_116] : memref<1x128xf32, #tpu.memory_space<vmem>>, vector<1x128xf32>
    %120 = vector.broadcast %119 : vector<1x128xf32> to vector<64x128xf32>
    %121 = arith.addf %118, %120 : vector<64x128xf32>
    %cst_117 = arith.constant 0.000000e+00 : f32
    %122 = vector.broadcast %cst_117 : f32 to vector<64x128xf32>
    %123 = arith.maximumf %121, %122 : vector<64x128xf32>
    %124 = arith.truncf %123 : vector<64x128xf32> to vector<64x128xbf16>
    %c0_118 = arith.constant 0 : index
    %c0_119 = arith.constant 0 : index
    %125 = vector.load %arg8[%c0_118, %c0_119] : memref<128x128xbf16, #tpu.memory_space<vmem>>, vector<128x128xbf16>
    %cst_120 = arith.constant dense<0.000000e+00> : vector<64x128xf32>
    %126 = tpu.matmul %124, %125, %cst_120 {dimension_numbers = #tpu.dot_dimension_numbers<[1], [0], [0], [1], [0, 0, 1, 1], [], []>} : vector<64x128xbf16>, vector<128x128xbf16>, vector<64x128xf32> -> vector<64x128xf32>
    %c0_121 = arith.constant 0 : index
    %c0_122 = arith.constant 0 : index
    %127 = vector.load %arg9[%c0_121, %c0_122] : memref<1x128xf32, #tpu.memory_space<vmem>>, vector<1x128xf32>
    %128 = vector.broadcast %127 : vector<1x128xf32> to vector<64x128xf32>
    %129 = arith.addf %126, %128 : vector<64x128xf32>
    %130 = arith.extf %23 : vector<64x128xbf16> to vector<64x128xf32>
    %131 = arith.addf %129, %130 : vector<64x128xf32>
    %cst_123 = arith.constant 0.000000e+00 : f32
    %132 = vector.broadcast %cst_123 : f32 to vector<64x128xf32>
    %133 = arith.maximumf %131, %132 : vector<64x128xf32>
    %134 = vector.shape_cast %133 : vector<64x128xf32> to vector<4x16x128xf32>
    %135 = arith.truncf %134 : vector<4x16x128xf32> to vector<4x16x128xbf16>
    %c0_124 = arith.constant 0 : index
    %c0_125 = arith.constant 0 : index
    %c0_126 = arith.constant 0 : index
    %c0_127 = arith.constant 0 : index
    %136 = vector.load %arg10[%c0_124, %c0_125, %c0_126, %c0_127] : memref<1x4x16x128xbf16, #tpu.memory_space<vmem>>, vector<1x4x16x128xbf16>
    %137 = vector.shape_cast %136 : vector<1x4x16x128xbf16> to vector<4x16x128xbf16>
    %138 = vector.shape_cast %135 : vector<4x16x128xbf16> to vector<1x4x16x128xbf16>
    tpu.vector_store %arg10[%c0_124, %c0_125, %c0_126, %c0_127], %138 {strides = array<i32>} : memref<1x4x16x128xbf16, #tpu.memory_space<vmem>>, vector<1x4x16x128xbf16>,
    return
  }
  func.func @transform_0(%arg0: i32, %arg1: i32) -> (i32, i32, i32, i32) {
    %c0_i32 = arith.constant 0 : i32
    %c0_i32_0 = arith.constant 0 : i32
    %c0_i32_1 = arith.constant 0 : i32
    return %arg0, %arg1, %c0_i32, %c0_i32_0 : i32, i32, i32, i32
  }
  func.func @transform_2(%arg0: i32, %arg1: i32) -> (i32, i32) {
    %c0_i32 = arith.constant 0 : i32
    %c0_i32_0 = arith.constant 0 : i32
    %c0_i32_1 = arith.constant 0 : i32
    return %c0_i32, %c0_i32_0 : i32, i32
  }
  func.func @transform_3(%arg0: i32, %arg1: i32) -> (i32, i32) {
    %c0_i32 = arith.constant 0 : i32
    %c0_i32_0 = arith.constant 0 : i32
    %c0_i32_1 = arith.constant 0 : i32
    return %c0_i32, %c0_i32_0 : i32, i32
  }
  func.func @transform_4(%arg0: i32, %arg1: i32) -> (i32, i32, i32) {
    %c0_i32 = arith.constant 0 : i32
    %c0_i32_0 = arith.constant 0 : i32
    %c0_i32_1 = arith.constant 0 : i32
    %c0_i32_2 = arith.constant 0 : i32
    return %c0_i32, %c0_i32_0, %c0_i32_1 : i32, i32, i32
  }
  func.func @transform_5(%arg0: i32, %arg1: i32) -> (i32, i32) {
    %c0_i32 = arith.constant 0 : i32
    %c0_i32_0 = arith.constant 0 : i32
    %c0_i32_1 = arith.constant 0 : i32
    return %c0_i32, %c0_i32_0 : i32, i32
  }
  func.func @transform_6(%arg0: i32, %arg1: i32) -> (i32, i32) {
    %c0_i32 = arith.constant 0 : i32
    %c0_i32_0 = arith.constant 0 : i32
    %c0_i32_1 = arith.constant 0 : i32
    return %c0_i32, %c0_i32_0 : i32, i32
  }
  func.func @transform_7(%arg0: i32, %arg1: i32) -> (i32, i32) {
    %c0_i32 = arith.constant 0 : i32
    %c0_i32_0 = arith.constant 0 : i32
    %c0_i32_1 = arith.constant 0 : i32
    return %c0_i32, %c0_i32_0 : i32, i32
  }
  func.func @transform_8(%arg0: i32, %arg1: i32) -> (i32, i32, i32, i32) {
    %c0_i32 = arith.constant 0 : i32
    %c0_i32_0 = arith.constant 0 : i32
    %c0_i32_1 = arith.constant 0 : i32
    return %arg0, %arg1, %c0_i32, %c0_i32_0 : i32, i32, i32, i32
  }
}

</mosaic_0001>

<llo_original>
// kernel: tpu_custom_call.1
$region0: #{tpu_custom_call.1}
  #allocation0 [shape = 'u32[]', space=smem, size = 0x4, offset = 0x4, fixed_abs, tag = 'smem constant byte address 0x4 - core index']
  #allocation1 [shape = 'u32[144,128]{1,0:T(1,128)}', space=vmem, size = 0x12000, scoped, tag = 'internal scratch']
  #allocation2 [shape = 'bf16[2,16,128]{2,1,0:T(16,128)(2,1)}', space=vmem, size = 0x2000, scoped, tag = 'scratch operand']
  #allocation3 [shape = 's32[2]{0}', space=sflag, size = 0x8, scoped, tag = 'scratch operand']
  #allocation4 [shape = 'bf16[6,18,128]{2,1,0:T(8,128)(2,1)}', space=vmem, size = 0x9000, scoped, tag = 'scratch operand']
  #allocation14 [shape = 's32[]', space=sflag, size = 0x4, offset = 0, fixed_abs, tag = 'sflag constant byte address 0x0 - dummy sync flag']
  #allocation15 [shape = 's32[]', space=sflag, size = 0x4, offset = 0, fixed_abs, tag = 'sflag constant byte address 0x0 - dummy sync flag']
  #allocation16 [shape = 'u32[]', space=smem, size = 0x4, offset = 0x44, fixed_abs, tag = 'smem constant byte address 0x44 - assertion arg 0']
  #allocation17 [shape = 'u32[]', space=smem, size = 0x4, offset = 0x48, fixed_abs, tag = 'smem constant byte address 0x48 - assertion arg 1']
  #allocation18 [shape = 's32[]', space=sflag, size = 0x4, offset = 0, fixed_abs, tag = 'sflag constant byte address 0x0 - dummy sync flag']
  #allocation19 [shape = 's32[]', space=sflag, size = 0x4, offset = 0, fixed_abs, tag = 'sflag constant byte address 0x0 - dummy sync flag']
  %s0 = inlined_call_operand.hbm [shape: bf16[2,16,16,128], index: 0, kind: input, shape index: {}]
  %s1 = inlined_call_operand.hbm [shape: bf16[2,16,16,128], index: 1, kind: input, shape index: {}]
  %s2 = inlined_call_operand.hbm [shape: bf16[128,128], index: 2, kind: input, shape index: {}]
  %s3 = inlined_call_operand.vmem [shape: f32[1,128], index: 3, kind: input, shape index: {}]
  %s4 = inlined_call_operand.hbm [shape: bf16[9,128,128], index: 4, kind: input, shape index: {}]
  %s5 = inlined_call_operand.vmem [shape: f32[1,128], index: 5, kind: input, shape index: {}]
  %s6 = inlined_call_operand.hbm [shape: bf16[128,128], index: 6, kind: input, shape index: {}]
  %s7 = inlined_call_operand.vmem [shape: f32[1,128], index: 7, kind: input, shape index: {}]
  %s8 = inlined_call_operand.hbm [shape: bf16[2,16,16,128], index: 8, kind: output, shape index: {}]
  %s9 = sld [smem:[#allocation0]]
  $region85: #{tpu_custom_call.1} parent=0
    _
  %s11 = ssub.s32 1, %s9
  %s12 = scalar_select 0, %s11, %s9
  $region1: #{tpu_custom_call.1} parent=0
    #allocation5 [shape = 'u8[32768]{0}', space=vmem, size = 0x8000, scoped, tag = 'input window, operand 0']
    #allocation6 [shape = 's32[2]{0}', space=sflag, size = 0x8, scoped, tag = 'scoped memory for tpu_custom_call.1']
    #allocation7 [shape = 's32[2]{0}', space=sflag, size = 0x8, scoped, tag = 'scoped memory for tpu_custom_call.1']
    #allocation8 [shape = 'u8[32768]{0}', space=vmem, size = 0x8000, scoped, tag = 'input window, operand 2, single buffered']
    #allocation9 [shape = 's32[1]{0}', space=sflag, size = 0x4, scoped, tag = 'scoped memory for tpu_custom_call.1']
    #allocation10 [shape = 'u8[294912]{0}', space=vmem, size = 0x48000, scoped, tag = 'input window, operand 4, single buffered']
    #allocation11 [shape = 'u8[32768]{0}', space=vmem, size = 0x8000, scoped, tag = 'input window, operand 6, single buffered']
    #allocation12 [shape = 's32[1]{0}', space=sflag, size = 0x4, scoped, tag = 'scoped memory for tpu_custom_call.1']
    #allocation13 [shape = 'u8[32768]{0}', space=vmem, size = 0x8000, scoped, tag = 'output window, operand 0']
    %13 = vsyncpa [#allocation6], 0
    %s14 = scalar_lea.sflag [#allocation6], 1
    %15 = vsyncpa %s14, 0
    %16 = vsyncpa [#allocation9], 0
    %17 = vsyncpa [#allocation12], 0
    %18 = vsyncpa [#allocation7], 0
    %s19 = scalar_lea.sflag [#allocation7], 1
    %20 = vsyncpa %s19, 0
    loop: start=0, step=1, limit=10
    $region2: #{tpu_custom_call.1} parent=1 // loop_pre_header
      _
    $region3: #{tpu_custom_call.1} parent=1 // loop_header
      %s22 = sphi 0, %s26
      %p23 = scmp.ge.s32.totalorder %s22, 10
      %s29 = sphi 0, %s41
      %s30 = sphi 0, %s37
      %s31 = sphi 0, %s29
      %s32 = sphi 0, %s30
      %s33 = sphi 0, %s31
      %s34 = sphi 0, %s32
      %s46 = sphi 0, %s48
      %s49 = sphi 0, %s46
      %s50 = sphi 0, %s49
      %s66 = sphi 0, %s50
      %s70 = sphi 0, %s70
      %s72 = sphi 0, %s70
      %s73 = sphi 0, %s72
      %s87 = sphi 0, %s73
      %s91 = sphi 0, %s91
      %s93 = sphi 0, %s91
      %s94 = sphi 0, %s93
      %s108 = sphi 0, %s94
      %s112 = sphi 0, %s112
      %s114 = sphi 0, %s112
      %s115 = sphi 0, %s114
      %s129 = sphi 0, %s115
      %s133 = sphi 0, %s133
      %s135 = sphi 0, %s133
      %s136 = sphi 0, %s135
      %s150 = sphi 0, %s136
      %s154 = sphi 0, %s154
      %s156 = sphi 0, %s154
      %s157 = sphi 0, %s156
      %s171 = sphi 0, %s157
      %s175 = sphi 0, %s175
      %s177 = sphi 0, %s175
      %s178 = sphi 0, %s177
      %s192 = sphi 0, %s178
      %s200 = sphi 0, %s202
      %s203 = sphi 0, %s200
      %s204 = sphi 0, %s203
      %s220 = sphi 0, %s204
    $region4: #{tpu_custom_call.1} parent=1 // loop_header_branch
      %25 = sbr.rel (%p23) target = $region8
    $region5: #{tpu_custom_call.1} parent=1 // loop_body
      %s27 = ssub.s32 %s22, 1
      %s28 = ssub.s32 %s22, 2
      %s35 = sadd.s32 1, %s30
      %p36 = scmp.ge.s32.totalorder %s35, 4
      %s37 = scalar_select %p36, 0, %s35
      %s38 = sadd.s32 1, %s29
      %s39 = scalar_select %p36, %s38, %s29
      %p40 = scmp.ge.s32.totalorder %s39, 2
      %s41 = scalar_select %p40, 0, %s39
      %s42 = ssub.s32 %s29, %s41
      %s43 = ssub.s32 %s30, %s37
      %s44 = sor.u32 %s42, %s43
      %p45 = scmp.eq.s32.totalorder %s44, 0
      %s47 = sadd.s32 %s46, 1
      %s48 = scalar_select %p45, %s46, %s47
      %p51 = pneg %p45
      %p52 = scmp.eq.s32.totalorder %s22, 7
      %p53 = por %p51, %p52
      %p54 = scmp.ne.s32.totalorder %s46, %s49
      %p55 = scmp.eq.s32.totalorder %s22, 0
      %p56 = por %p54, %p55
      %p57 = scmp.ne.s32.totalorder %s46, %s49
      %p58 = scmp.eq.s32.totalorder %s27, 7
      %p59 = por %p57, %p58
      %p60 = scmp.ne.s32.totalorder %s49, %s50
      %p61 = scmp.eq.s32.totalorder %s27, 0
      %p62 = por %p60, %p61
      %p63 = scmp.ne.s32.totalorder %s49, %s50
      %p64 = scmp.eq.s32.totalorder %s28, 7
      %p65 = por %p63, %p64
      %p67 = scmp.ne.s32.totalorder %s50, %s66
      %p68 = scmp.eq.s32.totalorder %s28, 0
      %p69 = por %p67, %p68
      %s71 = sadd.s32 %s70, 1
      %p74 = scmp.eq.s32.totalorder %s22, 7
      %p75 = scmp.ne.s32.totalorder %s70, %s72
      %p76 = scmp.eq.s32.totalorder %s22, 0
      %p77 = por %p75, %p76
      %p78 = scmp.ne.s32.totalorder %s70, %s72
      %p79 = scmp.eq.s32.totalorder %s27, 7
      %p80 = por %p78, %p79
      %p81 = scmp.ne.s32.totalorder %s72, %s73
      %p82 = scmp.eq.s32.totalorder %s27, 0
      %p83 = por %p81, %p82
      %p84 = scmp.ne.s32.totalorder %s72, %s73
      %p85 = scmp.eq.s32.totalorder %s28, 7
      %p86 = por %p84, %p85
      %p88 = scmp.ne.s32.totalorder %s73, %s87
      %p89 = scmp.eq.s32.totalorder %s28, 0
      %p90 = por %p88, %p89
      %s92 = sadd.s32 %s91, 1
      %p95 = scmp.eq.s32.totalorder %s22, 7
      %p96 = scmp.ne.s32.totalorder %s91, %s93
      %p97 = scmp.eq.s32.totalorder %s22, 0
      %p98 = por %p96, %p97
      %p99 = scmp.ne.s32.totalorder %s91, %s93
      %p100 = scmp.eq.s32.totalorder %s27, 7
      %p101 = por %p99, %p100
      %p102 = scmp.ne.s32.totalorder %s93, %s94
      %p103 = scmp.eq.s32.totalorder %s27, 0
      %p104 = por %p102, %p103
      %p105 = scmp.ne.s32.totalorder %s93, %s94
      %p106 = scmp.eq.s32.totalorder %s28, 7
      %p107 = por %p105, %p106
      %p109 = scmp.ne.s32.totalorder %s94, %s108
      %p110 = scmp.eq.s32.totalorder %s28, 0
      %p111 = por %p109, %p110
      %s113 = sadd.s32 %s112, 1
      %p116 = scmp.eq.s32.totalorder %s22, 7
      %p117 = scmp.ne.s32.totalorder %s112, %s114
      %p118 = scmp.eq.s32.totalorder %s22, 0
      %p119 = por %p117, %p118
      %p120 = scmp.ne.s32.totalorder %s112, %s114
      %p121 = scmp.eq.s32.totalorder %s27, 7
      %p122 = por %p120, %p121
      %p123 = scmp.ne.s32.totalorder %s114, %s115
      %p124 = scmp.eq.s32.totalorder %s27, 0
      %p125 = por %p123, %p124
      %p126 = scmp.ne.s32.totalorder %s114, %s115
      %p127 = scmp.eq.s32.totalorder %s28, 7
      %p128 = por %p126, %p127
      %p130 = scmp.ne.s32.totalorder %s115, %s129
      %p131 = scmp.eq.s32.totalorder %s28, 0
      %p132 = por %p130, %p131
      %s134 = sadd.s32 %s133, 1
      %p137 = scmp.eq.s32.totalorder %s22, 7
      %p138 = scmp.ne.s32.totalorder %s133, %s135
      %p139 = scmp.eq.s32.totalorder %s22, 0
      %p140 = por %p138, %p139
      %p141 = scmp.ne.s32.totalorder %s133, %s135
      %p142 = scmp.eq.s32.totalorder %s27, 7
      %p143 = por %p141, %p142
      %p144 = scmp.ne.s32.totalorder %s135, %s136
      %p145 = scmp.eq.s32.totalorder %s27, 0
      %p146 = por %p144, %p145
      %p147 = scmp.ne.s32.totalorder %s135, %s136
      %p148 = scmp.eq.s32.totalorder %s28, 7
      %p149 = por %p147, %p148
      %p151 = scmp.ne.s32.totalorder %s136, %s150
      %p152 = scmp.eq.s32.totalorder %s28, 0
      %p153 = por %p151, %p152
      %s155 = sadd.s32 %s154, 1
      %p158 = scmp.eq.s32.totalorder %s22, 7
      %p159 = scmp.ne.s32.totalorder %s154, %s156
      %p160 = scmp.eq.s32.totalorder %s22, 0
      %p161 = por %p159, %p160
      %p162 = scmp.ne.s32.totalorder %s154, %s156
      %p163 = scmp.eq.s32.totalorder %s27, 7
      %p164 = por %p162, %p163
      %p165 = scmp.ne.s32.totalorder %s156, %s157
      %p166 = scmp.eq.s32.totalorder %s27, 0
      %p167 = por %p165, %p166
      %p168 = scmp.ne.s32.totalorder %s156, %s157
      %p169 = scmp.eq.s32.totalorder %s28, 7
      %p170 = por %p168, %p169
      %p172 = scmp.ne.s32.totalorder %s157, %s171
      %p173 = scmp.eq.s32.totalorder %s28, 0
      %p174 = por %p172, %p173
      %s176 = sadd.s32 %s175, 1
      %p179 = scmp.eq.s32.totalorder %s22, 7
      %p180 = scmp.ne.s32.totalorder %s175, %s177
      %p181 = scmp.eq.s32.totalorder %s22, 0
      %p182 = por %p180, %p181
      %p183 = scmp.ne.s32.totalorder %s175, %s177
      %p184 = scmp.eq.s32.totalorder %s27, 7
      %p185 = por %p183, %p184
      %p186 = scmp.ne.s32.totalorder %s177, %s178
      %p187 = scmp.eq.s32.totalorder %s27, 0
      %p188 = por %p186, %p187
      %p189 = scmp.ne.s32.totalorder %s177, %s178
      %p190 = scmp.eq.s32.totalorder %s28, 7
      %p191 = por %p189, %p190
      %p193 = scmp.ne.s32.totalorder %s178, %s192
      %p194 = scmp.eq.s32.totalorder %s28, 0
      %p195 = por %p193, %p194
      %s196 = ssub.s32 %s29, %s41
      %s197 = ssub.s32 %s30, %s37
      %s198 = sor.u32 %s196, %s197
      %p199 = scmp.eq.s32.totalorder %s198, 0
      %s201 = sadd.s32 %s200, 1
      %s202 = scalar_select %p199, %s200, %s201
      %p205 = pneg %p199
      %p206 = scmp.eq.s32.totalorder %s22, 7
      %p207 = por %p205, %p206
      %p208 = scmp.ne.s32.totalorder %s200, %s203
      %p209 = scmp.eq.s32.totalorder %s22, 0
      %p210 = por %p208, %p209
      %p211 = scmp.ne.s32.totalorder %s200, %s203
      %p212 = scmp.eq.s32.totalorder %s27, 7
      %p213 = por %p211, %p212
      %p214 = scmp.ne.s32.totalorder %s203, %s204
      %p215 = scmp.eq.s32.totalorder %s27, 0
      %p216 = por %p214, %p215
      %p217 = scmp.ne.s32.totalorder %s203, %s204
      %p218 = scmp.eq.s32.totalorder %s28, 7
      %p219 = por %p217, %p218
      %p221 = scmp.ne.s32.totalorder %s204, %s220
      %p222 = scmp.eq.s32.totalorder %s28, 0
      %p223 = por %p221, %p222
      %p224 = scmp.le.s32.totalorder 1, %s22
      %p225 = scmp.lt.s32.totalorder %s22, 9
      %p226 = pnand %p224, %p225
      %p227 = pneg %p226
      // Predicated region
      $region9: #{tpu_custom_call.1} parent=5 // pred_check
        _
      $region10: #{tpu_custom_call.1} parent=5 // pred_check_branch
        %229 = sbr.rel (%p226) target = $region12
      $region11: #{tpu_custom_call.1} parent=5 // pred_region
        %s230 = ssub.s32 %s22, 1
        // Predicated region
        $region13: #{tpu_custom_call.1} parent=11 // pred_check
          %p231 = pneg %p83
        $region14: #{tpu_custom_call.1} parent=11 // pred_check_branch
          %233 = sbr.rel (%p231) target = $region16
        $region15: #{tpu_custom_call.1} parent=11 // pred_region
          %s235 = ssub.s32 1024, 1024
          %236 = vsyncadd [#allocation9], %s235
          %s237 = sshll.u32 [#allocation8], 4
          %s238 = int_to_ptr.vmem [resolvable:$true] %s237
          %243 = dma.hbm_to_vmem [thread:$0]  %s2, 1024, %s238, [#allocation9], 64, 64, 4
        $region16: #{tpu_custom_call.1} parent=11 // pred_fallthru
          _
        // Predicated region
        $region17: #{tpu_custom_call.1} parent=11 // pred_check
          %p244 = pneg %p104
        $region18: #{tpu_custom_call.1} parent=11 // pred_check_branch
          %246 = sbr.rel (%p244) target = $region20
        $region19: #{tpu_custom_call.1} parent=11 // pred_region
          _
        $region20: #{tpu_custom_call.1} parent=11 // pred_fallthru
          _
        // Predicated region
        $region21: #{tpu_custom_call.1} parent=11 // pred_check
          %p247 = pneg %p125
        $region22: #{tpu_custom_call.1} parent=11 // pred_check_branch
          %249 = sbr.rel (%p247) target = $region24
        $region23: #{tpu_custom_call.1} parent=11 // pred_region
          %s251 = ssub.s32 9216, 9216
          %252 = vsyncadd [#allocation9], %s251
          %s253 = sshll.u32 [#allocation10], 4
          %s254 = int_to_ptr.vmem [resolvable:$true] %s253
          %259 = dma.hbm_to_vmem [thread:$0]  %s4, 9216, %s254, [#allocation9], 64, 64, 4
        $region24: #{tpu_custom_call.1} parent=11 // pred_fallthru
          _
        // Predicated region
        $region25: #{tpu_custom_call.1} parent=11 // pred_check
          %p260 = pneg %p146
        $region26: #{tpu_custom_call.1} parent=11 // pred_check_branch
          %262 = sbr.rel (%p260) target = $region28
        $region27: #{tpu_custom_call.1} parent=11 // pred_region
          _
        $region28: #{tpu_custom_call.1} parent=11 // pred_fallthru
          _
        // Predicated region
        $region29: #{tpu_custom_call.1} parent=11 // pred_check
          %p263 = pneg %p167
        $region30: #{tpu_custom_call.1} parent=11 // pred_check_branch
          %265 = sbr.rel (%p263) target = $region32
        $region31: #{tpu_custom_call.1} parent=11 // pred_region
          %s267 = ssub.s32 1024, 1024
          %268 = vsyncadd [#allocation12], %s267
          %s269 = sshll.u32 [#allocation11], 4
          %s270 = int_to_ptr.vmem [resolvable:$true] %s269
          %275 = dma.hbm_to_vmem [thread:$0]  %s6, 1024, %s270, [#allocation12], 64, 64, 4
        $region32: #{tpu_custom_call.1} parent=11 // pred_fallthru
          _
        // Predicated region
        $region33: #{tpu_custom_call.1} parent=11 // pred_check
          %p276 = pneg %p188
        $region34: #{tpu_custom_call.1} parent=11 // pred_check_branch
          %278 = sbr.rel (%p276) target = $region36
        $region35: #{tpu_custom_call.1} parent=11 // pred_region
          _
        $region36: #{tpu_custom_call.1} parent=11 // pred_fallthru
          _
      $region12: #{tpu_custom_call.1} parent=5 // pred_fallthru
        _
      %p279 = scmp.lt.s32.totalorder %s22, 8
      // Predicated region
      $region37: #{tpu_custom_call.1} parent=5 // pred_check
        %p280 = pneg %p279
      $region38: #{tpu_custom_call.1} parent=5 // pred_check_branch
        %282 = sbr.rel (%p280) target = $region40
      $region39: #{tpu_custom_call.1} parent=5 // pred_region
        // Predicated region
        $region41: #{tpu_custom_call.1} parent=39 // pred_check
          %p283 = pneg %p56
        $region42: #{tpu_custom_call.1} parent=39 // pred_check_branch
          %285 = sbr.rel (%p283) target = $region44
        $region43: #{tpu_custom_call.1} parent=39 // pred_region
          %s286 = sand.u32 %s46, 1
          %s287 = scalar_lea.sflag [#allocation6], %s286
          %s288 = sand.u32 %s46, 1
          %s289 = smul.addr %s288, 32
          %s290 = scalar_lea.vmem [#allocation5], %s289
          %s291 = smul.u32 4, %s30
          %s293 = ssub.s32 512, 512
          %294 = vsyncadd %s287, %s293
          %s295 = smul.addr %s291, 2
          %s296 = smul.addr %s29, 32
          %s297 = sadd.s32 %s295, %s296
          %s298 = smul.addr %s297, 64
          %s299 = scalar_lea.hbm %s0, %s298
          %s300 = sshll.u32 %s290, 4
          %s301 = int_to_ptr.vmem [resolvable:$true] %s300
          %306 = dma.hbm_to_vmem [thread:$0]  %s299, 512, %s301, %s287, 64, 64, 4
        $region44: #{tpu_custom_call.1} parent=39 // pred_fallthru
          _
      $region40: #{tpu_custom_call.1} parent=5 // pred_fallthru
        _
      %p307 = scmp.le.s32.totalorder 1, %s22
      %p308 = scmp.lt.s32.totalorder %s22, 9
      %p309 = pnand %p307, %p308
      %p310 = pneg %p309
      // Predicated region
      $region45: #{tpu_custom_call.1} parent=5 // pred_check
        _
      $region46: #{tpu_custom_call.1} parent=5 // pred_check_branch
        %312 = sbr.rel (%p309) target = $region48
      $region47: #{tpu_custom_call.1} parent=5 // pred_region
        %s313 = ssub.s32 %s22, 1
        %s314 = sand.u32 %s49, 1
        %s315 = scalar_lea.sflag [#allocation6], %s314
        %s316 = sand.u32 %s49, 1
        %s317 = smul.addr %s316, 32
        %s318 = scalar_lea.vmem [#allocation5], %s317
        // Predicated region
        $region49: #{tpu_custom_call.1} parent=47 // pred_check
          %p319 = pneg %p62
        $region50: #{tpu_custom_call.1} parent=47 // pred_check_branch
          %321 = sbr.rel (%p319) target = $region52
        $region51: #{tpu_custom_call.1} parent=47 // pred_region
          %322 = dma.done %s315, 512
        $region52: #{tpu_custom_call.1} parent=47 // pred_fallthru
          _
        // Predicated region
        $region53: #{tpu_custom_call.1} parent=47 // pred_check
          %p323 = pneg %p83
        $region54: #{tpu_custom_call.1} parent=47 // pred_check_branch
          %325 = sbr.rel (%p323) target = $region56
        $region55: #{tpu_custom_call.1} parent=47 // pred_region
          %326 = dma.done [#allocation9], 1024
        $region56: #{tpu_custom_call.1} parent=47 // pred_fallthru
          _
        // Predicated region
        $region57: #{tpu_custom_call.1} parent=47 // pred_check
          %p327 = pneg %p125
        $region58: #{tpu_custom_call.1} parent=47 // pred_check_branch
          %329 = sbr.rel (%p327) target = $region60
        $region59: #{tpu_custom_call.1} parent=47 // pred_region
          %330 = dma.done [#allocation9], 9216
        $region60: #{tpu_custom_call.1} parent=47 // pred_fallthru
          _
        // Predicated region
        $region61: #{tpu_custom_call.1} parent=47 // pred_check
          %p331 = pneg %p167
        $region62: #{tpu_custom_call.1} parent=47 // pred_check_branch
          %333 = sbr.rel (%p331) target = $region64
        $region63: #{tpu_custom_call.1} parent=47 // pred_region
          %334 = dma.done [#allocation12], 1024
        $region64: #{tpu_custom_call.1} parent=47 // pred_fallthru
          _
        %s335 = sand.u32 %s49, 1
        %s336 = scalar_lea.sflag [#allocation6], %s335
        %s337 = sand.u32 %s49, 1
        %s338 = smul.addr %s337, 32
        %s339 = scalar_lea.vmem [#allocation5], %s338
        %p340 = pneg %p62
        %p341 = pneg %p59
        %p342 = pneg %p83
        %p343 = pneg %p80
        %p344 = pneg %p104
        %p345 = pneg %p101
        %p346 = pneg %p125
        %p347 = pneg %p122
        %p348 = pneg %p146
        %p349 = pneg %p143
        %p350 = pneg %p167
        %p351 = pneg %p164
        %p352 = pneg %p188
        %p353 = pneg %p185
        %p354 = pneg %p216
        %p355 = pneg %p213
        %s356 = sand.u32 %s203, 1
        %s357 = scalar_lea.sflag [#allocation7], %s356
        %s358 = sand.u32 %s203, 1
        %s359 = smul.addr %s358, 32
        %s360 = scalar_lea.vmem [#allocation13], %s359
        %s361 = smul.u32 4, %s32
        %s362 = smul.u32 4, %s32
        %s364 = smul.u32 %s32, 4
        %s365 = ssub.s32 %s364, 1
        %p366 = scmp.gt.s32.totalorder %s365, 0
        %s367 = scalar_select %p366, %s365, 0
        %s368 = sadd.s32 %s364, 4
        %p369 = scmp.lt.s32.totalorder %s368, 15
        %s370 = scalar_select %p369, %s368, 15
        %s371 = smul.u32 %s367, 2
        %s372 = smul.u32 %s31, 32
        %s373 = sadd.s32 %s371, %s372
        %s374 = smul.addr %s373, 64
        %s375 = scalar_lea.hbm %s1, %s374
        // Predicated region
        $region65: #{tpu_custom_call.1} parent=47 // pred_check
          _
        $region66: #{tpu_custom_call.1} parent=47 // pred_check_branch
          %377 = sbr.rel target = $region68
        $region67: #{tpu_custom_call.1} parent=47 // pred_region
          %378 = sst [smem:[#allocation16]] [#allocation15]
          %379 = sst [smem:[#allocation17]] [#allocation14]
        $region68: #{tpu_custom_call.1} parent=47 // pred_fallthru
          _
        %381 = shalt.err (0)
        %s383 = sshll.u32 [#allocation2], 4
        %s384 = int_to_ptr.vmem [resolvable:$true] %s383
        %386 = dma.hbm_to_vmem [thread:$0]  %s375, 128, %s384, [#allocation3]
        %s387 = smul.u32 %s370, 2
        %s388 = sadd.s32 %s387, %s372
        %s389 = smul.addr %s388, 64
        %s390 = scalar_lea.hbm %s1, %s389
        %s391 = scalar_lea.vmem [#allocation2], 8
        %s392 = scalar_lea.sflag [#allocation3], 1
        // Predicated region
        $region69: #{tpu_custom_call.1} parent=47 // pred_check
          _
        $region70: #{tpu_custom_call.1} parent=47 // pred_check_branch
          %394 = sbr.rel target = $region72
        $region71: #{tpu_custom_call.1} parent=47 // pred_region
          %395 = sst [smem:[#allocation16]] [#allocation19]
          %396 = sst [smem:[#allocation17]] [#allocation18]
        $region72: #{tpu_custom_call.1} parent=47 // pred_fallthru
          _
        %398 = shalt.err (0)
        %s400 = sshll.u32 %s391, 4
        %s401 = int_to_ptr.vmem [resolvable:$true] %s400
        %403 = dma.hbm_to_vmem [thread:$0]  %s390, 128, %s401, %s392
        %vm404 = vcmask 1040384
        %vm405 = vsmask.f32 256
        %vm406 = vmand %vm404, %vm405
        %v407 = vld [vmem:[#allocation4] sm:$0x1]
        %v408 = vsel %vm406, 0, %v407
        %409 = vst [vmem:[#allocation4] sm:$0x1] %v408
        %v410 = vld [vmem:[#allocation4 + $0xc] sm:$0x1]
        %v411 = vsel %vm406, 0, %v410
        %412 = vst [vmem:[#allocation4 + $0xc] sm:$0x1] %v411
        %v413 = vld [vmem:[#allocation4 + $0x18] sm:$0x1]
        %v414 = vsel %vm406, 0, %v413
        %415 = vst [vmem:[#allocation4 + $0x18] sm:$0x1] %v414
        %v416 = vld [vmem:[#allocation4 + $0x24] sm:$0x1]
        %v417 = vsel %vm406, 0, %v416
        %418 = vst [vmem:[#allocation4 + $0x24] sm:$0x1] %v417
        %v419 = vld [vmem:[#allocation4 + $0x30] sm:$0x1]
        %v420 = vsel %vm406, 0, %v419
        %421 = vst [vmem:[#allocation4 + $0x30] sm:$0x1] %v420
        %v422 = vld [vmem:[#allocation4 + $0x3c] sm:$0x1]
        %v423 = vsel %vm406, 0, %v422
        %424 = vst [vmem:[#allocation4 + $0x3c] sm:$0x1] %v423
        %vm425 = vsmask.f32 7938
        %vm426 = vmand %vm404, %vm425
        %v427 = vld [vmem:[#allocation4 + $0x8] sm:$0x1]
        %v428 = vsel %vm426, 0, %v427
        %429 = vst [vmem:[#allocation4 + $0x8] sm:$0x1] %v428
        %v430 = vld [vmem:[#allocation4 + $0x14] sm:$0x1]
        %v431 = vsel %vm426, 0, %v430
        %432 = vst [vmem:[#allocation4 + $0x14] sm:$0x1] %v431
        %v433 = vld [vmem:[#allocation4 + $0x20] sm:$0x1]
        %v434 = vsel %vm426, 0, %v433
        %435 = vst [vmem:[#allocation4 + $0x20] sm:$0x1] %v434
        %v436 = vld [vmem:[#allocation4 + $0x2c] sm:$0x1]
        %v437 = vsel %vm426, 0, %v436
        %438 = vst [vmem:[#allocation4 + $0x2c] sm:$0x1] %v437
        %v439 = vld [vmem:[#allocation4 + $0x38] sm:$0x1]
        %v440 = vsel %vm426, 0, %v439
        %441 = vst [vmem:[#allocation4 + $0x38] sm:$0x1] %v440
        %v442 = vld [vmem:[#allocation4 + $0x44] sm:$0x1]
        %v443 = vsel %vm426, 0, %v442
        %444 = vst [vmem:[#allocation4 + $0x44] sm:$0x1] %v443
        %v445 = vld [vmem:[%s318] sm:$0xf]
        %v446 = vld [vmem:[%s318 + $0x4] sm:$0xf]
        %v447 = vld [vmem:[%s318 + $0x8] sm:$0xf]
        %v448 = vld [vmem:[%s318 + $0xc] sm:$0xf]
        %v449 = vld [vmem:[%s318 + $0x10] sm:$0xf]
        %v450 = vld [vmem:[%s318 + $0x14] sm:$0xf]
        %v451 = vld [vmem:[%s318 + $0x18] sm:$0xf]
        %v452 = vld [vmem:[%s318 + $0x1c] sm:$0xf]
        %v453 = vld [vmem:[#allocation8] sm:$0xf]
        %v454 = vld [vmem:[#allocation8 + $0x4] sm:$0xf]
        %v455 = vld [vmem:[#allocation8 + $0x8] sm:$0xf]
        %v456 = vld [vmem:[#allocation8 + $0xc] sm:$0xf]
        %v457 = vld [vmem:[#allocation8 + $0x10] sm:$0xf]
        %v458 = vld [vmem:[#allocation8 + $0x14] sm:$0xf]
        %v459 = vld [vmem:[#allocation8 + $0x18] sm:$0xf]
        %v460 = vld [vmem:[#allocation8 + $0x1c] sm:$0xf]
        %v461 = vld [vmem:[#allocation8 + $0x20] sm:$0xf]
        %v462 = vld [vmem:[#allocation8 + $0x24] sm:$0xf]
        %v463 = vld [vmem:[#allocation8 + $0x28] sm:$0xf]
        %v464 = vld [vmem:[#allocation8 + $0x2c] sm:$0xf]
        %v465 = vld [vmem:[#allocation8 + $0x30] sm:$0xf]
        %v466 = vld [vmem:[#allocation8 + $0x34] sm:$0xf]
        %v467 = vld [vmem:[#allocation8 + $0x38] sm:$0xf]
        %v468 = vld [vmem:[#allocation8 + $0x3c] sm:$0xf]
        %v469 = vld [vmem:[%s3] sm:$0x1]
        %v471 = vlaneseq
        %v472 = vshrl.u32 %v471, 7
        %v473 = vsub.s32 0, %v472
        %v474 = vrot.slane %v469, %v473
        %v484 = vunpack.c.l.b16 %v445
        %v485 = vunpack.c.l.b16 %v446
        %v486 = vunpack.c.l.b16 %v447
        %v487 = vunpack.c.l.b16 %v448
        %v488 = vunpack.c.l.b16 %v449
        %v489 = vunpack.c.l.b16 %v450
        %v490 = vunpack.c.l.b16 %v451
        %v491 = vunpack.c.l.b16 %v452
        %v492 = vpack.c.b16 %v485, %v484
        %v493 = vpack.c.b16 %v487, %v486
        %v494 = vpack.c.b16 %v489, %v488
        %v495 = vpack.c.b16 %v491, %v490
        %v516 = vunpack.c.l.b16 %v453
        %v517 = vunpack.c.l.b16 %v454
        %v518 = vunpack.c.l.b16 %v455
        %v519 = vunpack.c.l.b16 %v456
        %v520 = vunpack.c.l.b16 %v457
        %v521 = vunpack.c.l.b16 %v458
        %v522 = vunpack.c.l.b16 %v459
        %v523 = vunpack.c.l.b16 %v460
        %v524 = vunpack.c.l.b16 %v461
        %v525 = vunpack.c.l.b16 %v462
        %v526 = vunpack.c.l.b16 %v463
        %v527 = vunpack.c.l.b16 %v464
        %v528 = vunpack.c.l.b16 %v465
        %v529 = vunpack.c.l.b16 %v466
        %v530 = vunpack.c.l.b16 %v467
        %v531 = vunpack.c.l.b16 %v468
        %v532 = vpack.c.b16 %v517, %v516
        %v533 = vpack.c.b16 %v519, %v518
        %v534 = vpack.c.b16 %v521, %v520
        %v535 = vpack.c.b16 %v523, %v522
        %v536 = vpack.c.b16 %v525, %v524
        %v537 = vpack.c.b16 %v527, %v526
        %v538 = vpack.c.b16 %v529, %v528
        %v539 = vpack.c.b16 %v531, %v530
        %548 = vmatprep.subr.bf16.mxu0 0
        %549 = vmatpush1.bf16.msra.mxu0 %v532
        %550 = vmatprep.subr.bf16.mxu0 0
        %551 = vmatpush1.bf16.msra.mxu0 %v533
        %552 = vmatprep.subr.bf16.mxu0 0
        %553 = vmatpush1.bf16.msra.mxu0 %v534
        %554 = vmatprep.subr.bf16.mxu0 0
        %555 = vmatpush1.bf16.msra.mxu0 %v535
        %556 = vmatprep.subr.bf16.mxu0 0
        %557 = vmatpush1.bf16.msra.mxu0 %v536
        %558 = vmatprep.subr.bf16.mxu0 0
        %559 = vmatpush1.bf16.msra.mxu0 %v537
        %560 = vmatprep.subr.bf16.mxu0 0
        %561 = vmatpush1.bf16.msra.mxu0 %v538
        %562 = vmatprep.subr.bf16.mxu0 0
        %563 = vmatpush1.bf16.msra.mxu0 %v539
        %564 = vmatprep.subr.bf16.mxu0 0
        %565 = vmatpush1.bf16.msra.mxu0 0
        %566 = vmatprep.subr.bf16.mxu0 0
        %567 = vmatpush1.bf16.msra.mxu0 0
        %568 = vmatprep.subr.bf16.mxu0 0
        %569 = vmatpush1.bf16.msra.mxu0 0
        %570 = vmatprep.subr.bf16.mxu0 0
        %571 = vmatpush1.bf16.msra.mxu0 0
        %572 = vmatprep.subr.bf16.mxu0 0
        %573 = vmatpush1.bf16.msra.mxu0 0
        %574 = vmatprep.subr.bf16.mxu0 0
        %575 = vmatpush1.bf16.msra.mxu0 0
        %576 = vmatprep.subr.bf16.mxu0 0
        %577 = vmatpush1.bf16.msra.mxu0 0
        %578 = vmatprep.subr.bf16.mxu0 0
        %579 = vmatpush1.bf16.msra.mxu0 0
        %580 = vmatprep.mubr.bf16.mxu0 0
        %581 = vmatmul.mubr.bf16.gmra.mrb[0].mxu0 %v492
        %v582 = vpop.f32.mrb[0].mxu0
        %v583 = vadd.f32 %v474, %v582
        %v584 = vpop.f32.mrb[0].mxu0
        %v585 = vpop.f32.mrb[0].mxu0
        %v586 = vadd.f32 %v474, %v585
        %v587 = vpop.f32.mrb[0].mxu0
        %588 = vmatprep.mubr.bf16.mxu0 0
        %589 = vmatmul.mubr.bf16.gmra.mrb[0].mxu0 %v493
        %v590 = vpop.f32.mrb[0].mxu0
        %v591 = vadd.f32 %v474, %v590
        %v592 = vpop.f32.mrb[0].mxu0
        %v593 = vpop.f32.mrb[0].mxu0
        %v594 = vadd.f32 %v474, %v593
        %v595 = vpop.f32.mrb[0].mxu0
        %596 = vmatprep.mubr.bf16.mxu0 0
        %597 = vmatmul.mubr.bf16.gmra.mrb[0].mxu0 %v494
        %v598 = vpop.f32.mrb[0].mxu0
        %v599 = vadd.f32 %v474, %v598
        %v600 = vpop.f32.mrb[0].mxu0
        %v601 = vpop.f32.mrb[0].mxu0
        %v602 = vadd.f32 %v474, %v601
        %v603 = vpop.f32.mrb[0].mxu0
        %604 = vmatprep.mubr.bf16.mxu0 0
        %605 = vmatmul.mubr.bf16.gmra.mrb[0].mxu0 %v495
        %v606 = vpop.f32.mrb[0].mxu0
        %v607 = vadd.f32 %v474, %v606
        %v608 = vpop.f32.mrb[0].mxu0
        %v609 = vpop.f32.mrb[0].mxu0
        %v610 = vadd.f32 %v474, %v609
        %v611 = vpop.f32.mrb[0].mxu0
        %612 = vdwg.mxu0
        %v613 = vmax.f32 %v583, 0.0
        %v614 = vmax.f32 %v586, 0.0
        %v615 = vmax.f32 %v591, 0.0
        %v616 = vmax.f32 %v594, 0.0
        %v617 = vmax.f32 %v599, 0.0
        %v618 = vmax.f32 %v602, 0.0
        %v619 = vmax.f32 %v607, 0.0
        %v620 = vmax.f32 %v610, 0.0
        %v621 = vpack.c.bf16 %v614, %v613
        %v622 = vpack.c.bf16 %v616, %v615
        %v623 = vpack.c.bf16 %v618, %v617
        %v624 = vpack.c.bf16 %v620, %v619
        %v629 = vunpack.c.l.b16 %v621
        %v630 = vunpack.c.h.b16 %v621
        %v631 = vunpack.c.l.b16 %v622
        %v632 = vunpack.c.h.b16 %v622
        %v633 = vunpack.c.l.b16 %v623
        %v634 = vunpack.c.h.b16 %v623
        %v635 = vunpack.c.l.b16 %v624
        %v636 = vunpack.c.h.b16 %v624
        %v637 = vpack.c.b16 %v629, %v629
        %v638 = vpack.c.b16 %v630, %v630
        %v639 = vpack.c.b16 %v631, %v631
        %v640 = vpack.c.b16 %v632, %v632
        %v641 = vpack.c.b16 %v633, %v633
        %v642 = vpack.c.b16 %v634, %v634
        %v643 = vpack.c.b16 %v635, %v635
        %v644 = vpack.c.b16 %v636, %v636
        %vm645 = vsmask.f32 4368
        %vm646 = vmor %vm405, %vm645
        %v648 = vshrl.u32 %v637, 16
        %v650 = vrot.slane %v648, 7
        %v651 = vshll.u32 %v637, 16
        %v653 = vor.u32 %v650, %v651
        %v654 = vrot.slane %v650, 4
        %v656 = vshrl.u32 %v638, 16
        %v658 = vrot.slane %v656, 7
        %v659 = vshll.u32 %v638, 16
        %v661 = vor.u32 %v658, %v659
        %v662 = vsel %vm646, %v654, %v661
        %v663 = vrot.slane %v658, 4
        %v665 = vshrl.u32 %v639, 16
        %v667 = vrot.slane %v665, 7
        %v668 = vshll.u32 %v639, 16
        %v670 = vor.u32 %v667, %v668
        %v671 = vrot.slane %v667, 4
        %v673 = vshrl.u32 %v640, 16
        %v675 = vrot.slane %v673, 7
        %v676 = vshll.u32 %v640, 16
        %v678 = vor.u32 %v675, %v676
        %v679 = vsel %vm646, %v671, %v678
        %v680 = vrot.slane %v675, 4
        %v682 = vshrl.u32 %v641, 16
        %v684 = vrot.slane %v682, 7
        %v685 = vshll.u32 %v641, 16
        %v687 = vor.u32 %v684, %v685
        %v688 = vrot.slane %v684, 4
        %v690 = vshrl.u32 %v642, 16
        %v692 = vrot.slane %v690, 7
        %v693 = vshll.u32 %v642, 16
        %v695 = vor.u32 %v692, %v693
        %v696 = vsel %vm646, %v688, %v695
        %v697 = vrot.slane %v692, 4
        %v699 = vshrl.u32 %v643, 16
        %v701 = vrot.slane %v699, 7
        %v702 = vshll.u32 %v643, 16
        %v704 = vor.u32 %v701, %v702
        %v705 = vrot.slane %v701, 4
        %v707 = vshrl.u32 %v644, 16
        %v709 = vrot.slane %v707, 7
        %v710 = vshll.u32 %v644, 16
        %v712 = vor.u32 %v709, %v710
        %v713 = vsel %vm646, %v705, %v712
        %v714 = vrot.slane %v709, 4
        %s727 = scalar_lea.vmem [#allocation4], 12
        %vm728 = vcmask 1043456
        %vm729 = vmand %vm728, %vm425
        %v730 = vld [vmem:[%s727] sm:$0xf]
        %v731 = vsel %vm729, %v653, %v730
        %732 = vst [vmem:[%s727] sm:$0xf] %v731
        %733 = vst [vmem:[%s727 + $0x4] sm:$0xf] %v662
        %v734 = vld [vmem:[%s727 + $0x8] sm:$0x1]
        %v735 = vsel %vm406, %v663, %v734
        %736 = vst [vmem:[%s727 + $0x8] sm:$0x1] %v735
        %v737 = vld [vmem:[%s727 + $0xc] sm:$0xf]
        %v738 = vsel %vm729, %v670, %v737
        %739 = vst [vmem:[%s727 + $0xc] sm:$0xf] %v738
        %740 = vst [vmem:[%s727 + $0x10] sm:$0xf] %v679
        %v741 = vld [vmem:[%s727 + $0x14] sm:$0x1]
        %v742 = vsel %vm406, %v680, %v741
        %743 = vst [vmem:[%s727 + $0x14] sm:$0x1] %v742
        %v744 = vld [vmem:[%s727 + $0x18] sm:$0xf]
        %v745 = vsel %vm729, %v687, %v744
        %746 = vst [vmem:[%s727 + $0x18] sm:$0xf] %v745
        %747 = vst [vmem:[%s727 + $0x1c] sm:$0xf] %v696
        %v748 = vld [vmem:[%s727 + $0x20] sm:$0x1]
        %v749 = vsel %vm406, %v697, %v748
        %750 = vst [vmem:[%s727 + $0x20] sm:$0x1] %v749
        %v751 = vld [vmem:[%s727 + $0x24] sm:$0xf]
        %v752 = vsel %vm729, %v704, %v751
        %753 = vst [vmem:[%s727 + $0x24] sm:$0xf] %v752
        %754 = vst [vmem:[%s727 + $0x28] sm:$0xf] %v713
        %v755 = vld [vmem:[%s727 + $0x2c] sm:$0x1]
        %v756 = vsel %vm406, %v714, %v755
        %757 = vst [vmem:[%s727 + $0x2c] sm:$0x1] %v756
        %s758 = smul.u32 4, 2
        %s759 = smul.u32 %s758, 1
        %s760 = sshll.u32 %s759, 4
        %761 = dma.done [#allocation3], %s760
        %s762 = sshll.u32 %s759, 4
        %763 = dma.done %s392, %s762
        %v764 = vld [vmem:[#allocation2] sm:$0xff]
        %v765 = vld [vmem:[#allocation2 + $0x8] sm:$0xff]
        %v766 = vld [vmem:[#allocation8] sm:$0xf]
        %v767 = vld [vmem:[#allocation8 + $0x4] sm:$0xf]
        %v768 = vld [vmem:[#allocation8 + $0x8] sm:$0xf]
        %v769 = vld [vmem:[#allocation8 + $0xc] sm:$0xf]
        %v770 = vld [vmem:[#allocation8 + $0x10] sm:$0xf]
        %v771 = vld [vmem:[#allocation8 + $0x14] sm:$0xf]
        %v772 = vld [vmem:[#allocation8 + $0x18] sm:$0xf]
        %v773 = vld [vmem:[#allocation8 + $0x1c] sm:$0xf]
        %v774 = vld [vmem:[#allocation8 + $0x20] sm:$0xf]
        %v775 = vld [vmem:[#allocation8 + $0x24] sm:$0xf]
        %v776 = vld [vmem:[#allocation8 + $0x28] sm:$0xf]
        %v777 = vld [vmem:[#allocation8 + $0x2c] sm:$0xf]
        %v778 = vld [vmem:[#allocation8 + $0x30] sm:$0xf]
        %v779 = vld [vmem:[#allocation8 + $0x34] sm:$0xf]
        %v780 = vld [vmem:[#allocation8 + $0x38] sm:$0xf]
        %v781 = vld [vmem:[#allocation8 + $0x3c] sm:$0xf]
        %v782 = vld [vmem:[%s3] sm:$0x1]
        %v784 = vlaneseq
        %v785 = vshrl.u32 %v784, 7
        %v786 = vsub.s32 0, %v785
        %v787 = vrot.slane %v782, %v786
        %v805 = vunpack.c.l.b16 %v766
        %v806 = vunpack.c.l.b16 %v767
        %v807 = vunpack.c.l.b16 %v768
        %v808 = vunpack.c.l.b16 %v769
        %v809 = vunpack.c.l.b16 %v770
        %v810 = vunpack.c.l.b16 %v771
        %v811 = vunpack.c.l.b16 %v772
        %v812 = vunpack.c.l.b16 %v773
        %v813 = vunpack.c.l.b16 %v774
        %v814 = vunpack.c.l.b16 %v775
        %v815 = vunpack.c.l.b16 %v776
        %v816 = vunpack.c.l.b16 %v777
        %v817 = vunpack.c.l.b16 %v778
        %v818 = vunpack.c.l.b16 %v779
        %v819 = vunpack.c.l.b16 %v780
        %v820 = vunpack.c.l.b16 %v781
        %v821 = vpack.c.b16 %v806, %v805
        %v822 = vpack.c.b16 %v808, %v807
        %v823 = vpack.c.b16 %v810, %v809
        %v824 = vpack.c.b16 %v812, %v811
        %v825 = vpack.c.b16 %v814, %v813
        %v826 = vpack.c.b16 %v816, %v815
        %v827 = vpack.c.b16 %v818, %v817
        %v828 = vpack.c.b16 %v820, %v819
        %837 = vmatprep.subr.bf16.mxu0 0
        %838 = vmatpush1.bf16.msra.mxu0 %v821
        %839 = vmatprep.subr.bf16.mxu0 0
        %840 = vmatpush1.bf16.msra.mxu0 %v822
        %841 = vmatprep.subr.bf16.mxu0 0
        %842 = vmatpush1.bf16.msra.mxu0 %v823
        %843 = vmatprep.subr.bf16.mxu0 0
        %844 = vmatpush1.bf16.msra.mxu0 %v824
        %845 = vmatprep.subr.bf16.mxu0 0
        %846 = vmatpush1.bf16.msra.mxu0 %v825
        %847 = vmatprep.subr.bf16.mxu0 0
        %848 = vmatpush1.bf16.msra.mxu0 %v826
        %849 = vmatprep.subr.bf16.mxu0 0
        %850 = vmatpush1.bf16.msra.mxu0 %v827
        %851 = vmatprep.subr.bf16.mxu0 0
        %852 = vmatpush1.bf16.msra.mxu0 %v828
        %853 = vmatprep.subr.bf16.mxu0 0
        %854 = vmatpush1.bf16.msra.mxu0 0
        %855 = vmatprep.subr.bf16.mxu0 0
        %856 = vmatpush1.bf16.msra.mxu0 0
        %857 = vmatprep.subr.bf16.mxu0 0
        %858 = vmatpush1.bf16.msra.mxu0 0
        %859 = vmatprep.subr.bf16.mxu0 0
        %860 = vmatpush1.bf16.msra.mxu0 0
        %861 = vmatprep.subr.bf16.mxu0 0
        %862 = vmatpush1.bf16.msra.mxu0 0
        %863 = vmatprep.subr.bf16.mxu0 0
        %864 = vmatpush1.bf16.msra.mxu0 0
        %865 = vmatprep.subr.bf16.mxu0 0
        %866 = vmatpush1.bf16.msra.mxu0 0
        %867 = vmatprep.subr.bf16.mxu0 0
        %868 = vmatpush1.bf16.msra.mxu0 0
        %869 = vmatprep.mubr.bf16.mxu0 0
        %870 = vmatmul.mubr.bf16.gmra.mrb[0].mxu0 %v764
        %v871 = vpop.f32.mrb[0].mxu0
        %v872 = vadd.f32 %v787, %v871
        %v873 = vpop.f32.mrb[0].mxu0
        %v874 = vpop.f32.mrb[0].mxu0
        %v875 = vadd.f32 %v787, %v874
        %v876 = vpop.f32.mrb[0].mxu0
        %877 = vmatprep.mubr.bf16.mxu0 0
        %878 = vmatmul.mubr.bf16.gmra.mrb[0].mxu0 %v765
        %v879 = vpop.f32.mrb[0].mxu0
        %v880 = vadd.f32 %v787, %v879
        %v881 = vpop.f32.mrb[0].mxu0
        %v882 = vpop.f32.mrb[0].mxu0
        %v883 = vadd.f32 %v787, %v882
        %v884 = vpop.f32.mrb[0].mxu0
        %885 = vdwg.mxu0
        %v886 = vmax.f32 %v872, 0.0
        %v887 = vmax.f32 %v875, 0.0
        %v888 = vmax.f32 %v880, 0.0
        %v889 = vmax.f32 %v883, 0.0
        %v890 = vpack.c.bf16 %v887, %v886
        %v891 = vpack.c.bf16 %v889, %v888
        %p892 = scmp.gt.s32.totalorder %s32, 0
        %s893 = scalar_select %p892, 1, 0
        %v894 = vstv %s893
        %vm895 = vcmp.eq.s32.totalorder %v894, 1
        %v896 = vsel %vm895, %v890, 0
        %v898 = vunpack.c.l.b16 %v896
        %v899 = vunpack.c.h.b16 %v896
        %v900 = vpack.c.b16 %v898, %v898
        %v901 = vpack.c.b16 %v899, %v899
        %v903 = vshrl.u32 %v900, 16
        %v905 = vrot.slane %v903, 7
        %v906 = vshll.u32 %v900, 16
        %v908 = vor.u32 %v905, %v906
        %v909 = vrot.slane %v905, 4
        %v911 = vshrl.u32 %v901, 16
        %v913 = vrot.slane %v911, 7
        %v914 = vshll.u32 %v901, 16
        %v916 = vor.u32 %v913, %v914
        %v917 = vsel %vm646, %v909, %v916
        %v918 = vrot.slane %v913, 4
        %v922 = vld [vmem:[#allocation4] sm:$0xf]
        %v923 = vsel %vm729, %v908, %v922
        %924 = vst [vmem:[#allocation4] sm:$0xf] %v923
        %925 = vst [vmem:[#allocation4 + $0x4] sm:$0xf] %v917
        %v926 = vld [vmem:[#allocation4 + $0x8] sm:$0x1]
        %v927 = vsel %vm406, %v918, %v926
        %928 = vst [vmem:[#allocation4 + $0x8] sm:$0x1] %v927
        %p929 = scmp.lt.s32.totalorder %s32, 3
        %s930 = scalar_select %p929, 1, 0
        %v931 = vstv %s930
        %vm932 = vcmp.eq.s32.totalorder %v931, 1
        %v933 = vsel %vm932, %v891, 0
        %v935 = vunpack.c.l.b16 %v933
        %v936 = vunpack.c.h.b16 %v933
        %v937 = vpack.c.b16 %v935, %v935
        %v938 = vpack.c.b16 %v936, %v936
        %v940 = vshrl.u32 %v937, 16
        %v942 = vrot.slane %v940, 7
        %v943 = vshll.u32 %v937, 16
        %v945 = vor.u32 %v942, %v943
        %v946 = vrot.slane %v942, 4
        %v948 = vshrl.u32 %v938, 16
        %v950 = vrot.slane %v948, 7
        %v951 = vshll.u32 %v938, 16
        %v953 = vor.u32 %v950, %v951
        %v954 = vsel %vm646, %v946, %v953
        %v955 = vrot.slane %v950, 4
        %s959 = scalar_lea.vmem [#allocation4], 60
        %v960 = vld [vmem:[%s959] sm:$0xf]
        %v961 = vsel %vm729, %v945, %v960
        %962 = vst [vmem:[%s959] sm:$0xf] %v961
        %963 = vst [vmem:[%s959 + $0x4] sm:$0xf] %v954
        %v964 = vld [vmem:[%s959 + $0x8] sm:$0x1]
        %v965 = vsel %vm406, %v955, %v964
        %966 = vst [vmem:[%s959 + $0x8] sm:$0x1] %v965
        %v967 = vld [vmem:[#allocation4] sm:$0xf]
        %v968 = vld [vmem:[#allocation4 + $0x4] sm:$0xf]
        %v969 = vld [vmem:[#allocation4 + $0xc] sm:$0xf]
        %v970 = vld [vmem:[#allocation4 + $0x10] sm:$0xf]
        %v971 = vld [vmem:[#allocation4 + $0x18] sm:$0xf]
        %v972 = vld [vmem:[#allocation4 + $0x1c] sm:$0xf]
        %v973 = vld [vmem:[#allocation4 + $0x24] sm:$0xf]
        %v974 = vld [vmem:[#allocation4 + $0x28] sm:$0xf]
        %v975 = vld [vmem:[#allocation10] sm:$0xf]
        %v976 = vld [vmem:[#allocation10 + $0x4] sm:$0xf]
        %v977 = vld [vmem:[#allocation10 + $0x8] sm:$0xf]
        %v978 = vld [vmem:[#allocation10 + $0xc] sm:$0xf]
        %v979 = vld [vmem:[#allocation10 + $0x10] sm:$0xf]
        %v980 = vld [vmem:[#allocation10 + $0x14] sm:$0xf]
        %v981 = vld [vmem:[#allocation10 + $0x18] sm:$0xf]
        %v982 = vld [vmem:[#allocation10 + $0x1c] sm:$0xf]
        %v983 = vld [vmem:[#allocation10 + $0x20] sm:$0xf]
        %v984 = vld [vmem:[#allocation10 + $0x24] sm:$0xf]
        %v985 = vld [vmem:[#allocation10 + $0x28] sm:$0xf]
        %v986 = vld [vmem:[#allocation10 + $0x2c] sm:$0xf]
        %v987 = vld [vmem:[#allocation10 + $0x30] sm:$0xf]
        %v988 = vld [vmem:[#allocation10 + $0x34] sm:$0xf]
        %v989 = vld [vmem:[#allocation10 + $0x38] sm:$0xf]
        %v990 = vld [vmem:[#allocation10 + $0x3c] sm:$0xf]
        %v991 = vld [vmem:[#allocation4 + $0x8] sm:$0x1]
        %v992 = vld [vmem:[#allocation4 + $0x14] sm:$0x1]
        %v993 = vld [vmem:[#allocation4 + $0x20] sm:$0x1]
        %v994 = vld [vmem:[#allocation4 + $0x2c] sm:$0x1]
        %vm995 = vsmask.f32 3328
        %vm996 = vsmask.f32 7440
        %vm997 = vmor %vm995, %vm996
        %v999 = vshrl.u32 %v967, 16
        %v1001 = vrot.slane %v999, 4
        %v1002 = vshll.u32 %v967, 16
        %v1004 = vrot.slane %v1002, 5
        %v1005 = vor.u32 %v1001, %v1004
        %v1006 = vrot.slane %v1005, 4
        %v1008 = vshll.u32 %v968, 16
        %v1010 = vrot.slane %v1008, 5
        %v1011 = vsel %vm997, %v1006, %v1010
        %v1012 = vshrl.u32 %v968, 16
        %v1014 = vrot.slane %v1012, 4
        %v1015 = vor.u32 %v1014, %v1010
        %v1016 = vrot.slane %v1015, 4
        %v1018 = vshll.u32 %v991, 16
        %v1020 = vrot.slane %v1018, 5
        %v1021 = vsel %vm997, %v1016, %v1020
        %v1023 = vshrl.u32 %v969, 16
        %v1025 = vrot.slane %v1023, 4
        %v1026 = vshll.u32 %v969, 16
        %v1028 = vrot.slane %v1026, 5
        %v1029 = vor.u32 %v1025, %v1028
        %v1030 = vrot.slane %v1029, 4
        %v1032 = vshll.u32 %v970, 16
        %v1034 = vrot.slane %v1032, 5
        %v1035 = vsel %vm997, %v1030, %v1034
        %v1036 = vshrl.u32 %v970, 16
        %v1038 = vrot.slane %v1036, 4
        %v1039 = vor.u32 %v1038, %v1034
        %v1040 = vrot.slane %v1039, 4
        %v1042 = vshll.u32 %v992, 16
        %v1044 = vrot.slane %v1042, 5
        %v1045 = vsel %vm997, %v1040, %v1044
        %v1047 = vshrl.u32 %v971, 16
        %v1049 = vrot.slane %v1047, 4
        %v1050 = vshll.u32 %v971, 16
        %v1052 = vrot.slane %v1050, 5
        %v1053 = vor.u32 %v1049, %v1052
        %v1054 = vrot.slane %v1053, 4
        %v1056 = vshll.u32 %v972, 16
        %v1058 = vrot.slane %v1056, 5
        %v1059 = vsel %vm997, %v1054, %v1058
        %v1060 = vshrl.u32 %v972, 16
        %v1062 = vrot.slane %v1060, 4
        %v1063 = vor.u32 %v1062, %v1058
        %v1064 = vrot.slane %v1063, 4
        %v1066 = vshll.u32 %v993, 16
        %v1068 = vrot.slane %v1066, 5
        %v1069 = vsel %vm997, %v1064, %v1068
        %v1071 = vshrl.u32 %v973, 16
        %v1073 = vrot.slane %v1071, 4
        %v1074 = vshll.u32 %v973, 16
        %v1076 = vrot.slane %v1074, 5
        %v1077 = vor.u32 %v1073, %v1076
        %v1078 = vrot.slane %v1077, 4
        %v1080 = vshll.u32 %v974, 16
        %v1082 = vrot.slane %v1080, 5
        %v1083 = vsel %vm997, %v1078, %v1082
        %v1084 = vshrl.u32 %v974, 16
        %v1086 = vrot.slane %v1084, 4
        %v1087 = vor.u32 %v1086, %v1082
        %v1088 = vrot.slane %v1087, 4
        %v1090 = vshll.u32 %v994, 16
        %v1092 = vrot.slane %v1090, 5
        %v1093 = vsel %vm997, %v1088, %v1092
        %s1094 = scalar_lea.vmem [#allocation10], 64
        %v1095 = vld [vmem:[%s1094] sm:$0xf]
        %v1096 = vld [vmem:[%s1094 + $0x4] sm:$0xf]
        %v1097 = vld [vmem:[%s1094 + $0x8] sm:$0xf]
        %v1098 = vld [vmem:[%s1094 + $0xc] sm:$0xf]
        %v1099 = vld [vmem:[%s1094 + $0x10] sm:$0xf]
        %v1100 = vld [vmem:[%s1094 + $0x14] sm:$0xf]
        %v1101 = vld [vmem:[%s1094 + $0x18] sm:$0xf]
        %v1102 = vld [vmem:[%s1094 + $0x1c] sm:$0xf]
        %v1103 = vld [vmem:[%s1094 + $0x20] sm:$0xf]
        %v1104 = vld [vmem:[%s1094 + $0x24] sm:$0xf]
        %v1105 = vld [vmem:[%s1094 + $0x28] sm:$0xf]
        %v1106 = vld [vmem:[%s1094 + $0x2c] sm:$0xf]
        %v1107 = vld [vmem:[%s1094 + $0x30] sm:$0xf]
        %v1108 = vld [vmem:[%s1094 + $0x34] sm:$0xf]
        %v1109 = vld [vmem:[%s1094 + $0x38] sm:$0xf]
        %v1110 = vld [vmem:[%s1094 + $0x3c] sm:$0xf]
        %v1111 = vunpack.c.l.b16 %v1011
        %v1112 = vunpack.c.l.b16 %v1021
        %v1113 = vunpack.c.l.b16 %v1035
        %v1114 = vunpack.c.l.b16 %v1045
        %v1115 = vunpack.c.l.b16 %v1059
        %v1116 = vunpack.c.l.b16 %v1069
        %v1117 = vunpack.c.l.b16 %v1083
        %v1118 = vunpack.c.l.b16 %v1093
        %v1119 = vpack.c.b16 %v1112, %v1111
        %v1120 = vpack.c.b16 %v1114, %v1113
        %v1121 = vpack.c.b16 %v1116, %v1115
        %v1122 = vpack.c.b16 %v1118, %v1117
        %v1143 = vunpack.c.l.b16 %v1095
        %v1144 = vunpack.c.l.b16 %v1096
        %v1145 = vunpack.c.l.b16 %v1097
        %v1146 = vunpack.c.l.b16 %v1098
        %v1147 = vunpack.c.l.b16 %v1099
        %v1148 = vunpack.c.l.b16 %v1100
        %v1149 = vunpack.c.l.b16 %v1101
        %v1150 = vunpack.c.l.b16 %v1102
        %v1151 = vunpack.c.l.b16 %v1103
        %v1152 = vunpack.c.l.b16 %v1104
        %v1153 = vunpack.c.l.b16 %v1105
        %v1154 = vunpack.c.l.b16 %v1106
        %v1155 = vunpack.c.l.b16 %v1107
        %v1156 = vunpack.c.l.b16 %v1108
        %v1157 = vunpack.c.l.b16 %v1109
        %v1158 = vunpack.c.l.b16 %v1110
        %v1159 = vpack.c.b16 %v1144, %v1143
        %v1160 = vpack.c.b16 %v1146, %v1145
        %v1161 = vpack.c.b16 %v1148, %v1147
        %v1162 = vpack.c.b16 %v1150, %v1149
        %v1163 = vpack.c.b16 %v1152, %v1151
        %v1164 = vpack.c.b16 %v1154, %v1153
        %v1165 = vpack.c.b16 %v1156, %v1155
        %v1166 = vpack.c.b16 %v1158, %v1157
        %1175 = vmatprep.subr.bf16.mxu0 0
        %1176 = vmatpush1.bf16.msra.mxu0 %v1159
        %1177 = vmatprep.subr.bf16.mxu0 0
        %1178 = vmatpush1.bf16.msra.mxu0 %v1160
        %1179 = vmatprep.subr.bf16.mxu0 0
        %1180 = vmatpush1.bf16.msra.mxu0 %v1161
        %1181 = vmatprep.subr.bf16.mxu0 0
        %1182 = vmatpush1.bf16.msra.mxu0 %v1162
        %1183 = vmatprep.subr.bf16.mxu0 0
        %1184 = vmatpush1.bf16.msra.mxu0 %v1163
        %1185 = vmatprep.subr.bf16.mxu0 0
        %1186 = vmatpush1.bf16.msra.mxu0 %v1164
        %1187 = vmatprep.subr.bf16.mxu0 0
        %1188 = vmatpush1.bf16.msra.mxu0 %v1165
        %1189 = vmatprep.subr.bf16.mxu0 0
        %1190 = vmatpush1.bf16.msra.mxu0 %v1166
        %1191 = vmatprep.subr.bf16.mxu0 0
        %1192 = vmatpush1.bf16.msra.mxu0 0
        %1193 = vmatprep.subr.bf16.mxu0 0
        %1194 = vmatpush1.bf16.msra.mxu0 0
        %1195 = vmatprep.subr.bf16.mxu0 0
        %1196 = vmatpush1.bf16.msra.mxu0 0
        %1197 = vmatprep.subr.bf16.mxu0 0
        %1198 = vmatpush1.bf16.msra.mxu0 0
        %1199 = vmatprep.subr.bf16.mxu0 0
        %1200 = vmatpush1.bf16.msra.mxu0 0
        %1201 = vmatprep.subr.bf16.mxu0 0
        %1202 = vmatpush1.bf16.msra.mxu0 0
        %1203 = vmatprep.subr.bf16.mxu0 0
        %1204 = vmatpush1.bf16.msra.mxu0 0
        %1205 = vmatprep.subr.bf16.mxu0 0
        %1206 = vmatpush1.bf16.msra.mxu0 0
        %1207 = vmatprep.mubr.bf16.mxu0 0
        %1208 = vmatmul.mubr.bf16.gmra.mrb[0].mxu0 %v1119
        %v1209 = vpop.f32.mrb[0].mxu0
        %v1210 = vadd.f32 0.0, %v1209
        %v1211 = vpop.f32.mrb[0].mxu0
        %v1212 = vpop.f32.mrb[0].mxu0
        %v1213 = vadd.f32 0.0, %v1212
        %v1214 = vpop.f32.mrb[0].mxu0
        %1215 = vmatprep.mubr.bf16.mxu0 0
        %1216 = vmatmul.mubr.bf16.gmra.mrb[0].mxu0 %v1120
        %v1217 = vpop.f32.mrb[0].mxu0
        %v1218 = vadd.f32 0.0, %v1217
        %v1219 = vpop.f32.mrb[0].mxu0
        %v1220 = vpop.f32.mrb[0].mxu0
        %v1221 = vadd.f32 0.0, %v1220
        %v1222 = vpop.f32.mrb[0].mxu0
        %1223 = vmatprep.mubr.bf16.mxu0 0
        %1224 = vmatmul.mubr.bf16.gmra.mrb[0].mxu0 %v1121
        %v1225 = vpop.f32.mrb[0].mxu0
        %v1226 = vadd.f32 0.0, %v1225
        %v1227 = vpop.f32.mrb[0].mxu0
        %v1228 = vpop.f32.mrb[0].mxu0
        %v1229 = vadd.f32 0.0, %v1228
        %v1230 = vpop.f32.mrb[0].mxu0
        %1231 = vmatprep.mubr.bf16.mxu0 0
        %1232 = vmatmul.mubr.bf16.gmra.mrb[0].mxu0 %v1122
        %v1233 = vpop.f32.mrb[0].mxu0
        %v1234 = vadd.f32 0.0, %v1233
        %v1235 = vpop.f32.mrb[0].mxu0
        %v1236 = vpop.f32.mrb[0].mxu0
        %v1237 = vadd.f32 0.0, %v1236
        %v1238 = vpop.f32.mrb[0].mxu0
        %1239 = vdwg.mxu0
        %v1248 = vunpack.c.l.b16 %v967
        %v1249 = vunpack.c.l.b16 %v968
        %v1250 = vunpack.c.l.b16 %v969
        %v1251 = vunpack.c.l.b16 %v970
        %v1252 = vunpack.c.l.b16 %v971
        %v1253 = vunpack.c.l.b16 %v972
        %v1254 = vunpack.c.l.b16 %v973
        %v1255 = vunpack.c.l.b16 %v974
        %v1256 = vpack.c.b16 %v1249, %v1248
        %v1257 = vpack.c.b16 %v1251, %v1250
        %v1258 = vpack.c.b16 %v1253, %v1252
        %v1259 = vpack.c.b16 %v1255, %v1254
        %v1280 = vunpack.c.l.b16 %v975
        %v1281 = vunpack.c.l.b16 %v976
        %v1282 = vunpack.c.l.b16 %v977
        %v1283 = vunpack.c.l.b16 %v978
        %v1284 = vunpack.c.l.b16 %v979
        %v1285 = vunpack.c.l.b16 %v980
        %v1286 = vunpack.c.l.b16 %v981
        %v1287 = vunpack.c.l.b16 %v982
        %v1288 = vunpack.c.l.b16 %v983
        %v1289 = vunpack.c.l.b16 %v984
        %v1290 = vunpack.c.l.b16 %v985
        %v1291 = vunpack.c.l.b16 %v986
        %v1292 = vunpack.c.l.b16 %v987
        %v1293 = vunpack.c.l.b16 %v988
        %v1294 = vunpack.c.l.b16 %v989
        %v1295 = vunpack.c.l.b16 %v990
        %v1296 = vpack.c.b16 %v1281, %v1280
        %v1297 = vpack.c.b16 %v1283, %v1282
        %v1298 = vpack.c.b16 %v1285, %v1284
        %v1299 = vpack.c.b16 %v1287, %v1286
        %v1300 = vpack.c.b16 %v1289, %v1288
        %v1301 = vpack.c.b16 %v1291, %v1290
        %v1302 = vpack.c.b16 %v1293, %v1292
        %v1303 = vpack.c.b16 %v1295, %v1294
        %1312 = vmatprep.subr.bf16.mxu0 0
        %1313 = vmatpush1.bf16.msra.mxu0 %v1296
        %1314 = vmatprep.subr.bf16.mxu0 0
        %1315 = vmatpush1.bf16.msra.mxu0 %v1297
        %1316 = vmatprep.subr.bf16.mxu0 0
        %1317 = vmatpush1.bf16.msra.mxu0 %v1298
        %1318 = vmatprep.subr.bf16.mxu0 0
        %1319 = vmatpush1.bf16.msra.mxu0 %v1299
        %1320 = vmatprep.subr.bf16.mxu0 0
        %1321 = vmatpush1.bf16.msra.mxu0 %v1300
        %1322 = vmatprep.subr.bf16.mxu0 0
        %1323 = vmatpush1.bf16.msra.mxu0 %v1301
        %1324 = vmatprep.subr.bf16.mxu0 0
        %1325 = vmatpush1.bf16.msra.mxu0 %v1302
        %1326 = vmatprep.subr.bf16.mxu0 0
        %1327 = vmatpush1.bf16.msra.mxu0 %v1303
        %1328 = vmatprep.subr.bf16.mxu0 0
        %1329 = vmatpush1.bf16.msra.mxu0 0
        %1330 = vmatprep.subr.bf16.mxu0 0
        %1331 = vmatpush1.bf16.msra.mxu0 0
        %1332 = vmatprep.subr.bf16.mxu0 0
        %1333 = vmatpush1.bf16.msra.mxu0 0
        %1334 = vmatprep.subr.bf16.mxu0 0
        %1335 = vmatpush1.bf16.msra.mxu0 0
        %1336 = vmatprep.subr.bf16.mxu0 0
        %1337 = vmatpush1.bf16.msra.mxu0 0
        %1338 = vmatprep.subr.bf16.mxu0 0
        %1339 = vmatpush1.bf16.msra.mxu0 0
        %1340 = vmatprep.subr.bf16.mxu0 0
        %1341 = vmatpush1.bf16.msra.mxu0 0
        %1342 = vmatprep.subr.bf16.mxu0 0
        %1343 = vmatpush1.bf16.msra.mxu0 0
        %1344 = vmatprep.mubr.bf16.mxu0 0
        %1345 = vmatmul.mubr.bf16.gmra.mrb[0].mxu0 %v1256
        %v1346 = vpop.f32.mrb[0].mxu0
        %v1347 = vadd.f32 %v1210, %v1346
        %v1348 = vpop.f32.mrb[0].mxu0
        %v1349 = vpop.f32.mrb[0].mxu0
        %v1350 = vadd.f32 %v1213, %v1349
        %v1351 = vpop.f32.mrb[0].mxu0
        %1352 = vmatprep.mubr.bf16.mxu0 0
        %1353 = vmatmul.mubr.bf16.gmra.mrb[0].mxu0 %v1257
        %v1354 = vpop.f32.mrb[0].mxu0
        %v1355 = vadd.f32 %v1218, %v1354
        %v1356 = vpop.f32.mrb[0].mxu0
        %v1357 = vpop.f32.mrb[0].mxu0
        %v1358 = vadd.f32 %v1221, %v1357
        %v1359 = vpop.f32.mrb[0].mxu0
        %1360 = vmatprep.mubr.bf16.mxu0 0
        %1361 = vmatmul.mubr.bf16.gmra.mrb[0].mxu0 %v1258
        %v1362 = vpop.f32.mrb[0].mxu0
        %v1363 = vadd.f32 %v1226, %v1362
        %v1364 = vpop.f32.mrb[0].mxu0
        %v1365 = vpop.f32.mrb[0].mxu0
        %v1366 = vadd.f32 %v1229, %v1365
        %v1367 = vpop.f32.mrb[0].mxu0
        %1368 = vmatprep.mubr.bf16.mxu0 0
        %1369 = vmatmul.mubr.bf16.gmra.mrb[0].mxu0 %v1259
        %v1370 = vpop.f32.mrb[0].mxu0
        %v1371 = vadd.f32 %v1234, %v1370
        %v1372 = vpop.f32.mrb[0].mxu0
        %v1373 = vpop.f32.mrb[0].mxu0
        %v1374 = vadd.f32 %v1237, %v1373
        %v1375 = vpop.f32.mrb[0].mxu0
        %1376 = vdwg.mxu0
        %v1377 = vld [vmem:[#allocation4] sm:$0xe]
        %v1378 = vld [vmem:[#allocation4 + $0xc] sm:$0xe]
        %v1379 = vld [vmem:[#allocation4 + $0x18] sm:$0xe]
        %v1380 = vld [vmem:[#allocation4 + $0x24] sm:$0xe]
        %vm1389 = vcmask 1042432
        %vm1390 = vcmask 1046532
        %vm1391 = vmor %vm1389, %vm1390
        %v1392 = vrot.slane %v1377, 5
        %v1393 = vrot.slane %v1392, 4
        %v1394 = vrot.slane %v968, 5
        %v1395 = vsel %vm1391, %v1393, %v1394
        %v1396 = vrot.slane %v1394, 4
        %v1397 = vrot.slane %v991, 5
        %v1398 = vsel %vm1391, %v1396, %v1397
        %v1399 = vrot.slane %v1378, 5
        %v1400 = vrot.slane %v1399, 4
        %v1401 = vrot.slane %v970, 5
        %v1402 = vsel %vm1391, %v1400, %v1401
        %v1403 = vrot.slane %v1401, 4
        %v1404 = vrot.slane %v992, 5
        %v1405 = vsel %vm1391, %v1403, %v1404
        %v1406 = vrot.slane %v1379, 5
        %v1407 = vrot.slane %v1406, 4
        %v1408 = vrot.slane %v972, 5
        %v1409 = vsel %vm1391, %v1407, %v1408
        %v1410 = vrot.slane %v1408, 4
        %v1411 = vrot.slane %v993, 5
        %v1412 = vsel %vm1391, %v1410, %v1411
        %v1413 = vrot.slane %v1380, 5
        %v1414 = vrot.slane %v1413, 4
        %v1415 = vrot.slane %v974, 5
        %v1416 = vsel %vm1391, %v1414, %v1415
        %v1417 = vrot.slane %v1415, 4
        %v1418 = vrot.slane %v994, 5
        %v1419 = vsel %vm1391, %v1417, %v1418
        %s1420 = scalar_lea.vmem [#allocation10], 128
        %v1421 = vld [vmem:[%s1420] sm:$0xf]
        %v1422 = vld [vmem:[%s1420 + $0x4] sm:$0xf]
        %v1423 = vld [vmem:[%s1420 + $0x8] sm:$0xf]
        %v1424 = vld [vmem:[%s1420 + $0xc] sm:$0xf]
        %v1425 = vld [vmem:[%s1420 + $0x10] sm:$0xf]
        %v1426 = vld [vmem:[%s1420 + $0x14] sm:$0xf]
        %v1427 = vld [vmem:[%s1420 + $0x18] sm:$0xf]
        %v1428 = vld [vmem:[%s1420 + $0x1c] sm:$0xf]
        %v1429 = vld [vmem:[%s1420 + $0x20] sm:$0xf]
        %v1430 = vld [vmem:[%s1420 + $0x24] sm:$0xf]
        %v1431 = vld [vmem:[%s1420 + $0x28] sm:$0xf]
        %v1432 = vld [vmem:[%s1420 + $0x2c] sm:$0xf]
        %v1433 = vld [vmem:[%s1420 + $0x30] sm:$0xf]
        %v1434 = vld [vmem:[%s1420 + $0x34] sm:$0xf]
        %v1435 = vld [vmem:[%s1420 + $0x38] sm:$0xf]
        %v1436 = vld [vmem:[%s1420 + $0x3c] sm:$0xf]
        %v1437 = vunpack.c.l.b16 %v1395
        %v1438 = vunpack.c.l.b16 %v1398
        %v1439 = vunpack.c.l.b16 %v1402
        %v1440 = vunpack.c.l.b16 %v1405
        %v1441 = vunpack.c.l.b16 %v1409
        %v1442 = vunpack.c.l.b16 %v1412
        %v1443 = vunpack.c.l.b16 %v1416
        %v1444 = vunpack.c.l.b16 %v1419
        %v1445 = vpack.c.b16 %v1438, %v1437
        %v1446 = vpack.c.b16 %v1440, %v1439
        %v1447 = vpack.c.b16 %v1442, %v1441
        %v1448 = vpack.c.b16 %v1444, %v1443
        %v1469 = vunpack.c.l.b16 %v1421
        %v1470 = vunpack.c.l.b16 %v1422
        %v1471 = vunpack.c.l.b16 %v1423
        %v1472 = vunpack.c.l.b16 %v1424
        %v1473 = vunpack.c.l.b16 %v1425
        %v1474 = vunpack.c.l.b16 %v1426
        %v1475 = vunpack.c.l.b16 %v1427
        %v1476 = vunpack.c.l.b16 %v1428
        %v1477 = vunpack.c.l.b16 %v1429
        %v1478 = vunpack.c.l.b16 %v1430
        %v1479 = vunpack.c.l.b16 %v1431
        %v1480 = vunpack.c.l.b16 %v1432
        %v1481 = vunpack.c.l.b16 %v1433
        %v1482 = vunpack.c.l.b16 %v1434
        %v1483 = vunpack.c.l.b16 %v1435
        %v1484 = vunpack.c.l.b16 %v1436
        %v1485 = vpack.c.b16 %v1470, %v1469
        %v1486 = vpack.c.b16 %v1472, %v1471
        %v1487 = vpack.c.b16 %v1474, %v1473
        %v1488 = vpack.c.b16 %v1476, %v1475
        %v1489 = vpack.c.b16 %v1478, %v1477
        %v1490 = vpack.c.b16 %v1480, %v1479
        %v1491 = vpack.c.b16 %v1482, %v1481
        %v1492 = vpack.c.b16 %v1484, %v1483
        %1501 = vmatprep.subr.bf16.mxu0 0
        %1502 = vmatpush1.bf16.msra.mxu0 %v1485
        %1503 = vmatprep.subr.bf16.mxu0 0
        %1504 = vmatpush1.bf16.msra.mxu0 %v1486
        %1505 = vmatprep.subr.bf16.mxu0 0
        %1506 = vmatpush1.bf16.msra.mxu0 %v1487
        %1507 = vmatprep.subr.bf16.mxu0 0
        %1508 = vmatpush1.bf16.msra.mxu0 %v1488
        %1509 = vmatprep.subr.bf16.mxu0 0
        %1510 = vmatpush1.bf16.msra.mxu0 %v1489
        %1511 = vmatprep.subr.bf16.mxu0 0
        %1512 = vmatpush1.bf16.msra.mxu0 %v1490
        %1513 = vmatprep.subr.bf16.mxu0 0
        %1514 = vmatpush1.bf16.msra.mxu0 %v1491
        %1515 = vmatprep.subr.bf16.mxu0 0
        %1516 = vmatpush1.bf16.msra.mxu0 %v1492
        %1517 = vmatprep.subr.bf16.mxu0 0
        %1518 = vmatpush1.bf16.msra.mxu0 0
        %1519 = vmatprep.subr.bf16.mxu0 0
        %1520 = vmatpush1.bf16.msra.mxu0 0
        %1521 = vmatprep.subr.bf16.mxu0 0
        %1522 = vmatpush1.bf16.msra.mxu0 0
        %1523 = vmatprep.subr.bf16.mxu0 0
        %1524 = vmatpush1.bf16.msra.mxu0 0
        %1525 = vmatprep.subr.bf16.mxu0 0
        %1526 = vmatpush1.bf16.msra.mxu0 0
        %1527 = vmatprep.subr.bf16.mxu0 0
        %1528 = vmatpush1.bf16.msra.mxu0 0
        %1529 = vmatprep.subr.bf16.mxu0 0
        %1530 = vmatpush1.bf16.msra.mxu0 0
        %1531 = vmatprep.subr.bf16.mxu0 0
        %1532 = vmatpush1.bf16.msra.mxu0 0
        %1533 = vmatprep.mubr.bf16.mxu0 0
        %1534 = vmatmul.mubr.bf16.gmra.mrb[0].mxu0 %v1445
        %v1535 = vpop.f32.mrb[0].mxu0
        %v1536 = vadd.f32 0.0, %v1535
        %v1537 = vpop.f32.mrb[0].mxu0
        %v1538 = vpop.f32.mrb[0].mxu0
        %v1539 = vadd.f32 0.0, %v1538
        %v1540 = vpop.f32.mrb[0].mxu0
        %1541 = vmatprep.mubr.bf16.mxu0 0
        %1542 = vmatmul.mubr.bf16.gmra.mrb[0].mxu0 %v1446
        %v1543 = vpop.f32.mrb[0].mxu0
        %v1544 = vadd.f32 0.0, %v1543
        %v1545 = vpop.f32.mrb[0].mxu0
        %v1546 = vpop.f32.mrb[0].mxu0
        %v1547 = vadd.f32 0.0, %v1546
        %v1548 = vpop.f32.mrb[0].mxu0
        %1549 = vmatprep.mubr.bf16.mxu0 0
        %1550 = vmatmul.mubr.bf16.gmra.mrb[0].mxu0 %v1447
        %v1551 = vpop.f32.mrb[0].mxu0
        %v1552 = vadd.f32 0.0, %v1551
        %v1553 = vpop.f32.mrb[0].mxu0
        %v1554 = vpop.f32.mrb[0].mxu0
        %v1555 = vadd.f32 0.0, %v1554
        %v1556 = vpop.f32.mrb[0].mxu0
        %1557 = vmatprep.mubr.bf16.mxu0 0
        %1558 = vmatmul.mubr.bf16.gmra.mrb[0].mxu0 %v1448
        %v1559 = vpop.f32.mrb[0].mxu0
        %v1560 = vadd.f32 0.0, %v1559
        %v1561 = vpop.f32.mrb[0].mxu0
        %v1562 = vpop.f32.mrb[0].mxu0
        %v1563 = vadd.f32 0.0, %v1562
        %v1564 = vpop.f32.mrb[0].mxu0
        %1565 = vdwg.mxu0
        %v1566 = vadd.f32 %v1347, %v1536
        %v1567 = vadd.f32 %v1350, %v1539
        %v1568 = vadd.f32 %v1355, %v1544
        %v1569 = vadd.f32 %v1358, %v1547
        %v1570 = vadd.f32 %v1363, %v1552
        %v1571 = vadd.f32 %v1366, %v1555
        %v1572 = vadd.f32 %v1371, %v1560
        %v1573 = vadd.f32 %v1374, %v1563
        %v1574 = vld [vmem:[%s727] sm:$0xf]
        %v1575 = vld [vmem:[%s727 + $0x4] sm:$0xf]
        %v1576 = vld [vmem:[%s727 + $0xc] sm:$0xf]
        %v1577 = vld [vmem:[%s727 + $0x10] sm:$0xf]
        %v1578 = vld [vmem:[%s727 + $0x18] sm:$0xf]
        %v1579 = vld [vmem:[%s727 + $0x1c] sm:$0xf]
        %v1580 = vld [vmem:[%s727 + $0x24] sm:$0xf]
        %v1581 = vld [vmem:[%s727 + $0x28] sm:$0xf]
        %s1582 = scalar_lea.vmem [#allocation10], 192
        %v1583 = vld [vmem:[%s1582] sm:$0xf]
        %v1584 = vld [vmem:[%s1582 + $0x4] sm:$0xf]
        %v1585 = vld [vmem:[%s1582 + $0x8] sm:$0xf]
        %v1586 = vld [vmem:[%s1582 + $0xc] sm:$0xf]
        %v1587 = vld [vmem:[%s1582 + $0x10] sm:$0xf]
        %v1588 = vld [vmem:[%s1582 + $0x14] sm:$0xf]
        %v1589 = vld [vmem:[%s1582 + $0x18] sm:$0xf]
        %v1590 = vld [vmem:[%s1582 + $0x1c] sm:$0xf]
        %v1591 = vld [vmem:[%s1582 + $0x20] sm:$0xf]
        %v1592 = vld [vmem:[%s1582 + $0x24] sm:$0xf]
        %v1593 = vld [vmem:[%s1582 + $0x28] sm:$0xf]
        %v1594 = vld [vmem:[%s1582 + $0x2c] sm:$0xf]
        %v1595 = vld [vmem:[%s1582 + $0x30] sm:$0xf]
        %v1596 = vld [vmem:[%s1582 + $0x34] sm:$0xf]
        %v1597 = vld [vmem:[%s1582 + $0x38] sm:$0xf]
        %v1598 = vld [vmem:[%s1582 + $0x3c] sm:$0xf]
        %v1607 = vunpack.c.l.b16 %v1574
        %v1608 = vunpack.c.l.b16 %v1575
        %v1609 = vunpack.c.l.b16 %v1576
        %v1610 = vunpack.c.l.b16 %v1577
        %v1611 = vunpack.c.l.b16 %v1578
        %v1612 = vunpack.c.l.b16 %v1579
        %v1613 = vunpack.c.l.b16 %v1580
        %v1614 = vunpack.c.l.b16 %v1581
        %v1615 = vpack.c.b16 %v1608, %v1607
        %v1616 = vpack.c.b16 %v1610, %v1609
        %v1617 = vpack.c.b16 %v1612, %v1611
        %v1618 = vpack.c.b16 %v1614, %v1613
        %v1639 = vunpack.c.l.b16 %v1583
        %v1640 = vunpack.c.l.b16 %v1584
        %v1641 = vunpack.c.l.b16 %v1585
        %v1642 = vunpack.c.l.b16 %v1586
        %v1643 = vunpack.c.l.b16 %v1587
        %v1644 = vunpack.c.l.b16 %v1588
        %v1645 = vunpack.c.l.b16 %v1589
        %v1646 = vunpack.c.l.b16 %v1590
        %v1647 = vunpack.c.l.b16 %v1591
        %v1648 = vunpack.c.l.b16 %v1592
        %v1649 = vunpack.c.l.b16 %v1593
        %v1650 = vunpack.c.l.b16 %v1594
        %v1651 = vunpack.c.l.b16 %v1595
        %v1652 = vunpack.c.l.b16 %v1596
        %v1653 = vunpack.c.l.b16 %v1597
        %v1654 = vunpack.c.l.b16 %v1598
        %v1655 = vpack.c.b16 %v1640, %v1639
        %v1656 = vpack.c.b16 %v1642, %v1641
        %v1657 = vpack.c.b16 %v1644, %v1643
        %v1658 = vpack.c.b16 %v1646, %v1645
        %v1659 = vpack.c.b16 %v1648, %v1647
        %v1660 = vpack.c.b16 %v1650, %v1649
        %v1661 = vpack.c.b16 %v1652, %v1651
        %v1662 = vpack.c.b16 %v1654, %v1653
        %1671 = vmatprep.subr.bf16.mxu0 0
        %1672 = vmatpush1.bf16.msra.mxu0 %v1655
        %1673 = vmatprep.subr.bf16.mxu0 0
        %1674 = vmatpush1.bf16.msra.mxu0 %v1656
        %1675 = vmatprep.subr.bf16.mxu0 0
        %1676 = vmatpush1.bf16.msra.mxu0 %v1657
        %1677 = vmatprep.subr.bf16.mxu0 0
        %1678 = vmatpush1.bf16.msra.mxu0 %v1658
        %1679 = vmatprep.subr.bf16.mxu0 0
        %1680 = vmatpush1.bf16.msra.mxu0 %v1659
        %1681 = vmatprep.subr.bf16.mxu0 0
        %1682 = vmatpush1.bf16.msra.mxu0 %v1660
        %1683 = vmatprep.subr.bf16.mxu0 0
        %1684 = vmatpush1.bf16.msra.mxu0 %v1661
        %1685 = vmatprep.subr.bf16.mxu0 0
        %1686 = vmatpush1.bf16.msra.mxu0 %v1662
        %1687 = vmatprep.subr.bf16.mxu0 0
        %1688 = vmatpush1.bf16.msra.mxu0 0
        %1689 = vmatprep.subr.bf16.mxu0 0
        %1690 = vmatpush1.bf16.msra.mxu0 0
        %1691 = vmatprep.subr.bf16.mxu0 0
        %1692 = vmatpush1.bf16.msra.mxu0 0
        %1693 = vmatprep.subr.bf16.mxu0 0
        %1694 = vmatpush1.bf16.msra.mxu0 0
        %1695 = vmatprep.subr.bf16.mxu0 0
        %1696 = vmatpush1.bf16.msra.mxu0 0
        %1697 = vmatprep.subr.bf16.mxu0 0
        %1698 = vmatpush1.bf16.msra.mxu0 0
        %1699 = vmatprep.subr.bf16.mxu0 0
        %1700 = vmatpush1.bf16.msra.mxu0 0
        %1701 = vmatprep.subr.bf16.mxu0 0
        %1702 = vmatpush1.bf16.msra.mxu0 0
        %1703 = vmatprep.mubr.bf16.mxu0 0
        %1704 = vmatmul.mubr.bf16.gmra.mrb[0].mxu0 %v1615
        %v1705 = vpop.f32.mrb[0].mxu0
        %v1706 = vadd.f32 0.0, %v1705
        %v1707 = vpop.f32.mrb[0].mxu0
        %v1708 = vpop.f32.mrb[0].mxu0
        %v1709 = vadd.f32 0.0, %v1708
        %v1710 = vpop.f32.mrb[0].mxu0
        %1711 = vmatprep.mubr.bf16.mxu0 0
        %1712 = vmatmul.mubr.bf16.gmra.mrb[0].mxu0 %v1616
        %v1713 = vpop.f32.mrb[0].mxu0
        %v1714 = vadd.f32 0.0, %v1713
        %v1715 = vpop.f32.mrb[0].mxu0
        %v1716 = vpop.f32.mrb[0].mxu0
        %v1717 = vadd.f32 0.0, %v1716
        %v1718 = vpop.f32.mrb[0].mxu0
        %1719 = vmatprep.mubr.bf16.mxu0 0
        %1720 = vmatmul.mubr.bf16.gmra.mrb[0].mxu0 %v1617
        %v1721 = vpop.f32.mrb[0].mxu0
        %v1722 = vadd.f32 0.0, %v1721
        %v1723 = vpop.f32.mrb[0].mxu0
        %v1724 = vpop.f32.mrb[0].mxu0
        %v1725 = vadd.f32 0.0, %v1724
        %v1726 = vpop.f32.mrb[0].mxu0
        %1727 = vmatprep.mubr.bf16.mxu0 0
        %1728 = vmatmul.mubr.bf16.gmra.mrb[0].mxu0 %v1618
        %v1729 = vpop.f32.mrb[0].mxu0
        %v1730 = vadd.f32 0.0, %v1729
        %v1731 = vpop.f32.mrb[0].mxu0
        %v1732 = vpop.f32.mrb[0].mxu0
        %v1733 = vadd.f32 0.0, %v1732
        %v1734 = vpop.f32.mrb[0].mxu0
        %1735 = vdwg.mxu0
        %v1736 = vadd.f32 %v1566, %v1706
        %v1737 = vadd.f32 %v1567, %v1709
        %v1738 = vadd.f32 %v1568, %v1714
        %v1739 = vadd.f32 %v1569, %v1717
        %v1740 = vadd.f32 %v1570, %v1722
        %v1741 = vadd.f32 %v1571, %v1725
        %v1742 = vadd.f32 %v1572, %v1730
        %v1743 = vadd.f32 %v1573, %v1733
        %v1744 = vld [vmem:[%s727] sm:$0xf]
        %v1745 = vld [vmem:[%s727 + $0x4] sm:$0xf]
        %v1746 = vld [vmem:[%s727 + $0x8] sm:$0x1]
        %v1747 = vld [vmem:[%s727 + $0xc] sm:$0xf]
        %v1748 = vld [vmem:[%s727 + $0x10] sm:$0xf]
        %v1749 = vld [vmem:[%s727 + $0x14] sm:$0x1]
        %v1750 = vld [vmem:[%s727 + $0x18] sm:$0xf]
        %v1751 = vld [vmem:[%s727 + $0x1c] sm:$0xf]
        %v1752 = vld [vmem:[%s727 + $0x20] sm:$0x1]
        %v1753 = vld [vmem:[%s727 + $0x24] sm:$0xf]
        %v1754 = vld [vmem:[%s727 + $0x28] sm:$0xf]
        %v1755 = vld [vmem:[%s727 + $0x2c] sm:$0x1]
        %v1757 = vshrl.u32 %v1744, 16
        %v1759 = vrot.slane %v1757, 4
        %v1760 = vshll.u32 %v1744, 16
        %v1762 = vrot.slane %v1760, 5
        %v1763 = vor.u32 %v1759, %v1762
        %v1764 = vrot.slane %v1763, 4
        %v1766 = vshll.u32 %v1745, 16
        %v1768 = vrot.slane %v1766, 5
        %v1769 = vsel %vm997, %v1764, %v1768
        %v1770 = vshrl.u32 %v1745, 16
        %v1772 = vrot.slane %v1770, 4
        %v1773 = vor.u32 %v1772, %v1768
        %v1774 = vrot.slane %v1773, 4
        %v1776 = vshll.u32 %v1746, 16
        %v1778 = vrot.slane %v1776, 5
        %v1779 = vsel %vm997, %v1774, %v1778
        %v1781 = vshrl.u32 %v1747, 16
        %v1783 = vrot.slane %v1781, 4
        %v1784 = vshll.u32 %v1747, 16
        %v1786 = vrot.slane %v1784, 5
        %v1787 = vor.u32 %v1783, %v1786
        %v1788 = vrot.slane %v1787, 4
        %v1790 = vshll.u32 %v1748, 16
        %v1792 = vrot.slane %v1790, 5
        %v1793 = vsel %vm997, %v1788, %v1792
        %v1794 = vshrl.u32 %v1748, 16
        %v1796 = vrot.slane %v1794, 4
        %v1797 = vor.u32 %v1796, %v1792
        %v1798 = vrot.slane %v1797, 4
        %v1800 = vshll.u32 %v1749, 16
        %v1802 = vrot.slane %v1800, 5
        %v1803 = vsel %vm997, %v1798, %v1802
        %v1805 = vshrl.u32 %v1750, 16
        %v1807 = vrot.slane %v1805, 4
        %v1808 = vshll.u32 %v1750, 16
        %v1810 = vrot.slane %v1808, 5
        %v1811 = vor.u32 %v1807, %v1810
        %v1812 = vrot.slane %v1811, 4
        %v1814 = vshll.u32 %v1751, 16
        %v1816 = vrot.slane %v1814, 5
        %v1817 = vsel %vm997, %v1812, %v1816
        %v1818 = vshrl.u32 %v1751, 16
        %v1820 = vrot.slane %v1818, 4
        %v1821 = vor.u32 %v1820, %v1816
        %v1822 = vrot.slane %v1821, 4
        %v1824 = vshll.u32 %v1752, 16
        %v1826 = vrot.slane %v1824, 5
        %v1827 = vsel %vm997, %v1822, %v1826
        %v1829 = vshrl.u32 %v1753, 16
        %v1831 = vrot.slane %v1829, 4
        %v1832 = vshll.u32 %v1753, 16
        %v1834 = vrot.slane %v1832, 5
        %v1835 = vor.u32 %v1831, %v1834
        %v1836 = vrot.slane %v1835, 4
        %v1838 = vshll.u32 %v1754, 16
        %v1840 = vrot.slane %v1838, 5
        %v1841 = vsel %vm997, %v1836, %v1840
        %v1842 = vshrl.u32 %v1754, 16
        %v1844 = vrot.slane %v1842, 4
        %v1845 = vor.u32 %v1844, %v1840
        %v1846 = vrot.slane %v1845, 4
        %v1848 = vshll.u32 %v1755, 16
        %v1850 = vrot.slane %v1848, 5
        %v1851 = vsel %vm997, %v1846, %v1850
        %s1852 = scalar_lea.vmem [#allocation10], 256
        %v1853 = vld [vmem:[%s1852] sm:$0xf]
        %v1854 = vld [vmem:[%s1852 + $0x4] sm:$0xf]
        %v1855 = vld [vmem:[%s1852 + $0x8] sm:$0xf]
        %v1856 = vld [vmem:[%s1852 + $0xc] sm:$0xf]
        %v1857 = vld [vmem:[%s1852 + $0x10] sm:$0xf]
        %v1858 = vld [vmem:[%s1852 + $0x14] sm:$0xf]
        %v1859 = vld [vmem:[%s1852 + $0x18] sm:$0xf]
        %v1860 = vld [vmem:[%s1852 + $0x1c] sm:$0xf]
        %v1861 = vld [vmem:[%s1852 + $0x20] sm:$0xf]
        %v1862 = vld [vmem:[%s1852 + $0x24] sm:$0xf]
        %v1863 = vld [vmem:[%s1852 + $0x28] sm:$0xf]
        %v1864 = vld [vmem:[%s1852 + $0x2c] sm:$0xf]
        %v1865 = vld [vmem:[%s1852 + $0x30] sm:$0xf]
        %v1866 = vld [vmem:[%s1852 + $0x34] sm:$0xf]
        %v1867 = vld [vmem:[%s1852 + $0x38] sm:$0xf]
        %v1868 = vld [vmem:[%s1852 + $0x3c] sm:$0xf]
        %v1869 = vunpack.c.l.b16 %v1769
        %v1870 = vunpack.c.l.b16 %v1779
        %v1871 = vunpack.c.l.b16 %v1793
        %v1872 = vunpack.c.l.b16 %v1803
        %v1873 = vunpack.c.l.b16 %v1817
        %v1874 = vunpack.c.l.b16 %v1827
        %v1875 = vunpack.c.l.b16 %v1841
        %v1876 = vunpack.c.l.b16 %v1851
        %v1877 = vpack.c.b16 %v1870, %v1869
        %v1878 = vpack.c.b16 %v1872, %v1871
        %v1879 = vpack.c.b16 %v1874, %v1873
        %v1880 = vpack.c.b16 %v1876, %v1875
        %v1901 = vunpack.c.l.b16 %v1853
        %v1902 = vunpack.c.l.b16 %v1854
        %v1903 = vunpack.c.l.b16 %v1855
        %v1904 = vunpack.c.l.b16 %v1856
        %v1905 = vunpack.c.l.b16 %v1857
        %v1906 = vunpack.c.l.b16 %v1858
        %v1907 = vunpack.c.l.b16 %v1859
        %v1908 = vunpack.c.l.b16 %v1860
        %v1909 = vunpack.c.l.b16 %v1861
        %v1910 = vunpack.c.l.b16 %v1862
        %v1911 = vunpack.c.l.b16 %v1863
        %v1912 = vunpack.c.l.b16 %v1864
        %v1913 = vunpack.c.l.b16 %v1865
        %v1914 = vunpack.c.l.b16 %v1866
        %v1915 = vunpack.c.l.b16 %v1867
        %v1916 = vunpack.c.l.b16 %v1868
        %v1917 = vpack.c.b16 %v1902, %v1901
        %v1918 = vpack.c.b16 %v1904, %v1903
        %v1919 = vpack.c.b16 %v1906, %v1905
        %v1920 = vpack.c.b16 %v1908, %v1907
        %v1921 = vpack.c.b16 %v1910, %v1909
        %v1922 = vpack.c.b16 %v1912, %v1911
        %v1923 = vpack.c.b16 %v1914, %v1913
        %v1924 = vpack.c.b16 %v1916, %v1915
        %1933 = vmatprep.subr.bf16.mxu0 0
        %1934 = vmatpush1.bf16.msra.mxu0 %v1917
        %1935 = vmatprep.subr.bf16.mxu0 0
        %1936 = vmatpush1.bf16.msra.mxu0 %v1918
        %1937 = vmatprep.subr.bf16.mxu0 0
        %1938 = vmatpush1.bf16.msra.mxu0 %v1919
        %1939 = vmatprep.subr.bf16.mxu0 0
        %1940 = vmatpush1.bf16.msra.mxu0 %v1920
        %1941 = vmatprep.subr.bf16.mxu0 0
        %1942 = vmatpush1.bf16.msra.mxu0 %v1921
        %1943 = vmatprep.subr.bf16.mxu0 0
        %1944 = vmatpush1.bf16.msra.mxu0 %v1922
        %1945 = vmatprep.subr.bf16.mxu0 0
        %1946 = vmatpush1.bf16.msra.mxu0 %v1923
        %1947 = vmatprep.subr.bf16.mxu0 0
        %1948 = vmatpush1.bf16.msra.mxu0 %v1924
        %1949 = vmatprep.subr.bf16.mxu0 0
        %1950 = vmatpush1.bf16.msra.mxu0 0
        %1951 = vmatprep.subr.bf16.mxu0 0
        %1952 = vmatpush1.bf16.msra.mxu0 0
        %1953 = vmatprep.subr.bf16.mxu0 0
        %1954 = vmatpush1.bf16.msra.mxu0 0
        %1955 = vmatprep.subr.bf16.mxu0 0
        %1956 = vmatpush1.bf16.msra.mxu0 0
        %1957 = vmatprep.subr.bf16.mxu0 0
        %1958 = vmatpush1.bf16.msra.mxu0 0
        %1959 = vmatprep.subr.bf16.mxu0 0
        %1960 = vmatpush1.bf16.msra.mxu0 0
        %1961 = vmatprep.subr.bf16.mxu0 0
        %1962 = vmatpush1.bf16.msra.mxu0 0
        %1963 = vmatprep.subr.bf16.mxu0 0
        %1964 = vmatpush1.bf16.msra.mxu0 0
        %1965 = vmatprep.mubr.bf16.mxu0 0
        %1966 = vmatmul.mubr.bf16.gmra.mrb[0].mxu0 %v1877
        %v1967 = vpop.f32.mrb[0].mxu0
        %v1968 = vadd.f32 0.0, %v1967
        %v1969 = vpop.f32.mrb[0].mxu0
        %v1970 = vpop.f32.mrb[0].mxu0
        %v1971 = vadd.f32 0.0, %v1970
        %v1972 = vpop.f32.mrb[0].mxu0
        %1973 = vmatprep.mubr.bf16.mxu0 0
        %1974 = vmatmul.mubr.bf16.gmra.mrb[0].mxu0 %v1878
        %v1975 = vpop.f32.mrb[0].mxu0
        %v1976 = vadd.f32 0.0, %v1975
        %v1977 = vpop.f32.mrb[0].mxu0
        %v1978 = vpop.f32.mrb[0].mxu0
        %v1979 = vadd.f32 0.0, %v1978
        %v1980 = vpop.f32.mrb[0].mxu0
        %1981 = vmatprep.mubr.bf16.mxu0 0
        %1982 = vmatmul.mubr.bf16.gmra.mrb[0].mxu0 %v1879
        %v1983 = vpop.f32.mrb[0].mxu0
        %v1984 = vadd.f32 0.0, %v1983
        %v1985 = vpop.f32.mrb[0].mxu0
        %v1986 = vpop.f32.mrb[0].mxu0
        %v1987 = vadd.f32 0.0, %v1986
        %v1988 = vpop.f32.mrb[0].mxu0
        %1989 = vmatprep.mubr.bf16.mxu0 0
        %1990 = vmatmul.mubr.bf16.gmra.mrb[0].mxu0 %v1880
        %v1991 = vpop.f32.mrb[0].mxu0
        %v1992 = vadd.f32 0.0, %v1991
        %v1993 = vpop.f32.mrb[0].mxu0
        %v1994 = vpop.f32.mrb[0].mxu0
        %v1995 = vadd.f32 0.0, %v1994
        %v1996 = vpop.f32.mrb[0].mxu0
        %1997 = vdwg.mxu0
        %v1998 = vadd.f32 %v1736, %v1968
        %v1999 = vadd.f32 %v1737, %v1971
        %v2000 = vadd.f32 %v1738, %v1976
        %v2001 = vadd.f32 %v1739, %v1979
        %v2002 = vadd.f32 %v1740, %v1984
        %v2003 = vadd.f32 %v1741, %v1987
        %v2004 = vadd.f32 %v1742, %v1992
        %v2005 = vadd.f32 %v1743, %v1995
        %v2006 = vld [vmem:[%s727] sm:$0xe]
        %v2007 = vld [vmem:[%s727 + $0xc] sm:$0xe]
        %v2008 = vld [vmem:[%s727 + $0x18] sm:$0xe]
        %v2009 = vld [vmem:[%s727 + $0x24] sm:$0xe]
        %v2022 = vrot.slane %v2006, 5
        %v2023 = vrot.slane %v2022, 4
        %v2024 = vrot.slane %v1745, 5
        %v2025 = vsel %vm1391, %v2023, %v2024
        %v2026 = vrot.slane %v2024, 4
        %v2027 = vrot.slane %v1746, 5
        %v2028 = vsel %vm1391, %v2026, %v2027
        %v2029 = vrot.slane %v2007, 5
        %v2030 = vrot.slane %v2029, 4
        %v2031 = vrot.slane %v1748, 5
        %v2032 = vsel %vm1391, %v2030, %v2031
        %v2033 = vrot.slane %v2031, 4
        %v2034 = vrot.slane %v1749, 5
        %v2035 = vsel %vm1391, %v2033, %v2034
        %v2036 = vrot.slane %v2008, 5
        %v2037 = vrot.slane %v2036, 4
        %v2038 = vrot.slane %v1751, 5
        %v2039 = vsel %vm1391, %v2037, %v2038
        %v2040 = vrot.slane %v2038, 4
        %v2041 = vrot.slane %v1752, 5
        %v2042 = vsel %vm1391, %v2040, %v2041
        %v2043 = vrot.slane %v2009, 5
        %v2044 = vrot.slane %v2043, 4
        %v2045 = vrot.slane %v1754, 5
        %v2046 = vsel %vm1391, %v2044, %v2045
        %v2047 = vrot.slane %v2045, 4
        %v2048 = vrot.slane %v1755, 5
        %v2049 = vsel %vm1391, %v2047, %v2048
        %s2050 = scalar_lea.vmem [#allocation10], 320
        %v2051 = vld [vmem:[%s2050] sm:$0xf]
        %v2052 = vld [vmem:[%s2050 + $0x4] sm:$0xf]
        %v2053 = vld [vmem:[%s2050 + $0x8] sm:$0xf]
        %v2054 = vld [vmem:[%s2050 + $0xc] sm:$0xf]
        %v2055 = vld [vmem:[%s2050 + $0x10] sm:$0xf]
        %v2056 = vld [vmem:[%s2050 + $0x14] sm:$0xf]
        %v2057 = vld [vmem:[%s2050 + $0x18] sm:$0xf]
        %v2058 = vld [vmem:[%s2050 + $0x1c] sm:$0xf]
        %v2059 = vld [vmem:[%s2050 + $0x20] sm:$0xf]
        %v2060 = vld [vmem:[%s2050 + $0x24] sm:$0xf]
        %v2061 = vld [vmem:[%s2050 + $0x28] sm:$0xf]
        %v2062 = vld [vmem:[%s2050 + $0x2c] sm:$0xf]
        %v2063 = vld [vmem:[%s2050 + $0x30] sm:$0xf]
        %v2064 = vld [vmem:[%s2050 + $0x34] sm:$0xf]
        %v2065 = vld [vmem:[%s2050 + $0x38] sm:$0xf]
        %v2066 = vld [vmem:[%s2050 + $0x3c] sm:$0xf]
        %v2067 = vunpack.c.l.b16 %v2025
        %v2068 = vunpack.c.l.b16 %v2028
        %v2069 = vunpack.c.l.b16 %v2032
        %v2070 = vunpack.c.l.b16 %v2035
        %v2071 = vunpack.c.l.b16 %v2039
        %v2072 = vunpack.c.l.b16 %v2042
        %v2073 = vunpack.c.l.b16 %v2046
        %v2074 = vunpack.c.l.b16 %v2049
        %v2075 = vpack.c.b16 %v2068, %v2067
        %v2076 = vpack.c.b16 %v2070, %v2069
        %v2077 = vpack.c.b16 %v2072, %v2071
        %v2078 = vpack.c.b16 %v2074, %v2073
        %v2099 = vunpack.c.l.b16 %v2051
        %v2100 = vunpack.c.l.b16 %v2052
        %v2101 = vunpack.c.l.b16 %v2053
        %v2102 = vunpack.c.l.b16 %v2054
        %v2103 = vunpack.c.l.b16 %v2055
        %v2104 = vunpack.c.l.b16 %v2056
        %v2105 = vunpack.c.l.b16 %v2057
        %v2106 = vunpack.c.l.b16 %v2058
        %v2107 = vunpack.c.l.b16 %v2059
        %v2108 = vunpack.c.l.b16 %v2060
        %v2109 = vunpack.c.l.b16 %v2061
        %v2110 = vunpack.c.l.b16 %v2062
        %v2111 = vunpack.c.l.b16 %v2063
        %v2112 = vunpack.c.l.b16 %v2064
        %v2113 = vunpack.c.l.b16 %v2065
        %v2114 = vunpack.c.l.b16 %v2066
        %v2115 = vpack.c.b16 %v2100, %v2099
        %v2116 = vpack.c.b16 %v2102, %v2101
        %v2117 = vpack.c.b16 %v2104, %v2103
        %v2118 = vpack.c.b16 %v2106, %v2105
        %v2119 = vpack.c.b16 %v2108, %v2107
        %v2120 = vpack.c.b16 %v2110, %v2109
        %v2121 = vpack.c.b16 %v2112, %v2111
        %v2122 = vpack.c.b16 %v2114, %v2113
        %2131 = vmatprep.subr.bf16.mxu0 0
        %2132 = vmatpush1.bf16.msra.mxu0 %v2115
        %2133 = vmatprep.subr.bf16.mxu0 0
        %2134 = vmatpush1.bf16.msra.mxu0 %v2116
        %2135 = vmatprep.subr.bf16.mxu0 0
        %2136 = vmatpush1.bf16.msra.mxu0 %v2117
        %2137 = vmatprep.subr.bf16.mxu0 0
        %2138 = vmatpush1.bf16.msra.mxu0 %v2118
        %2139 = vmatprep.subr.bf16.mxu0 0
        %2140 = vmatpush1.bf16.msra.mxu0 %v2119
        %2141 = vmatprep.subr.bf16.mxu0 0
        %2142 = vmatpush1.bf16.msra.mxu0 %v2120
        %2143 = vmatprep.subr.bf16.mxu0 0
        %2144 = vmatpush1.bf16.msra.mxu0 %v2121
        %2145 = vmatprep.subr.bf16.mxu0 0
        %2146 = vmatpush1.bf16.msra.mxu0 %v2122
        %2147 = vmatprep.subr.bf16.mxu0 0
        %2148 = vmatpush1.bf16.msra.mxu0 0
        %2149 = vmatprep.subr.bf16.mxu0 0
        %2150 = vmatpush1.bf16.msra.mxu0 0
        %2151 = vmatprep.subr.bf16.mxu0 0
        %2152 = vmatpush1.bf16.msra.mxu0 0
        %2153 = vmatprep.subr.bf16.mxu0 0
        %2154 = vmatpush1.bf16.msra.mxu0 0
        %2155 = vmatprep.subr.bf16.mxu0 0
        %2156 = vmatpush1.bf16.msra.mxu0 0
        %2157 = vmatprep.subr.bf16.mxu0 0
        %2158 = vmatpush1.bf16.msra.mxu0 0
        %2159 = vmatprep.subr.bf16.mxu0 0
        %2160 = vmatpush1.bf16.msra.mxu0 0
        %2161 = vmatprep.subr.bf16.mxu0 0
        %2162 = vmatpush1.bf16.msra.mxu0 0
        %2163 = vmatprep.mubr.bf16.mxu0 0
        %2164 = vmatmul.mubr.bf16.gmra.mrb[0].mxu0 %v2075
        %v2165 = vpop.f32.mrb[0].mxu0
        %v2166 = vadd.f32 0.0, %v2165
        %v2167 = vpop.f32.mrb[0].mxu0
        %v2168 = vpop.f32.mrb[0].mxu0
        %v2169 = vadd.f32 0.0, %v2168
        %v2170 = vpop.f32.mrb[0].mxu0
        %2171 = vmatprep.mubr.bf16.mxu0 0
        %2172 = vmatmul.mubr.bf16.gmra.mrb[0].mxu0 %v2076
        %v2173 = vpop.f32.mrb[0].mxu0
        %v2174 = vadd.f32 0.0, %v2173
        %v2175 = vpop.f32.mrb[0].mxu0
        %v2176 = vpop.f32.mrb[0].mxu0
        %v2177 = vadd.f32 0.0, %v2176
        %v2178 = vpop.f32.mrb[0].mxu0
        %2179 = vmatprep.mubr.bf16.mxu0 0
        %2180 = vmatmul.mubr.bf16.gmra.mrb[0].mxu0 %v2077
        %v2181 = vpop.f32.mrb[0].mxu0
        %v2182 = vadd.f32 0.0, %v2181
        %v2183 = vpop.f32.mrb[0].mxu0
        %v2184 = vpop.f32.mrb[0].mxu0
        %v2185 = vadd.f32 0.0, %v2184
        %v2186 = vpop.f32.mrb[0].mxu0
        %2187 = vmatprep.mubr.bf16.mxu0 0
        %2188 = vmatmul.mubr.bf16.gmra.mrb[0].mxu0 %v2078
        %v2189 = vpop.f32.mrb[0].mxu0
        %v2190 = vadd.f32 0.0, %v2189
        %v2191 = vpop.f32.mrb[0].mxu0
        %v2192 = vpop.f32.mrb[0].mxu0
        %v2193 = vadd.f32 0.0, %v2192
        %v2194 = vpop.f32.mrb[0].mxu0
        %2195 = vdwg.mxu0
        %v2196 = vadd.f32 %v1998, %v2166
        %v2197 = vadd.f32 %v1999, %v2169
        %v2198 = vadd.f32 %v2000, %v2174
        %v2199 = vadd.f32 %v2001, %v2177
        %v2200 = vadd.f32 %v2002, %v2182
        %v2201 = vadd.f32 %v2003, %v2185
        %v2202 = vadd.f32 %v2004, %v2190
        %v2203 = vadd.f32 %v2005, %v2193
        %s2204 = scalar_lea.vmem [#allocation4], 24
        %v2205 = vld [vmem:[%s2204] sm:$0xf]
        %v2206 = vld [vmem:[%s2204 + $0x4] sm:$0xf]
        %v2207 = vld [vmem:[%s2204 + $0xc] sm:$0xf]
        %v2208 = vld [vmem:[%s2204 + $0x10] sm:$0xf]
        %v2209 = vld [vmem:[%s2204 + $0x18] sm:$0xf]
        %v2210 = vld [vmem:[%s2204 + $0x1c] sm:$0xf]
        %v2211 = vld [vmem:[%s2204 + $0x24] sm:$0xf]
        %v2212 = vld [vmem:[%s2204 + $0x28] sm:$0xf]
        %s2213 = scalar_lea.vmem [#allocation10], 384
        %v2214 = vld [vmem:[%s2213] sm:$0xf]
        %v2215 = vld [vmem:[%s2213 + $0x4] sm:$0xf]
        %v2216 = vld [vmem:[%s2213 + $0x8] sm:$0xf]
        %v2217 = vld [vmem:[%s2213 + $0xc] sm:$0xf]
        %v2218 = vld [vmem:[%s2213 + $0x10] sm:$0xf]
        %v2219 = vld [vmem:[%s2213 + $0x14] sm:$0xf]
        %v2220 = vld [vmem:[%s2213 + $0x18] sm:$0xf]
        %v2221 = vld [vmem:[%s2213 + $0x1c] sm:$0xf]
        %v2222 = vld [vmem:[%s2213 + $0x20] sm:$0xf]
        %v2223 = vld [vmem:[%s2213 + $0x24] sm:$0xf]
        %v2224 = vld [vmem:[%s2213 + $0x28] sm:$0xf]
        %v2225 = vld [vmem:[%s2213 + $0x2c] sm:$0xf]
        %v2226 = vld [vmem:[%s2213 + $0x30] sm:$0xf]
        %v2227 = vld [vmem:[%s2213 + $0x34] sm:$0xf]
        %v2228 = vld [vmem:[%s2213 + $0x38] sm:$0xf]
        %v2229 = vld [vmem:[%s2213 + $0x3c] sm:$0xf]
        %v2238 = vunpack.c.l.b16 %v2205
        %v2239 = vunpack.c.l.b16 %v2206
        %v2240 = vunpack.c.l.b16 %v2207
        %v2241 = vunpack.c.l.b16 %v2208
        %v2242 = vunpack.c.l.b16 %v2209
        %v2243 = vunpack.c.l.b16 %v2210
        %v2244 = vunpack.c.l.b16 %v2211
        %v2245 = vunpack.c.l.b16 %v2212
        %v2246 = vpack.c.b16 %v2239, %v2238
        %v2247 = vpack.c.b16 %v2241, %v2240
        %v2248 = vpack.c.b16 %v2243, %v2242
        %v2249 = vpack.c.b16 %v2245, %v2244
        %v2270 = vunpack.c.l.b16 %v2214
        %v2271 = vunpack.c.l.b16 %v2215
        %v2272 = vunpack.c.l.b16 %v2216
        %v2273 = vunpack.c.l.b16 %v2217
        %v2274 = vunpack.c.l.b16 %v2218
        %v2275 = vunpack.c.l.b16 %v2219
        %v2276 = vunpack.c.l.b16 %v2220
        %v2277 = vunpack.c.l.b16 %v2221
        %v2278 = vunpack.c.l.b16 %v2222
        %v2279 = vunpack.c.l.b16 %v2223
        %v2280 = vunpack.c.l.b16 %v2224
        %v2281 = vunpack.c.l.b16 %v2225
        %v2282 = vunpack.c.l.b16 %v2226
        %v2283 = vunpack.c.l.b16 %v2227
        %v2284 = vunpack.c.l.b16 %v2228
        %v2285 = vunpack.c.l.b16 %v2229
        %v2286 = vpack.c.b16 %v2271, %v2270
        %v2287 = vpack.c.b16 %v2273, %v2272
        %v2288 = vpack.c.b16 %v2275, %v2274
        %v2289 = vpack.c.b16 %v2277, %v2276
        %v2290 = vpack.c.b16 %v2279, %v2278
        %v2291 = vpack.c.b16 %v2281, %v2280
        %v2292 = vpack.c.b16 %v2283, %v2282
        %v2293 = vpack.c.b16 %v2285, %v2284
        %2302 = vmatprep.subr.bf16.mxu0 0
        %2303 = vmatpush1.bf16.msra.mxu0 %v2286
        %2304 = vmatprep.subr.bf16.mxu0 0
        %2305 = vmatpush1.bf16.msra.mxu0 %v2287
        %2306 = vmatprep.subr.bf16.mxu0 0
        %2307 = vmatpush1.bf16.msra.mxu0 %v2288
        %2308 = vmatprep.subr.bf16.mxu0 0
        %2309 = vmatpush1.bf16.msra.mxu0 %v2289
        %2310 = vmatprep.subr.bf16.mxu0 0
        %2311 = vmatpush1.bf16.msra.mxu0 %v2290
        %2312 = vmatprep.subr.bf16.mxu0 0
        %2313 = vmatpush1.bf16.msra.mxu0 %v2291
        %2314 = vmatprep.subr.bf16.mxu0 0
        %2315 = vmatpush1.bf16.msra.mxu0 %v2292
        %2316 = vmatprep.subr.bf16.mxu0 0
        %2317 = vmatpush1.bf16.msra.mxu0 %v2293
        %2318 = vmatprep.subr.bf16.mxu0 0
        %2319 = vmatpush1.bf16.msra.mxu0 0
        %2320 = vmatprep.subr.bf16.mxu0 0
        %2321 = vmatpush1.bf16.msra.mxu0 0
        %2322 = vmatprep.subr.bf16.mxu0 0
        %2323 = vmatpush1.bf16.msra.mxu0 0
        %2324 = vmatprep.subr.bf16.mxu0 0
        %2325 = vmatpush1.bf16.msra.mxu0 0
        %2326 = vmatprep.subr.bf16.mxu0 0
        %2327 = vmatpush1.bf16.msra.mxu0 0
        %2328 = vmatprep.subr.bf16.mxu0 0
        %2329 = vmatpush1.bf16.msra.mxu0 0
        %2330 = vmatprep.subr.bf16.mxu0 0
        %2331 = vmatpush1.bf16.msra.mxu0 0
        %2332 = vmatprep.subr.bf16.mxu0 0
        %2333 = vmatpush1.bf16.msra.mxu0 0
        %2334 = vmatprep.mubr.bf16.mxu0 0
        %2335 = vmatmul.mubr.bf16.gmra.mrb[0].mxu0 %v2246
        %v2336 = vpop.f32.mrb[0].mxu0
        %v2337 = vadd.f32 0.0, %v2336
        %v2338 = vpop.f32.mrb[0].mxu0
        %v2339 = vpop.f32.mrb[0].mxu0
        %v2340 = vadd.f32 0.0, %v2339
        %v2341 = vpop.f32.mrb[0].mxu0
        %2342 = vmatprep.mubr.bf16.mxu0 0
        %2343 = vmatmul.mubr.bf16.gmra.mrb[0].mxu0 %v2247
        %v2344 = vpop.f32.mrb[0].mxu0
        %v2345 = vadd.f32 0.0, %v2344
        %v2346 = vpop.f32.mrb[0].mxu0
        %v2347 = vpop.f32.mrb[0].mxu0
        %v2348 = vadd.f32 0.0, %v2347
        %v2349 = vpop.f32.mrb[0].mxu0
        %2350 = vmatprep.mubr.bf16.mxu0 0
        %2351 = vmatmul.mubr.bf16.gmra.mrb[0].mxu0 %v2248
        %v2352 = vpop.f32.mrb[0].mxu0
        %v2353 = vadd.f32 0.0, %v2352
        %v2354 = vpop.f32.mrb[0].mxu0
        %v2355 = vpop.f32.mrb[0].mxu0
        %v2356 = vadd.f32 0.0, %v2355
        %v2357 = vpop.f32.mrb[0].mxu0
        %2358 = vmatprep.mubr.bf16.mxu0 0
        %2359 = vmatmul.mubr.bf16.gmra.mrb[0].mxu0 %v2249
        %v2360 = vpop.f32.mrb[0].mxu0
        %v2361 = vadd.f32 0.0, %v2360
        %v2362 = vpop.f32.mrb[0].mxu0
        %v2363 = vpop.f32.mrb[0].mxu0
        %v2364 = vadd.f32 0.0, %v2363
        %v2365 = vpop.f32.mrb[0].mxu0
        %2366 = vdwg.mxu0
        %v2367 = vadd.f32 %v2196, %v2337
        %v2368 = vadd.f32 %v2197, %v2340
        %v2369 = vadd.f32 %v2198, %v2345
        %v2370 = vadd.f32 %v2199, %v2348
        %v2371 = vadd.f32 %v2200, %v2353
        %v2372 = vadd.f32 %v2201, %v2356
        %v2373 = vadd.f32 %v2202, %v2361
        %v2374 = vadd.f32 %v2203, %v2364
        %v2375 = vld [vmem:[%s2204] sm:$0xf]
        %v2376 = vld [vmem:[%s2204 + $0x4] sm:$0xf]
        %v2377 = vld [vmem:[%s2204 + $0x8] sm:$0x1]
        %v2378 = vld [vmem:[%s2204 + $0xc] sm:$0xf]
        %v2379 = vld [vmem:[%s2204 + $0x10] sm:$0xf]
        %v2380 = vld [vmem:[%s2204 + $0x14] sm:$0x1]
        %v2381 = vld [vmem:[%s2204 + $0x18] sm:$0xf]
        %v2382 = vld [vmem:[%s2204 + $0x1c] sm:$0xf]
        %v2383 = vld [vmem:[%s2204 + $0x20] sm:$0x1]
        %v2384 = vld [vmem:[%s2204 + $0x24] sm:$0xf]
        %v2385 = vld [vmem:[%s2204 + $0x28] sm:$0xf]
        %v2386 = vld [vmem:[%s2204 + $0x2c] sm:$0x1]
        %v2388 = vshrl.u32 %v2375, 16
        %v2390 = vrot.slane %v2388, 4
        %v2391 = vshll.u32 %v2375, 16
        %v2393 = vrot.slane %v2391, 5
        %v2394 = vor.u32 %v2390, %v2393
        %v2395 = vrot.slane %v2394, 4
        %v2397 = vshll.u32 %v2376, 16
        %v2399 = vrot.slane %v2397, 5
        %v2400 = vsel %vm997, %v2395, %v2399
        %v2401 = vshrl.u32 %v2376, 16
        %v2403 = vrot.slane %v2401, 4
        %v2404 = vor.u32 %v2403, %v2399
        %v2405 = vrot.slane %v2404, 4
        %v2407 = vshll.u32 %v2377, 16
        %v2409 = vrot.slane %v2407, 5
        %v2410 = vsel %vm997, %v2405, %v2409
        %v2412 = vshrl.u32 %v2378, 16
        %v2414 = vrot.slane %v2412, 4
        %v2415 = vshll.u32 %v2378, 16
        %v2417 = vrot.slane %v2415, 5
        %v2418 = vor.u32 %v2414, %v2417
        %v2419 = vrot.slane %v2418, 4
        %v2421 = vshll.u32 %v2379, 16
        %v2423 = vrot.slane %v2421, 5
        %v2424 = vsel %vm997, %v2419, %v2423
        %v2425 = vshrl.u32 %v2379, 16
        %v2427 = vrot.slane %v2425, 4
        %v2428 = vor.u32 %v2427, %v2423
        %v2429 = vrot.slane %v2428, 4
        %v2431 = vshll.u32 %v2380, 16
        %v2433 = vrot.slane %v2431, 5
        %v2434 = vsel %vm997, %v2429, %v2433
        %v2436 = vshrl.u32 %v2381, 16
        %v2438 = vrot.slane %v2436, 4
        %v2439 = vshll.u32 %v2381, 16
        %v2441 = vrot.slane %v2439, 5
        %v2442 = vor.u32 %v2438, %v2441
        %v2443 = vrot.slane %v2442, 4
        %v2445 = vshll.u32 %v2382, 16
        %v2447 = vrot.slane %v2445, 5
        %v2448 = vsel %vm997, %v2443, %v2447
        %v2449 = vshrl.u32 %v2382, 16
        %v2451 = vrot.slane %v2449, 4
        %v2452 = vor.u32 %v2451, %v2447
        %v2453 = vrot.slane %v2452, 4
        %v2455 = vshll.u32 %v2383, 16
        %v2457 = vrot.slane %v2455, 5
        %v2458 = vsel %vm997, %v2453, %v2457
        %v2460 = vshrl.u32 %v2384, 16
        %v2462 = vrot.slane %v2460, 4
        %v2463 = vshll.u32 %v2384, 16
        %v2465 = vrot.slane %v2463, 5
        %v2466 = vor.u32 %v2462, %v2465
        %v2467 = vrot.slane %v2466, 4
        %v2469 = vshll.u32 %v2385, 16
        %v2471 = vrot.slane %v2469, 5
        %v2472 = vsel %vm997, %v2467, %v2471
        %v2473 = vshrl.u32 %v2385, 16
        %v2475 = vrot.slane %v2473, 4
        %v2476 = vor.u32 %v2475, %v2471
        %v2477 = vrot.slane %v2476, 4
        %v2479 = vshll.u32 %v2386, 16
        %v2481 = vrot.slane %v2479, 5
        %v2482 = vsel %vm997, %v2477, %v2481
        %s2483 = scalar_lea.vmem [#allocation10], 448
        %v2484 = vld [vmem:[%s2483] sm:$0xf]
        %v2485 = vld [vmem:[%s2483 + $0x4] sm:$0xf]
        %v2486 = vld [vmem:[%s2483 + $0x8] sm:$0xf]
        %v2487 = vld [vmem:[%s2483 + $0xc] sm:$0xf]
        %v2488 = vld [vmem:[%s2483 + $0x10] sm:$0xf]
        %v2489 = vld [vmem:[%s2483 + $0x14] sm:$0xf]
        %v2490 = vld [vmem:[%s2483 + $0x18] sm:$0xf]
        %v2491 = vld [vmem:[%s2483 + $0x1c] sm:$0xf]
        %v2492 = vld [vmem:[%s2483 + $0x20] sm:$0xf]
        %v2493 = vld [vmem:[%s2483 + $0x24] sm:$0xf]
        %v2494 = vld [vmem:[%s2483 + $0x28] sm:$0xf]
        %v2495 = vld [vmem:[%s2483 + $0x2c] sm:$0xf]
        %v2496 = vld [vmem:[%s2483 + $0x30] sm:$0xf]
        %v2497 = vld [vmem:[%s2483 + $0x34] sm:$0xf]
        %v2498 = vld [vmem:[%s2483 + $0x38] sm:$0xf]
        %v2499 = vld [vmem:[%s2483 + $0x3c] sm:$0xf]
        %v2500 = vunpack.c.l.b16 %v2400
        %v2501 = vunpack.c.l.b16 %v2410
        %v2502 = vunpack.c.l.b16 %v2424
        %v2503 = vunpack.c.l.b16 %v2434
        %v2504 = vunpack.c.l.b16 %v2448
        %v2505 = vunpack.c.l.b16 %v2458
        %v2506 = vunpack.c.l.b16 %v2472
        %v2507 = vunpack.c.l.b16 %v2482
        %v2508 = vpack.c.b16 %v2501, %v2500
        %v2509 = vpack.c.b16 %v2503, %v2502
        %v2510 = vpack.c.b16 %v2505, %v2504
        %v2511 = vpack.c.b16 %v2507, %v2506
        %v2532 = vunpack.c.l.b16 %v2484
        %v2533 = vunpack.c.l.b16 %v2485
        %v2534 = vunpack.c.l.b16 %v2486
        %v2535 = vunpack.c.l.b16 %v2487
        %v2536 = vunpack.c.l.b16 %v2488
        %v2537 = vunpack.c.l.b16 %v2489
        %v2538 = vunpack.c.l.b16 %v2490
        %v2539 = vunpack.c.l.b16 %v2491
        %v2540 = vunpack.c.l.b16 %v2492
        %v2541 = vunpack.c.l.b16 %v2493
        %v2542 = vunpack.c.l.b16 %v2494
        %v2543 = vunpack.c.l.b16 %v2495
        %v2544 = vunpack.c.l.b16 %v2496
        %v2545 = vunpack.c.l.b16 %v2497
        %v2546 = vunpack.c.l.b16 %v2498
        %v2547 = vunpack.c.l.b16 %v2499
        %v2548 = vpack.c.b16 %v2533, %v2532
        %v2549 = vpack.c.b16 %v2535, %v2534
        %v2550 = vpack.c.b16 %v2537, %v2536
        %v2551 = vpack.c.b16 %v2539, %v2538
        %v2552 = vpack.c.b16 %v2541, %v2540
        %v2553 = vpack.c.b16 %v2543, %v2542
        %v2554 = vpack.c.b16 %v2545, %v2544
        %v2555 = vpack.c.b16 %v2547, %v2546
        %2564 = vmatprep.subr.bf16.mxu0 0
        %2565 = vmatpush1.bf16.msra.mxu0 %v2548
        %2566 = vmatprep.subr.bf16.mxu0 0
        %2567 = vmatpush1.bf16.msra.mxu0 %v2549
        %2568 = vmatprep.subr.bf16.mxu0 0
        %2569 = vmatpush1.bf16.msra.mxu0 %v2550
        %2570 = vmatprep.subr.bf16.mxu0 0
        %2571 = vmatpush1.bf16.msra.mxu0 %v2551
        %2572 = vmatprep.subr.bf16.mxu0 0
        %2573 = vmatpush1.bf16.msra.mxu0 %v2552
        %2574 = vmatprep.subr.bf16.mxu0 0
        %2575 = vmatpush1.bf16.msra.mxu0 %v2553
        %2576 = vmatprep.subr.bf16.mxu0 0
        %2577 = vmatpush1.bf16.msra.mxu0 %v2554
        %2578 = vmatprep.subr.bf16.mxu0 0
        %2579 = vmatpush1.bf16.msra.mxu0 %v2555
        %2580 = vmatprep.subr.bf16.mxu0 0
        %2581 = vmatpush1.bf16.msra.mxu0 0
        %2582 = vmatprep.subr.bf16.mxu0 0
        %2583 = vmatpush1.bf16.msra.mxu0 0
        %2584 = vmatprep.subr.bf16.mxu0 0
        %2585 = vmatpush1.bf16.msra.mxu0 0
        %2586 = vmatprep.subr.bf16.mxu0 0
        %2587 = vmatpush1.bf16.msra.mxu0 0
        %2588 = vmatprep.subr.bf16.mxu0 0
        %2589 = vmatpush1.bf16.msra.mxu0 0
        %2590 = vmatprep.subr.bf16.mxu0 0
        %2591 = vmatpush1.bf16.msra.mxu0 0
        %2592 = vmatprep.subr.bf16.mxu0 0
        %2593 = vmatpush1.bf16.msra.mxu0 0
        %2594 = vmatprep.subr.bf16.mxu0 0
        %2595 = vmatpush1.bf16.msra.mxu0 0
        %2596 = vmatprep.mubr.bf16.mxu0 0
        %2597 = vmatmul.mubr.bf16.gmra.mrb[0].mxu0 %v2508
        %v2598 = vpop.f32.mrb[0].mxu0
        %v2599 = vadd.f32 0.0, %v2598
        %v2600 = vpop.f32.mrb[0].mxu0
        %v2601 = vpop.f32.mrb[0].mxu0
        %v2602 = vadd.f32 0.0, %v2601
        %v2603 = vpop.f32.mrb[0].mxu0
        %2604 = vmatprep.mubr.bf16.mxu0 0
        %2605 = vmatmul.mubr.bf16.gmra.mrb[0].mxu0 %v2509
        %v2606 = vpop.f32.mrb[0].mxu0
        %v2607 = vadd.f32 0.0, %v2606
        %v2608 = vpop.f32.mrb[0].mxu0
        %v2609 = vpop.f32.mrb[0].mxu0
        %v2610 = vadd.f32 0.0, %v2609
        %v2611 = vpop.f32.mrb[0].mxu0
        %2612 = vmatprep.mubr.bf16.mxu0 0
        %2613 = vmatmul.mubr.bf16.gmra.mrb[0].mxu0 %v2510
        %v2614 = vpop.f32.mrb[0].mxu0
        %v2615 = vadd.f32 0.0, %v2614
        %v2616 = vpop.f32.mrb[0].mxu0
        %v2617 = vpop.f32.mrb[0].mxu0
        %v2618 = vadd.f32 0.0, %v2617
        %v2619 = vpop.f32.mrb[0].mxu0
        %2620 = vmatprep.mubr.bf16.mxu0 0
        %2621 = vmatmul.mubr.bf16.gmra.mrb[0].mxu0 %v2511
        %v2622 = vpop.f32.mrb[0].mxu0
        %v2623 = vadd.f32 0.0, %v2622
        %v2624 = vpop.f32.mrb[0].mxu0
        %v2625 = vpop.f32.mrb[0].mxu0
        %v2626 = vadd.f32 0.0, %v2625
        %v2627 = vpop.f32.mrb[0].mxu0
        %2628 = vdwg.mxu0
        %v2629 = vadd.f32 %v2367, %v2599
        %v2630 = vadd.f32 %v2368, %v2602
        %v2631 = vadd.f32 %v2369, %v2607
        %v2632 = vadd.f32 %v2370, %v2610
        %v2633 = vadd.f32 %v2371, %v2615
        %v2634 = vadd.f32 %v2372, %v2618
        %v2635 = vadd.f32 %v2373, %v2623
        %v2636 = vadd.f32 %v2374, %v2626
        %v2637 = vld [vmem:[%s2204] sm:$0xe]
        %v2638 = vld [vmem:[%s2204 + $0xc] sm:$0xe]
        %v2639 = vld [vmem:[%s2204 + $0x18] sm:$0xe]
        %v2640 = vld [vmem:[%s2204 + $0x24] sm:$0xe]
        %v2653 = vrot.slane %v2637, 5
        %v2654 = vrot.slane %v2653, 4
        %v2655 = vrot.slane %v2376, 5
        %v2656 = vsel %vm1391, %v2654, %v2655
        %v2657 = vrot.slane %v2655, 4
        %v2658 = vrot.slane %v2377, 5
        %v2659 = vsel %vm1391, %v2657, %v2658
        %v2660 = vrot.slane %v2638, 5
        %v2661 = vrot.slane %v2660, 4
        %v2662 = vrot.slane %v2379, 5
        %v2663 = vsel %vm1391, %v2661, %v2662
        %v2664 = vrot.slane %v2662, 4
        %v2665 = vrot.slane %v2380, 5
        %v2666 = vsel %vm1391, %v2664, %v2665
        %v2667 = vrot.slane %v2639, 5
        %v2668 = vrot.slane %v2667, 4
        %v2669 = vrot.slane %v2382, 5
        %v2670 = vsel %vm1391, %v2668, %v2669
        %v2671 = vrot.slane %v2669, 4
        %v2672 = vrot.slane %v2383, 5
        %v2673 = vsel %vm1391, %v2671, %v2672
        %v2674 = vrot.slane %v2640, 5
        %v2675 = vrot.slane %v2674, 4
        %v2676 = vrot.slane %v2385, 5
        %v2677 = vsel %vm1391, %v2675, %v2676
        %v2678 = vrot.slane %v2676, 4
        %v2679 = vrot.slane %v2386, 5
        %v2680 = vsel %vm1391, %v2678, %v2679
        %s2681 = scalar_lea.vmem [#allocation10], 512
        %v2682 = vld [vmem:[%s2681] sm:$0xf]
        %v2683 = vld [vmem:[%s2681 + $0x4] sm:$0xf]
        %v2684 = vld [vmem:[%s2681 + $0x8] sm:$0xf]
        %v2685 = vld [vmem:[%s2681 + $0xc] sm:$0xf]
        %v2686 = vld [vmem:[%s2681 + $0x10] sm:$0xf]
        %v2687 = vld [vmem:[%s2681 + $0x14] sm:$0xf]
        %v2688 = vld [vmem:[%s2681 + $0x18] sm:$0xf]
        %v2689 = vld [vmem:[%s2681 + $0x1c] sm:$0xf]
        %v2690 = vld [vmem:[%s2681 + $0x20] sm:$0xf]
        %v2691 = vld [vmem:[%s2681 + $0x24] sm:$0xf]
        %v2692 = vld [vmem:[%s2681 + $0x28] sm:$0xf]
        %v2693 = vld [vmem:[%s2681 + $0x2c] sm:$0xf]
        %v2694 = vld [vmem:[%s2681 + $0x30] sm:$0xf]
        %v2695 = vld [vmem:[%s2681 + $0x34] sm:$0xf]
        %v2696 = vld [vmem:[%s2681 + $0x38] sm:$0xf]
        %v2697 = vld [vmem:[%s2681 + $0x3c] sm:$0xf]
        %v2698 = vunpack.c.l.b16 %v2656
        %v2699 = vunpack.c.l.b16 %v2659
        %v2700 = vunpack.c.l.b16 %v2663
        %v2701 = vunpack.c.l.b16 %v2666
        %v2702 = vunpack.c.l.b16 %v2670
        %v2703 = vunpack.c.l.b16 %v2673
        %v2704 = vunpack.c.l.b16 %v2677
        %v2705 = vunpack.c.l.b16 %v2680
        %v2706 = vpack.c.b16 %v2699, %v2698
        %v2707 = vpack.c.b16 %v2701, %v2700
        %v2708 = vpack.c.b16 %v2703, %v2702
        %v2709 = vpack.c.b16 %v2705, %v2704
        %v2730 = vunpack.c.l.b16 %v2682
        %v2731 = vunpack.c.l.b16 %v2683
        %v2732 = vunpack.c.l.b16 %v2684
        %v2733 = vunpack.c.l.b16 %v2685
        %v2734 = vunpack.c.l.b16 %v2686
        %v2735 = vunpack.c.l.b16 %v2687
        %v2736 = vunpack.c.l.b16 %v2688
        %v2737 = vunpack.c.l.b16 %v2689
        %v2738 = vunpack.c.l.b16 %v2690
        %v2739 = vunpack.c.l.b16 %v2691
        %v2740 = vunpack.c.l.b16 %v2692
        %v2741 = vunpack.c.l.b16 %v2693
        %v2742 = vunpack.c.l.b16 %v2694
        %v2743 = vunpack.c.l.b16 %v2695
        %v2744 = vunpack.c.l.b16 %v2696
        %v2745 = vunpack.c.l.b16 %v2697
        %v2746 = vpack.c.b16 %v2731, %v2730
        %v2747 = vpack.c.b16 %v2733, %v2732
        %v2748 = vpack.c.b16 %v2735, %v2734
        %v2749 = vpack.c.b16 %v2737, %v2736
        %v2750 = vpack.c.b16 %v2739, %v2738
        %v2751 = vpack.c.b16 %v2741, %v2740
        %v2752 = vpack.c.b16 %v2743, %v2742
        %v2753 = vpack.c.b16 %v2745, %v2744
        %2762 = vmatprep.subr.bf16.mxu0 0
        %2763 = vmatpush1.bf16.msra.mxu0 %v2746
        %2764 = vmatprep.subr.bf16.mxu0 0
        %2765 = vmatpush1.bf16.msra.mxu0 %v2747
        %2766 = vmatprep.subr.bf16.mxu0 0
        %2767 = vmatpush1.bf16.msra.mxu0 %v2748
        %2768 = vmatprep.subr.bf16.mxu0 0
        %2769 = vmatpush1.bf16.msra.mxu0 %v2749
        %2770 = vmatprep.subr.bf16.mxu0 0
        %2771 = vmatpush1.bf16.msra.mxu0 %v2750
        %2772 = vmatprep.subr.bf16.mxu0 0
        %2773 = vmatpush1.bf16.msra.mxu0 %v2751
        %2774 = vmatprep.subr.bf16.mxu0 0
        %2775 = vmatpush1.bf16.msra.mxu0 %v2752
        %2776 = vmatprep.subr.bf16.mxu0 0
        %2777 = vmatpush1.bf16.msra.mxu0 %v2753
        %2778 = vmatprep.subr.bf16.mxu0 0
        %2779 = vmatpush1.bf16.msra.mxu0 0
        %2780 = vmatprep.subr.bf16.mxu0 0
        %2781 = vmatpush1.bf16.msra.mxu0 0
        %2782 = vmatprep.subr.bf16.mxu0 0
        %2783 = vmatpush1.bf16.msra.mxu0 0
        %2784 = vmatprep.subr.bf16.mxu0 0
        %2785 = vmatpush1.bf16.msra.mxu0 0
        %2786 = vmatprep.subr.bf16.mxu0 0
        %2787 = vmatpush1.bf16.msra.mxu0 0
        %2788 = vmatprep.subr.bf16.mxu0 0
        %2789 = vmatpush1.bf16.msra.mxu0 0
        %2790 = vmatprep.subr.bf16.mxu0 0
        %2791 = vmatpush1.bf16.msra.mxu0 0
        %2792 = vmatprep.subr.bf16.mxu0 0
        %2793 = vmatpush1.bf16.msra.mxu0 0
        %2794 = vmatprep.mubr.bf16.mxu0 0
        %2795 = vmatmul.mubr.bf16.gmra.mrb[0].mxu0 %v2706
        %v2796 = vpop.f32.mrb[0].mxu0
        %v2797 = vadd.f32 0.0, %v2796
        %v2798 = vpop.f32.mrb[0].mxu0
        %v2799 = vpop.f32.mrb[0].mxu0
        %v2800 = vadd.f32 0.0, %v2799
        %v2801 = vpop.f32.mrb[0].mxu0
        %2802 = vmatprep.mubr.bf16.mxu0 0
        %2803 = vmatmul.mubr.bf16.gmra.mrb[0].mxu0 %v2707
        %v2804 = vpop.f32.mrb[0].mxu0
        %v2805 = vadd.f32 0.0, %v2804
        %v2806 = vpop.f32.mrb[0].mxu0
        %v2807 = vpop.f32.mrb[0].mxu0
        %v2808 = vadd.f32 0.0, %v2807
        %v2809 = vpop.f32.mrb[0].mxu0
        %2810 = vmatprep.mubr.bf16.mxu0 0
        %2811 = vmatmul.mubr.bf16.gmra.mrb[0].mxu0 %v2708
        %v2812 = vpop.f32.mrb[0].mxu0
        %v2813 = vadd.f32 0.0, %v2812
        %v2814 = vpop.f32.mrb[0].mxu0
        %v2815 = vpop.f32.mrb[0].mxu0
        %v2816 = vadd.f32 0.0, %v2815
        %v2817 = vpop.f32.mrb[0].mxu0
        %2818 = vmatprep.mubr.bf16.mxu0 0
        %2819 = vmatmul.mubr.bf16.gmra.mrb[0].mxu0 %v2709
        %v2820 = vpop.f32.mrb[0].mxu0
        %v2821 = vadd.f32 0.0, %v2820
        %v2822 = vpop.f32.mrb[0].mxu0
        %v2823 = vpop.f32.mrb[0].mxu0
        %v2824 = vadd.f32 0.0, %v2823
        %v2825 = vpop.f32.mrb[0].mxu0
        %2826 = vdwg.mxu0
        %v2827 = vadd.f32 %v2629, %v2797
        %v2828 = vadd.f32 %v2630, %v2800
        %v2829 = vadd.f32 %v2631, %v2805
        %v2830 = vadd.f32 %v2632, %v2808
        %v2831 = vadd.f32 %v2633, %v2813
        %v2832 = vadd.f32 %v2634, %v2816
        %v2833 = vadd.f32 %v2635, %v2821
        %v2834 = vadd.f32 %v2636, %v2824
        %v2835 = vld [vmem:[%s5] sm:$0x1]
        %v2837 = vlaneseq
        %v2838 = vshrl.u32 %v2837, 7
        %v2839 = vsub.s32 0, %v2838
        %v2840 = vrot.slane %v2835, %v2839
        %v2842 = vadd.f32 %v2827, %v2840
        %v2843 = vadd.f32 %v2828, %v2840
        %v2844 = vadd.f32 %v2829, %v2840
        %v2845 = vadd.f32 %v2830, %v2840
        %v2846 = vadd.f32 %v2831, %v2840
        %v2847 = vadd.f32 %v2832, %v2840
        %v2848 = vadd.f32 %v2833, %v2840
        %v2849 = vadd.f32 %v2834, %v2840
        %v2850 = vmax.f32 %v2842, 0.0
        %v2851 = vmax.f32 %v2843, 0.0
        %v2852 = vmax.f32 %v2844, 0.0
        %v2853 = vmax.f32 %v2845, 0.0
        %v2854 = vmax.f32 %v2846, 0.0
        %v2855 = vmax.f32 %v2847, 0.0
        %v2856 = vmax.f32 %v2848, 0.0
        %v2857 = vmax.f32 %v2849, 0.0
        %v2858 = vpack.c.bf16 %v2851, %v2850
        %v2859 = vpack.c.bf16 %v2853, %v2852
        %v2860 = vpack.c.bf16 %v2855, %v2854
        %v2861 = vpack.c.bf16 %v2857, %v2856
        %v2862 = vld [vmem:[#allocation11] sm:$0xf]
        %v2863 = vld [vmem:[#allocation11 + $0x4] sm:$0xf]
        %v2864 = vld [vmem:[#allocation11 + $0x8] sm:$0xf]
        %v2865 = vld [vmem:[#allocation11 + $0xc] sm:$0xf]
        %v2866 = vld [vmem:[#allocation11 + $0x10] sm:$0xf]
        %v2867 = vld [vmem:[#allocation11 + $0x14] sm:$0xf]
        %v2868 = vld [vmem:[#allocation11 + $0x18] sm:$0xf]
        %v2869 = vld [vmem:[#allocation11 + $0x1c] sm:$0xf]
        %v2870 = vld [vmem:[#allocation11 + $0x20] sm:$0xf]
        %v2871 = vld [vmem:[#allocation11 + $0x24] sm:$0xf]
        %v2872 = vld [vmem:[#allocation11 + $0x28] sm:$0xf]
        %v2873 = vld [vmem:[#allocation11 + $0x2c] sm:$0xf]
        %v2874 = vld [vmem:[#allocation11 + $0x30] sm:$0xf]
        %v2875 = vld [vmem:[#allocation11 + $0x34] sm:$0xf]
        %v2876 = vld [vmem:[#allocation11 + $0x38] sm:$0xf]
        %v2877 = vld [vmem:[#allocation11 + $0x3c] sm:$0xf]
        %v2878 = vld [vmem:[%s7] sm:$0x1]
        %v2880 = vlaneseq
        %v2881 = vshrl.u32 %v2880, 7
        %v2882 = vsub.s32 0, %v2881
        %v2883 = vrot.slane %v2878, %v2882
        %v2901 = vunpack.c.l.b16 %v2862
        %v2902 = vunpack.c.l.b16 %v2863
        %v2903 = vunpack.c.l.b16 %v2864
        %v2904 = vunpack.c.l.b16 %v2865
        %v2905 = vunpack.c.l.b16 %v2866
        %v2906 = vunpack.c.l.b16 %v2867
        %v2907 = vunpack.c.l.b16 %v2868
        %v2908 = vunpack.c.l.b16 %v2869
        %v2909 = vunpack.c.l.b16 %v2870
        %v2910 = vunpack.c.l.b16 %v2871
        %v2911 = vunpack.c.l.b16 %v2872
        %v2912 = vunpack.c.l.b16 %v2873
        %v2913 = vunpack.c.l.b16 %v2874
        %v2914 = vunpack.c.l.b16 %v2875
        %v2915 = vunpack.c.l.b16 %v2876
        %v2916 = vunpack.c.l.b16 %v2877
        %v2917 = vpack.c.b16 %v2902, %v2901
        %v2918 = vpack.c.b16 %v2904, %v2903
        %v2919 = vpack.c.b16 %v2906, %v2905
        %v2920 = vpack.c.b16 %v2908, %v2907
        %v2921 = vpack.c.b16 %v2910, %v2909
        %v2922 = vpack.c.b16 %v2912, %v2911
        %v2923 = vpack.c.b16 %v2914, %v2913
        %v2924 = vpack.c.b16 %v2916, %v2915
        %2933 = vmatprep.subr.bf16.mxu0 0
        %2934 = vmatpush1.bf16.msra.mxu0 %v2917
        %2935 = vmatprep.subr.bf16.mxu0 0
        %2936 = vmatpush1.bf16.msra.mxu0 %v2918
        %2937 = vmatprep.subr.bf16.mxu0 0
        %2938 = vmatpush1.bf16.msra.mxu0 %v2919
        %2939 = vmatprep.subr.bf16.mxu0 0
        %2940 = vmatpush1.bf16.msra.mxu0 %v2920
        %2941 = vmatprep.subr.bf16.mxu0 0
        %2942 = vmatpush1.bf16.msra.mxu0 %v2921
        %2943 = vmatprep.subr.bf16.mxu0 0
        %2944 = vmatpush1.bf16.msra.mxu0 %v2922
        %2945 = vmatprep.subr.bf16.mxu0 0
        %2946 = vmatpush1.bf16.msra.mxu0 %v2923
        %2947 = vmatprep.subr.bf16.mxu0 0
        %2948 = vmatpush1.bf16.msra.mxu0 %v2924
        %2949 = vmatprep.subr.bf16.mxu0 0
        %2950 = vmatpush1.bf16.msra.mxu0 0
        %2951 = vmatprep.subr.bf16.mxu0 0
        %2952 = vmatpush1.bf16.msra.mxu0 0
        %2953 = vmatprep.subr.bf16.mxu0 0
        %2954 = vmatpush1.bf16.msra.mxu0 0
        %2955 = vmatprep.subr.bf16.mxu0 0
        %2956 = vmatpush1.bf16.msra.mxu0 0
        %2957 = vmatprep.subr.bf16.mxu0 0
        %2958 = vmatpush1.bf16.msra.mxu0 0
        %2959 = vmatprep.subr.bf16.mxu0 0
        %2960 = vmatpush1.bf16.msra.mxu0 0
        %2961 = vmatprep.subr.bf16.mxu0 0
        %2962 = vmatpush1.bf16.msra.mxu0 0
        %2963 = vmatprep.subr.bf16.mxu0 0
        %2964 = vmatpush1.bf16.msra.mxu0 0
        %2965 = vmatprep.mubr.bf16.mxu0 0
        %2966 = vmatmul.mubr.bf16.gmra.mrb[0].mxu0 %v2858
        %v2967 = vpop.f32.mrb[0].mxu0
        %v2968 = vadd.f32 %v2883, %v2967
        %v2969 = vpop.f32.mrb[0].mxu0
        %v2970 = vpop.f32.mrb[0].mxu0
        %v2971 = vadd.f32 %v2883, %v2970
        %v2972 = vpop.f32.mrb[0].mxu0
        %2973 = vmatprep.mubr.bf16.mxu0 0
        %2974 = vmatmul.mubr.bf16.gmra.mrb[0].mxu0 %v2859
        %v2975 = vpop.f32.mrb[0].mxu0
        %v2976 = vadd.f32 %v2883, %v2975
        %v2977 = vpop.f32.mrb[0].mxu0
        %v2978 = vpop.f32.mrb[0].mxu0
        %v2979 = vadd.f32 %v2883, %v2978
        %v2980 = vpop.f32.mrb[0].mxu0
        %2981 = vmatprep.mubr.bf16.mxu0 0
        %2982 = vmatmul.mubr.bf16.gmra.mrb[0].mxu0 %v2860
        %v2983 = vpop.f32.mrb[0].mxu0
        %v2984 = vadd.f32 %v2883, %v2983
        %v2985 = vpop.f32.mrb[0].mxu0
        %v2986 = vpop.f32.mrb[0].mxu0
        %v2987 = vadd.f32 %v2883, %v2986
        %v2988 = vpop.f32.mrb[0].mxu0
        %2989 = vmatprep.mubr.bf16.mxu0 0
        %2990 = vmatmul.mubr.bf16.gmra.mrb[0].mxu0 %v2861
        %v2991 = vpop.f32.mrb[0].mxu0
        %v2992 = vadd.f32 %v2883, %v2991
        %v2993 = vpop.f32.mrb[0].mxu0
        %v2994 = vpop.f32.mrb[0].mxu0
        %v2995 = vadd.f32 %v2883, %v2994
        %v2996 = vpop.f32.mrb[0].mxu0
        %2997 = vdwg.mxu0
        %v2998 = vunpack.c.l.bf16 %v445
        %v2999 = vunpack.c.l.bf16 %v446
        %v3000 = vunpack.c.l.bf16 %v447
        %v3001 = vunpack.c.l.bf16 %v448
        %v3002 = vunpack.c.l.bf16 %v449
        %v3003 = vunpack.c.l.bf16 %v450
        %v3004 = vunpack.c.l.bf16 %v451
        %v3005 = vunpack.c.l.bf16 %v452
        %v3006 = vadd.f32 %v2968, %v2998
        %v3007 = vadd.f32 %v2971, %v2999
        %v3008 = vadd.f32 %v2976, %v3000
        %v3009 = vadd.f32 %v2979, %v3001
        %v3010 = vadd.f32 %v2984, %v3002
        %v3011 = vadd.f32 %v2987, %v3003
        %v3012 = vadd.f32 %v2992, %v3004
        %v3013 = vadd.f32 %v2995, %v3005
        %v3014 = vmax.f32 %v3006, 0.0
        %v3015 = vmax.f32 %v3007, 0.0
        %v3016 = vmax.f32 %v3008, 0.0
        %v3017 = vmax.f32 %v3009, 0.0
        %v3018 = vmax.f32 %v3010, 0.0
        %v3019 = vmax.f32 %v3011, 0.0
        %v3020 = vmax.f32 %v3012, 0.0
        %v3021 = vmax.f32 %v3013, 0.0
        %v3022 = vpack.c.bf16 %v3015, %v3014
        %v3023 = vpack.c.bf16 %v3017, %v3016
        %v3024 = vpack.c.bf16 %v3019, %v3018
        %v3025 = vpack.c.bf16 %v3021, %v3020
        %v3030 = vunpack.c.l.b16 %v3022
        %v3031 = vunpack.c.h.b16 %v3022
        %v3032 = vunpack.c.l.b16 %v3023
        %v3033 = vunpack.c.h.b16 %v3023
        %v3034 = vunpack.c.l.b16 %v3024
        %v3035 = vunpack.c.h.b16 %v3024
        %v3036 = vunpack.c.l.b16 %v3025
        %v3037 = vunpack.c.h.b16 %v3025
        %v3038 = vpack.c.b16 %v3030, %v3030
        %v3039 = vpack.c.b16 %v3031, %v3031
        %v3040 = vpack.c.b16 %v3032, %v3032
        %v3041 = vpack.c.b16 %v3033, %v3033
        %v3042 = vpack.c.b16 %v3034, %v3034
        %v3043 = vpack.c.b16 %v3035, %v3035
        %v3044 = vpack.c.b16 %v3036, %v3036
        %v3045 = vpack.c.b16 %v3037, %v3037
        %3054 = vst [vmem:[%s360] sm:$0xf] %v3038
        %3055 = vst [vmem:[%s360 + $0x4] sm:$0xf] %v3039
        %3056 = vst [vmem:[%s360 + $0x8] sm:$0xf] %v3040
        %3057 = vst [vmem:[%s360 + $0xc] sm:$0xf] %v3041
        %3058 = vst [vmem:[%s360 + $0x10] sm:$0xf] %v3042
        %3059 = vst [vmem:[%s360 + $0x14] sm:$0xf] %v3043
        %3060 = vst [vmem:[%s360 + $0x18] sm:$0xf] %v3044
        %3061 = vst [vmem:[%s360 + $0x1c] sm:$0xf] %v3045
        %s3062 = sand.u32 %s203, 1
        %s3063 = scalar_lea.sflag [#allocation7], %s3062
        %s3064 = sand.u32 %s203, 1
        %s3065 = smul.addr %s3064, 32
        %s3066 = scalar_lea.vmem [#allocation13], %s3065
        // Predicated region
        $region73: #{tpu_custom_call.1} parent=47 // pred_check
          %p3067 = pneg %p213
        $region74: #{tpu_custom_call.1} parent=47 // pred_check_branch
          %3069 = sbr.rel (%p3067) target = $region76
        $region75: #{tpu_custom_call.1} parent=47 // pred_region
          %s3070 = smul.u32 4, %s32
          %s3072 = ssub.s32 512, 512
          %3073 = vsyncadd %s3063, %s3072
          %s3074 = smul.addr %s3070, 2
          %s3075 = smul.addr %s31, 32
          %s3076 = sadd.s32 %s3074, %s3075
          %s3077 = smul.addr %s3076, 64
          %s3078 = scalar_lea.hbm %s8, %s3077
          %s3079 = sshll.u32 %s3066, 4
          %s3080 = int_to_ptr.vmem [resolvable:$true] %s3079
          %3085 = dma.vmem_to_hbm [thread:$0]  %s3080, 512, %s3078, %s3063, 64, 64, 4
        $region76: #{tpu_custom_call.1} parent=47 // pred_fallthru
          _
      $region48: #{tpu_custom_call.1} parent=5 // pred_fallthru
        _
      %p3086 = scmp.le.s32.totalorder 2, %s22
      // Predicated region
      $region77: #{tpu_custom_call.1} parent=5 // pred_check
        %p3087 = pneg %p3086
      $region78: #{tpu_custom_call.1} parent=5 // pred_check_branch
        %3089 = sbr.rel (%p3087) target = $region80
      $region79: #{tpu_custom_call.1} parent=5 // pred_region
        %s3090 = ssub.s32 %s22, 2
        // Predicated region
        $region81: #{tpu_custom_call.1} parent=79 // pred_check
          %p3091 = pneg %p219
        $region82: #{tpu_custom_call.1} parent=79 // pred_check_branch
          %3093 = sbr.rel (%p3091) target = $region84
        $region83: #{tpu_custom_call.1} parent=79 // pred_region
          %s3094 = sand.u32 %s204, 1
          %s3095 = scalar_lea.sflag [#allocation7], %s3094
          %s3096 = sand.u32 %s204, 1
          %s3097 = smul.addr %s3096, 32
          %s3098 = scalar_lea.vmem [#allocation13], %s3097
          %3099 = dma.done %s3095, 512
        $region84: #{tpu_custom_call.1} parent=79 // pred_fallthru
          _
      $region80: #{tpu_custom_call.1} parent=5 // pred_fallthru
        _
    $region6: #{tpu_custom_call.1} parent=1 // loop_footer
      %s26 = sadd.s32 1, %s22
    $region7: #{tpu_custom_call.1} parent=1 // loop_footer_branch
      %21 = sbr.rel target = $region3
    $region8: #{tpu_custom_call.1} parent=1 // loop_exit
      _
    %3100 = vsyncpa [#allocation6], 1
    %s3101 = scalar_lea.sflag [#allocation6], 1
    %3102 = vsyncpa %s3101, 1
    %3103 = vsyncpa [#allocation9], 1
    %3104 = vsyncpa [#allocation12], 1
    %3105 = vsyncpa [#allocation7], 1
    %s3106 = scalar_lea.sflag [#allocation7], 1
    %3107 = vsyncpa %s3106, 1
  %3108 = vsyncmov [#allocation3]
  %s3109 = vpop.sfrf %3108
  %p3110 = scmp.eq.s32.totalorder %s3109, 0
  %p3111 = pneg %p3110
  %3113 = shalt.err (%p3111)
  %s3114 = scalar_lea.sflag [#allocation3], 1
  %3115 = vsyncmov %s3114
  %s3116 = vpop.sfrf %3115
  %p3117 = scmp.eq.s32.totalorder %s3116, 0
  %p3118 = pneg %p3117
  %3120 = shalt.err (%p3118)

// kernel: tpu_custom_call.1
$region0: #{tpu_custom_call.1}
  #allocation0 [shape = 'u32[]', space=smem, size = 0x4, offset = 0x4, fixed_abs, tag = 'smem constant byte address 0x4 - core index']
  #allocation1 [shape = 'u32[144,128]{1,0:T(1,128)}', space=vmem, size = 0x12000, scoped, tag = 'internal scratch']
  #allocation2 [shape = 'bf16[2,16,128]{2,1,0:T(16,128)(2,1)}', space=vmem, size = 0x2000, scoped, tag = 'scratch operand']
  #allocation3 [shape = 's32[2]{0}', space=sflag, size = 0x8, scoped, tag = 'scratch operand']
  #allocation4 [shape = 'bf16[6,18,128]{2,1,0:T(8,128)(2,1)}', space=vmem, size = 0x9000, scoped, tag = 'scratch operand']
  #allocation14 [shape = 's32[]', space=sflag, size = 0x4, offset = 0, fixed_abs, tag = 'sflag constant byte address 0x0 - dummy sync flag']
  #allocation15 [shape = 's32[]', space=sflag, size = 0x4, offset = 0, fixed_abs, tag = 'sflag constant byte address 0x0 - dummy sync flag']
  #allocation16 [shape = 'u32[]', space=smem, size = 0x4, offset = 0x44, fixed_abs, tag = 'smem constant byte address 0x44 - assertion arg 0']
  #allocation17 [shape = 'u32[]', space=smem, size = 0x4, offset = 0x48, fixed_abs, tag = 'smem constant byte address 0x48 - assertion arg 1']
  #allocation18 [shape = 's32[]', space=sflag, size = 0x4, offset = 0, fixed_abs, tag = 'sflag constant byte address 0x0 - dummy sync flag']
  #allocation19 [shape = 's32[]', space=sflag, size = 0x4, offset = 0, fixed_abs, tag = 'sflag constant byte address 0x0 - dummy sync flag']
  %s0 = inlined_call_operand.hbm [shape: bf16[2,16,16,128], index: 0, kind: input, shape index: {}]
  %s1 = inlined_call_operand.hbm [shape: bf16[2,16,16,128], index: 1, kind: input, shape index: {}]
  %s2 = inlined_call_operand.hbm [shape: bf16[128,128], index: 2, kind: input, shape index: {}]
  %s3 = inlined_call_operand.vmem [shape: f32[1,128], index: 3, kind: input, shape index: {}]
  %s4 = inlined_call_operand.hbm [shape: bf16[9,128,128], index: 4, kind: input, shape index: {}]
  %s5 = inlined_call_operand.vmem [shape: f32[1,128], index: 5, kind: input, shape index: {}]
  %s6 = inlined_call_operand.hbm [shape: bf16[128,128], index: 6, kind: input, shape index: {}]
  %s7 = inlined_call_operand.vmem [shape: f32[1,128], index: 7, kind: input, shape index: {}]
  %s8 = inlined_call_operand.hbm [shape: bf16[2,16,16,128], index: 8, kind: output, shape index: {}]
  %s9 = sld [smem:[#allocation0]]
  $region85: #{tpu_custom_call.1} parent=0
    _
  %s11 = ssub.s32 1, %s9
  %s12 = scalar_select 0, %s11, %s9
  $region1: #{tpu_custom_call.1} parent=0
    #allocation5 [shape = 'u8[32768]{0}', space=vmem, size = 0x8000, scoped, tag = 'input window, operand 0']
    #allocation6 [shape = 's32[2]{0}', space=sflag, size = 0x8, scoped, tag = 'scoped memory for tpu_custom_call.1']
    #allocation7 [shape = 's32[2]{0}', space=sflag, size = 0x8, scoped, tag = 'scoped memory for tpu_custom_call.1']
    #allocation8 [shape = 'u8[32768]{0}', space=vmem, size = 0x8000, scoped, tag = 'input window, operand 2, single buffered']
    #allocation9 [shape = 's32[1]{0}', space=sflag, size = 0x4, scoped, tag = 'scoped memory for tpu_custom_call.1']
    #allocation10 [shape = 'u8[294912]{0}', space=vmem, size = 0x48000, scoped, tag = 'input window, operand 4, single buffered']
    #allocation11 [shape = 'u8[32768]{0}', space=vmem, size = 0x8000, scoped, tag = 'input window, operand 6, single buffered']
    #allocation12 [shape = 's32[1]{0}', space=sflag, size = 0x4, scoped, tag = 'scoped memory for tpu_custom_call.1']
    #allocation13 [shape = 'u8[32768]{0}', space=vmem, size = 0x8000, scoped, tag = 'output window, operand 0']
    %13 = vsyncpa [#allocation6], 0
    %s14 = scalar_lea.sflag [#allocation6], 1
    %15 = vsyncpa %s14, 0
    %16 = vsyncpa [#allocation9], 0
    %17 = vsyncpa [#allocation12], 0
    %18 = vsyncpa [#allocation7], 0
    %s19 = scalar_lea.sflag [#allocation7], 1
    %20 = vsyncpa %s19, 0
    loop: start=0, step=1, limit=10
    $region2: #{tpu_custom_call.1} parent=1 // loop_pre_header
      _
    $region3: #{tpu_custom_call.1} parent=1 // loop_header
      %s22 = sphi 0, %s26
      %p23 = scmp.ge.s32.totalorder %s22, 10
      %s29 = sphi 0, %s41
      %s30 = sphi 0, %s37
      %s31 = sphi 0, %s29
      %s32 = sphi 0, %s30
      %s33 = sphi 0, %s31
      %s34 = sphi 0, %s32
      %s46 = sphi 0, %s48
      %s49 = sphi 0, %s46
      %s50 = sphi 0, %s49
      %s66 = sphi 0, %s50
      %s70 = sphi 0, %s70
      %s72 = sphi 0, %s70
      %s73 = sphi 0, %s72
      %s87 = sphi 0, %s73
      %s91 = sphi 0, %s91
      %s93 = sphi 0, %s91
      %s94 = sphi 0, %s93
      %s108 = sphi 0, %s94
      %s112 = sphi 0, %s112
      %s114 = sphi 0, %s112
      %s115 = sphi 0, %s114
      %s129 = sphi 0, %s115
      %s133 = sphi 0, %s133
      %s135 = sphi 0, %s133
      %s136 = sphi 0, %s135
      %s150 = sphi 0, %s136
      %s154 = sphi 0, %s154
      %s156 = sphi 0, %s154
      %s157 = sphi 0, %s156
      %s171 = sphi 0, %s157
      %s175 = sphi 0, %s175
      %s177 = sphi 0, %s175
      %s178 = sphi 0, %s177
      %s192 = sphi 0, %s178
      %s200 = sphi 0, %s202
      %s203 = sphi 0, %s200
      %s204 = sphi 0, %s203
      %s220 = sphi 0, %s204
    $region4: #{tpu_custom_call.1} parent=1 // loop_header_branch
      %25 = sbr.rel (%p23) target = $region8
    $region5: #{tpu_custom_call.1} parent=1 // loop_body
      %s27 = ssub.s32 %s22, 1
      %s28 = ssub.s32 %s22, 2
      %s35 = sadd.s32 1, %s30
      %p36 = scmp.ge.s32.totalorder %s35, 4
      %s37 = scalar_select %p36, 0, %s35
      %s38 = sadd.s32 1, %s29
      %s39 = scalar_select %p36, %s38, %s29
      %p40 = scmp.ge.s32.totalorder %s39, 2
      %s41 = scalar_select %p40, 0, %s39
      %s42 = ssub.s32 %s29, %s41
      %s43 = ssub.s32 %s30, %s37
      %s44 = sor.u32 %s42, %s43
      %p45 = scmp.eq.s32.totalorder %s44, 0
      %s47 = sadd.s32 %s46, 1
      %s48 = scalar_select %p45, %s46, %s47
      %p51 = pneg %p45
      %p52 = scmp.eq.s32.totalorder %s22, 7
      %p53 = por %p51, %p52
      %p54 = scmp.ne.s32.totalorder %s46, %s49
      %p55 = scmp.eq.s32.totalorder %s22, 0
      %p56 = por %p54, %p55
      %p57 = scmp.ne.s32.totalorder %s46, %s49
      %p58 = scmp.eq.s32.totalorder %s27, 7
      %p59 = por %p57, %p58
      %p60 = scmp.ne.s32.totalorder %s49, %s50
      %p61 = scmp.eq.s32.totalorder %s27, 0
      %p62 = por %p60, %p61
      %p63 = scmp.ne.s32.totalorder %s49, %s50
      %p64 = scmp.eq.s32.totalorder %s28, 7
      %p65 = por %p63, %p64
      %p67 = scmp.ne.s32.totalorder %s50, %s66
      %p68 = scmp.eq.s32.totalorder %s28, 0
      %p69 = por %p67, %p68
      %s71 = sadd.s32 %s70, 1
      %p74 = scmp.eq.s32.totalorder %s22, 7
      %p75 = scmp.ne.s32.totalorder %s70, %s72
      %p76 = scmp.eq.s32.totalorder %s22, 0
      %p77 = por %p75, %p76
      %p78 = scmp.ne.s32.totalorder %s70, %s72
      %p79 = scmp.eq.s32.totalorder %s27, 7
      %p80 = por %p78, %p79
      %p81 = scmp.ne.s32.totalorder %s72, %s73
      %p82 = scmp.eq.s32.totalorder %s27, 0
      %p83 = por %p81, %p82
      %p84 = scmp.ne.s32.totalorder %s72, %s73
      %p85 = scmp.eq.s32.totalorder %s28, 7
      %p86 = por %p84, %p85
      %p88 = scmp.ne.s32.totalorder %s73, %s87
      %p89 = scmp.eq.s32.totalorder %s28, 0
      %p90 = por %p88, %p89
      %s92 = sadd.s32 %s91, 1
      %p95 = scmp.eq.s32.totalorder %s22, 7
      %p96 = scmp.ne.s32.totalorder %s91, %s93
      %p97 = scmp.eq.s32.totalorder %s22, 0
      %p98 = por %p96, %p97
      %p99 = scmp.ne.s32.totalorder %s91, %s93
      %p100 = scmp.eq.s32.totalorder %s27, 7
      %p101 = por %p99, %p100
      %p102 = scmp.ne.s32.totalorder %s93, %s94
      %p103 = scmp.eq.s32.totalorder %s27, 0
      %p104 = por %p102, %p103
      %p105 = scmp.ne.s32.totalorder %s93, %s94
      %p106 = scmp.eq.s32.totalorder %s28, 7
      %p107 = por %p105, %p106
      %p109 = scmp.ne.s32.totalorder %s94, %s108
      %p110 = scmp.eq.s32.totalorder %s28, 0
      %p111 = por %p109, %p110
      %s113 = sadd.s32 %s112, 1
      %p116 = scmp.eq.s32.totalorder %s22, 7
      %p117 = scmp.ne.s32.totalorder %s112, %s114
      %p118 = scmp.eq.s32.totalorder %s22, 0
      %p119 = por %p117, %p118
      %p120 = scmp.ne.s32.totalorder %s112, %s114
      %p121 = scmp.eq.s32.totalorder %s27, 7
      %p122 = por %p120, %p121
      %p123 = scmp.ne.s32.totalorder %s114, %s115
      %p124 = scmp.eq.s32.totalorder %s27, 0
      %p125 = por %p123, %p124
      %p126 = scmp.ne.s32.totalorder %s114, %s115
      %p127 = scmp.eq.s32.totalorder %s28, 7
      %p128 = por %p126, %p127
      %p130 = scmp.ne.s32.totalorder %s115, %s129
      %p131 = scmp.eq.s32.totalorder %s28, 0
      %p132 = por %p130, %p131
      %s134 = sadd.s32 %s133, 1
      %p137 = scmp.eq.s32.totalorder %s22, 7
      %p138 = scmp.ne.s32.totalorder %s133, %s135
      %p139 = scmp.eq.s32.totalorder %s22, 0
      %p140 = por %p138, %p139
      %p141 = scmp.ne.s32.totalorder %s133, %s135
      %p142 = scmp.eq.s32.totalorder %s27, 7
      %p143 = por %p141, %p142
      %p144 = scmp.ne.s32.totalorder %s135, %s136
      %p145 = scmp.eq.s32.totalorder %s27, 0
      %p146 = por %p144, %p145
      %p147 = scmp.ne.s32.totalorder %s135, %s136
      %p148 = scmp.eq.s32.totalorder %s28, 7
      %p149 = por %p147, %p148
      %p151 = scmp.ne.s32.totalorder %s136, %s150
      %p152 = scmp.eq.s32.totalorder %s28, 0
      %p153 = por %p151, %p152
      %s155 = sadd.s32 %s154, 1
      %p158 = scmp.eq.s32.totalorder %s22, 7
      %p159 = scmp.ne.s32.totalorder %s154, %s156
      %p160 = scmp.eq.s32.totalorder %s22, 0
      %p161 = por %p159, %p160
      %p162 = scmp.ne.s32.totalorder %s154, %s156
      %p163 = scmp.eq.s32.totalorder %s27, 7
      %p164 = por %p162, %p163
      %p165 = scmp.ne.s32.totalorder %s156, %s157
      %p166 = scmp.eq.s32.totalorder %s27, 0
      %p167 = por %p165, %p166
      %p168 = scmp.ne.s32.totalorder %s156, %s157
      %p169 = scmp.eq.s32.totalorder %s28, 7
      %p170 = por %p168, %p169
      %p172 = scmp.ne.s32.totalorder %s157, %s171
      %p173 = scmp.eq.s32.totalorder %s28, 0
      %p174 = por %p172, %p173
      %s176 = sadd.s32 %s175, 1
      %p179 = scmp.eq.s32.totalorder %s22, 7
      %p180 = scmp.ne.s32.totalorder %s175, %s177
      %p181 = scmp.eq.s32.totalorder %s22, 0
      %p182 = por %p180, %p181
      %p183 = scmp.ne.s32.totalorder %s175, %s177
      %p184 = scmp.eq.s32.totalorder %s27, 7
      %p185 = por %p183, %p184
      %p186 = scmp.ne.s32.totalorder %s177, %s178
      %p187 = scmp.eq.s32.totalorder %s27, 0
      %p188 = por %p186, %p187
      %p189 = scmp.ne.s32.totalorder %s177, %s178
      %p190 = scmp.eq.s32.totalorder %s28, 7
      %p191 = por %p189, %p190
      %p193 = scmp.ne.s32.totalorder %s178, %s192
      %p194 = scmp.eq.s32.totalorder %s28, 0
      %p195 = por %p193, %p194
      %s196 = ssub.s32 %s29, %s41
      %s197 = ssub.s32 %s30, %s37
      %s198 = sor.u32 %s196, %s197
      %p199 = scmp.eq.s32.totalorder %s198, 0
      %s201 = sadd.s32 %s200, 1
      %s202 = scalar_select %p199, %s200, %s201
      %p205 = pneg %p199
      %p206 = scmp.eq.s32.totalorder %s22, 7
      %p207 = por %p205, %p206
      %p208 = scmp.ne.s32.totalorder %s200, %s203
      %p209 = scmp.eq.s32.totalorder %s22, 0
      %p210 = por %p208, %p209
      %p211 = scmp.ne.s32.totalorder %s200, %s203
      %p212 = scmp.eq.s32.totalorder %s27, 7
      %p213 = por %p211, %p212
      %p214 = scmp.ne.s32.totalorder %s203, %s204
      %p215 = scmp.eq.s32.totalorder %s27, 0
      %p216 = por %p214, %p215
      %p217 = scmp.ne.s32.totalorder %s203, %s204
      %p218 = scmp.eq.s32.totalorder %s28, 7
      %p219 = por %p217, %p218
      %p221 = scmp.ne.s32.totalorder %s204, %s220
      %p222 = scmp.eq.s32.totalorder %s28, 0
      %p223 = por %p221, %p222
      %p224 = scmp.le.s32.totalorder 1, %s22
      %p225 = scmp.lt.s32.totalorder %s22, 9
      %p226 = pnand %p224, %p225
      %p227 = pneg %p226
      // Predicated region
      $region9: #{tpu_custom_call.1} parent=5 // pred_check
        _
      $region10: #{tpu_custom_call.1} parent=5 // pred_check_branch
        %229 = sbr.rel (%p226) target = $region12
      $region11: #{tpu_custom_call.1} parent=5 // pred_region
        %s230 = ssub.s32 %s22, 1
        // Predicated region
        $region13: #{tpu_custom_call.1} parent=11 // pred_check
          %p231 = pneg %p83
        $region14: #{tpu_custom_call.1} parent=11 // pred_check_branch
          %233 = sbr.rel (%p231) target = $region16
        $region15: #{tpu_custom_call.1} parent=11 // pred_region
          %s235 = ssub.s32 1024, 1024
          %236 = vsyncadd [#allocation9], %s235
          %s237 = sshll.u32 [#allocation8], 4
          %s238 = int_to_ptr.vmem [resolvable:$true] %s237
          %243 = dma.hbm_to_vmem [thread:$0]  %s2, 1024, %s238, [#allocation9], 64, 64, 4
        $region16: #{tpu_custom_call.1} parent=11 // pred_fallthru
          _
        // Predicated region
        $region17: #{tpu_custom_call.1} parent=11 // pred_check
          %p244 = pneg %p104
        $region18: #{tpu_custom_call.1} parent=11 // pred_check_branch
          %246 = sbr.rel (%p244) target = $region20
        $region19: #{tpu_custom_call.1} parent=11 // pred_region
          _
        $region20: #{tpu_custom_call.1} parent=11 // pred_fallthru
          _
        // Predicated region
        $region21: #{tpu_custom_call.1} parent=11 // pred_check
          %p247 = pneg %p125
        $region22: #{tpu_custom_call.1} parent=11 // pred_check_branch
          %249 = sbr.rel (%p247) target = $region24
        $region23: #{tpu_custom_call.1} parent=11 // pred_region
          %s251 = ssub.s32 9216, 9216
          %252 = vsyncadd [#allocation9], %s251
          %s253 = sshll.u32 [#allocation10], 4
          %s254 = int_to_ptr.vmem [resolvable:$true] %s253
          %259 = dma.hbm_to_vmem [thread:$0]  %s4, 9216, %s254, [#allocation9], 64, 64, 4
        $region24: #{tpu_custom_call.1} parent=11 // pred_fallthru
          _
        // Predicated region
        $region25: #{tpu_custom_call.1} parent=11 // pred_check
          %p260 = pneg %p146
        $region26: #{tpu_custom_call.1} parent=11 // pred_check_branch
          %262 = sbr.rel (%p260) target = $region28
        $region27: #{tpu_custom_call.1} parent=11 // pred_region
          _
        $region28: #{tpu_custom_call.1} parent=11 // pred_fallthru
          _
        // Predicated region
        $region29: #{tpu_custom_call.1} parent=11 // pred_check
          %p263 = pneg %p167
        $region30: #{tpu_custom_call.1} parent=11 // pred_check_branch
          %265 = sbr.rel (%p263) target = $region32
        $region31: #{tpu_custom_call.1} parent=11 // pred_region
          %s267 = ssub.s32 1024, 1024
          %268 = vsyncadd [#allocation12], %s267
          %s269 = sshll.u32 [#allocation11], 4
          %s270 = int_to_ptr.vmem [resolvable:$true] %s269
          %275 = dma.hbm_to_vmem [thread:$0]  %s6, 1024, %s270, [#allocation12], 64, 64, 4
        $region32: #{tpu_custom_call.1} parent=11 // pred_fallthru
          _
        // Predicated region
        $region33: #{tpu_custom_call.1} parent=11 // pred_check
          %p276 = pneg %p188
        $region34: #{tpu_custom_call.1} parent=11 // pred_check_branch
          %278 = sbr.rel (%p276) target = $region36
        $region35: #{tpu_custom_call.1} parent=11 // pred_region
          _
        $region36: #{tpu_custom_call.1} parent=11 // pred_fallthru
          _
      $region12: #{tpu_custom_call.1} parent=5 // pred_fallthru
        _
      %p279 = scmp.lt.s32.totalorder %s22, 8
      // Predicated region
      $region37: #{tpu_custom_call.1} parent=5 // pred_check
        %p280 = pneg %p279
      $region38: #{tpu_custom_call.1} parent=5 // pred_check_branch
        %282 = sbr.rel (%p280) target = $region40
      $region39: #{tpu_custom_call.1} parent=5 // pred_region
        // Predicated region
        $region41: #{tpu_custom_call.1} parent=39 // pred_check
          %p283 = pneg %p56
        $region42: #{tpu_custom_call.1} parent=39 // pred_check_branch
          %285 = sbr.rel (%p283) target = $region44
        $region43: #{tpu_custom_call.1} parent=39 // pred_region
          %s286 = sand.u32 %s46, 1
          %s287 = scalar_lea.sflag [#allocation6], %s286
          %s288 = sand.u32 %s46, 1
          %s289 = smul.addr %s288, 32
          %s290 = scalar_lea.vmem [#allocation5], %s289
          %s291 = smul.u32 4, %s30
          %s293 = ssub.s32 512, 512
          %294 = vsyncadd %s287, %s293
          %s295 = smul.addr %s291, 2
          %s296 = smul.addr %s29, 32
          %s297 = sadd.s32 %s295, %s296
          %s298 = smul.addr %s297, 64
          %s299 = scalar_lea.hbm %s0, %s298
          %s300 = sshll.u32 %s290, 4
          %s301 = int_to_ptr.vmem [resolvable:$true] %s300
          %306 = dma.hbm_to_vmem [thread:$0]  %s299, 512, %s301, %s287, 64, 64, 4
        $region44: #{tpu_custom_call.1} parent=39 // pred_fallthru
          _
      $region40: #{tpu_custom_call.1} parent=5 // pred_fallthru
        _
      %p307 = scmp.le.s32.totalorder 1, %s22
      %p308 = scmp.lt.s32.totalorder %s22, 9
      %p309 = pnand %p307, %p308
      %p310 = pneg %p309
      // Predicated region
      $region45: #{tpu_custom_call.1} parent=5 // pred_check
        _
      $region46: #{tpu_custom_call.1} parent=5 // pred_check_branch
        %312 = sbr.rel (%p309) target = $region48
      $region47: #{tpu_custom_call.1} parent=5 // pred_region
        %s313 = ssub.s32 %s22, 1
        %s314 = sand.u32 %s49, 1
        %s315 = scalar_lea.sflag [#allocation6], %s314
        %s316 = sand.u32 %s49, 1
        %s317 = smul.addr %s316, 32
        %s318 = scalar_lea.vmem [#allocation5], %s317
        // Predicated region
        $region49: #{tpu_custom_call.1} parent=47 // pred_check
          %p319 = pneg %p62
        $region50: #{tpu_custom_call.1} parent=47 // pred_check_branch
          %321 = sbr.rel (%p319) target = $region52
        $region51: #{tpu_custom_call.1} parent=47 // pred_region
          %322 = dma.done %s315, 512
        $region52: #{tpu_custom_call.1} parent=47 // pred_fallthru
          _
        // Predicated region
        $region53: #{tpu_custom_call.1} parent=47 // pred_check
          %p323 = pneg %p83
        $region54: #{tpu_custom_call.1} parent=47 // pred_check_branch
          %325 = sbr.rel (%p323) target = $region56
        $region55: #{tpu_custom_call.1} parent=47 // pred_region
          %326 = dma.done [#allocation9], 1024
        $region56: #{tpu_custom_call.1} parent=47 // pred_fallthru
          _
        // Predicated region
        $region57: #{tpu_custom_call.1} parent=47 // pred_check
          %p327 = pneg %p125
        $region58: #{tpu_custom_call.1} parent=47 // pred_check_branch
          %329 = sbr.rel (%p327) target = $region60
        $region59: #{tpu_custom_call.1} parent=47 // pred_region
          %330 = dma.done [#allocation9], 9216
        $region60: #{tpu_custom_call.1} parent=47 // pred_fallthru
          _
        // Predicated region
        $region61: #{tpu_custom_call.1} parent=47 // pred_check
          %p331 = pneg %p167
        $region62: #{tpu_custom_call.1} parent=47 // pred_check_branch
          %333 = sbr.rel (%p331) target = $region64
        $region63: #{tpu_custom_call.1} parent=47 // pred_region
          %334 = dma.done [#allocation12], 1024
        $region64: #{tpu_custom_call.1} parent=47 // pred_fallthru
          _
        %s335 = sand.u32 %s49, 1
        %s336 = scalar_lea.sflag [#allocation6], %s335
        %s337 = sand.u32 %s49, 1
        %s338 = smul.addr %s337, 32
        %s339 = scalar_lea.vmem [#allocation5], %s338
        %p340 = pneg %p62
        %p341 = pneg %p59
        %p342 = pneg %p83
        %p343 = pneg %p80
        %p344 = pneg %p104
        %p345 = pneg %p101
        %p346 = pneg %p125
        %p347 = pneg %p122
        %p348 = pneg %p146
        %p349 = pneg %p143
        %p350 = pneg %p167
        %p351 = pneg %p164
        %p352 = pneg %p188
        %p353 = pneg %p185
        %p354 = pneg %p216
        %p355 = pneg %p213
        %s356 = sand.u32 %s203, 1
        %s357 = scalar_lea.sflag [#allocation7], %s356
        %s358 = sand.u32 %s203, 1
        %s359 = smul.addr %s358, 32
        %s360 = scalar_lea.vmem [#allocation13], %s359
        %s361 = smul.u32 4, %s32
        %s362 = smul.u32 4, %s32
        %s364 = smul.u32 %s32, 4
        %s365 = ssub.s32 %s364, 1
        %p366 = scmp.gt.s32.totalorder %s365, 0
        %s367 = scalar_select %p366, %s365, 0
        %s368 = sadd.s32 %s364, 4
        %p369 = scmp.lt.s32.totalorder %s368, 15
        %s370 = scalar_select %p369, %s368, 15
        %s371 = smul.u32 %s367, 2
        %s372 = smul.u32 %s31, 32
        %s373 = sadd.s32 %s371, %s372
        %s374 = smul.addr %s373, 64
        %s375 = scalar_lea.hbm %s1, %s374
        // Predicated region
        $region65: #{tpu_custom_call.1} parent=47 // pred_check
          _
        $region66: #{tpu_custom_call.1} parent=47 // pred_check_branch
          %377 = sbr.rel target = $region68
        $region67: #{tpu_custom_call.1} parent=47 // pred_region
          %378 = sst [smem:[#allocation16]] [#allocation15]
          %379 = sst [smem:[#allocation17]] [#allocation14]
        $region68: #{tpu_custom_call.1} parent=47 // pred_fallthru
          _
        %381 = shalt.err (0)
        %s383 = sshll.u32 [#allocation2], 4
        %s384 = int_to_ptr.vmem [resolvable:$true] %s383
        %386 = dma.hbm_to_vmem [thread:$0]  %s375, 128, %s384, [#allocation3]
        %s387 = smul.u32 %s370, 2
        %s388 = sadd.s32 %s387, %s372
        %s389 = smul.addr %s388, 64
        %s390 = scalar_lea.hbm %s1, %s389
        %s391 = scalar_lea.vmem [#allocation2], 8
        %s392 = scalar_lea.sflag [#allocation3], 1
        // Predicated region
        $region69: #{tpu_custom_call.1} parent=47 // pred_check
          _
        $region70: #{tpu_custom_call.1} parent=47 // pred_check_branch
          %394 = sbr.rel target = $region72
        $region71: #{tpu_custom_call.1} parent=47 // pred_region
          %395 = sst [smem:[#allocation16]] [#allocation19]
          %396 = sst [smem:[#allocation17]] [#allocation18]
        $region72: #{tpu_custom_call.1} parent=47 // pred_fallthru
          _
        %398 = shalt.err (0)
        %s400 = sshll.u32 %s391, 4
        %s401 = int_to_ptr.vmem [resolvable:$true] %s400
        %403 = dma.hbm_to_vmem [thread:$0]  %s390, 128, %s401, %s392
        %vm404 = vcmask 1040384
        %vm405 = vsmask.f32 256
        %vm406 = vmand %vm404, %vm405
        %v407 = vld [vmem:[#allocation4] sm:$0x1]
        %v408 = vsel %vm406, 0, %v407
        %409 = vst [vmem:[#allocation4] sm:$0x1] %v408
        %v410 = vld [vmem:[#allocation4 + $0xc] sm:$0x1]
        %v411 = vsel %vm406, 0, %v410
        %412 = vst [vmem:[#allocation4 + $0xc] sm:$0x1] %v411
        %v413 = vld [vmem:[#allocation4 + $0x18] sm:$0x1]
        %v414 = vsel %vm406, 0, %v413
        %415 = vst [vmem:[#allocation4 + $0x18] sm:$0x1] %v414
        %v416 = vld [vmem:[#allocation4 + $0x24] sm:$0x1]
        %v417 = vsel %vm406, 0, %v416
        %418 = vst [vmem:[#allocation4 + $0x24] sm:$0x1] %v417
        %v419 = vld [vmem:[#allocation4 + $0x30] sm:$0x1]
        %v420 = vsel %vm406, 0, %v419
        %421 = vst [vmem:[#allocation4 + $0x30] sm:$0x1] %v420
        %v422 = vld [vmem:[#allocation4 + $0x3c] sm:$0x1]
        %v423 = vsel %vm406, 0, %v422
        %424 = vst [vmem:[#allocation4 + $0x3c] sm:$0x1] %v423
        %vm425 = vsmask.f32 7938
        %vm426 = vmand %vm404, %vm425
        %v427 = vld [vmem:[#allocation4 + $0x8] sm:$0x1]
        %v428 = vsel %vm426, 0, %v427
        %429 = vst [vmem:[#allocation4 + $0x8] sm:$0x1] %v428
        %v430 = vld [vmem:[#allocation4 + $0x14] sm:$0x1]
        %v431 = vsel %vm426, 0, %v430
        %432 = vst [vmem:[#allocation4 + $0x14] sm:$0x1] %v431
        %v433 = vld [vmem:[#allocation4 + $0x20] sm:$0x1]
        %v434 = vsel %vm426, 0, %v433
        %435 = vst [vmem:[#allocation4 + $0x20] sm:$0x1] %v434
        %v436 = vld [vmem:[#allocation4 + $0x2c] sm:$0x1]
        %v437 = vsel %vm426, 0, %v436
        %438 = vst [vmem:[#allocation4 + $0x2c] sm:$0x1] %v437
        %v439 = vld [vmem:[#allocation4 + $0x38] sm:$0x1]
        %v440 = vsel %vm426, 0, %v439
        %441 = vst [vmem:[#allocation4 + $0x38] sm:$0x1] %v440
        %v442 = vld [vmem:[#allocation4 + $0x44] sm:$0x1]
        %v443 = vsel %vm426, 0, %v442
        %444 = vst [vmem:[#allocation4 + $0x44] sm:$0x1] %v443
        %v445 = vld [vmem:[%s318] sm:$0xf]
        %v446 = vld [vmem:[%s318 + $0x4] sm:$0xf]
        %v447 = vld [vmem:[%s318 + $0x8] sm:$0xf]
        %v448 = vld [vmem:[%s318 + $0xc] sm:$0xf]
        %v449 = vld [vmem:[%s318 + $0x10] sm:$0xf]
        %v450 = vld [vmem:[%s318 + $0x14] sm:$0xf]
        %v451 = vld [vmem:[%s318 + $0x18] sm:$0xf]
        %v452 = vld [vmem:[%s318 + $0x1c] sm:$0xf]
        %v453 = vld [vmem:[#allocation8] sm:$0xf]
        %v454 = vld [vmem:[#allocation8 + $0x4] sm:$0xf]
        %v455 = vld [vmem:[#allocation8 + $0x8] sm:$0xf]
        %v456 = vld [vmem:[#allocation8 + $0xc] sm:$0xf]
        %v457 = vld [vmem:[#allocation8 + $0x10] sm:$0xf]
        %v458 = vld [vmem:[#allocation8 + $0x14] sm:$0xf]
        %v459 = vld [vmem:[#allocation8 + $0x18] sm:$0xf]
        %v460 = vld [vmem:[#allocation8 + $0x1c] sm:$0xf]
        %v461 = vld [vmem:[#allocation8 + $0x20] sm:$0xf]
        %v462 = vld [vmem:[#allocation8 + $0x24] sm:$0xf]
        %v463 = vld [vmem:[#allocation8 + $0x28] sm:$0xf]
        %v464 = vld [vmem:[#allocation8 + $0x2c] sm:$0xf]
        %v465 = vld [vmem:[#allocation8 + $0x30] sm:$0xf]
        %v466 = vld [vmem:[#allocation8 + $0x34] sm:$0xf]
        %v467 = vld [vmem:[#allocation8 + $0x38] sm:$0xf]
        %v468 = vld [vmem:[#allocation8 + $0x3c] sm:$0xf]
        %v469 = vld [vmem:[%s3] sm:$0x1]
        %v471 = vlaneseq
        %v472 = vshrl.u32 %v471, 7
        %v473 = vsub.s32 0, %v472
        %v474 = vrot.slane %v469, %v473
        %v484 = vunpack.c.l.b16 %v445
        %v485 = vunpack.c.l.b16 %v446
        %v486 = vunpack.c.l.b16 %v447
        %v487 = vunpack.c.l.b16 %v448
        %v488 = vunpack.c.l.b16 %v449
        %v489 = vunpack.c.l.b16 %v450
        %v490 = vunpack.c.l.b16 %v451
        %v491 = vunpack.c.l.b16 %v452
        %v492 = vpack.c.b16 %v485, %v484
        %v493 = vpack.c.b16 %v487, %v486
        %v494 = vpack.c.b16 %v489, %v488
        %v495 = vpack.c.b16 %v491, %v490
        %v516 = vunpack.c.l.b16 %v453
        %v517 = vunpack.c.l.b16 %v454
        %v518 = vunpack.c.l.b16 %v455
        %v519 = vunpack.c.l.b16 %v456
        %v520 = vunpack.c.l.b16 %v457
        %v521 = vunpack.c.l.b16 %v458
        %v522 = vunpack.c.l.b16 %v459
        %v523 = vunpack.c.l.b16 %v460
        %v524 = vunpack.c.l.b16 %v461
        %v525 = vunpack.c.l.b16 %v462
        %v526 = vunpack.c.l.b16 %v463
        %v527 = vunpack.c.l.b16 %v464
        %v528 = vunpack.c.l.b16 %v465
        %v529 = vunpack.c.l.b16 %v466
        %v530 = vunpack.c.l.b16 %v467
        %v531 = vunpack.c.l.b16 %v468
        %v532 = vpack.c.b16 %v517, %v516
        %v533 = vpack.c.b16 %v519, %v518
        %v534 = vpack.c.b16 %v521, %v520
        %v535 = vpack.c.b16 %v523, %v522
        %v536 = vpack.c.b16 %v525, %v524
        %v537 = vpack.c.b16 %v527, %v526
        %v538 = vpack.c.b16 %v529, %v528
        %v539 = vpack.c.b16 %v531, %v530
        %548 = vmatprep.subr.bf16.mxu0 0
        %549 = vmatpush1.bf16.msra.mxu0 %v532
        %550 = vmatprep.subr.bf16.mxu0 0
        %551 = vmatpush1.bf16.msra.mxu0 %v533
        %552 = vmatprep.subr.bf16.mxu0 0
        %553 = vmatpush1.bf16.msra.mxu0 %v534
        %554 = vmatprep.subr.bf16.mxu0 0
        %555 = vmatpush1.bf16.msra.mxu0 %v535
        %556 = vmatprep.subr.bf16.mxu0 0
        %557 = vmatpush1.bf16.msra.mxu0 %v536
        %558 = vmatprep.subr.bf16.mxu0 0
        %559 = vmatpush1.bf16.msra.mxu0 %v537
        %560 = vmatprep.subr.bf16.mxu0 0
        %561 = vmatpush1.bf16.msra.mxu0 %v538
        %562 = vmatprep.subr.bf16.mxu0 0
        %563 = vmatpush1.bf16.msra.mxu0 %v539
        %564 = vmatprep.subr.bf16.mxu0 0
        %565 = vmatpush1.bf16.msra.mxu0 0
        %566 = vmatprep.subr.bf16.mxu0 0
        %567 = vmatpush1.bf16.msra.mxu0 0
        %568 = vmatprep.subr.bf16.mxu0 0
        %569 = vmatpush1.bf16.msra.mxu0 0
        %570 = vmatprep.subr.bf16.mxu0 0
        %571 = vmatpush1.bf16.msra.mxu0 0
        %572 = vmatprep.subr.bf16.mxu0 0
        %573 = vmatpush1.bf16.msra.mxu0 0
        %574 = vmatprep.subr.bf16.mxu0 0
        %575 = vmatpush1.bf16.msra.mxu0 0
        %576 = vmatprep.subr.bf16.mxu0 0
        %577 = vmatpush1.bf16.msra.mxu0 0
        %578 = vmatprep.subr.bf16.mxu0 0
        %579 = vmatpush1.bf16.msra.mxu0 0
        %580 = vmatprep.mubr.bf16.mxu0 0
        %581 = vmatmul.mubr.bf16.gmra.mrb[0].mxu0 %v492
        %v582 = vpop.f32.mrb[0].mxu0
        %v583 = vadd.f32 %v474, %v582
        %v584 = vpop.f32.mrb[0].mxu0
        %v585 = vpop.f32.mrb[0].mxu0
        %v586 = vadd.f32 %v474, %v585
        %v587 = vpop.f32.mrb[0].mxu0
        %588 = vmatprep.mubr.bf16.mxu0 0
        %589 = vmatmul.mubr.bf16.gmra.mrb[0].mxu0 %v493
        %v590 = vpop.f32.mrb[0].mxu0
        %v591 = vadd.f32 %v474, %v590
        %v592 = vpop.f32.mrb[0].mxu0
        %v593 = vpop.f32.mrb[0].mxu0
        %v594 = vadd.f32 %v474, %v593
        %v595 = vpop.f32.mrb[0].mxu0
        %596 = vmatprep.mubr.bf16.mxu0 0
        %597 = vmatmul.mubr.bf16.gmra.mrb[0].mxu0 %v494
        %v598 = vpop.f32.mrb[0].mxu0
        %v599 = vadd.f32 %v474, %v598
        %v600 = vpop.f32.mrb[0].mxu0
        %v601 = vpop.f32.mrb[0].mxu0
        %v602 = vadd.f32 %v474, %v601
        %v603 = vpop.f32.mrb[0].mxu0
        %604 = vmatprep.mubr.bf16.mxu0 0
        %605 = vmatmul.mubr.bf16.gmra.mrb[0].mxu0 %v495
        %v606 = vpop.f32.mrb[0].mxu0
        %v607 = vadd.f32 %v474, %v606
        %v608 = vpop.f32.mrb[0].mxu0
        %v609 = vpop.f32.mrb[0].mxu0
        %v610 = vadd.f32 %v474, %v609
        %v611 = vpop.f32.mrb[0].mxu0
        %612 = vdwg.mxu0
        %v613 = vmax.f32 %v583, 0.0
        %v614 = vmax.f32 %v586, 0.0
        %v615 = vmax.f32 %v591, 0.0
        %v616 = vmax.f32 %v594, 0.0
        %v617 = vmax.f32 %v599, 0.0
        %v618 = vmax.f32 %v602, 0.0
        %v619 = vmax.f32 %v607, 0.0
        %v620 = vmax.f32 %v610, 0.0
        %v621 = vpack.c.bf16 %v614, %v613
        %v622 = vpack.c.bf16 %v616, %v615
        %v623 = vpack.c.bf16 %v618, %v617
        %v624 = vpack.c.bf16 %v620, %v619
        %v629 = vunpack.c.l.b16 %v621
        %v630 = vunpack.c.h.b16 %v621
        %v631 = vunpack.c.l.b16 %v622
        %v632 = vunpack.c.h.b16 %v622
        %v633 = vunpack.c.l.b16 %v623
        %v634 = vunpack.c.h.b16 %v623
        %v635 = vunpack.c.l.b16 %v624
        %v636 = vunpack.c.h.b16 %v624
        %v637 = vpack.c.b16 %v629, %v629
        %v638 = vpack.c.b16 %v630, %v630
        %v639 = vpack.c.b16 %v631, %v631
        %v640 = vpack.c.b16 %v632, %v632
        %v641 = vpack.c.b16 %v633, %v633
        %v642 = vpack.c.b16 %v634, %v634
        %v643 = vpack.c.b16 %v635, %v635
        %v644 = vpack.c.b16 %v636, %v636
        %vm645 = vsmask.f32 4368
        %vm646 = vmor %vm405, %vm645
        %v648 = vshrl.u32 %v637, 16
        %v650 = vrot.slane %v648, 7
        %v651 = vshll.u32 %v637, 16
        %v653 = vor.u32 %v650, %v651
        %v654 = vrot.slane %v650, 4
        %v656 = vshrl.u32 %v638, 16
        %v658 = vrot.slane %v656, 7
        %v659 = vshll.u32 %v638, 16
        %v661 = vor.u32 %v658, %v659
        %v662 = vsel %vm646, %v654, %v661
        %v663 = vrot.slane %v658, 4
        %v665 = vshrl.u32 %v639, 16
        %v667 = vrot.slane %v665, 7
        %v668 = vshll.u32 %v639, 16
        %v670 = vor.u32 %v667, %v668
        %v671 = vrot.slane %v667, 4
        %v673 = vshrl.u32 %v640, 16
        %v675 = vrot.slane %v673, 7
        %v676 = vshll.u32 %v640, 16
        %v678 = vor.u32 %v675, %v676
        %v679 = vsel %vm646, %v671, %v678
        %v680 = vrot.slane %v675, 4
        %v682 = vshrl.u32 %v641, 16
        %v684 = vrot.slane %v682, 7
        %v685 = vshll.u32 %v641, 16
        %v687 = vor.u32 %v684, %v685
        %v688 = vrot.slane %v684, 4
        %v690 = vshrl.u32 %v642, 16
        %v692 = vrot.slane %v690, 7
        %v693 = vshll.u32 %v642, 16
        %v695 = vor.u32 %v692, %v693
        %v696 = vsel %vm646, %v688, %v695
        %v697 = vrot.slane %v692, 4
        %v699 = vshrl.u32 %v643, 16
        %v701 = vrot.slane %v699, 7
        %v702 = vshll.u32 %v643, 16
        %v704 = vor.u32 %v701, %v702
        %v705 = vrot.slane %v701, 4
        %v707 = vshrl.u32 %v644, 16
        %v709 = vrot.slane %v707, 7
        %v710 = vshll.u32 %v644, 16
        %v712 = vor.u32 %v709, %v710
        %v713 = vsel %vm646, %v705, %v712
        %v714 = vrot.slane %v709, 4
        %s727 = scalar_lea.vmem [#allocation4], 12
        %vm728 = vcmask 1043456
        %vm729 = vmand %vm728, %vm425
        %v730 = vld [vmem:[%s727] sm:$0xf]
        %v731 = vsel %vm729, %v653, %v730
        %732 = vst [vmem:[%s727] sm:$0xf] %v731
        %733 = vst [vmem:[%s727 + $0x4] sm:$0xf] %v662
        %v734 = vld [vmem:[%s727 + $0x8] sm:$0x1]
        %v735 = vsel %vm406, %v663, %v734
        %736 = vst [vmem:[%s727 + $0x8] sm:$0x1] %v735
        %v737 = vld [vmem:[%s727 + $0xc] sm:$0xf]
        %v738 = vsel %vm729, %v670, %v737
        %739 = vst [vmem:[%s727 + $0xc] sm:$0xf] %v738
        %740 = vst [vmem:[%s727 + $0x10] sm:$0xf] %v679
        %v741 = vld [vmem:[%s727 + $0x14] sm:$0x1]
        %v742 = vsel %vm406, %v680, %v741
        %743 = vst [vmem:[%s727 + $0x14] sm:$0x1] %v742
        %v744 = vld [vmem:[%s727 + $0x18] sm:$0xf]
        %v745 = vsel %vm729, %v687, %v744
        %746 = vst [vmem:[%s727 + $0x18] sm:$0xf] %v745
        %747 = vst [vmem:[%s727 + $0x1c] sm:$0xf] %v696
        %v748 = vld [vmem:[%s727 + $0x20] sm:$0x1]
        %v749 = vsel %vm406, %v697, %v748
        %750 = vst [vmem:[%s727 + $0x20] sm:$0x1] %v749
        %v751 = vld [vmem:[%s727 + $0x24] sm:$0xf]
        %v752 = vsel %vm729, %v704, %v751
        %753 = vst [vmem:[%s727 + $0x24] sm:$0xf] %v752
        %754 = vst [vmem:[%s727 + $0x28] sm:$0xf] %v713
        %v755 = vld [vmem:[%s727 + $0x2c] sm:$0x1]
        %v756 = vsel %vm406, %v714, %v755
        %757 = vst [vmem:[%s727 + $0x2c] sm:$0x1] %v756
        %s758 = smul.u32 4, 2
        %s759 = smul.u32 %s758, 1
        %s760 = sshll.u32 %s759, 4
        %761 = dma.done [#allocation3], %s760
        %s762 = sshll.u32 %s759, 4
        %763 = dma.done %s392, %s762
        %v764 = vld [vmem:[#allocation2] sm:$0xff]
        %v765 = vld [vmem:[#allocation2 + $0x8] sm:$0xff]
        %v766 = vld [vmem:[#allocation8] sm:$0xf]
        %v767 = vld [vmem:[#allocation8 + $0x4] sm:$0xf]
        %v768 = vld [vmem:[#allocation8 + $0x8] sm:$0xf]
        %v769 = vld [vmem:[#allocation8 + $0xc] sm:$0xf]
        %v770 = vld [vmem:[#allocation8 + $0x10] sm:$0xf]
        %v771 = vld [vmem:[#allocation8 + $0x14] sm:$0xf]
        %v772 = vld [vmem:[#allocation8 + $0x18] sm:$0xf]
        %v773 = vld [vmem:[#allocation8 + $0x1c] sm:$0xf]
        %v774 = vld [vmem:[#allocation8 + $0x20] sm:$0xf]
        %v775 = vld [vmem:[#allocation8 + $0x24] sm:$0xf]
        %v776 = vld [vmem:[#allocation8 + $0x28] sm:$0xf]
        %v777 = vld [vmem:[#allocation8 + $0x2c] sm:$0xf]
        %v778 = vld [vmem:[#allocation8 + $0x30] sm:$0xf]
        %v779 = vld [vmem:[#allocation8 + $0x34] sm:$0xf]
        %v780 = vld [vmem:[#allocation8 + $0x38] sm:$0xf]
        %v781 = vld [vmem:[#allocation8 + $0x3c] sm:$0xf]
        %v782 = vld [vmem:[%s3] sm:$0x1]
        %v784 = vlaneseq
        %v785 = vshrl.u32 %v784, 7
        %v786 = vsub.s32 0, %v785
        %v787 = vrot.slane %v782, %v786
        %v805 = vunpack.c.l.b16 %v766
        %v806 = vunpack.c.l.b16 %v767
        %v807 = vunpack.c.l.b16 %v768
        %v808 = vunpack.c.l.b16 %v769
        %v809 = vunpack.c.l.b16 %v770
        %v810 = vunpack.c.l.b16 %v771
        %v811 = vunpack.c.l.b16 %v772
        %v812 = vunpack.c.l.b16 %v773
        %v813 = vunpack.c.l.b16 %v774
        %v814 = vunpack.c.l.b16 %v775
        %v815 = vunpack.c.l.b16 %v776
        %v816 = vunpack.c.l.b16 %v777
        %v817 = vunpack.c.l.b16 %v778
        %v818 = vunpack.c.l.b16 %v779
        %v819 = vunpack.c.l.b16 %v780
        %v820 = vunpack.c.l.b16 %v781
        %v821 = vpack.c.b16 %v806, %v805
        %v822 = vpack.c.b16 %v808, %v807
        %v823 = vpack.c.b16 %v810, %v809
        %v824 = vpack.c.b16 %v812, %v811
        %v825 = vpack.c.b16 %v814, %v813
        %v826 = vpack.c.b16 %v816, %v815
        %v827 = vpack.c.b16 %v818, %v817
        %v828 = vpack.c.b16 %v820, %v819
        %837 = vmatprep.subr.bf16.mxu0 0
        %838 = vmatpush1.bf16.msra.mxu0 %v821
        %839 = vmatprep.subr.bf16.mxu0 0
        %840 = vmatpush1.bf16.msra.mxu0 %v822
        %841 = vmatprep.subr.bf16.mxu0 0
        %842 = vmatpush1.bf16.msra.mxu0 %v823
        %843 = vmatprep.subr.bf16.mxu0 0
        %844 = vmatpush1.bf16.msra.mxu0 %v824
        %845 = vmatprep.subr.bf16.mxu0 0
        %846 = vmatpush1.bf16.msra.mxu0 %v825
        %847 = vmatprep.subr.bf16.mxu0 0
        %848 = vmatpush1.bf16.msra.mxu0 %v826
        %849 = vmatprep.subr.bf16.mxu0 0
        %850 = vmatpush1.bf16.msra.mxu0 %v827
        %851 = vmatprep.subr.bf16.mxu0 0
        %852 = vmatpush1.bf16.msra.mxu0 %v828
        %853 = vmatprep.subr.bf16.mxu0 0
        %854 = vmatpush1.bf16.msra.mxu0 0
        %855 = vmatprep.subr.bf16.mxu0 0
        %856 = vmatpush1.bf16.msra.mxu0 0
        %857 = vmatprep.subr.bf16.mxu0 0
        %858 = vmatpush1.bf16.msra.mxu0 0
        %859 = vmatprep.subr.bf16.mxu0 0
        %860 = vmatpush1.bf16.msra.mxu0 0
        %861 = vmatprep.subr.bf16.mxu0 0
        %862 = vmatpush1.bf16.msra.mxu0 0
        %863 = vmatprep.subr.bf16.mxu0 0
        %864 = vmatpush1.bf16.msra.mxu0 0
        %865 = vmatprep.subr.bf16.mxu0 0
        %866 = vmatpush1.bf16.msra.mxu0 0
        %867 = vmatprep.subr.bf16.mxu0 0
        %868 = vmatpush1.bf16.msra.mxu0 0
        %869 = vmatprep.mubr.bf16.mxu0 0
        %870 = vmatmul.mubr.bf16.gmra.mrb[0].mxu0 %v764
        %v871 = vpop.f32.mrb[0].mxu0
        %v872 = vadd.f32 %v787, %v871
        %v873 = vpop.f32.mrb[0].mxu0
        %v874 = vpop.f32.mrb[0].mxu0
        %v875 = vadd.f32 %v787, %v874
        %v876 = vpop.f32.mrb[0].mxu0
        %877 = vmatprep.mubr.bf16.mxu0 0
        %878 = vmatmul.mubr.bf16.gmra.mrb[0].mxu0 %v765
        %v879 = vpop.f32.mrb[0].mxu0
        %v880 = vadd.f32 %v787, %v879
        %v881 = vpop.f32.mrb[0].mxu0
        %v882 = vpop.f32.mrb[0].mxu0
        %v883 = vadd.f32 %v787, %v882
        %v884 = vpop.f32.mrb[0].mxu0
        %885 = vdwg.mxu0
        %v886 = vmax.f32 %v872, 0.0
        %v887 = vmax.f32 %v875, 0.0
        %v888 = vmax.f32 %v880, 0.0
        %v889 = vmax.f32 %v883, 0.0
        %v890 = vpack.c.bf16 %v887, %v886
        %v891 = vpack.c.bf16 %v889, %v888
        %p892 = scmp.gt.s32.totalorder %s32, 0
        %s893 = scalar_select %p892, 1, 0
        %v894 = vstv %s893
        %vm895 = vcmp.eq.s32.totalorder %v894, 1
        %v896 = vsel %vm895, %v890, 0
        %v898 = vunpack.c.l.b16 %v896
        %v899 = vunpack.c.h.b16 %v896
        %v900 = vpack.c.b16 %v898, %v898
        %v901 = vpack.c.b16 %v899, %v899
        %v903 = vshrl.u32 %v900, 16
        %v905 = vrot.slane %v903, 7
        %v906 = vshll.u32 %v900, 16
        %v908 = vor.u32 %v905, %v906
        %v909 = vrot.slane %v905, 4
        %v911 = vshrl.u32 %v901, 16
        %v913 = vrot.slane %v911, 7
        %v914 = vshll.u32 %v901, 16
        %v916 = vor.u32 %v913, %v914
        %v917 = vsel %vm646, %v909, %v916
        %v918 = vrot.slane %v913, 4
        %v922 = vld [vmem:[#allocation4] sm:$0xf]
        %v923 = vsel %vm729, %v908, %v922
        %924 = vst [vmem:[#allocation4] sm:$0xf] %v923
        %925 = vst [vmem:[#allocation4 + $0x4] sm:$0xf] %v917
        %v926 = vld [vmem:[#allocation4 + $0x8] sm:$0x1]
        %v927 = vsel %vm406, %v918, %v926
        %928 = vst [vmem:[#allocation4 + $0x8] sm:$0x1] %v927
        %p929 = scmp.lt.s32.totalorder %s32, 3
        %s930 = scalar_select %p929, 1, 0
        %v931 = vstv %s930
        %vm932 = vcmp.eq.s32.totalorder %v931, 1
        %v933 = vsel %vm932, %v891, 0
        %v935 = vunpack.c.l.b16 %v933
        %v936 = vunpack.c.h.b16 %v933
        %v937 = vpack.c.b16 %v935, %v935
        %v938 = vpack.c.b16 %v936, %v936
        %v940 = vshrl.u32 %v937, 16
        %v942 = vrot.slane %v940, 7
        %v943 = vshll.u32 %v937, 16
        %v945 = vor.u32 %v942, %v943
        %v946 = vrot.slane %v942, 4
        %v948 = vshrl.u32 %v938, 16
        %v950 = vrot.slane %v948, 7
        %v951 = vshll.u32 %v938, 16
        %v953 = vor.u32 %v950, %v951
        %v954 = vsel %vm646, %v946, %v953
        %v955 = vrot.slane %v950, 4
        %s959 = scalar_lea.vmem [#allocation4], 60
        %v960 = vld [vmem:[%s959] sm:$0xf]
        %v961 = vsel %vm729, %v945, %v960
        %962 = vst [vmem:[%s959] sm:$0xf] %v961
        %963 = vst [vmem:[%s959 + $0x4] sm:$0xf] %v954
        %v964 = vld [vmem:[%s959 + $0x8] sm:$0x1]
        %v965 = vsel %vm406, %v955, %v964
        %966 = vst [vmem:[%s959 + $0x8] sm:$0x1] %v965
        %v967 = vld [vmem:[#allocation4] sm:$0xf]
        %v968 = vld [vmem:[#allocation4 + $0x4] sm:$0xf]
        %v969 = vld [vmem:[#allocation4 + $0xc] sm:$0xf]
        %v970 = vld [vmem:[#allocation4 + $0x10] sm:$0xf]
        %v971 = vld [vmem:[#allocation4 + $0x18] sm:$0xf]
        %v972 = vld [vmem:[#allocation4 + $0x1c] sm:$0xf]
        %v973 = vld [vmem:[#allocation4 + $0x24] sm:$0xf]
        %v974 = vld [vmem:[#allocation4 + $0x28] sm:$0xf]
        %v975 = vld [vmem:[#allocation10] sm:$0xf]
        %v976 = vld [vmem:[#allocation10 + $0x4] sm:$0xf]
        %v977 = vld [vmem:[#allocation10 + $0x8] sm:$0xf]
        %v978 = vld [vmem:[#allocation10 + $0xc] sm:$0xf]
        %v979 = vld [vmem:[#allocation10 + $0x10] sm:$0xf]
        %v980 = vld [vmem:[#allocation10 + $0x14] sm:$0xf]
        %v981 = vld [vmem:[#allocation10 + $0x18] sm:$0xf]
        %v982 = vld [vmem:[#allocation10 + $0x1c] sm:$0xf]
        %v983 = vld [vmem:[#allocation10 + $0x20] sm:$0xf]
        %v984 = vld [vmem:[#allocation10 + $0x24] sm:$0xf]
        %v985 = vld [vmem:[#allocation10 + $0x28] sm:$0xf]
        %v986 = vld [vmem:[#allocation10 + $0x2c] sm:$0xf]
        %v987 = vld [vmem:[#allocation10 + $0x30] sm:$0xf]
        %v988 = vld [vmem:[#allocation10 + $0x34] sm:$0xf]
        %v989 = vld [vmem:[#allocation10 + $0x38] sm:$0xf]
        %v990 = vld [vmem:[#allocation10 + $0x3c] sm:$0xf]
        %v991 = vld [vmem:[#allocation4 + $0x8] sm:$0x1]
        %v992 = vld [vmem:[#allocation4 + $0x14] sm:$0x1]
        %v993 = vld [vmem:[#allocation4 + $0x20] sm:$0x1]
        %v994 = vld [vmem:[#allocation4 + $0x2c] sm:$0x1]
        %vm995 = vsmask.f32 3328
        %vm996 = vsmask.f32 7440
        %vm997 = vmor %vm995, %vm996
        %v999 = vshrl.u32 %v967, 16
        %v1001 = vrot.slane %v999, 4
        %v1002 = vshll.u32 %v967, 16
        %v1004 = vrot.slane %v1002, 5
        %v1005 = vor.u32 %v1001, %v1004
        %v1006 = vrot.slane %v1005, 4
        %v1008 = vshll.u32 %v968, 16
        %v1010 = vrot.slane %v1008, 5
        %v1011 = vsel %vm997, %v1006, %v1010
        %v1012 = vshrl.u32 %v968, 16
        %v1014 = vrot.slane %v1012, 4
        %v1015 = vor.u32 %v1014, %v1010
        %v1016 = vrot.slane %v1015, 4
        %v1018 = vshll.u32 %v991, 16
        %v1020 = vrot.slane %v1018, 5
        %v1021 = vsel %vm997, %v1016, %v1020
        %v1023 = vshrl.u32 %v969, 16
        %v1025 = vrot.slane %v1023, 4
        %v1026 = vshll.u32 %v969, 16
        %v1028 = vrot.slane %v1026, 5
        %v1029 = vor.u32 %v1025, %v1028
        %v1030 = vrot.slane %v1029, 4
        %v1032 = vshll.u32 %v970, 16
        %v1034 = vrot.slane %v1032, 5
        %v1035 = vsel %vm997, %v1030, %v1034
        %v1036 = vshrl.u32 %v970, 16
        %v1038 = vrot.slane %v1036, 4
        %v1039 = vor.u32 %v1038, %v1034
        %v1040 = vrot.slane %v1039, 4
        %v1042 = vshll.u32 %v992, 16
        %v1044 = vrot.slane %v1042, 5
        %v1045 = vsel %vm997, %v1040, %v1044
        %v1047 = vshrl.u32 %v971, 16
        %v1049 = vrot.slane %v1047, 4
        %v1050 = vshll.u32 %v971, 16
        %v1052 = vrot.slane %v1050, 5
        %v1053 = vor.u32 %v1049, %v1052
        %v1054 = vrot.slane %v1053, 4
        %v1056 = vshll.u32 %v972, 16
        %v1058 = vrot.slane %v1056, 5
        %v1059 = vsel %vm997, %v1054, %v1058
        %v1060 = vshrl.u32 %v972, 16
        %v1062 = vrot.slane %v1060, 4
        %v1063 = vor.u32 %v1062, %v1058
        %v1064 = vrot.slane %v1063, 4
        %v1066 = vshll.u32 %v993, 16
        %v1068 = vrot.slane %v1066, 5
        %v1069 = vsel %vm997, %v1064, %v1068
        %v1071 = vshrl.u32 %v973, 16
        %v1073 = vrot.slane %v1071, 4
        %v1074 = vshll.u32 %v973, 16
        %v1076 = vrot.slane %v1074, 5
        %v1077 = vor.u32 %v1073, %v1076
        %v1078 = vrot.slane %v1077, 4
        %v1080 = vshll.u32 %v974, 16
        %v1082 = vrot.slane %v1080, 5
        %v1083 = vsel %vm997, %v1078, %v1082
        %v1084 = vshrl.u32 %v974, 16
        %v1086 = vrot.slane %v1084, 4
        %v1087 = vor.u32 %v1086, %v1082
        %v1088 = vrot.slane %v1087, 4
        %v1090 = vshll.u32 %v994, 16
        %v1092 = vrot.slane %v1090, 5
        %v1093 = vsel %vm997, %v1088, %v1092
        %s1094 = scalar_lea.vmem [#allocation10], 64
        %v1095 = vld [vmem:[%s1094] sm:$0xf]
        %v1096 = vld [vmem:[%s1094 + $0x4] sm:$0xf]
        %v1097 = vld [vmem:[%s1094 + $0x8] sm:$0xf]
        %v1098 = vld [vmem:[%s1094 + $0xc] sm:$0xf]
        %v1099 = vld [vmem:[%s1094 + $0x10] sm:$0xf]
        %v1100 = vld [vmem:[%s1094 + $0x14] sm:$0xf]
        %v1101 = vld [vmem:[%s1094 + $0x18] sm:$0xf]
        %v1102 = vld [vmem:[%s1094 + $0x1c] sm:$0xf]
        %v1103 = vld [vmem:[%s1094 + $0x20] sm:$0xf]
        %v1104 = vld [vmem:[%s1094 + $0x24] sm:$0xf]
        %v1105 = vld [vmem:[%s1094 + $0x28] sm:$0xf]
        %v1106 = vld [vmem:[%s1094 + $0x2c] sm:$0xf]
        %v1107 = vld [vmem:[%s1094 + $0x30] sm:$0xf]
        %v1108 = vld [vmem:[%s1094 + $0x34] sm:$0xf]
        %v1109 = vld [vmem:[%s1094 + $0x38] sm:$0xf]
        %v1110 = vld [vmem:[%s1094 + $0x3c] sm:$0xf]
        %v1111 = vunpack.c.l.b16 %v1011
        %v1112 = vunpack.c.l.b16 %v1021
        %v1113 = vunpack.c.l.b16 %v1035
        %v1114 = vunpack.c.l.b16 %v1045
        %v1115 = vunpack.c.l.b16 %v1059
        %v1116 = vunpack.c.l.b16 %v1069
        %v1117 = vunpack.c.l.b16 %v1083
        %v1118 = vunpack.c.l.b16 %v1093
        %v1119 = vpack.c.b16 %v1112, %v1111
        %v1120 = vpack.c.b16 %v1114, %v1113
        %v1121 = vpack.c.b16 %v1116, %v1115
        %v1122 = vpack.c.b16 %v1118, %v1117
        %v1143 = vunpack.c.l.b16 %v1095
        %v1144 = vunpack.c.l.b16 %v1096
        %v1145 = vunpack.c.l.b16 %v1097
        %v1146 = vunpack.c.l.b16 %v1098
        %v1147 = vunpack.c.l.b16 %v1099
        %v1148 = vunpack.c.l.b16 %v1100
        %v1149 = vunpack.c.l.b16 %v1101
        %v1150 = vunpack.c.l.b16 %v1102
        %v1151 = vunpack.c.l.b16 %v1103
        %v1152 = vunpack.c.l.b16 %v1104
        %v1153 = vunpack.c.l.b16 %v1105
        %v1154 = vunpack.c.l.b16 %v1106
        %v1155 = vunpack.c.l.b16 %v1107
        %v1156 = vunpack.c.l.b16 %v1108
        %v1157 = vunpack.c.l.b16 %v1109
        %v1158 = vunpack.c.l.b16 %v1110
        %v1159 = vpack.c.b16 %v1144, %v1143
        %v1160 = vpack.c.b16 %v1146, %v1145
        %v1161 = vpack.c.b16 %v1148, %v1147
        %v1162 = vpack.c.b16 %v1150, %v1149
        %v1163 = vpack.c.b16 %v1152, %v1151
        %v1164 = vpack.c.b16 %v1154, %v1153
        %v1165 = vpack.c.b16 %v1156, %v1155
        %v1166 = vpack.c.b16 %v1158, %v1157
        %1175 = vmatprep.subr.bf16.mxu0 0
        %1176 = vmatpush1.bf16.msra.mxu0 %v1159
        %1177 = vmatprep.subr.bf16.mxu0 0
        %1178 = vmatpush1.bf16.msra.mxu0 %v1160
        %1179 = vmatprep.subr.bf16.mxu0 0
        %1180 = vmatpush1.bf16.msra.mxu0 %v1161
        %1181 = vmatprep.subr.bf16.mxu0 0
        %1182 = vmatpush1.bf16.msra.mxu0 %v1162
        %1183 = vmatprep.subr.bf16.mxu0 0
        %1184 = vmatpush1.bf16.msra.mxu0 %v1163
        %1185 = vmatprep.subr.bf16.mxu0 0
        %1186 = vmatpush1.bf16.msra.mxu0 %v1164
        %1187 = vmatprep.subr.bf16.mxu0 0
        %1188 = vmatpush1.bf16.msra.mxu0 %v1165
        %1189 = vmatprep.subr.bf16.mxu0 0
        %1190 = vmatpush1.bf16.msra.mxu0 %v1166
        %1191 = vmatprep.subr.bf16.mxu0 0
        %1192 = vmatpush1.bf16.msra.mxu0 0
        %1193 = vmatprep.subr.bf16.mxu0 0
        %1194 = vmatpush1.bf16.msra.mxu0 0
        %1195 = vmatprep.subr.bf16.mxu0 0
        %1196 = vmatpush1.bf16.msra.mxu0 0
        %1197 = vmatprep.subr.bf16.mxu0 0
        %1198 = vmatpush1.bf16.msra.mxu0 0
        %1199 = vmatprep.subr.bf16.mxu0 0
        %1200 = vmatpush1.bf16.msra.mxu0 0
        %1201 = vmatprep.subr.bf16.mxu0 0
        %1202 = vmatpush1.bf16.msra.mxu0 0
        %1203 = vmatprep.subr.bf16.mxu0 0
        %1204 = vmatpush1.bf16.msra.mxu0 0
        %1205 = vmatprep.subr.bf16.mxu0 0
        %1206 = vmatpush1.bf16.msra.mxu0 0
        %1207 = vmatprep.mubr.bf16.mxu0 0
        %1208 = vmatmul.mubr.bf16.gmra.mrb[0].mxu0 %v1119
        %v1209 = vpop.f32.mrb[0].mxu0
        %v1210 = vadd.f32 0.0, %v1209
        %v1211 = vpop.f32.mrb[0].mxu0
        %v1212 = vpop.f32.mrb[0].mxu0
        %v1213 = vadd.f32 0.0, %v1212
        %v1214 = vpop.f32.mrb[0].mxu0
        %1215 = vmatprep.mubr.bf16.mxu0 0
        %1216 = vmatmul.mubr.bf16.gmra.mrb[0].mxu0 %v1120
        %v1217 = vpop.f32.mrb[0].mxu0
        %v1218 = vadd.f32 0.0, %v1217
        %v1219 = vpop.f32.mrb[0].mxu0
        %v1220 = vpop.f32.mrb[0].mxu0
        %v1221 = vadd.f32 0.0, %v1220
        %v1222 = vpop.f32.mrb[0].mxu0
        %1223 = vmatprep.mubr.bf16.mxu0 0
        %1224 = vmatmul.mubr.bf16.gmra.mrb[0].mxu0 %v1121
        %v1225 = vpop.f32.mrb[0].mxu0
        %v1226 = vadd.f32 0.0, %v1225
        %v1227 = vpop.f32.mrb[0].mxu0
        %v1228 = vpop.f32.mrb[0].mxu0
        %v1229 = vadd.f32 0.0, %v1228
        %v1230 = vpop.f32.mrb[0].mxu0
        %1231 = vmatprep.mubr.bf16.mxu0 0
        %1232 = vmatmul.mubr.bf16.gmra.mrb[0].mxu0 %v1122
        %v1233 = vpop.f32.mrb[0].mxu0
        %v1234 = vadd.f32 0.0, %v1233
        %v1235 = vpop.f32.mrb[0].mxu0
        %v1236 = vpop.f32.mrb[0].mxu0
        %v1237 = vadd.f32 0.0, %v1236
        %v1238 = vpop.f32.mrb[0].mxu0
        %1239 = vdwg.mxu0
        %v1248 = vunpack.c.l.b16 %v967
        %v1249 = vunpack.c.l.b16 %v968
        %v1250 = vunpack.c.l.b16 %v969
        %v1251 = vunpack.c.l.b16 %v970
        %v1252 = vunpack.c.l.b16 %v971
        %v1253 = vunpack.c.l.b16 %v972
        %v1254 = vunpack.c.l.b16 %v973
        %v1255 = vunpack.c.l.b16 %v974
        %v1256 = vpack.c.b16 %v1249, %v1248
        %v1257 = vpack.c.b16 %v1251, %v1250
        %v1258 = vpack.c.b16 %v1253, %v1252
        %v1259 = vpack.c.b16 %v1255, %v1254
        %v1280 = vunpack.c.l.b16 %v975
        %v1281 = vunpack.c.l.b16 %v976
        %v1282 = vunpack.c.l.b16 %v977
        %v1283 = vunpack.c.l.b16 %v978
        %v1284 = vunpack.c.l.b16 %v979
        %v1285 = vunpack.c.l.b16 %v980
        %v1286 = vunpack.c.l.b16 %v981
        %v1287 = vunpack.c.l.b16 %v982
        %v1288 = vunpack.c.l.b16 %v983
        %v1289 = vunpack.c.l.b16 %v984
        %v1290 = vunpack.c.l.b16 %v985
        %v1291 = vunpack.c.l.b16 %v986
        %v1292 = vunpack.c.l.b16 %v987
        %v1293 = vunpack.c.l.b16 %v988
        %v1294 = vunpack.c.l.b16 %v989
        %v1295 = vunpack.c.l.b16 %v990
        %v1296 = vpack.c.b16 %v1281, %v1280
        %v1297 = vpack.c.b16 %v1283, %v1282
        %v1298 = vpack.c.b16 %v1285, %v1284
        %v1299 = vpack.c.b16 %v1287, %v1286
        %v1300 = vpack.c.b16 %v1289, %v1288
        %v1301 = vpack.c.b16 %v1291, %v1290
        %v1302 = vpack.c.b16 %v1293, %v1292
        %v1303 = vpack.c.b16 %v1295, %v1294
        %1312 = vmatprep.subr.bf16.mxu0 0
        %1313 = vmatpush1.bf16.msra.mxu0 %v1296
        %1314 = vmatprep.subr.bf16.mxu0 0
        %1315 = vmatpush1.bf16.msra.mxu0 %v1297
        %1316 = vmatprep.subr.bf16.mxu0 0
        %1317 = vmatpush1.bf16.msra.mxu0 %v1298
        %1318 = vmatprep.subr.bf16.mxu0 0
        %1319 = vmatpush1.bf16.msra.mxu0 %v1299
        %1320 = vmatprep.subr.bf16.mxu0 0
        %1321 = vmatpush1.bf16.msra.mxu0 %v1300
        %1322 = vmatprep.subr.bf16.mxu0 0
        %1323 = vmatpush1.bf16.msra.mxu0 %v1301
        %1324 = vmatprep.subr.bf16.mxu0 0
        %1325 = vmatpush1.bf16.msra.mxu0 %v1302
        %1326 = vmatprep.subr.bf16.mxu0 0
        %1327 = vmatpush1.bf16.msra.mxu0 %v1303
        %1328 = vmatprep.subr.bf16.mxu0 0
        %1329 = vmatpush1.bf16.msra.mxu0 0
        %1330 = vmatprep.subr.bf16.mxu0 0
        %1331 = vmatpush1.bf16.msra.mxu0 0
        %1332 = vmatprep.subr.bf16.mxu0 0
        %1333 = vmatpush1.bf16.msra.mxu0 0
        %1334 = vmatprep.subr.bf16.mxu0 0
        %1335 = vmatpush1.bf16.msra.mxu0 0
        %1336 = vmatprep.subr.bf16.mxu0 0
        %1337 = vmatpush1.bf16.msra.mxu0 0
        %1338 = vmatprep.subr.bf16.mxu0 0
        %1339 = vmatpush1.bf16.msra.mxu0 0
        %1340 = vmatprep.subr.bf16.mxu0 0
        %1341 = vmatpush1.bf16.msra.mxu0 0
        %1342 = vmatprep.subr.bf16.mxu0 0
        %1343 = vmatpush1.bf16.msra.mxu0 0
        %1344 = vmatprep.mubr.bf16.mxu0 0
        %1345 = vmatmul.mubr.bf16.gmra.mrb[0].mxu0 %v1256
        %v1346 = vpop.f32.mrb[0].mxu0
        %v1347 = vadd.f32 %v1210, %v1346
        %v1348 = vpop.f32.mrb[0].mxu0
        %v1349 = vpop.f32.mrb[0].mxu0
        %v1350 = vadd.f32 %v1213, %v1349
        %v1351 = vpop.f32.mrb[0].mxu0
        %1352 = vmatprep.mubr.bf16.mxu0 0
        %1353 = vmatmul.mubr.bf16.gmra.mrb[0].mxu0 %v1257
        %v1354 = vpop.f32.mrb[0].mxu0
        %v1355 = vadd.f32 %v1218, %v1354
        %v1356 = vpop.f32.mrb[0].mxu0
        %v1357 = vpop.f32.mrb[0].mxu0
        %v1358 = vadd.f32 %v1221, %v1357
        %v1359 = vpop.f32.mrb[0].mxu0
        %1360 = vmatprep.mubr.bf16.mxu0 0
        %1361 = vmatmul.mubr.bf16.gmra.mrb[0].mxu0 %v1258
        %v1362 = vpop.f32.mrb[0].mxu0
        %v1363 = vadd.f32 %v1226, %v1362
        %v1364 = vpop.f32.mrb[0].mxu0
        %v1365 = vpop.f32.mrb[0].mxu0
        %v1366 = vadd.f32 %v1229, %v1365
        %v1367 = vpop.f32.mrb[0].mxu0
        %1368 = vmatprep.mubr.bf16.mxu0 0
        %1369 = vmatmul.mubr.bf16.gmra.mrb[0].mxu0 %v1259
        %v1370 = vpop.f32.mrb[0].mxu0
        %v1371 = vadd.f32 %v1234, %v1370
        %v1372 = vpop.f32.mrb[0].mxu0
        %v1373 = vpop.f32.mrb[0].mxu0
        %v1374 = vadd.f32 %v1237, %v1373
        %v1375 = vpop.f32.mrb[0].mxu0
        %1376 = vdwg.mxu0
        %v1377 = vld [vmem:[#allocation4] sm:$0xe]
        %v1378 = vld [vmem:[#allocation4 + $0xc] sm:$0xe]
        %v1379 = vld [vmem:[#allocation4 + $0x18] sm:$0xe]
        %v1380 = vld [vmem:[#allocation4 + $0x24] sm:$0xe]
        %vm1389 = vcmask 1042432
        %vm1390 = vcmask 1046532
        %vm1391 = vmor %vm1389, %vm1390
        %v1392 = vrot.slane %v1377, 5
        %v1393 = vrot.slane %v1392, 4
        %v1394 = vrot.slane %v968, 5
        %v1395 = vsel %vm1391, %v1393, %v1394
        %v1396 = vrot.slane %v1394, 4
        %v1397 = vrot.slane %v991, 5
        %v1398 = vsel %vm1391, %v1396, %v1397
        %v1399 = vrot.slane %v1378, 5
        %v1400 = vrot.slane %v1399, 4
        %v1401 = vrot.slane %v970, 5
        %v1402 = vsel %vm1391, %v1400, %v1401
        %v1403 = vrot.slane %v1401, 4
        %v1404 = vrot.slane %v992, 5
        %v1405 = vsel %vm1391, %v1403, %v1404
        %v1406 = vrot.slane %v1379, 5
        %v1407 = vrot.slane %v1406, 4
        %v1408 = vrot.slane %v972, 5
        %v1409 = vsel %vm1391, %v1407, %v1408
        %v1410 = vrot.slane %v1408, 4
        %v1411 = vrot.slane %v993, 5
        %v1412 = vsel %vm1391, %v1410, %v1411
        %v1413 = vrot.slane %v1380, 5
        %v1414 = vrot.slane %v1413, 4
        %v1415 = vrot.slane %v974, 5
        %v1416 = vsel %vm1391, %v1414, %v1415
        %v1417 = vrot.slane %v1415, 4
        %v1418 = vrot.slane %v994, 5
        %v1419 = vsel %vm1391, %v1417, %v1418
        %s1420 = scalar_lea.vmem [#allocation10], 128
        %v1421 = vld [vmem:[%s1420] sm:$0xf]
        %v1422 = vld [vmem:[%s1420 + $0x4] sm:$0xf]
        %v1423 = vld [vmem:[%s1420 + $0x8] sm:$0xf]
        %v1424 = vld [vmem:[%s1420 + $0xc] sm:$0xf]
        %v1425 = vld [vmem:[%s1420 + $0x10] sm:$0xf]
        %v1426 = vld [vmem:[%s1420 + $0x14] sm:$0xf]
        %v1427 = vld [vmem:[%s1420 + $0x18] sm:$0xf]
        %v1428 = vld [vmem:[%s1420 + $0x1c] sm:$0xf]
        %v1429 = vld [vmem:[%s1420 + $0x20] sm:$0xf]
        %v1430 = vld [vmem:[%s1420 + $0x24] sm:$0xf]
        %v1431 = vld [vmem:[%s1420 + $0x28] sm:$0xf]
        %v1432 = vld [vmem:[%s1420 + $0x2c] sm:$0xf]
        %v1433 = vld [vmem:[%s1420 + $0x30] sm:$0xf]
        %v1434 = vld [vmem:[%s1420 + $0x34] sm:$0xf]
        %v1435 = vld [vmem:[%s1420 + $0x38] sm:$0xf]
        %v1436 = vld [vmem:[%s1420 + $0x3c] sm:$0xf]
        %v1437 = vunpack.c.l.b16 %v1395
        %v1438 = vunpack.c.l.b16 %v1398
        %v1439 = vunpack.c.l.b16 %v1402
        %v1440 = vunpack.c.l.b16 %v1405
        %v1441 = vunpack.c.l.b16 %v1409
        %v1442 = vunpack.c.l.b16 %v1412
        %v1443 = vunpack.c.l.b16 %v1416
        %v1444 = vunpack.c.l.b16 %v1419
        %v1445 = vpack.c.b16 %v1438, %v1437
        %v1446 = vpack.c.b16 %v1440, %v1439
        %v1447 = vpack.c.b16 %v1442, %v1441
        %v1448 = vpack.c.b16 %v1444, %v1443
        %v1469 = vunpack.c.l.b16 %v1421
        %v1470 = vunpack.c.l.b16 %v1422
        %v1471 = vunpack.c.l.b16 %v1423
        %v1472 = vunpack.c.l.b16 %v1424
        %v1473 = vunpack.c.l.b16 %v1425
        %v1474 = vunpack.c.l.b16 %v1426
        %v1475 = vunpack.c.l.b16 %v1427
        %v1476 = vunpack.c.l.b16 %v1428
        %v1477 = vunpack.c.l.b16 %v1429
        %v1478 = vunpack.c.l.b16 %v1430
        %v1479 = vunpack.c.l.b16 %v1431
        %v1480 = vunpack.c.l.b16 %v1432
        %v1481 = vunpack.c.l.b16 %v1433
        %v1482 = vunpack.c.l.b16 %v1434
        %v1483 = vunpack.c.l.b16 %v1435
        %v1484 = vunpack.c.l.b16 %v1436
        %v1485 = vpack.c.b16 %v1470, %v1469
        %v1486 = vpack.c.b16 %v1472, %v1471
        %v1487 = vpack.c.b16 %v1474, %v1473
        %v1488 = vpack.c.b16 %v1476, %v1475
        %v1489 = vpack.c.b16 %v1478, %v1477
        %v1490 = vpack.c.b16 %v1480, %v1479
        %v1491 = vpack.c.b16 %v1482, %v1481
        %v1492 = vpack.c.b16 %v1484, %v1483
        %1501 = vmatprep.subr.bf16.mxu0 0
        %1502 = vmatpush1.bf16.msra.mxu0 %v1485
        %1503 = vmatprep.subr.bf16.mxu0 0
        %1504 = vmatpush1.bf16.msra.mxu0 %v1486
        %1505 = vmatprep.subr.bf16.mxu0 0
        %1506 = vmatpush1.bf16.msra.mxu0 %v1487
        %1507 = vmatprep.subr.bf16.mxu0 0
        %1508 = vmatpush1.bf16.msra.mxu0 %v1488
        %1509 = vmatprep.subr.bf16.mxu0 0
        %1510 = vmatpush1.bf16.msra.mxu0 %v1489
        %1511 = vmatprep.subr.bf16.mxu0 0
        %1512 = vmatpush1.bf16.msra.mxu0 %v1490
        %1513 = vmatprep.subr.bf16.mxu0 0
        %1514 = vmatpush1.bf16.msra.mxu0 %v1491
        %1515 = vmatprep.subr.bf16.mxu0 0
        %1516 = vmatpush1.bf16.msra.mxu0 %v1492
        %1517 = vmatprep.subr.bf16.mxu0 0
        %1518 = vmatpush1.bf16.msra.mxu0 0
        %1519 = vmatprep.subr.bf16.mxu0 0
        %1520 = vmatpush1.bf16.msra.mxu0 0
        %1521 = vmatprep.subr.bf16.mxu0 0
        %1522 = vmatpush1.bf16.msra.mxu0 0
        %1523 = vmatprep.subr.bf16.mxu0 0
        %1524 = vmatpush1.bf16.msra.mxu0 0
        %1525 = vmatprep.subr.bf16.mxu0 0
        %1526 = vmatpush1.bf16.msra.mxu0 0
        %1527 = vmatprep.subr.bf16.mxu0 0
        %1528 = vmatpush1.bf16.msra.mxu0 0
        %1529 = vmatprep.subr.bf16.mxu0 0
        %1530 = vmatpush1.bf16.msra.mxu0 0
        %1531 = vmatprep.subr.bf16.mxu0 0
        %1532 = vmatpush1.bf16.msra.mxu0 0
        %1533 = vmatprep.mubr.bf16.mxu0 0
        %1534 = vmatmul.mubr.bf16.gmra.mrb[0].mxu0 %v1445
        %v1535 = vpop.f32.mrb[0].mxu0
        %v1536 = vadd.f32 0.0, %v1535
        %v1537 = vpop.f32.mrb[0].mxu0
        %v1538 = vpop.f32.mrb[0].mxu0
        %v1539 = vadd.f32 0.0, %v1538
        %v1540 = vpop.f32.mrb[0].mxu0
        %1541 = vmatprep.mubr.bf16.mxu0 0
        %1542 = vmatmul.mubr.bf16.gmra.mrb[0].mxu0 %v1446
        %v1543 = vpop.f32.mrb[0].mxu0
        %v1544 = vadd.f32 0.0, %v1543
        %v1545 = vpop.f32.mrb[0].mxu0
        %v1546 = vpop.f32.mrb[0].mxu0
        %v1547 = vadd.f32 0.0, %v1546
        %v1548 = vpop.f32.mrb[0].mxu0
        %1549 = vmatprep.mubr.bf16.mxu0 0
        %1550 = vmatmul.mubr.bf16.gmra.mrb[0].mxu0 %v1447
        %v1551 = vpop.f32.mrb[0].mxu0
        %v1552 = vadd.f32 0.0, %v1551
        %v1553 = vpop.f32.mrb[0].mxu0
        %v1554 = vpop.f32.mrb[0].mxu0
        %v1555 = vadd.f32 0.0, %v1554
        %v1556 = vpop.f32.mrb[0].mxu0
        %1557 = vmatprep.mubr.bf16.mxu0 0
        %1558 = vmatmul.mubr.bf16.gmra.mrb[0].mxu0 %v1448
        %v1559 = vpop.f32.mrb[0].mxu0
        %v1560 = vadd.f32 0.0, %v1559
        %v1561 = vpop.f32.mrb[0].mxu0
        %v1562 = vpop.f32.mrb[0].mxu0
        %v1563 = vadd.f32 0.0, %v1562
        %v1564 = vpop.f32.mrb[0].mxu0
        %1565 = vdwg.mxu0
        %v1566 = vadd.f32 %v1347, %v1536
        %v1567 = vadd.f32 %v1350, %v1539
        %v1568 = vadd.f32 %v1355, %v1544
        %v1569 = vadd.f32 %v1358, %v1547
        %v1570 = vadd.f32 %v1363, %v1552
        %v1571 = vadd.f32 %v1366, %v1555
        %v1572 = vadd.f32 %v1371, %v1560
        %v1573 = vadd.f32 %v1374, %v1563
        %v1574 = vld [vmem:[%s727] sm:$0xf]
        %v1575 = vld [vmem:[%s727 + $0x4] sm:$0xf]
        %v1576 = vld [vmem:[%s727 + $0xc] sm:$0xf]
        %v1577 = vld [vmem:[%s727 + $0x10] sm:$0xf]
        %v1578 = vld [vmem:[%s727 + $0x18] sm:$0xf]
        %v1579 = vld [vmem:[%s727 + $0x1c] sm:$0xf]
        %v1580 = vld [vmem:[%s727 + $0x24] sm:$0xf]
        %v1581 = vld [vmem:[%s727 + $0x28] sm:$0xf]
        %s1582 = scalar_lea.vmem [#allocation10], 192
        %v1583 = vld [vmem:[%s1582] sm:$0xf]
        %v1584 = vld [vmem:[%s1582 + $0x4] sm:$0xf]
        %v1585 = vld [vmem:[%s1582 + $0x8] sm:$0xf]
        %v1586 = vld [vmem:[%s1582 + $0xc] sm:$0xf]
        %v1587 = vld [vmem:[%s1582 + $0x10] sm:$0xf]
        %v1588 = vld [vmem:[%s1582 + $0x14] sm:$0xf]
        %v1589 = vld [vmem:[%s1582 + $0x18] sm:$0xf]
        %v1590 = vld [vmem:[%s1582 + $0x1c] sm:$0xf]
        %v1591 = vld [vmem:[%s1582 + $0x20] sm:$0xf]
        %v1592 = vld [vmem:[%s1582 + $0x24] sm:$0xf]
        %v1593 = vld [vmem:[%s1582 + $0x28] sm:$0xf]
        %v1594 = vld [vmem:[%s1582 + $0x2c] sm:$0xf]
        %v1595 = vld [vmem:[%s1582 + $0x30] sm:$0xf]
        %v1596 = vld [vmem:[%s1582 + $0x34] sm:$0xf]
        %v1597 = vld [vmem:[%s1582 + $0x38] sm:$0xf]
        %v1598 = vld [vmem:[%s1582 + $0x3c] sm:$0xf]
        %v1607 = vunpack.c.l.b16 %v1574
        %v1608 = vunpack.c.l.b16 %v1575
        %v1609 = vunpack.c.l.b16 %v1576
        %v1610 = vunpack.c.l.b16 %v1577
        %v1611 = vunpack.c.l.b16 %v1578
        %v1612 = vunpack.c.l.b16 %v1579
        %v1613 = vunpack.c.l.b16 %v1580
        %v1614 = vunpack.c.l.b16 %v1581
        %v1615 = vpack.c.b16 %v1608, %v1607
        %v1616 = vpack.c.b16 %v1610, %v1609
        %v1617 = vpack.c.b16 %v1612, %v1611
        %v1618 = vpack.c.b16 %v1614, %v1613
        %v1639 = vunpack.c.l.b16 %v1583
        %v1640 = vunpack.c.l.b16 %v1584
        %v1641 = vunpack.c.l.b16 %v1585
        %v1642 = vunpack.c.l.b16 %v1586
        %v1643 = vunpack.c.l.b16 %v1587
        %v1644 = vunpack.c.l.b16 %v1588
        %v1645 = vunpack.c.l.b16 %v1589
        %v1646 = vunpack.c.l.b16 %v1590
        %v1647 = vunpack.c.l.b16 %v1591
        %v1648 = vunpack.c.l.b16 %v1592
        %v1649 = vunpack.c.l.b16 %v1593
        %v1650 = vunpack.c.l.b16 %v1594
        %v1651 = vunpack.c.l.b16 %v1595
        %v1652 = vunpack.c.l.b16 %v1596
        %v1653 = vunpack.c.l.b16 %v1597
        %v1654 = vunpack.c.l.b16 %v1598
        %v1655 = vpack.c.b16 %v1640, %v1639
        %v1656 = vpack.c.b16 %v1642, %v1641
        %v1657 = vpack.c.b16 %v1644, %v1643
        %v1658 = vpack.c.b16 %v1646, %v1645
        %v1659 = vpack.c.b16 %v1648, %v1647
        %v1660 = vpack.c.b16 %v1650, %v1649
        %v1661 = vpack.c.b16 %v1652, %v1651
        %v1662 = vpack.c.b16 %v1654, %v1653
        %1671 = vmatprep.subr.bf16.mxu0 0
        %1672 = vmatpush1.bf16.msra.mxu0 %v1655
        %1673 = vmatprep.subr.bf16.mxu0 0
        %1674 = vmatpush1.bf16.msra.mxu0 %v1656
        %1675 = vmatprep.subr.bf16.mxu0 0
        %1676 = vmatpush1.bf16.msra.mxu0 %v1657
        %1677 = vmatprep.subr.bf16.mxu0 0
        %1678 = vmatpush1.bf16.msra.mxu0 %v1658
        %1679 = vmatprep.subr.bf16.mxu0 0
        %1680 = vmatpush1.bf16.msra.mxu0 %v1659
        %1681 = vmatprep.subr.bf16.mxu0 0
        %1682 = vmatpush1.bf16.msra.mxu0 %v1660
        %1683 = vmatprep.subr.bf16.mxu0 0
        %1684 = vmatpush1.bf16.msra.mxu0 %v1661
        %1685 = vmatprep.subr.bf16.mxu0 0
        %1686 = vmatpush1.bf16.msra.mxu0 %v1662
        %1687 = vmatprep.subr.bf16.mxu0 0
        %1688 = vmatpush1.bf16.msra.mxu0 0
        %1689 = vmatprep.subr.bf16.mxu0 0
        %1690 = vmatpush1.bf16.msra.mxu0 0
        %1691 = vmatprep.subr.bf16.mxu0 0
        %1692 = vmatpush1.bf16.msra.mxu0 0
        %1693 = vmatprep.subr.bf16.mxu0 0
        %1694 = vmatpush1.bf16.msra.mxu0 0
        %1695 = vmatprep.subr.bf16.mxu0 0
        %1696 = vmatpush1.bf16.msra.mxu0 0
        %1697 = vmatprep.subr.bf16.mxu0 0
        %1698 = vmatpush1.bf16.msra.mxu0 0
        %1699 = vmatprep.subr.bf16.mxu0 0
        %1700 = vmatpush1.bf16.msra.mxu0 0
        %1701 = vmatprep.subr.bf16.mxu0 0
        %1702 = vmatpush1.bf16.msra.mxu0 0
        %1703 = vmatprep.mubr.bf16.mxu0 0
        %1704 = vmatmul.mubr.bf16.gmra.mrb[0].mxu0 %v1615
        %v1705 = vpop.f32.mrb[0].mxu0
        %v1706 = vadd.f32 0.0, %v1705
        %v1707 = vpop.f32.mrb[0].mxu0
        %v1708 = vpop.f32.mrb[0].mxu0
        %v1709 = vadd.f32 0.0, %v1708
        %v1710 = vpop.f32.mrb[0].mxu0
        %1711 = vmatprep.mubr.bf16.mxu0 0
        %1712 = vmatmul.mubr.bf16.gmra.mrb[0].mxu0 %v1616
        %v1713 = vpop.f32.mrb[0].mxu0
        %v1714 = vadd.f32 0.0, %v1713
        %v1715 = vpop.f32.mrb[0].mxu0
        %v1716 = vpop.f32.mrb[0].mxu0
        %v1717 = vadd.f32 0.0, %v1716
        %v1718 = vpop.f32.mrb[0].mxu0
        %1719 = vmatprep.mubr.bf16.mxu0 0
        %1720 = vmatmul.mubr.bf16.gmra.mrb[0].mxu0 %v1617
        %v1721 = vpop.f32.mrb[0].mxu0
        %v1722 = vadd.f32 0.0, %v1721
        %v1723 = vpop.f32.mrb[0].mxu0
        %v1724 = vpop.f32.mrb[0].mxu0
        %v1725 = vadd.f32 0.0, %v1724
        %v1726 = vpop.f32.mrb[0].mxu0
        %1727 = vmatprep.mubr.bf16.mxu0 0
        %1728 = vmatmul.mubr.bf16.gmra.mrb[0].mxu0 %v1618
        %v1729 = vpop.f32.mrb[0].mxu0
        %v1730 = vadd.f32 0.0, %v1729
        %v1731 = vpop.f32.mrb[0].mxu0
        %v1732 = vpop.f32.mrb[0].mxu0
        %v1733 = vadd.f32 0.0, %v1732
        %v1734 = vpop.f32.mrb[0].mxu0
        %1735 = vdwg.mxu0
        %v1736 = vadd.f32 %v1566, %v1706
        %v1737 = vadd.f32 %v1567, %v1709
        %v1738 = vadd.f32 %v1568, %v1714
        %v1739 = vadd.f32 %v1569, %v1717
        %v1740 = vadd.f32 %v1570, %v1722
        %v1741 = vadd.f32 %v1571, %v1725
        %v1742 = vadd.f32 %v1572, %v1730
        %v1743 = vadd.f32 %v1573, %v1733
        %v1744 = vld [vmem:[%s727] sm:$0xf]
        %v1745 = vld [vmem:[%s727 + $0x4] sm:$0xf]
        %v1746 = vld [vmem:[%s727 + $0x8] sm:$0x1]
        %v1747 = vld [vmem:[%s727 + $0xc] sm:$0xf]
        %v1748 = vld [vmem:[%s727 + $0x10] sm:$0xf]
        %v1749 = vld [vmem:[%s727 + $0x14] sm:$0x1]
        %v1750 = vld [vmem:[%s727 + $0x18] sm:$0xf]
        %v1751 = vld [vmem:[%s727 + $0x1c] sm:$0xf]
        %v1752 = vld [vmem:[%s727 + $0x20] sm:$0x1]
        %v1753 = vld [vmem:[%s727 + $0x24] sm:$0xf]
        %v1754 = vld [vmem:[%s727 + $0x28] sm:$0xf]
        %v1755 = vld [vmem:[%s727 + $0x2c] sm:$0x1]
        %v1757 = vshrl.u32 %v1744, 16
        %v1759 = vrot.slane %v1757, 4
        %v1760 = vshll.u32 %v1744, 16
        %v1762 = vrot.slane %v1760, 5
        %v1763 = vor.u32 %v1759, %v1762
        %v1764 = vrot.slane %v1763, 4
        %v1766 = vshll.u32 %v1745, 16
        %v1768 = vrot.slane %v1766, 5
        %v1769 = vsel %vm997, %v1764, %v1768
        %v1770 = vshrl.u32 %v1745, 16
        %v1772 = vrot.slane %v1770, 4
        %v1773 = vor.u32 %v1772, %v1768
        %v1774 = vrot.slane %v1773, 4
        %v1776 = vshll.u32 %v1746, 16
        %v1778 = vrot.slane %v1776, 5
        %v1779 = vsel %vm997, %v1774, %v1778
        %v1781 = vshrl.u32 %v1747, 16
        %v1783 = vrot.slane %v1781, 4
        %v1784 = vshll.u32 %v1747, 16
        %v1786 = vrot.slane %v1784, 5
        %v1787 = vor.u32 %v1783, %v1786
        %v1788 = vrot.slane %v1787, 4
        %v1790 = vshll.u32 %v1748, 16
        %v1792 = vrot.slane %v1790, 5
        %v1793 = vsel %vm997, %v1788, %v1792
        %v1794 = vshrl.u32 %v1748, 16
        %v1796 = vrot.slane %v1794, 4
        %v1797 = vor.u32 %v1796, %v1792
        %v1798 = vrot.slane %v1797, 4
        %v1800 = vshll.u32 %v1749, 16
        %v1802 = vrot.slane %v1800, 5
        %v1803 = vsel %vm997, %v1798, %v1802
        %v1805 = vshrl.u32 %v1750, 16
        %v1807 = vrot.slane %v1805, 4
        %v1808 = vshll.u32 %v1750, 16
        %v1810 = vrot.slane %v1808, 5
        %v1811 = vor.u32 %v1807, %v1810
        %v1812 = vrot.slane %v1811, 4
        %v1814 = vshll.u32 %v1751, 16
        %v1816 = vrot.slane %v1814, 5
        %v1817 = vsel %vm997, %v1812, %v1816
        %v1818 = vshrl.u32 %v1751, 16
        %v1820 = vrot.slane %v1818, 4
        %v1821 = vor.u32 %v1820, %v1816
        %v1822 = vrot.slane %v1821, 4
        %v1824 = vshll.u32 %v1752, 16
        %v1826 = vrot.slane %v1824, 5
        %v1827 = vsel %vm997, %v1822, %v1826
        %v1829 = vshrl.u32 %v1753, 16
        %v1831 = vrot.slane %v1829, 4
        %v1832 = vshll.u32 %v1753, 16
        %v1834 = vrot.slane %v1832, 5
        %v1835 = vor.u32 %v1831, %v1834
        %v1836 = vrot.slane %v1835, 4
        %v1838 = vshll.u32 %v1754, 16
        %v1840 = vrot.slane %v1838, 5
        %v1841 = vsel %vm997, %v1836, %v1840
        %v1842 = vshrl.u32 %v1754, 16
        %v1844 = vrot.slane %v1842, 4
        %v1845 = vor.u32 %v1844, %v1840
        %v1846 = vrot.slane %v1845, 4
        %v1848 = vshll.u32 %v1755, 16
        %v1850 = vrot.slane %v1848, 5
        %v1851 = vsel %vm997, %v1846, %v1850
        %s1852 = scalar_lea.vmem [#allocation10], 256
        %v1853 = vld [vmem:[%s1852] sm:$0xf]
        %v1854 = vld [vmem:[%s1852 + $0x4] sm:$0xf]
        %v1855 = vld [vmem:[%s1852 + $0x8] sm:$0xf]
        %v1856 = vld [vmem:[%s1852 + $0xc] sm:$0xf]
        %v1857 = vld [vmem:[%s1852 + $0x10] sm:$0xf]
        %v1858 = vld [vmem:[%s1852 + $0x14] sm:$0xf]
        %v1859 = vld [vmem:[%s1852 + $0x18] sm:$0xf]
        %v1860 = vld [vmem:[%s1852 + $0x1c] sm:$0xf]
        %v1861 = vld [vmem:[%s1852 + $0x20] sm:$0xf]
        %v1862 = vld [vmem:[%s1852 + $0x24] sm:$0xf]
        %v1863 = vld [vmem:[%s1852 + $0x28] sm:$0xf]
        %v1864 = vld [vmem:[%s1852 + $0x2c] sm:$0xf]
        %v1865 = vld [vmem:[%s1852 + $0x30] sm:$0xf]
        %v1866 = vld [vmem:[%s1852 + $0x34] sm:$0xf]
        %v1867 = vld [vmem:[%s1852 + $0x38] sm:$0xf]
        %v1868 = vld [vmem:[%s1852 + $0x3c] sm:$0xf]
        %v1869 = vunpack.c.l.b16 %v1769
        %v1870 = vunpack.c.l.b16 %v1779
        %v1871 = vunpack.c.l.b16 %v1793
        %v1872 = vunpack.c.l.b16 %v1803
        %v1873 = vunpack.c.l.b16 %v1817
        %v1874 = vunpack.c.l.b16 %v1827
        %v1875 = vunpack.c.l.b16 %v1841
        %v1876 = vunpack.c.l.b16 %v1851
        %v1877 = vpack.c.b16 %v1870, %v1869
        %v1878 = vpack.c.b16 %v1872, %v1871
        %v1879 = vpack.c.b16 %v1874, %v1873
        %v1880 = vpack.c.b16 %v1876, %v1875
        %v1901 = vunpack.c.l.b16 %v1853
        %v1902 = vunpack.c.l.b16 %v1854
        %v1903 = vunpack.c.l.b16 %v1855
        %v1904 = vunpack.c.l.b16 %v1856
        %v1905 = vunpack.c.l.b16 %v1857
        %v1906 = vunpack.c.l.b16 %v1858
        %v1907 = vunpack.c.l.b16 %v1859
        %v1908 = vunpack.c.l.b16 %v1860
        %v1909 = vunpack.c.l.b16 %v1861
        %v1910 = vunpack.c.l.b16 %v1862
        %v1911 = vunpack.c.l.b16 %v1863
        %v1912 = vunpack.c.l.b16 %v1864
        %v1913 = vunpack.c.l.b16 %v1865
        %v1914 = vunpack.c.l.b16 %v1866
        %v1915 = vunpack.c.l.b16 %v1867
        %v1916 = vunpack.c.l.b16 %v1868
        %v1917 = vpack.c.b16 %v1902, %v1901
        %v1918 = vpack.c.b16 %v1904, %v1903
        %v1919 = vpack.c.b16 %v1906, %v1905
        %v1920 = vpack.c.b16 %v1908, %v1907
        %v1921 = vpack.c.b16 %v1910, %v1909
        %v1922 = vpack.c.b16 %v1912, %v1911
        %v1923 = vpack.c.b16 %v1914, %v1913
        %v1924 = vpack.c.b16 %v1916, %v1915
        %1933 = vmatprep.subr.bf16.mxu0 0
        %1934 = vmatpush1.bf16.msra.mxu0 %v1917
        %1935 = vmatprep.subr.bf16.mxu0 0
        %1936 = vmatpush1.bf16.msra.mxu0 %v1918
        %1937 = vmatprep.subr.bf16.mxu0 0
        %1938 = vmatpush1.bf16.msra.mxu0 %v1919
        %1939 = vmatprep.subr.bf16.mxu0 0
        %1940 = vmatpush1.bf16.msra.mxu0 %v1920
        %1941 = vmatprep.subr.bf16.mxu0 0
        %1942 = vmatpush1.bf16.msra.mxu0 %v1921
        %1943 = vmatprep.subr.bf16.mxu0 0
        %1944 = vmatpush1.bf16.msra.mxu0 %v1922
        %1945 = vmatprep.subr.bf16.mxu0 0
        %1946 = vmatpush1.bf16.msra.mxu0 %v1923
        %1947 = vmatprep.subr.bf16.mxu0 0
        %1948 = vmatpush1.bf16.msra.mxu0 %v1924
        %1949 = vmatprep.subr.bf16.mxu0 0
        %1950 = vmatpush1.bf16.msra.mxu0 0
        %1951 = vmatprep.subr.bf16.mxu0 0
        %1952 = vmatpush1.bf16.msra.mxu0 0
        %1953 = vmatprep.subr.bf16.mxu0 0
        %1954 = vmatpush1.bf16.msra.mxu0 0
        %1955 = vmatprep.subr.bf16.mxu0 0
        %1956 = vmatpush1.bf16.msra.mxu0 0
        %1957 = vmatprep.subr.bf16.mxu0 0
        %1958 = vmatpush1.bf16.msra.mxu0 0
        %1959 = vmatprep.subr.bf16.mxu0 0
        %1960 = vmatpush1.bf16.msra.mxu0 0
        %1961 = vmatprep.subr.bf16.mxu0 0
        %1962 = vmatpush1.bf16.msra.mxu0 0
        %1963 = vmatprep.subr.bf16.mxu0 0
        %1964 = vmatpush1.bf16.msra.mxu0 0
        %1965 = vmatprep.mubr.bf16.mxu0 0
        %1966 = vmatmul.mubr.bf16.gmra.mrb[0].mxu0 %v1877
        %v1967 = vpop.f32.mrb[0].mxu0
        %v1968 = vadd.f32 0.0, %v1967
        %v1969 = vpop.f32.mrb[0].mxu0
        %v1970 = vpop.f32.mrb[0].mxu0
        %v1971 = vadd.f32 0.0, %v1970
        %v1972 = vpop.f32.mrb[0].mxu0
        %1973 = vmatprep.mubr.bf16.mxu0 0
        %1974 = vmatmul.mubr.bf16.gmra.mrb[0].mxu0 %v1878
        %v1975 = vpop.f32.mrb[0].mxu0
        %v1976 = vadd.f32 0.0, %v1975
        %v1977 = vpop.f32.mrb[0].mxu0
        %v1978 = vpop.f32.mrb[0].mxu0
        %v1979 = vadd.f32 0.0, %v1978
        %v1980 = vpop.f32.mrb[0].mxu0
        %1981 = vmatprep.mubr.bf16.mxu0 0
        %1982 = vmatmul.mubr.bf16.gmra.mrb[0].mxu0 %v1879
        %v1983 = vpop.f32.mrb[0].mxu0
        %v1984 = vadd.f32 0.0, %v1983
        %v1985 = vpop.f32.mrb[0].mxu0
        %v1986 = vpop.f32.mrb[0].mxu0
        %v1987 = vadd.f32 0.0, %v1986
        %v1988 = vpop.f32.mrb[0].mxu0
        %1989 = vmatprep.mubr.bf16.mxu0 0
        %1990 = vmatmul.mubr.bf16.gmra.mrb[0].mxu0 %v1880
        %v1991 = vpop.f32.mrb[0].mxu0
        %v1992 = vadd.f32 0.0, %v1991
        %v1993 = vpop.f32.mrb[0].mxu0
        %v1994 = vpop.f32.mrb[0].mxu0
        %v1995 = vadd.f32 0.0, %v1994
        %v1996 = vpop.f32.mrb[0].mxu0
        %1997 = vdwg.mxu0
        %v1998 = vadd.f32 %v1736, %v1968
        %v1999 = vadd.f32 %v1737, %v1971
        %v2000 = vadd.f32 %v1738, %v1976
        %v2001 = vadd.f32 %v1739, %v1979
        %v2002 = vadd.f32 %v1740, %v1984
        %v2003 = vadd.f32 %v1741, %v1987
        %v2004 = vadd.f32 %v1742, %v1992
        %v2005 = vadd.f32 %v1743, %v1995
        %v2006 = vld [vmem:[%s727] sm:$0xe]
        %v2007 = vld [vmem:[%s727 + $0xc] sm:$0xe]
        %v2008 = vld [vmem:[%s727 + $0x18] sm:$0xe]
        %v2009 = vld [vmem:[%s727 + $0x24] sm:$0xe]
        %v2022 = vrot.slane %v2006, 5
        %v2023 = vrot.slane %v2022, 4
        %v2024 = vrot.slane %v1745, 5
        %v2025 = vsel %vm1391, %v2023, %v2024
        %v2026 = vrot.slane %v2024, 4
        %v2027 = vrot.slane %v1746, 5
        %v2028 = vsel %vm1391, %v2026, %v2027
        %v2029 = vrot.slane %v2007, 5
        %v2030 = vrot.slane %v2029, 4
        %v2031 = vrot.slane %v1748, 5
        %v2032 = vsel %vm1391, %v2030, %v2031
        %v2033 = vrot.slane %v2031, 4
        %v2034 = vrot.slane %v1749, 5
        %v2035 = vsel %vm1391, %v2033, %v2034
        %v2036 = vrot.slane %v2008, 5
        %v2037 = vrot.slane %v2036, 4
        %v2038 = vrot.slane %v1751, 5
        %v2039 = vsel %vm1391, %v2037, %v2038
        %v2040 = vrot.slane %v2038, 4
        %v2041 = vrot.slane %v1752, 5
        %v2042 = vsel %vm1391, %v2040, %v2041
        %v2043 = vrot.slane %v2009, 5
        %v2044 = vrot.slane %v2043, 4
        %v2045 = vrot.slane %v1754, 5
        %v2046 = vsel %vm1391, %v2044, %v2045
        %v2047 = vrot.slane %v2045, 4
        %v2048 = vrot.slane %v1755, 5
        %v2049 = vsel %vm1391, %v2047, %v2048
        %s2050 = scalar_lea.vmem [#allocation10], 320
        %v2051 = vld [vmem:[%s2050] sm:$0xf]
        %v2052 = vld [vmem:[%s2050 + $0x4] sm:$0xf]
        %v2053 = vld [vmem:[%s2050 + $0x8] sm:$0xf]
        %v2054 = vld [vmem:[%s2050 + $0xc] sm:$0xf]
        %v2055 = vld [vmem:[%s2050 + $0x10] sm:$0xf]
        %v2056 = vld [vmem:[%s2050 + $0x14] sm:$0xf]
        %v2057 = vld [vmem:[%s2050 + $0x18] sm:$0xf]
        %v2058 = vld [vmem:[%s2050 + $0x1c] sm:$0xf]
        %v2059 = vld [vmem:[%s2050 + $0x20] sm:$0xf]
        %v2060 = vld [vmem:[%s2050 + $0x24] sm:$0xf]
        %v2061 = vld [vmem:[%s2050 + $0x28] sm:$0xf]
        %v2062 = vld [vmem:[%s2050 + $0x2c] sm:$0xf]
        %v2063 = vld [vmem:[%s2050 + $0x30] sm:$0xf]
        %v2064 = vld [vmem:[%s2050 + $0x34] sm:$0xf]
        %v2065 = vld [vmem:[%s2050 + $0x38] sm:$0xf]
        %v2066 = vld [vmem:[%s2050 + $0x3c] sm:$0xf]
        %v2067 = vunpack.c.l.b16 %v2025
        %v2068 = vunpack.c.l.b16 %v2028
        %v2069 = vunpack.c.l.b16 %v2032
        %v2070 = vunpack.c.l.b16 %v2035
        %v2071 = vunpack.c.l.b16 %v2039
        %v2072 = vunpack.c.l.b16 %v2042
        %v2073 = vunpack.c.l.b16 %v2046
        %v2074 = vunpack.c.l.b16 %v2049
        %v2075 = vpack.c.b16 %v2068, %v2067
        %v2076 = vpack.c.b16 %v2070, %v2069
        %v2077 = vpack.c.b16 %v2072, %v2071
        %v2078 = vpack.c.b16 %v2074, %v2073
        %v2099 = vunpack.c.l.b16 %v2051
        %v2100 = vunpack.c.l.b16 %v2052
        %v2101 = vunpack.c.l.b16 %v2053
        %v2102 = vunpack.c.l.b16 %v2054
        %v2103 = vunpack.c.l.b16 %v2055
        %v2104 = vunpack.c.l.b16 %v2056
        %v2105 = vunpack.c.l.b16 %v2057
        %v2106 = vunpack.c.l.b16 %v2058
        %v2107 = vunpack.c.l.b16 %v2059
        %v2108 = vunpack.c.l.b16 %v2060
        %v2109 = vunpack.c.l.b16 %v2061
        %v2110 = vunpack.c.l.b16 %v2062
        %v2111 = vunpack.c.l.b16 %v2063
        %v2112 = vunpack.c.l.b16 %v2064
        %v2113 = vunpack.c.l.b16 %v2065
        %v2114 = vunpack.c.l.b16 %v2066
        %v2115 = vpack.c.b16 %v2100, %v2099
        %v2116 = vpack.c.b16 %v2102, %v2101
        %v2117 = vpack.c.b16 %v2104, %v2103
        %v2118 = vpack.c.b16 %v2106, %v2105
        %v2119 = vpack.c.b16 %v2108, %v2107
        %v2120 = vpack.c.b16 %v2110, %v2109
        %v2121 = vpack.c.b16 %v2112, %v2111
        %v2122 = vpack.c.b16 %v2114, %v2113
        %2131 = vmatprep.subr.bf16.mxu0 0
        %2132 = vmatpush1.bf16.msra.mxu0 %v2115
        %2133 = vmatprep.subr.bf16.mxu0 0
        %2134 = vmatpush1.bf16.msra.mxu0 %v2116
        %2135 = vmatprep.subr.bf16.mxu0 0
        %2136 = vmatpush1.bf16.msra.mxu0 %v2117
        %2137 = vmatprep.subr.bf16.mxu0 0
        %2138 = vmatpush1.bf16.msra.mxu0 %v2118
        %2139 = vmatprep.subr.bf16.mxu0 0
        %2140 = vmatpush1.bf16.msra.mxu0 %v2119
        %2141 = vmatprep.subr.bf16.mxu0 0
        %2142 = vmatpush1.bf16.msra.mxu0 %v2120
        %2143 = vmatprep.subr.bf16.mxu0 0
        %2144 = vmatpush1.bf16.msra.mxu0 %v2121
        %2145 = vmatprep.subr.bf16.mxu0 0
        %2146 = vmatpush1.bf16.msra.mxu0 %v2122
        %2147 = vmatprep.subr.bf16.mxu0 0
        %2148 = vmatpush1.bf16.msra.mxu0 0
        %2149 = vmatprep.subr.bf16.mxu0 0
        %2150 = vmatpush1.bf16.msra.mxu0 0
        %2151 = vmatprep.subr.bf16.mxu0 0
        %2152 = vmatpush1.bf16.msra.mxu0 0
        %2153 = vmatprep.subr.bf16.mxu0 0
        %2154 = vmatpush1.bf16.msra.mxu0 0
        %2155 = vmatprep.subr.bf16.mxu0 0
        %2156 = vmatpush1.bf16.msra.mxu0 0
        %2157 = vmatprep.subr.bf16.mxu0 0
        %2158 = vmatpush1.bf16.msra.mxu0 0
        %2159 = vmatprep.subr.bf16.mxu0 0
        %2160 = vmatpush1.bf16.msra.mxu0 0
        %2161 = vmatprep.subr.bf16.mxu0 0
        %2162 = vmatpush1.bf16.msra.mxu0 0
        %2163 = vmatprep.mubr.bf16.mxu0 0
        %2164 = vmatmul.mubr.bf16.gmra.mrb[0].mxu0 %v2075
        %v2165 = vpop.f32.mrb[0].mxu0
        %v2166 = vadd.f32 0.0, %v2165
        %v2167 = vpop.f32.mrb[0].mxu0
        %v2168 = vpop.f32.mrb[0].mxu0
        %v2169 = vadd.f32 0.0, %v2168
        %v2170 = vpop.f32.mrb[0].mxu0
        %2171 = vmatprep.mubr.bf16.mxu0 0
        %2172 = vmatmul.mubr.bf16.gmra.mrb[0].mxu0 %v2076
        %v2173 = vpop.f32.mrb[0].mxu0
        %v2174 = vadd.f32 0.0, %v2173
        %v2175 = vpop.f32.mrb[0].mxu0
        %v2176 = vpop.f32.mrb[0].mxu0
        %v2177 = vadd.f32 0.0, %v2176
        %v2178 = vpop.f32.mrb[0].mxu0
        %2179 = vmatprep.mubr.bf16.mxu0 0
        %2180 = vmatmul.mubr.bf16.gmra.mrb[0].mxu0 %v2077
        %v2181 = vpop.f32.mrb[0].mxu0
        %v2182 = vadd.f32 0.0, %v2181
        %v2183 = vpop.f32.mrb[0].mxu0
        %v2184 = vpop.f32.mrb[0].mxu0
        %v2185 = vadd.f32 0.0, %v2184
        %v2186 = vpop.f32.mrb[0].mxu0
        %2187 = vmatprep.mubr.bf16.mxu0 0
        %2188 = vmatmul.mubr.bf16.gmra.mrb[0].mxu0 %v2078
        %v2189 = vpop.f32.mrb[0].mxu0
        %v2190 = vadd.f32 0.0, %v2189
        %v2191 = vpop.f32.mrb[0].mxu0
        %v2192 = vpop.f32.mrb[0].mxu0
        %v2193 = vadd.f32 0.0, %v2192
        %v2194 = vpop.f32.mrb[0].mxu0
        %2195 = vdwg.mxu0
        %v2196 = vadd.f32 %v1998, %v2166
        %v2197 = vadd.f32 %v1999, %v2169
        %v2198 = vadd.f32 %v2000, %v2174
        %v2199 = vadd.f32 %v2001, %v2177
        %v2200 = vadd.f32 %v2002, %v2182
        %v2201 = vadd.f32 %v2003, %v2185
        %v2202 = vadd.f32 %v2004, %v2190
        %v2203 = vadd.f32 %v2005, %v2193
        %s2204 = scalar_lea.vmem [#allocation4], 24
        %v2205 = vld [vmem:[%s2204] sm:$0xf]
        %v2206 = vld [vmem:[%s2204 + $0x4] sm:$0xf]
        %v2207 = vld [vmem:[%s2204 + $0xc] sm:$0xf]
        %v2208 = vld [vmem:[%s2204 + $0x10] sm:$0xf]
        %v2209 = vld [vmem:[%s2204 + $0x18] sm:$0xf]
        %v2210 = vld [vmem:[%s2204 + $0x1c] sm:$0xf]
        %v2211 = vld [vmem:[%s2204 + $0x24] sm:$0xf]
        %v2212 = vld [vmem:[%s2204 + $0x28] sm:$0xf]
        %s2213 = scalar_lea.vmem [#allocation10], 384
        %v2214 = vld [vmem:[%s2213] sm:$0xf]
        %v2215 = vld [vmem:[%s2213 + $0x4] sm:$0xf]
        %v2216 = vld [vmem:[%s2213 + $0x8] sm:$0xf]
        %v2217 = vld [vmem:[%s2213 + $0xc] sm:$0xf]
        %v2218 = vld [vmem:[%s2213 + $0x10] sm:$0xf]
        %v2219 = vld [vmem:[%s2213 + $0x14] sm:$0xf]
        %v2220 = vld [vmem:[%s2213 + $0x18] sm:$0xf]
        %v2221 = vld [vmem:[%s2213 + $0x1c] sm:$0xf]
        %v2222 = vld [vmem:[%s2213 + $0x20] sm:$0xf]
        %v2223 = vld [vmem:[%s2213 + $0x24] sm:$0xf]
        %v2224 = vld [vmem:[%s2213 + $0x28] sm:$0xf]
        %v2225 = vld [vmem:[%s2213 + $0x2c] sm:$0xf]
        %v2226 = vld [vmem:[%s2213 + $0x30] sm:$0xf]
        %v2227 = vld [vmem:[%s2213 + $0x34] sm:$0xf]
        %v2228 = vld [vmem:[%s2213 + $0x38] sm:$0xf]
        %v2229 = vld [vmem:[%s2213 + $0x3c] sm:$0xf]
        %v2238 = vunpack.c.l.b16 %v2205
        %v2239 = vunpack.c.l.b16 %v2206
        %v2240 = vunpack.c.l.b16 %v2207
        %v2241 = vunpack.c.l.b16 %v2208
        %v2242 = vunpack.c.l.b16 %v2209
        %v2243 = vunpack.c.l.b16 %v2210
        %v2244 = vunpack.c.l.b16 %v2211
        %v2245 = vunpack.c.l.b16 %v2212
        %v2246 = vpack.c.b16 %v2239, %v2238
        %v2247 = vpack.c.b16 %v2241, %v2240
        %v2248 = vpack.c.b16 %v2243, %v2242
        %v2249 = vpack.c.b16 %v2245, %v2244
        %v2270 = vunpack.c.l.b16 %v2214
        %v2271 = vunpack.c.l.b16 %v2215
        %v2272 = vunpack.c.l.b16 %v2216
        %v2273 = vunpack.c.l.b16 %v2217
        %v2274 = vunpack.c.l.b16 %v2218
        %v2275 = vunpack.c.l.b16 %v2219
        %v2276 = vunpack.c.l.b16 %v2220
        %v2277 = vunpack.c.l.b16 %v2221
        %v2278 = vunpack.c.l.b16 %v2222
        %v2279 = vunpack.c.l.b16 %v2223
        %v2280 = vunpack.c.l.b16 %v2224
        %v2281 = vunpack.c.l.b16 %v2225
        %v2282 = vunpack.c.l.b16 %v2226
        %v2283 = vunpack.c.l.b16 %v2227
        %v2284 = vunpack.c.l.b16 %v2228
        %v2285 = vunpack.c.l.b16 %v2229
        %v2286 = vpack.c.b16 %v2271, %v2270
        %v2287 = vpack.c.b16 %v2273, %v2272
        %v2288 = vpack.c.b16 %v2275, %v2274
        %v2289 = vpack.c.b16 %v2277, %v2276
        %v2290 = vpack.c.b16 %v2279, %v2278
        %v2291 = vpack.c.b16 %v2281, %v2280
        %v2292 = vpack.c.b16 %v2283, %v2282
        %v2293 = vpack.c.b16 %v2285, %v2284
        %2302 = vmatprep.subr.bf16.mxu0 0
        %2303 = vmatpush1.bf16.msra.mxu0 %v2286
        %2304 = vmatprep.subr.bf16.mxu0 0
        %2305 = vmatpush1.bf16.msra.mxu0 %v2287
        %2306 = vmatprep.subr.bf16.mxu0 0
        %2307 = vmatpush1.bf16.msra.mxu0 %v2288
        %2308 = vmatprep.subr.bf16.mxu0 0
        %2309 = vmatpush1.bf16.msra.mxu0 %v2289
        %2310 = vmatprep.subr.bf16.mxu0 0
        %2311 = vmatpush1.bf16.msra.mxu0 %v2290
        %2312 = vmatprep.subr.bf16.mxu0 0
        %2313 = vmatpush1.bf16.msra.mxu0 %v2291
        %2314 = vmatprep.subr.bf16.mxu0 0
        %2315 = vmatpush1.bf16.msra.mxu0 %v2292
        %2316 = vmatprep.subr.bf16.mxu0 0
        %2317 = vmatpush1.bf16.msra.mxu0 %v2293
        %2318 = vmatprep.subr.bf16.mxu0 0
        %2319 = vmatpush1.bf16.msra.mxu0 0
        %2320 = vmatprep.subr.bf16.mxu0 0
        %2321 = vmatpush1.bf16.msra.mxu0 0
        %2322 = vmatprep.subr.bf16.mxu0 0
        %2323 = vmatpush1.bf16.msra.mxu0 0
        %2324 = vmatprep.subr.bf16.mxu0 0
        %2325 = vmatpush1.bf16.msra.mxu0 0
        %2326 = vmatprep.subr.bf16.mxu0 0
        %2327 = vmatpush1.bf16.msra.mxu0 0
        %2328 = vmatprep.subr.bf16.mxu0 0
        %2329 = vmatpush1.bf16.msra.mxu0 0
        %2330 = vmatprep.subr.bf16.mxu0 0
        %2331 = vmatpush1.bf16.msra.mxu0 0
        %2332 = vmatprep.subr.bf16.mxu0 0
        %2333 = vmatpush1.bf16.msra.mxu0 0
        %2334 = vmatprep.mubr.bf16.mxu0 0
        %2335 = vmatmul.mubr.bf16.gmra.mrb[0].mxu0 %v2246
        %v2336 = vpop.f32.mrb[0].mxu0
        %v2337 = vadd.f32 0.0, %v2336
        %v2338 = vpop.f32.mrb[0].mxu0
        %v2339 = vpop.f32.mrb[0].mxu0
        %v2340 = vadd.f32 0.0, %v2339
        %v2341 = vpop.f32.mrb[0].mxu0
        %2342 = vmatprep.mubr.bf16.mxu0 0
        %2343 = vmatmul.mubr.bf16.gmra.mrb[0].mxu0 %v2247
        %v2344 = vpop.f32.mrb[0].mxu0
        %v2345 = vadd.f32 0.0, %v2344
        %v2346 = vpop.f32.mrb[0].mxu0
        %v2347 = vpop.f32.mrb[0].mxu0
        %v2348 = vadd.f32 0.0, %v2347
        %v2349 = vpop.f32.mrb[0].mxu0
        %2350 = vmatprep.mubr.bf16.mxu0 0
        %2351 = vmatmul.mubr.bf16.gmra.mrb[0].mxu0 %v2248
        %v2352 = vpop.f32.mrb[0].mxu0
        %v2353 = vadd.f32 0.0, %v2352
        %v2354 = vpop.f32.mrb[0].mxu0
        %v2355 = vpop.f32.mrb[0].mxu0
        %v2356 = vadd.f32 0.0, %v2355
        %v2357 = vpop.f32.mrb[0].mxu0
        %2358 = vmatprep.mubr.bf16.mxu0 0
        %2359 = vmatmul.mubr.bf16.gmra.mrb[0].mxu0 %v2249
        %v2360 = vpop.f32.mrb[0].mxu0
        %v2361 = vadd.f32 0.0, %v2360
        %v2362 = vpop.f32.mrb[0].mxu0
        %v2363 = vpop.f32.mrb[0].mxu0
        %v2364 = vadd.f32 0.0, %v2363
        %v2365 = vpop.f32.mrb[0].mxu0
        %2366 = vdwg.mxu0
        %v2367 = vadd.f32 %v2196, %v2337
        %v2368 = vadd.f32 %v2197, %v2340
        %v2369 = vadd.f32 %v2198, %v2345
        %v2370 = vadd.f32 %v2199, %v2348
        %v2371 = vadd.f32 %v2200, %v2353
        %v2372 = vadd.f32 %v2201, %v2356
        %v2373 = vadd.f32 %v2202, %v2361
        %v2374 = vadd.f32 %v2203, %v2364
        %v2375 = vld [vmem:[%s2204] sm:$0xf]
        %v2376 = vld [vmem:[%s2204 + $0x4] sm:$0xf]
        %v2377 = vld [vmem:[%s2204 + $0x8] sm:$0x1]
        %v2378 = vld [vmem:[%s2204 + $0xc] sm:$0xf]
        %v2379 = vld [vmem:[%s2204 + $0x10] sm:$0xf]
        %v2380 = vld [vmem:[%s2204 + $0x14] sm:$0x1]
        %v2381 = vld [vmem:[%s2204 + $0x18] sm:$0xf]
        %v2382 = vld [vmem:[%s2204 + $0x1c] sm:$0xf]
        %v2383 = vld [vmem:[%s2204 + $0x20] sm:$0x1]
        %v2384 = vld [vmem:[%s2204 + $0x24] sm:$0xf]
        %v2385 = vld [vmem:[%s2204 + $0x28] sm:$0xf]
        %v2386 = vld [vmem:[%s2204 + $0x2c] sm:$0x1]
        %v2388 = vshrl.u32 %v2375, 16
        %v2390 = vrot.slane %v2388, 4
        %v2391 = vshll.u32 %v2375, 16
        %v2393 = vrot.slane %v2391, 5
        %v2394 = vor.u32 %v2390, %v2393
        %v2395 = vrot.slane %v2394, 4
        %v2397 = vshll.u32 %v2376, 16
        %v2399 = vrot.slane %v2397, 5
        %v2400 = vsel %vm997, %v2395, %v2399
        %v2401 = vshrl.u32 %v2376, 16
        %v2403 = vrot.slane %v2401, 4
        %v2404 = vor.u32 %v2403, %v2399
        %v2405 = vrot.slane %v2404, 4
        %v2407 = vshll.u32 %v2377, 16
        %v2409 = vrot.slane %v2407, 5
        %v2410 = vsel %vm997, %v2405, %v2409
        %v2412 = vshrl.u32 %v2378, 16
        %v2414 = vrot.slane %v2412, 4
        %v2415 = vshll.u32 %v2378, 16
        %v2417 = vrot.slane %v2415, 5
        %v2418 = vor.u32 %v2414, %v2417
        %v2419 = vrot.slane %v2418, 4
        %v2421 = vshll.u32 %v2379, 16
        %v2423 = vrot.slane %v2421, 5
        %v2424 = vsel %vm997, %v2419, %v2423
        %v2425 = vshrl.u32 %v2379, 16
        %v2427 = vrot.slane %v2425, 4
        %v2428 = vor.u32 %v2427, %v2423
        %v2429 = vrot.slane %v2428, 4
        %v2431 = vshll.u32 %v2380, 16
        %v2433 = vrot.slane %v2431, 5
        %v2434 = vsel %vm997, %v2429, %v2433
        %v2436 = vshrl.u32 %v2381, 16
        %v2438 = vrot.slane %v2436, 4
        %v2439 = vshll.u32 %v2381, 16
        %v2441 = vrot.slane %v2439, 5
        %v2442 = vor.u32 %v2438, %v2441
        %v2443 = vrot.slane %v2442, 4
        %v2445 = vshll.u32 %v2382, 16
        %v2447 = vrot.slane %v2445, 5
        %v2448 = vsel %vm997, %v2443, %v2447
        %v2449 = vshrl.u32 %v2382, 16
        %v2451 = vrot.slane %v2449, 4
        %v2452 = vor.u32 %v2451, %v2447
        %v2453 = vrot.slane %v2452, 4
        %v2455 = vshll.u32 %v2383, 16
        %v2457 = vrot.slane %v2455, 5
        %v2458 = vsel %vm997, %v2453, %v2457
        %v2460 = vshrl.u32 %v2384, 16
        %v2462 = vrot.slane %v2460, 4
        %v2463 = vshll.u32 %v2384, 16
        %v2465 = vrot.slane %v2463, 5
        %v2466 = vor.u32 %v2462, %v2465
        %v2467 = vrot.slane %v2466, 4
        %v2469 = vshll.u32 %v2385, 16
        %v2471 = vrot.slane %v2469, 5
        %v2472 = vsel %vm997, %v2467, %v2471
        %v2473 = vshrl.u32 %v2385, 16
        %v2475 = vrot.slane %v2473, 4
        %v2476 = vor.u32 %v2475, %v2471
        %v2477 = vrot.slane %v2476, 4
        %v2479 = vshll.u32 %v2386, 16
        %v2481 = vrot.slane %v2479, 5
        %v2482 = vsel %vm997, %v2477, %v2481
        %s2483 = scalar_lea.vmem [#allocation10], 448
        %v2484 = vld [vmem:[%s2483] sm:$0xf]
        %v2485 = vld [vmem:[%s2483 + $0x4] sm:$0xf]
        %v2486 = vld [vmem:[%s2483 + $0x8] sm:$0xf]
        %v2487 = vld [vmem:[%s2483 + $0xc] sm:$0xf]
        %v2488 = vld [vmem:[%s2483 + $0x10] sm:$0xf]
        %v2489 = vld [vmem:[%s2483 + $0x14] sm:$0xf]
        %v2490 = vld [vmem:[%s2483 + $0x18] sm:$0xf]
        %v2491 = vld [vmem:[%s2483 + $0x1c] sm:$0xf]
        %v2492 = vld [vmem:[%s2483 + $0x20] sm:$0xf]
        %v2493 = vld [vmem:[%s2483 + $0x24] sm:$0xf]
        %v2494 = vld [vmem:[%s2483 + $0x28] sm:$0xf]
        %v2495 = vld [vmem:[%s2483 + $0x2c] sm:$0xf]
        %v2496 = vld [vmem:[%s2483 + $0x30] sm:$0xf]
        %v2497 = vld [vmem:[%s2483 + $0x34] sm:$0xf]
        %v2498 = vld [vmem:[%s2483 + $0x38] sm:$0xf]
        %v2499 = vld [vmem:[%s2483 + $0x3c] sm:$0xf]
        %v2500 = vunpack.c.l.b16 %v2400
        %v2501 = vunpack.c.l.b16 %v2410
        %v2502 = vunpack.c.l.b16 %v2424
        %v2503 = vunpack.c.l.b16 %v2434
        %v2504 = vunpack.c.l.b16 %v2448
        %v2505 = vunpack.c.l.b16 %v2458
        %v2506 = vunpack.c.l.b16 %v2472
        %v2507 = vunpack.c.l.b16 %v2482
        %v2508 = vpack.c.b16 %v2501, %v2500
        %v2509 = vpack.c.b16 %v2503, %v2502
        %v2510 = vpack.c.b16 %v2505, %v2504
        %v2511 = vpack.c.b16 %v2507, %v2506
        %v2532 = vunpack.c.l.b16 %v2484
        %v2533 = vunpack.c.l.b16 %v2485
        %v2534 = vunpack.c.l.b16 %v2486
        %v2535 = vunpack.c.l.b16 %v2487
        %v2536 = vunpack.c.l.b16 %v2488
        %v2537 = vunpack.c.l.b16 %v2489
        %v2538 = vunpack.c.l.b16 %v2490
        %v2539 = vunpack.c.l.b16 %v2491
        %v2540 = vunpack.c.l.b16 %v2492
        %v2541 = vunpack.c.l.b16 %v2493
        %v2542 = vunpack.c.l.b16 %v2494
        %v2543 = vunpack.c.l.b16 %v2495
        %v2544 = vunpack.c.l.b16 %v2496
        %v2545 = vunpack.c.l.b16 %v2497
        %v2546 = vunpack.c.l.b16 %v2498
        %v2547 = vunpack.c.l.b16 %v2499
        %v2548 = vpack.c.b16 %v2533, %v2532
        %v2549 = vpack.c.b16 %v2535, %v2534
        %v2550 = vpack.c.b16 %v2537, %v2536
        %v2551 = vpack.c.b16 %v2539, %v2538
        %v2552 = vpack.c.b16 %v2541, %v2540
        %v2553 = vpack.c.b16 %v2543, %v2542
        %v2554 = vpack.c.b16 %v2545, %v2544
        %v2555 = vpack.c.b16 %v2547, %v2546
        %2564 = vmatprep.subr.bf16.mxu0 0
        %2565 = vmatpush1.bf16.msra.mxu0 %v2548
        %2566 = vmatprep.subr.bf16.mxu0 0
        %2567 = vmatpush1.bf16.msra.mxu0 %v2549
        %2568 = vmatprep.subr.bf16.mxu0 0
        %2569 = vmatpush1.bf16.msra.mxu0 %v2550
        %2570 = vmatprep.subr.bf16.mxu0 0
        %2571 = vmatpush1.bf16.msra.mxu0 %v2551
        %2572 = vmatprep.subr.bf16.mxu0 0
        %2573 = vmatpush1.bf16.msra.mxu0 %v2552
        %2574 = vmatprep.subr.bf16.mxu0 0
        %2575 = vmatpush1.bf16.msra.mxu0 %v2553
        %2576 = vmatprep.subr.bf16.mxu0 0
        %2577 = vmatpush1.bf16.msra.mxu0 %v2554
        %2578 = vmatprep.subr.bf16.mxu0 0
        %2579 = vmatpush1.bf16.msra.mxu0 %v2555
        %2580 = vmatprep.subr.bf16.mxu0 0
        %2581 = vmatpush1.bf16.msra.mxu0 0
        %2582 = vmatprep.subr.bf16.mxu0 0
        %2583 = vmatpush1.bf16.msra.mxu0 0
        %2584 = vmatprep.subr.bf16.mxu0 0
        %2585 = vmatpush1.bf16.msra.mxu0 0
        %2586 = vmatprep.subr.bf16.mxu0 0
        %2587 = vmatpush1.bf16.msra.mxu0 0
        %2588 = vmatprep.subr.bf16.mxu0 0
        %2589 = vmatpush1.bf16.msra.mxu0 0
        %2590 = vmatprep.subr.bf16.mxu0 0
        %2591 = vmatpush1.bf16.msra.mxu0 0
        %2592 = vmatprep.subr.bf16.mxu0 0
        %2593 = vmatpush1.bf16.msra.mxu0 0
        %2594 = vmatprep.subr.bf16.mxu0 0
        %2595 = vmatpush1.bf16.msra.mxu0 0
        %2596 = vmatprep.mubr.bf16.mxu0 0
        %2597 = vmatmul.mubr.bf16.gmra.mrb[0].mxu0 %v2508
        %v2598 = vpop.f32.mrb[0].mxu0
        %v2599 = vadd.f32 0.0, %v2598
        %v2600 = vpop.f32.mrb[0].mxu0
        %v2601 = vpop.f32.mrb[0].mxu0
        %v2602 = vadd.f32 0.0, %v2601
        %v2603 = vpop.f32.mrb[0].mxu0
        %2604 = vmatprep.mubr.bf16.mxu0 0
        %2605 = vmatmul.mubr.bf16.gmra.mrb[0].mxu0 %v2509
        %v2606 = vpop.f32.mrb[0].mxu0
        %v2607 = vadd.f32 0.0, %v2606
        %v2608 = vpop.f32.mrb[0].mxu0
        %v2609 = vpop.f32.mrb[0].mxu0
        %v2610 = vadd.f32 0.0, %v2609
        %v2611 = vpop.f32.mrb[0].mxu0
        %2612 = vmatprep.mubr.bf16.mxu0 0
        %2613 = vmatmul.mubr.bf16.gmra.mrb[0].mxu0 %v2510
        %v2614 = vpop.f32.mrb[0].mxu0
        %v2615 = vadd.f32 0.0, %v2614
        %v2616 = vpop.f32.mrb[0].mxu0
        %v2617 = vpop.f32.mrb[0].mxu0
        %v2618 = vadd.f32 0.0, %v2617
        %v2619 = vpop.f32.mrb[0].mxu0
        %2620 = vmatprep.mubr.bf16.mxu0 0
        %2621 = vmatmul.mubr.bf16.gmra.mrb[0].mxu0 %v2511
        %v2622 = vpop.f32.mrb[0].mxu0
        %v2623 = vadd.f32 0.0, %v2622
        %v2624 = vpop.f32.mrb[0].mxu0
        %v2625 = vpop.f32.mrb[0].mxu0
        %v2626 = vadd.f32 0.0, %v2625
        %v2627 = vpop.f32.mrb[0].mxu0
        %2628 = vdwg.mxu0
        %v2629 = vadd.f32 %v2367, %v2599
        %v2630 = vadd.f32 %v2368, %v2602
        %v2631 = vadd.f32 %v2369, %v2607
        %v2632 = vadd.f32 %v2370, %v2610
        %v2633 = vadd.f32 %v2371, %v2615
        %v2634 = vadd.f32 %v2372, %v2618
        %v2635 = vadd.f32 %v2373, %v2623
        %v2636 = vadd.f32 %v2374, %v2626
        %v2637 = vld [vmem:[%s2204] sm:$0xe]
        %v2638 = vld [vmem:[%s2204 + $0xc] sm:$0xe]
        %v2639 = vld [vmem:[%s2204 + $0x18] sm:$0xe]
        %v2640 = vld [vmem:[%s2204 + $0x24] sm:$0xe]
        %v2653 = vrot.slane %v2637, 5
        %v2654 = vrot.slane %v2653, 4
        %v2655 = vrot.slane %v2376, 5
        %v2656 = vsel %vm1391, %v2654, %v2655
        %v2657 = vrot.slane %v2655, 4
        %v2658 = vrot.slane %v2377, 5
        %v2659 = vsel %vm1391, %v2657, %v2658
        %v2660 = vrot.slane %v2638, 5
        %v2661 = vrot.slane %v2660, 4
        %v2662 = vrot.slane %v2379, 5
        %v2663 = vsel %vm1391, %v2661, %v2662
        %v2664 = vrot.slane %v2662, 4
        %v2665 = vrot.slane %v2380, 5
        %v2666 = vsel %vm1391, %v2664, %v2665
        %v2667 = vrot.slane %v2639, 5
        %v2668 = vrot.slane %v2667, 4
        %v2669 = vrot.slane %v2382, 5
        %v2670 = vsel %vm1391, %v2668, %v2669
        %v2671 = vrot.slane %v2669, 4
        %v2672 = vrot.slane %v2383, 5
        %v2673 = vsel %vm1391, %v2671, %v2672
        %v2674 = vrot.slane %v2640, 5
        %v2675 = vrot.slane %v2674, 4
        %v2676 = vrot.slane %v2385, 5
        %v2677 = vsel %vm1391, %v2675, %v2676
        %v2678 = vrot.slane %v2676, 4
        %v2679 = vrot.slane %v2386, 5
        %v2680 = vsel %vm1391, %v2678, %v2679
        %s2681 = scalar_lea.vmem [#allocation10], 512
        %v2682 = vld [vmem:[%s2681] sm:$0xf]
        %v2683 = vld [vmem:[%s2681 + $0x4] sm:$0xf]
        %v2684 = vld [vmem:[%s2681 + $0x8] sm:$0xf]
        %v2685 = vld [vmem:[%s2681 + $0xc] sm:$0xf]
        %v2686 = vld [vmem:[%s2681 + $0x10] sm:$0xf]
        %v2687 = vld [vmem:[%s2681 + $0x14] sm:$0xf]
        %v2688 = vld [vmem:[%s2681 + $0x18] sm:$0xf]
        %v2689 = vld [vmem:[%s2681 + $0x1c] sm:$0xf]
        %v2690 = vld [vmem:[%s2681 + $0x20] sm:$0xf]
        %v2691 = vld [vmem:[%s2681 + $0x24] sm:$0xf]
        %v2692 = vld [vmem:[%s2681 + $0x28] sm:$0xf]
        %v2693 = vld [vmem:[%s2681 + $0x2c] sm:$0xf]
        %v2694 = vld [vmem:[%s2681 + $0x30] sm:$0xf]
        %v2695 = vld [vmem:[%s2681 + $0x34] sm:$0xf]
        %v2696 = vld [vmem:[%s2681 + $0x38] sm:$0xf]
        %v2697 = vld [vmem:[%s2681 + $0x3c] sm:$0xf]
        %v2698 = vunpack.c.l.b16 %v2656
        %v2699 = vunpack.c.l.b16 %v2659
        %v2700 = vunpack.c.l.b16 %v2663
        %v2701 = vunpack.c.l.b16 %v2666
        %v2702 = vunpack.c.l.b16 %v2670
        %v2703 = vunpack.c.l.b16 %v2673
        %v2704 = vunpack.c.l.b16 %v2677
        %v2705 = vunpack.c.l.b16 %v2680
        %v2706 = vpack.c.b16 %v2699, %v2698
        %v2707 = vpack.c.b16 %v2701, %v2700
        %v2708 = vpack.c.b16 %v2703, %v2702
        %v2709 = vpack.c.b16 %v2705, %v2704
        %v2730 = vunpack.c.l.b16 %v2682
        %v2731 = vunpack.c.l.b16 %v2683
        %v2732 = vunpack.c.l.b16 %v2684
        %v2733 = vunpack.c.l.b16 %v2685
        %v2734 = vunpack.c.l.b16 %v2686
        %v2735 = vunpack.c.l.b16 %v2687
        %v2736 = vunpack.c.l.b16 %v2688
        %v2737 = vunpack.c.l.b16 %v2689
        %v2738 = vunpack.c.l.b16 %v2690
        %v2739 = vunpack.c.l.b16 %v2691
        %v2740 = vunpack.c.l.b16 %v2692
        %v2741 = vunpack.c.l.b16 %v2693
        %v2742 = vunpack.c.l.b16 %v2694
        %v2743 = vunpack.c.l.b16 %v2695
        %v2744 = vunpack.c.l.b16 %v2696
        %v2745 = vunpack.c.l.b16 %v2697
        %v2746 = vpack.c.b16 %v2731, %v2730
        %v2747 = vpack.c.b16 %v2733, %v2732
        %v2748 = vpack.c.b16 %v2735, %v2734
        %v2749 = vpack.c.b16 %v2737, %v2736
        %v2750 = vpack.c.b16 %v2739, %v2738
        %v2751 = vpack.c.b16 %v2741, %v2740
        %v2752 = vpack.c.b16 %v2743, %v2742
        %v2753 = vpack.c.b16 %v2745, %v2744
        %2762 = vmatprep.subr.bf16.mxu0 0
        %2763 = vmatpush1.bf16.msra.mxu0 %v2746
        %2764 = vmatprep.subr.bf16.mxu0 0
        %2765 = vmatpush1.bf16.msra.mxu0 %v2747
        %2766 = vmatprep.subr.bf16.mxu0 0
        %2767 = vmatpush1.bf16.msra.mxu0 %v2748
        %2768 = vmatprep.subr.bf16.mxu0 0
        %2769 = vmatpush1.bf16.msra.mxu0 %v2749
        %2770 = vmatprep.subr.bf16.mxu0 0
        %2771 = vmatpush1.bf16.msra.mxu0 %v2750
        %2772 = vmatprep.subr.bf16.mxu0 0
        %2773 = vmatpush1.bf16.msra.mxu0 %v2751
        %2774 = vmatprep.subr.bf16.mxu0 0
        %2775 = vmatpush1.bf16.msra.mxu0 %v2752
        %2776 = vmatprep.subr.bf16.mxu0 0
        %2777 = vmatpush1.bf16.msra.mxu0 %v2753
        %2778 = vmatprep.subr.bf16.mxu0 0
        %2779 = vmatpush1.bf16.msra.mxu0 0
        %2780 = vmatprep.subr.bf16.mxu0 0
        %2781 = vmatpush1.bf16.msra.mxu0 0
        %2782 = vmatprep.subr.bf16.mxu0 0
        %2783 = vmatpush1.bf16.msra.mxu0 0
        %2784 = vmatprep.subr.bf16.mxu0 0
        %2785 = vmatpush1.bf16.msra.mxu0 0
        %2786 = vmatprep.subr.bf16.mxu0 0
        %2787 = vmatpush1.bf16.msra.mxu0 0
        %2788 = vmatprep.subr.bf16.mxu0 0
        %2789 = vmatpush1.bf16.msra.mxu0 0
        %2790 = vmatprep.subr.bf16.mxu0 0
        %2791 = vmatpush1.bf16.msra.mxu0 0
        %2792 = vmatprep.subr.bf16.mxu0 0
        %2793 = vmatpush1.bf16.msra.mxu0 0
        %2794 = vmatprep.mubr.bf16.mxu0 0
        %2795 = vmatmul.mubr.bf16.gmra.mrb[0].mxu0 %v2706
        %v2796 = vpop.f32.mrb[0].mxu0
        %v2797 = vadd.f32 0.0, %v2796
        %v2798 = vpop.f32.mrb[0].mxu0
        %v2799 = vpop.f32.mrb[0].mxu0
        %v2800 = vadd.f32 0.0, %v2799
        %v2801 = vpop.f32.mrb[0].mxu0
        %2802 = vmatprep.mubr.bf16.mxu0 0
        %2803 = vmatmul.mubr.bf16.gmra.mrb[0].mxu0 %v2707
        %v2804 = vpop.f32.mrb[0].mxu0
        %v2805 = vadd.f32 0.0, %v2804
        %v2806 = vpop.f32.mrb[0].mxu0
        %v2807 = vpop.f32.mrb[0].mxu0
        %v2808 = vadd.f32 0.0, %v2807
        %v2809 = vpop.f32.mrb[0].mxu0
        %2810 = vmatprep.mubr.bf16.mxu0 0
        %2811 = vmatmul.mubr.bf16.gmra.mrb[0].mxu0 %v2708
        %v2812 = vpop.f32.mrb[0].mxu0
        %v2813 = vadd.f32 0.0, %v2812
        %v2814 = vpop.f32.mrb[0].mxu0
        %v2815 = vpop.f32.mrb[0].mxu0
        %v2816 = vadd.f32 0.0, %v2815
        %v2817 = vpop.f32.mrb[0].mxu0
        %2818 = vmatprep.mubr.bf16.mxu0 0
        %2819 = vmatmul.mubr.bf16.gmra.mrb[0].mxu0 %v2709
        %v2820 = vpop.f32.mrb[0].mxu0
        %v2821 = vadd.f32 0.0, %v2820
        %v2822 = vpop.f32.mrb[0].mxu0
        %v2823 = vpop.f32.mrb[0].mxu0
        %v2824 = vadd.f32 0.0, %v2823
        %v2825 = vpop.f32.mrb[0].mxu0
        %2826 = vdwg.mxu0
        %v2827 = vadd.f32 %v2629, %v2797
        %v2828 = vadd.f32 %v2630, %v2800
        %v2829 = vadd.f32 %v2631, %v2805
        %v2830 = vadd.f32 %v2632, %v2808
        %v2831 = vadd.f32 %v2633, %v2813
        %v2832 = vadd.f32 %v2634, %v2816
        %v2833 = vadd.f32 %v2635, %v2821
        %v2834 = vadd.f32 %v2636, %v2824
        %v2835 = vld [vmem:[%s5] sm:$0x1]
        %v2837 = vlaneseq
        %v2838 = vshrl.u32 %v2837, 7
        %v2839 = vsub.s32 0, %v2838
        %v2840 = vrot.slane %v2835, %v2839
        %v2842 = vadd.f32 %v2827, %v2840
        %v2843 = vadd.f32 %v2828, %v2840
        %v2844 = vadd.f32 %v2829, %v2840
        %v2845 = vadd.f32 %v2830, %v2840
        %v2846 = vadd.f32 %v2831, %v2840
        %v2847 = vadd.f32 %v2832, %v2840
        %v2848 = vadd.f32 %v2833, %v2840
        %v2849 = vadd.f32 %v2834, %v2840
        %v2850 = vmax.f32 %v2842, 0.0
        %v2851 = vmax.f32 %v2843, 0.0
        %v2852 = vmax.f32 %v2844, 0.0
        %v2853 = vmax.f32 %v2845, 0.0
        %v2854 = vmax.f32 %v2846, 0.0
        %v2855 = vmax.f32 %v2847, 0.0
        %v2856 = vmax.f32 %v2848, 0.0
        %v2857 = vmax.f32 %v2849, 0.0
        %v2858 = vpack.c.bf16 %v2851, %v2850
        %v2859 = vpack.c.bf16 %v2853, %v2852
        %v2860 = vpack.c.bf16 %v2855, %v2854
        %v2861 = vpack.c.bf16 %v2857, %v2856
        %v2862 = vld [vmem:[#allocation11] sm:$0xf]
        %v2863 = vld [vmem:[#allocation11 + $0x4] sm:$0xf]
        %v2864 = vld [vmem:[#allocation11 + $0x8] sm:$0xf]
        %v2865 = vld [vmem:[#allocation11 + $0xc] sm:$0xf]
        %v2866 = vld [vmem:[#allocation11 + $0x10] sm:$0xf]
        %v2867 = vld [vmem:[#allocation11 + $0x14] sm:$0xf]
        %v2868 = vld [vmem:[#allocation11 + $0x18] sm:$0xf]
        %v2869 = vld [vmem:[#allocation11 + $0x1c] sm:$0xf]
        %v2870 = vld [vmem:[#allocation11 + $0x20] sm:$0xf]
        %v2871 = vld [vmem:[#allocation11 + $0x24] sm:$0xf]
        %v2872 = vld [vmem:[#allocation11 + $0x28] sm:$0xf]
        %v2873 = vld [vmem:[#allocation11 + $0x2c] sm:$0xf]
        %v2874 = vld [vmem:[#allocation11 + $0x30] sm:$0xf]
        %v2875 = vld [vmem:[#allocation11 + $0x34] sm:$0xf]
        %v2876 = vld [vmem:[#allocation11 + $0x38] sm:$0xf]
        %v2877 = vld [vmem:[#allocation11 + $0x3c] sm:$0xf]
        %v2878 = vld [vmem:[%s7] sm:$0x1]
        %v2880 = vlaneseq
        %v2881 = vshrl.u32 %v2880, 7
        %v2882 = vsub.s32 0, %v2881
        %v2883 = vrot.slane %v2878, %v2882
        %v2901 = vunpack.c.l.b16 %v2862
        %v2902 = vunpack.c.l.b16 %v2863
        %v2903 = vunpack.c.l.b16 %v2864
        %v2904 = vunpack.c.l.b16 %v2865
        %v2905 = vunpack.c.l.b16 %v2866
        %v2906 = vunpack.c.l.b16 %v2867
        %v2907 = vunpack.c.l.b16 %v2868
        %v2908 = vunpack.c.l.b16 %v2869
        %v2909 = vunpack.c.l.b16 %v2870
        %v2910 = vunpack.c.l.b16 %v2871
        %v2911 = vunpack.c.l.b16 %v2872
        %v2912 = vunpack.c.l.b16 %v2873
        %v2913 = vunpack.c.l.b16 %v2874
        %v2914 = vunpack.c.l.b16 %v2875
        %v2915 = vunpack.c.l.b16 %v2876
        %v2916 = vunpack.c.l.b16 %v2877
        %v2917 = vpack.c.b16 %v2902, %v2901
        %v2918 = vpack.c.b16 %v2904, %v2903
        %v2919 = vpack.c.b16 %v2906, %v2905
        %v2920 = vpack.c.b16 %v2908, %v2907
        %v2921 = vpack.c.b16 %v2910, %v2909
        %v2922 = vpack.c.b16 %v2912, %v2911
        %v2923 = vpack.c.b16 %v2914, %v2913
        %v2924 = vpack.c.b16 %v2916, %v2915
        %2933 = vmatprep.subr.bf16.mxu0 0
        %2934 = vmatpush1.bf16.msra.mxu0 %v2917
        %2935 = vmatprep.subr.bf16.mxu0 0
        %2936 = vmatpush1.bf16.msra.mxu0 %v2918
        %2937 = vmatprep.subr.bf16.mxu0 0
        %2938 = vmatpush1.bf16.msra.mxu0 %v2919
        %2939 = vmatprep.subr.bf16.mxu0 0
        %2940 = vmatpush1.bf16.msra.mxu0 %v2920
        %2941 = vmatprep.subr.bf16.mxu0 0
        %2942 = vmatpush1.bf16.msra.mxu0 %v2921
        %2943 = vmatprep.subr.bf16.mxu0 0
        %2944 = vmatpush1.bf16.msra.mxu0 %v2922
        %2945 = vmatprep.subr.bf16.mxu0 0
        %2946 = vmatpush1.bf16.msra.mxu0 %v2923
        %2947 = vmatprep.subr.bf16.mxu0 0
        %2948 = vmatpush1.bf16.msra.mxu0 %v2924
        %2949 = vmatprep.subr.bf16.mxu0 0
        %2950 = vmatpush1.bf16.msra.mxu0 0
        %2951 = vmatprep.subr.bf16.mxu0 0
        %2952 = vmatpush1.bf16.msra.mxu0 0
        %2953 = vmatprep.subr.bf16.mxu0 0
        %2954 = vmatpush1.bf16.msra.mxu0 0
        %2955 = vmatprep.subr.bf16.mxu0 0
        %2956 = vmatpush1.bf16.msra.mxu0 0
        %2957 = vmatprep.subr.bf16.mxu0 0
        %2958 = vmatpush1.bf16.msra.mxu0 0
        %2959 = vmatprep.subr.bf16.mxu0 0
        %2960 = vmatpush1.bf16.msra.mxu0 0
        %2961 = vmatprep.subr.bf16.mxu0 0
        %2962 = vmatpush1.bf16.msra.mxu0 0
        %2963 = vmatprep.subr.bf16.mxu0 0
        %2964 = vmatpush1.bf16.msra.mxu0 0
        %2965 = vmatprep.mubr.bf16.mxu0 0
        %2966 = vmatmul.mubr.bf16.gmra.mrb[0].mxu0 %v2858
        %v2967 = vpop.f32.mrb[0].mxu0
        %v2968 = vadd.f32 %v2883, %v2967
        %v2969 = vpop.f32.mrb[0].mxu0
        %v2970 = vpop.f32.mrb[0].mxu0
        %v2971 = vadd.f32 %v2883, %v2970
        %v2972 = vpop.f32.mrb[0].mxu0
        %2973 = vmatprep.mubr.bf16.mxu0 0
        %2974 = vmatmul.mubr.bf16.gmra.mrb[0].mxu0 %v2859
        %v2975 = vpop.f32.mrb[0].mxu0
        %v2976 = vadd.f32 %v2883, %v2975
        %v2977 = vpop.f32.mrb[0].mxu0
        %v2978 = vpop.f32.mrb[0].mxu0
        %v2979 = vadd.f32 %v2883, %v2978
        %v2980 = vpop.f32.mrb[0].mxu0
        %2981 = vmatprep.mubr.bf16.mxu0 0
        %2982 = vmatmul.mubr.bf16.gmra.mrb[0].mxu0 %v2860
        %v2983 = vpop.f32.mrb[0].mxu0
        %v2984 = vadd.f32 %v2883, %v2983
        %v2985 = vpop.f32.mrb[0].mxu0
        %v2986 = vpop.f32.mrb[0].mxu0
        %v2987 = vadd.f32 %v2883, %v2986
        %v2988 = vpop.f32.mrb[0].mxu0
        %2989 = vmatprep.mubr.bf16.mxu0 0
        %2990 = vmatmul.mubr.bf16.gmra.mrb[0].mxu0 %v2861
        %v2991 = vpop.f32.mrb[0].mxu0
        %v2992 = vadd.f32 %v2883, %v2991
        %v2993 = vpop.f32.mrb[0].mxu0
        %v2994 = vpop.f32.mrb[0].mxu0
        %v2995 = vadd.f32 %v2883, %v2994
        %v2996 = vpop.f32.mrb[0].mxu0
        %2997 = vdwg.mxu0
        %v2998 = vunpack.c.l.bf16 %v445
        %v2999 = vunpack.c.l.bf16 %v446
        %v3000 = vunpack.c.l.bf16 %v447
        %v3001 = vunpack.c.l.bf16 %v448
        %v3002 = vunpack.c.l.bf16 %v449
        %v3003 = vunpack.c.l.bf16 %v450
        %v3004 = vunpack.c.l.bf16 %v451
        %v3005 = vunpack.c.l.bf16 %v452
        %v3006 = vadd.f32 %v2968, %v2998
        %v3007 = vadd.f32 %v2971, %v2999
        %v3008 = vadd.f32 %v2976, %v3000
        %v3009 = vadd.f32 %v2979, %v3001
        %v3010 = vadd.f32 %v2984, %v3002
        %v3011 = vadd.f32 %v2987, %v3003
        %v3012 = vadd.f32 %v2992, %v3004
        %v3013 = vadd.f32 %v2995, %v3005
        %v3014 = vmax.f32 %v3006, 0.0
        %v3015 = vmax.f32 %v3007, 0.0
        %v3016 = vmax.f32 %v3008, 0.0
        %v3017 = vmax.f32 %v3009, 0.0
        %v3018 = vmax.f32 %v3010, 0.0
        %v3019 = vmax.f32 %v3011, 0.0
        %v3020 = vmax.f32 %v3012, 0.0
        %v3021 = vmax.f32 %v3013, 0.0
        %v3022 = vpack.c.bf16 %v3015, %v3014
        %v3023 = vpack.c.bf16 %v3017, %v3016
        %v3024 = vpack.c.bf16 %v3019, %v3018
        %v3025 = vpack.c.bf16 %v3021, %v3020
        %v3030 = vunpack.c.l.b16 %v3022
        %v3031 = vunpack.c.h.b16 %v3022
        %v3032 = vunpack.c.l.b16 %v3023
        %v3033 = vunpack.c.h.b16 %v3023
        %v3034 = vunpack.c.l.b16 %v3024
        %v3035 = vunpack.c.h.b16 %v3024
        %v3036 = vunpack.c.l.b16 %v3025
        %v3037 = vunpack.c.h.b16 %v3025
        %v3038 = vpack.c.b16 %v3030, %v3030
        %v3039 = vpack.c.b16 %v3031, %v3031
        %v3040 = vpack.c.b16 %v3032, %v3032
        %v3041 = vpack.c.b16 %v3033, %v3033
        %v3042 = vpack.c.b16 %v3034, %v3034
        %v3043 = vpack.c.b16 %v3035, %v3035
        %v3044 = vpack.c.b16 %v3036, %v3036
        %v3045 = vpack.c.b16 %v3037, %v3037
        %3054 = vst [vmem:[%s360] sm:$0xf] %v3038
        %3055 = vst [vmem:[%s360 + $0x4] sm:$0xf] %v3039
        %3056 = vst [vmem:[%s360 + $0x8] sm:$0xf] %v3040
        %3057 = vst [vmem:[%s360 + $0xc] sm:$0xf] %v3041
        %3058 = vst [vmem:[%s360 + $0x10] sm:$0xf] %v3042
        %3059 = vst [vmem:[%s360 + $0x14] sm:$0xf] %v3043
        %3060 = vst [vmem:[%s360 + $0x18] sm:$0xf] %v3044
        %3061 = vst [vmem:[%s360 + $0x1c] sm:$0xf] %v3045
        %s3062 = sand.u32 %s203, 1
        %s3063 = scalar_lea.sflag [#allocation7], %s3062
        %s3064 = sand.u32 %s203, 1
        %s3065 = smul.addr %s3064, 32
        %s3066 = scalar_lea.vmem [#allocation13], %s3065
        // Predicated region
        $region73: #{tpu_custom_call.1} parent=47 // pred_check
          %p3067 = pneg %p213
        $region74: #{tpu_custom_call.1} parent=47 // pred_check_branch
          %3069 = sbr.rel (%p3067) target = $region76
        $region75: #{tpu_custom_call.1} parent=47 // pred_region
          %s3070 = smul.u32 4, %s32
          %s3072 = ssub.s32 512, 512
          %3073 = vsyncadd %s3063, %s3072
          %s3074 = smul.addr %s3070, 2
          %s3075 = smul.addr %s31, 32
          %s3076 = sadd.s32 %s3074, %s3075
          %s3077 = smul.addr %s3076, 64
          %s3078 = scalar_lea.hbm %s8, %s3077
          %s3079 = sshll.u32 %s3066, 4
          %s3080 = int_to_ptr.vmem [resolvable:$true] %s3079
          %3085 = dma.vmem_to_hbm [thread:$0]  %s3080, 512, %s3078, %s3063, 64, 64, 4
        $region76: #{tpu_custom_call.1} parent=47 // pred_fallthru
          _
      $region48: #{tpu_custom_call.1} parent=5 // pred_fallthru
        _
      %p3086 = scmp.le.s32.totalorder 2, %s22
      // Predicated region
      $region77: #{tpu_custom_call.1} parent=5 // pred_check
        %p3087 = pneg %p3086
      $region78: #{tpu_custom_call.1} parent=5 // pred_check_branch
        %3089 = sbr.rel (%p3087) target = $region80
      $region79: #{tpu_custom_call.1} parent=5 // pred_region
        %s3090 = ssub.s32 %s22, 2
        // Predicated region
        $region81: #{tpu_custom_call.1} parent=79 // pred_check
          %p3091 = pneg %p219
        $region82: #{tpu_custom_call.1} parent=79 // pred_check_branch
          %3093 = sbr.rel (%p3091) target = $region84
        $region83: #{tpu_custom_call.1} parent=79 // pred_region
          %s3094 = sand.u32 %s204, 1
          %s3095 = scalar_lea.sflag [#allocation7], %s3094
          %s3096 = sand.u32 %s204, 1
          %s3097 = smul.addr %s3096, 32
          %s3098 = scalar_lea.vmem [#allocation13], %s3097
          %3099 = dma.done %s3095, 512
        $region84: #{tpu_custom_call.1} parent=79 // pred_fallthru
          _
      $region80: #{tpu_custom_call.1} parent=5 // pred_fallthru
        _
    $region6: #{tpu_custom_call.1} parent=1 // loop_footer
      %s26 = sadd.s32 1, %s22
    $region7: #{tpu_custom_call.1} parent=1 // loop_footer_branch
      %21 = sbr.rel target = $region3
    $region8: #{tpu_custom_call.1} parent=1 // loop_exit
      _
    %3100 = vsyncpa [#allocation6], 1
    %s3101 = scalar_lea.sflag [#allocation6], 1
    %3102 = vsyncpa %s3101, 1
    %3103 = vsyncpa [#allocation9], 1
    %3104 = vsyncpa [#allocation12], 1
    %3105 = vsyncpa [#allocation7], 1
    %s3106 = scalar_lea.sflag [#allocation7], 1
    %3107 = vsyncpa %s3106, 1
  %3108 = vsyncmov [#allocation3]
  %s3109 = vpop.sfrf %3108
  %p3110 = scmp.eq.s32.totalorder %s3109, 0
  %p3111 = pneg %p3110
  %3113 = shalt.err (%p3111)
  %s3114 = scalar_lea.sflag [#allocation3], 1
  %3115 = vsyncmov %s3114
  %s3116 = vpop.sfrf %3115
  %p3117 = scmp.eq.s32.totalorder %s3116, 0
  %p3118 = pneg %p3117
  %3120 = shalt.err (%p3118)

</llo_original>
